<compile_context>
chip_gen: v6e
topology: v6e:2x2x1
jax: 0.10.0
libtpu: 0.0.40
codegen_flags: <defaults>
</compile_context>

<pallas_src>
import functools

import numpy as np
import jax
import jax.numpy as jnp
from jax.experimental import pallas as pl
from jax.experimental.pallas import tpu as pltpu

NUM_LAYERS = 6            # input channels (numLayers in the reference script)
K, S, P = 4, 2, 1         # conv kernel / stride / padding
C1P = 8                   # layer-1 input channels zero-padded 6 -> 8
OCP = 128                 # output channels padded to 128 (lane-dense stores)
C1, C2, C3 = 16, 32, 32   # true output channels of the three conv layers


def _conv_out(n):
    return (n + 2 * P - K) // S + 1


# --------------------------- host-side constant prep -------------------------
@functools.lru_cache(maxsize=None)
def _gather_mats(hin, win, hout, wout):
    """g[kh*K+kw, oh*wout+ow, ih*win+iw] = 1 where (ih, iw) is the input pixel
    used by kernel tap (kh, kw) at output (oh, ow); out-of-range taps (the
    conv zero-padding) simply stay zero rows."""
    g = np.zeros((K * K, hout * wout, hin * win), np.float32)
    for oh in range(hout):
        for ow in range(wout):
            i = oh * wout + ow
            for kh in range(K):
                ih = S * oh + kh - P
                if not (0 <= ih < hin):
                    continue
                for kw in range(K):
                    iw = S * ow + kw - P
                    if 0 <= iw < win:
                        g[kh * K + kw, i, ih * win + iw] = 1.0
    return g


def _prep_weight(w_oihw, ic_pad=None, oc_pad=OCP):
    """PyTorch conv weight (OC, IC, KH, KW) -> (KH*KW*ICp, OCp); row order is
    (kh, kw, ic), matching the gather-matrix tap index j = kh*K + kw."""
    oc, ic = w_oihw.shape[0], w_oihw.shape[1]
    w = jnp.transpose(w_oihw, (2, 3, 1, 0))               # (KH, KW, IC, OC)
    if ic_pad is not None and ic_pad > ic:
        w = jnp.pad(w, ((0, 0), (0, 0), (0, ic_pad - ic), (0, 0)))
    w = w.reshape(-1, oc)
    return jnp.pad(w, ((0, 0), (0, oc_pad - oc))).astype(jnp.float32)


def _prep_bias(b, oc_pad=OCP):
    return jnp.pad(b, (0, oc_pad - b.shape[0])).reshape(1, oc_pad).astype(jnp.float32)


# --------------------------------- kernel ------------------------------------
def _conv_block(g_ref, w_ref, b_ref, x, cin):
    """One conv(k=4,s=2,p=1)+ReLU layer, fully VMEM-resident.
    g_ref: (K*K, M, HWin) gather matrices, w_ref: (K*K*cin, OCP), b_ref: (1, OCP)
    x:     (HWin, cin) flattened NHWC input activation (value)
    returns y: (M, OCP)."""
    acc = None
    for j in range(K * K):                       # static unroll over the 16 taps
        patch = jnp.dot(g_ref[j], x, preferred_element_type=jnp.float32)     # (M, cin)
        term = jnp.dot(patch, w_ref[pl.ds(j * cin, cin), :],
                       preferred_element_type=jnp.float32)                   # (M, OCP)
        acc = term if acc is None else acc + term
    return jnp.maximum(acc + b_ref[...], 0.0)


def _fused_kernel(x_ref, g1_ref, w1_ref, b1_ref, g2_ref, w2_ref, b2_ref,
                  g3_ref, w3_ref, b3_ref, o1_ref, o2_ref, o3_ref):
    y1 = _conv_block(g1_ref, w1_ref, b1_ref, x_ref[...], C1P)   # (m1, OCP)
    o1_ref[...] = y1
    y2 = _conv_block(g2_ref, w2_ref, b2_ref, y1[:, :C1], C1)    # (m2, OCP)
    o2_ref[...] = y2
    y3 = _conv_block(g3_ref, w3_ref, b3_ref, y2[:, :C2], C2)    # (m3, OCP)
    o3_ref[...] = y3


# --------------------------------- forward -----------------------------------
@jax.jit
def cnn_features_forward(x_nchw, params):
    """Replicates CNNFeatures.forward: returns (flat, [feat1, feat2, feat3])."""
    (w1, b1), (w2, b2), (w3, b3) = params
    N, cin, H, W = x_nchw.shape
    oh1, ow1 = _conv_out(H), _conv_out(W)
    oh2, ow2 = _conv_out(oh1), _conv_out(ow1)
    oh3, ow3 = _conv_out(oh2), _conv_out(ow2)
    m1, m2, m3 = oh1 * ow1, oh2 * ow2, oh3 * ow3

    # NCHW -> NHWC, pad channels 6 -> 8, flatten spatial: (N, H*W, 8)
    x = jnp.transpose(x_nchw, (0, 2, 3, 1)).astype(jnp.float32)
    x = jnp.pad(x, ((0, 0), (0, 0), (0, 0), (0, C1P - cin))).reshape(N, H * W, C1P)

    g1 = jnp.asarray(_gather_mats(H, W, oh1, ow1))          # (16, m1, H*W)
    g2 = jnp.asarray(_gather_mats(oh1, ow1, oh2, ow2))      # (16, m2, m1)
    g3 = jnp.asarray(_gather_mats(oh2, ow2, oh3, ow3))      # (16, m3, m2)

    w1m, b1v = _prep_weight(w1, ic_pad=C1P), _prep_bias(b1)
    w2m, b2v = _prep_weight(w2), _prep_bias(b2)
    w3m, b3v = _prep_weight(w3), _prep_bias(b3)

    flops = N * (K * K) * (
        2 * m1 * (H * W) * C1P + 2 * m1 * C1P * OCP
        + 2 * m2 * m1 * C1 + 2 * m2 * C1 * OCP
        + 2 * m3 * m2 * C2 + 2 * m3 * C2 * OCP)
    bytes_accessed = 4 * (N * H * W * C1P + g1.size + g2.size + g3.size
                          + w1m.size + w2m.size + w3m.size + 3 * OCP
                          + N * (m1 + m2 + m3) * OCP)

    o1, o2, o3 = pl.pallas_call(
        _fused_kernel,
        out_shape=(jax.ShapeDtypeStruct((N, m1, OCP), jnp.float32),
                   jax.ShapeDtypeStruct((N, m2, OCP), jnp.float32),
                   jax.ShapeDtypeStruct((N, m3, OCP), jnp.float32)),
        grid=(N,),
        in_specs=[
            pl.BlockSpec((None, H * W, C1P), lambda n: (n, 0, 0)),
            pl.BlockSpec(g1.shape, lambda n: (0, 0, 0)),
            pl.BlockSpec((K * K * C1P, OCP), lambda n: (0, 0)),
            pl.BlockSpec((1, OCP), lambda n: (0, 0)),
            pl.BlockSpec(g2.shape, lambda n: (0, 0, 0)),
            pl.BlockSpec((K * K * C1, OCP), lambda n: (0, 0)),
            pl.BlockSpec((1, OCP), lambda n: (0, 0)),
            pl.BlockSpec(g3.shape, lambda n: (0, 0, 0)),
            pl.BlockSpec((K * K * C2, OCP), lambda n: (0, 0)),
            pl.BlockSpec((1, OCP), lambda n: (0, 0)),
        ],
        out_specs=(
            pl.BlockSpec((None, m1, OCP), lambda n: (n, 0, 0)),
            pl.BlockSpec((None, m2, OCP), lambda n: (n, 0, 0)),
            pl.BlockSpec((None, m3, OCP), lambda n: (n, 0, 0)),
        ),
        compiler_params=pltpu.CompilerParams(dimension_semantics=("parallel",)),
        cost_estimate=pl.CostEstimate(flops=flops, transcendentals=0,
                                      bytes_accessed=bytes_accessed),
    )(x, g1, w1m, b1v, g2, w2m, b2v, g3, w3m, b3v)

    # slice padded OC back out, restore NCHW feature maps + (C,H,W) flatten
    feat1 = jnp.transpose(o1[:, :, :C1].reshape(N, oh1, ow1, C1), (0, 3, 1, 2))
    feat2 = jnp.transpose(o2[:, :, :C2].reshape(N, oh2, ow2, C2), (0, 3, 1, 2))
    feat3 = jnp.transpose(o3[:, :, :C3].reshape(N, oh3, ow3, C3), (0, 3, 1, 2))
    flat = feat3.reshape(N, -1)
    return flat, [feat1, feat2, feat3]


# ------------------------------ reference / init ------------------------------
def init_params(key):
    """Deterministic synthetic init (shapes from nn.Conv2d in __init__)."""
    shapes = [
        ((C1, NUM_LAYERS, K, K), (C1,)),
        ((C2, C1, K, K), (C2,)),
        ((C3, C2, K, K), (C3,)),
    ]
    params = []
    for i, (ws, bs) in enumerate(shapes):
        kw, kb = jax.random.split(jax.random.fold_in(key, i))
        fan_in = ws[1] * ws[2] * ws[3]
        w = jax.random.normal(kw, ws, jnp.float32) * (1.0 / jnp.sqrt(fan_in))
        b = jax.random.normal(kb, bs, jnp.float32) * 0.01
        params.append((w, b))
    return params


def reference_forward(x_nchw, params):
    """Pure-JAX reference using lax.conv (for correctness check)."""
    x = x_nchw
    feats = []
    for (w, b) in params:
        y = jax.lax.conv_general_dilated(
            x, w, window_strides=(S, S), padding=[(P, P), (P, P)],
            dimension_numbers=("NCHW", "OIHW", "NCHW"))
        y = jnp.maximum(y + b[None, :, None, None], 0.0)
        feats.append(y)
        x = y
    return feats[-1].reshape(feats[-1].shape[0], -1), feats


if __name__ == "__main__":
    key = jax.random.PRNGKey(0)
    kx, kp = jax.random.split(key)
    x = jax.random.normal(kx, (2, NUM_LAYERS, 16, 16), jnp.float32)  # NCHW
    params = init_params(kp)

    flat, feats = cnn_features_forward(x, params)
    jax.block_until_ready(flat)
    for f in feats:
        jax.block_until_ready(f)

    # sanity check against pure-JAX conv reference
    flat_ref, feats_ref = reference_forward(x, params)
    assert flat.shape == (2, C3 * 2 * 2)
    assert feats[0].shape == (2, C1, 8, 8)
    assert feats[1].shape == (2, C2, 4, 4)
    assert feats[2].shape == (2, C3, 2, 2)
    assert jnp.allclose(flat, flat_ref, atol=1e-3, rtol=1e-3)
    for a, b in zip(feats, feats_ref):
        assert jnp.allclose(a, b, atol=1e-3, rtol=1e-3)

    print("KERNEL_OK")
</pallas_src>

<mosaic_0001>
module attributes {stable_mosaic.version = 11 : i64} {
  func.func @_fused_kernel(%arg0: i32, %arg1: memref<1x256x8xf32, #tpu.memory_space<vmem>>, %arg2: memref<16x64x256xf32, #tpu.memory_space<vmem>>, %arg3: memref<128x128xf32, #tpu.memory_space<vmem>>, %arg4: memref<1x128xf32, #tpu.memory_space<vmem>>, %arg5: memref<16x16x64xf32, #tpu.memory_space<vmem>>, %arg6: memref<256x128xf32, #tpu.memory_space<vmem>>, %arg7: memref<1x128xf32, #tpu.memory_space<vmem>>, %arg8: memref<16x4x16xf32, #tpu.memory_space<vmem>>, %arg9: memref<512x128xf32, #tpu.memory_space<vmem>>, %arg10: memref<1x128xf32, #tpu.memory_space<vmem>>, %arg11: memref<1x64x128xf32, #tpu.memory_space<vmem>>, %arg12: memref<1x16x128xf32, #tpu.memory_space<vmem>>, %arg13: memref<1x4x128xf32, #tpu.memory_space<vmem>>) attributes {dimension_semantics = [#tpu.dimension_semantics<parallel>], iteration_bounds = array<i64: 2>, scalar_prefetch = 0 : i64, scratch_operands = 0 : i64, tpu.core_type = #tpu.core_type<tc>, window_params = [{transform_indices = @transform_0, window_bounds = array<i64: 1, 256, 8>}, {pipeline_mode = #tpu.pipeline_mode<synchronous>, transform_indices = @transform_1, window_bounds = array<i64: 16, 64, 256>}, {pipeline_mode = #tpu.pipeline_mode<synchronous>, transform_indices = @transform_2, window_bounds = array<i64: 128, 128>}, {pipeline_mode = #tpu.pipeline_mode<synchronous>, transform_indices = @transform_3, window_bounds = array<i64: 1, 128>}, {pipeline_mode = #tpu.pipeline_mode<synchronous>, transform_indices = @transform_4, window_bounds = array<i64: 16, 16, 64>}, {pipeline_mode = #tpu.pipeline_mode<synchronous>, transform_indices = @transform_5, window_bounds = array<i64: 256, 128>}, {pipeline_mode = #tpu.pipeline_mode<synchronous>, transform_indices = @transform_6, window_bounds = array<i64: 1, 128>}, {pipeline_mode = #tpu.pipeline_mode<synchronous>, transform_indices = @transform_7, window_bounds = array<i64: 16, 4, 16>}, {pipeline_mode = #tpu.pipeline_mode<synchronous>, transform_indices = @transform_8, window_bounds = array<i64: 512, 128>}, {pipeline_mode = #tpu.pipeline_mode<synchronous>, transform_indices = @transform_9, window_bounds = array<i64: 1, 128>}, {transform_indices = @transform_10, window_bounds = array<i64: 1, 64, 128>}, {transform_indices = @transform_11, window_bounds = array<i64: 1, 16, 128>}, {transform_indices = @transform_12, window_bounds = array<i64: 1, 4, 128>}]} {
    %c0 = arith.constant 0 : index
    %c0_0 = arith.constant 0 : index
    %c0_1 = arith.constant 0 : index
    %0 = vector.load %arg1[%c0, %c0_0, %c0_1] : memref<1x256x8xf32, #tpu.memory_space<vmem>>, vector<1x256x8xf32>
    %1 = vector.shape_cast %0 : vector<1x256x8xf32> to vector<256x8xf32>
    %c0_2 = arith.constant 0 : index
    %c0_3 = arith.constant 0 : index
    %c0_4 = arith.constant 0 : index
    %2 = vector.load %arg2[%c0_2, %c0_3, %c0_4] : memref<16x64x256xf32, #tpu.memory_space<vmem>>, vector<1x64x256xf32>
    %3 = vector.shape_cast %2 : vector<1x64x256xf32> to vector<64x256xf32>
    %cst = arith.constant dense<0.000000e+00> : vector<64x8xf32>
    %4 = tpu.matmul %3, %1, %cst {dimension_numbers = #tpu.dot_dimension_numbers<[1], [0], [0], [1], [0, 0, 1, 1], [], []>} : vector<64x256xf32>, vector<256x8xf32>, vector<64x8xf32> -> vector<64x8xf32>
    %c0_5 = arith.constant 0 : index
    %c0_6 = arith.constant 0 : index
    %5 = vector.load %arg3[%c0_5, %c0_6] : memref<128x128xf32, #tpu.memory_space<vmem>>, vector<8x128xf32>
    %cst_7 = arith.constant dense<0.000000e+00> : vector<64x128xf32>
    %6 = tpu.matmul %4, %5, %cst_7 {dimension_numbers = #tpu.dot_dimension_numbers<[1], [0], [0], [1], [0, 0, 1, 1], [], []>} : vector<64x8xf32>, vector<8x128xf32>, vector<64x128xf32> -> vector<64x128xf32>
    %c1 = arith.constant 1 : index
    %c0_8 = arith.constant 0 : index
    %c0_9 = arith.constant 0 : index
    %7 = vector.load %arg2[%c1, %c0_8, %c0_9] : memref<16x64x256xf32, #tpu.memory_space<vmem>>, vector<1x64x256xf32>
    %8 = vector.shape_cast %7 : vector<1x64x256xf32> to vector<64x256xf32>
    %cst_10 = arith.constant dense<0.000000e+00> : vector<64x8xf32>
    %9 = tpu.matmul %8, %1, %cst_10 {dimension_numbers = #tpu.dot_dimension_numbers<[1], [0], [0], [1], [0, 0, 1, 1], [], []>} : vector<64x256xf32>, vector<256x8xf32>, vector<64x8xf32> -> vector<64x8xf32>
    %c8 = arith.constant 8 : index
    %c0_11 = arith.constant 0 : index
    %10 = vector.load %arg3[%c8, %c0_11] : memref<128x128xf32, #tpu.memory_space<vmem>>, vector<8x128xf32>
    %cst_12 = arith.constant dense<0.000000e+00> : vector<64x128xf32>
    %11 = tpu.matmul %9, %10, %cst_12 {dimension_numbers = #tpu.dot_dimension_numbers<[1], [0], [0], [1], [0, 0, 1, 1], [], []>} : vector<64x8xf32>, vector<8x128xf32>, vector<64x128xf32> -> vector<64x128xf32>
    %12 = arith.addf %6, %11 : vector<64x128xf32>
    %c2 = arith.constant 2 : index
    %c0_13 = arith.constant 0 : index
    %c0_14 = arith.constant 0 : index
    %13 = vector.load %arg2[%c2, %c0_13, %c0_14] : memref<16x64x256xf32, #tpu.memory_space<vmem>>, vector<1x64x256xf32>
    %14 = vector.shape_cast %13 : vector<1x64x256xf32> to vector<64x256xf32>
    %cst_15 = arith.constant dense<0.000000e+00> : vector<64x8xf32>
    %15 = tpu.matmul %14, %1, %cst_15 {dimension_numbers = #tpu.dot_dimension_numbers<[1], [0], [0], [1], [0, 0, 1, 1], [], []>} : vector<64x256xf32>, vector<256x8xf32>, vector<64x8xf32> -> vector<64x8xf32>
    %c16 = arith.constant 16 : index
    %c0_16 = arith.constant 0 : index
    %16 = vector.load %arg3[%c16, %c0_16] : memref<128x128xf32, #tpu.memory_space<vmem>>, vector<8x128xf32>
    %cst_17 = arith.constant dense<0.000000e+00> : vector<64x128xf32>
    %17 = tpu.matmul %15, %16, %cst_17 {dimension_numbers = #tpu.dot_dimension_numbers<[1], [0], [0], [1], [0, 0, 1, 1], [], []>} : vector<64x8xf32>, vector<8x128xf32>, vector<64x128xf32> -> vector<64x128xf32>
    %18 = arith.addf %12, %17 : vector<64x128xf32>
    %c3 = arith.constant 3 : index
    %c0_18 = arith.constant 0 : index
    %c0_19 = arith.constant 0 : index
    %19 = vector.load %arg2[%c3, %c0_18, %c0_19] : memref<16x64x256xf32, #tpu.memory_space<vmem>>, vector<1x64x256xf32>
    %20 = vector.shape_cast %19 : vector<1x64x256xf32> to vector<64x256xf32>
    %cst_20 = arith.constant dense<0.000000e+00> : vector<64x8xf32>
    %21 = tpu.matmul %20, %1, %cst_20 {dimension_numbers = #tpu.dot_dimension_numbers<[1], [0], [0], [1], [0, 0, 1, 1], [], []>} : vector<64x256xf32>, vector<256x8xf32>, vector<64x8xf32> -> vector<64x8xf32>
    %c24 = arith.constant 24 : index
    %c0_21 = arith.constant 0 : index
    %22 = vector.load %arg3[%c24, %c0_21] : memref<128x128xf32, #tpu.memory_space<vmem>>, vector<8x128xf32>
    %cst_22 = arith.constant dense<0.000000e+00> : vector<64x128xf32>
    %23 = tpu.matmul %21, %22, %cst_22 {dimension_numbers = #tpu.dot_dimension_numbers<[1], [0], [0], [1], [0, 0, 1, 1], [], []>} : vector<64x8xf32>, vector<8x128xf32>, vector<64x128xf32> -> vector<64x128xf32>
    %24 = arith.addf %18, %23 : vector<64x128xf32>
    %c4 = arith.constant 4 : index
    %c0_23 = arith.constant 0 : index
    %c0_24 = arith.constant 0 : index
    %25 = vector.load %arg2[%c4, %c0_23, %c0_24] : memref<16x64x256xf32, #tpu.memory_space<vmem>>, vector<1x64x256xf32>
    %26 = vector.shape_cast %25 : vector<1x64x256xf32> to vector<64x256xf32>
    %cst_25 = arith.constant dense<0.000000e+00> : vector<64x8xf32>
    %27 = tpu.matmul %26, %1, %cst_25 {dimension_numbers = #tpu.dot_dimension_numbers<[1], [0], [0], [1], [0, 0, 1, 1], [], []>} : vector<64x256xf32>, vector<256x8xf32>, vector<64x8xf32> -> vector<64x8xf32>
    %c32 = arith.constant 32 : index
    %c0_26 = arith.constant 0 : index
    %28 = vector.load %arg3[%c32, %c0_26] : memref<128x128xf32, #tpu.memory_space<vmem>>, vector<8x128xf32>
    %cst_27 = arith.constant dense<0.000000e+00> : vector<64x128xf32>
    %29 = tpu.matmul %27, %28, %cst_27 {dimension_numbers = #tpu.dot_dimension_numbers<[1], [0], [0], [1], [0, 0, 1, 1], [], []>} : vector<64x8xf32>, vector<8x128xf32>, vector<64x128xf32> -> vector<64x128xf32>
    %30 = arith.addf %24, %29 : vector<64x128xf32>
    %c5 = arith.constant 5 : index
    %c0_28 = arith.constant 0 : index
    %c0_29 = arith.constant 0 : index
    %31 = vector.load %arg2[%c5, %c0_28, %c0_29] : memref<16x64x256xf32, #tpu.memory_space<vmem>>, vector<1x64x256xf32>
    %32 = vector.shape_cast %31 : vector<1x64x256xf32> to vector<64x256xf32>
    %cst_30 = arith.constant dense<0.000000e+00> : vector<64x8xf32>
    %33 = tpu.matmul %32, %1, %cst_30 {dimension_numbers = #tpu.dot_dimension_numbers<[1], [0], [0], [1], [0, 0, 1, 1], [], []>} : vector<64x256xf32>, vector<256x8xf32>, vector<64x8xf32> -> vector<64x8xf32>
    %c40 = arith.constant 40 : index
    %c0_31 = arith.constant 0 : index
    %34 = vector.load %arg3[%c40, %c0_31] : memref<128x128xf32, #tpu.memory_space<vmem>>, vector<8x128xf32>
    %cst_32 = arith.constant dense<0.000000e+00> : vector<64x128xf32>
    %35 = tpu.matmul %33, %34, %cst_32 {dimension_numbers = #tpu.dot_dimension_numbers<[1], [0], [0], [1], [0, 0, 1, 1], [], []>} : vector<64x8xf32>, vector<8x128xf32>, vector<64x128xf32> -> vector<64x128xf32>
    %36 = arith.addf %30, %35 : vector<64x128xf32>
    %c6 = arith.constant 6 : index
    %c0_33 = arith.constant 0 : index
    %c0_34 = arith.constant 0 : index
    %37 = vector.load %arg2[%c6, %c0_33, %c0_34] : memref<16x64x256xf32, #tpu.memory_space<vmem>>, vector<1x64x256xf32>
    %38 = vector.shape_cast %37 : vector<1x64x256xf32> to vector<64x256xf32>
    %cst_35 = arith.constant dense<0.000000e+00> : vector<64x8xf32>
    %39 = tpu.matmul %38, %1, %cst_35 {dimension_numbers = #tpu.dot_dimension_numbers<[1], [0], [0], [1], [0, 0, 1, 1], [], []>} : vector<64x256xf32>, vector<256x8xf32>, vector<64x8xf32> -> vector<64x8xf32>
    %c48 = arith.constant 48 : index
    %c0_36 = arith.constant 0 : index
    %40 = vector.load %arg3[%c48, %c0_36] : memref<128x128xf32, #tpu.memory_space<vmem>>, vector<8x128xf32>
    %cst_37 = arith.constant dense<0.000000e+00> : vector<64x128xf32>
    %41 = tpu.matmul %39, %40, %cst_37 {dimension_numbers = #tpu.dot_dimension_numbers<[1], [0], [0], [1], [0, 0, 1, 1], [], []>} : vector<64x8xf32>, vector<8x128xf32>, vector<64x128xf32> -> vector<64x128xf32>
    %42 = arith.addf %36, %41 : vector<64x128xf32>
    %c7 = arith.constant 7 : index
    %c0_38 = arith.constant 0 : index
    %c0_39 = arith.constant 0 : index
    %43 = vector.load %arg2[%c7, %c0_38, %c0_39] : memref<16x64x256xf32, #tpu.memory_space<vmem>>, vector<1x64x256xf32>
    %44 = vector.shape_cast %43 : vector<1x64x256xf32> to vector<64x256xf32>
    %cst_40 = arith.constant dense<0.000000e+00> : vector<64x8xf32>
    %45 = tpu.matmul %44, %1, %cst_40 {dimension_numbers = #tpu.dot_dimension_numbers<[1], [0], [0], [1], [0, 0, 1, 1], [], []>} : vector<64x256xf32>, vector<256x8xf32>, vector<64x8xf32> -> vector<64x8xf32>
    %c56 = arith.constant 56 : index
    %c0_41 = arith.constant 0 : index
    %46 = vector.load %arg3[%c56, %c0_41] : memref<128x128xf32, #tpu.memory_space<vmem>>, vector<8x128xf32>
    %cst_42 = arith.constant dense<0.000000e+00> : vector<64x128xf32>
    %47 = tpu.matmul %45, %46, %cst_42 {dimension_numbers = #tpu.dot_dimension_numbers<[1], [0], [0], [1], [0, 0, 1, 1], [], []>} : vector<64x8xf32>, vector<8x128xf32>, vector<64x128xf32> -> vector<64x128xf32>
    %48 = arith.addf %42, %47 : vector<64x128xf32>
    %c8_43 = arith.constant 8 : index
    %c0_44 = arith.constant 0 : index
    %c0_45 = arith.constant 0 : index
    %49 = vector.load %arg2[%c8_43, %c0_44, %c0_45] : memref<16x64x256xf32, #tpu.memory_space<vmem>>, vector<1x64x256xf32>
    %50 = vector.shape_cast %49 : vector<1x64x256xf32> to vector<64x256xf32>
    %cst_46 = arith.constant dense<0.000000e+00> : vector<64x8xf32>
    %51 = tpu.matmul %50, %1, %cst_46 {dimension_numbers = #tpu.dot_dimension_numbers<[1], [0], [0], [1], [0, 0, 1, 1], [], []>} : vector<64x256xf32>, vector<256x8xf32>, vector<64x8xf32> -> vector<64x8xf32>
    %c64 = arith.constant 64 : index
    %c0_47 = arith.constant 0 : index
    %52 = vector.load %arg3[%c64, %c0_47] : memref<128x128xf32, #tpu.memory_space<vmem>>, vector<8x128xf32>
    %cst_48 = arith.constant dense<0.000000e+00> : vector<64x128xf32>
    %53 = tpu.matmul %51, %52, %cst_48 {dimension_numbers = #tpu.dot_dimension_numbers<[1], [0], [0], [1], [0, 0, 1, 1], [], []>} : vector<64x8xf32>, vector<8x128xf32>, vector<64x128xf32> -> vector<64x128xf32>
    %54 = arith.addf %48, %53 : vector<64x128xf32>
    %c9 = arith.constant 9 : index
    %c0_49 = arith.constant 0 : index
    %c0_50 = arith.constant 0 : index
    %55 = vector.load %arg2[%c9, %c0_49, %c0_50] : memref<16x64x256xf32, #tpu.memory_space<vmem>>, vector<1x64x256xf32>
    %56 = vector.shape_cast %55 : vector<1x64x256xf32> to vector<64x256xf32>
    %cst_51 = arith.constant dense<0.000000e+00> : vector<64x8xf32>
    %57 = tpu.matmul %56, %1, %cst_51 {dimension_numbers = #tpu.dot_dimension_numbers<[1], [0], [0], [1], [0, 0, 1, 1], [], []>} : vector<64x256xf32>, vector<256x8xf32>, vector<64x8xf32> -> vector<64x8xf32>
    %c72 = arith.constant 72 : index
    %c0_52 = arith.constant 0 : index
    %58 = vector.load %arg3[%c72, %c0_52] : memref<128x128xf32, #tpu.memory_space<vmem>>, vector<8x128xf32>
    %cst_53 = arith.constant dense<0.000000e+00> : vector<64x128xf32>
    %59 = tpu.matmul %57, %58, %cst_53 {dimension_numbers = #tpu.dot_dimension_numbers<[1], [0], [0], [1], [0, 0, 1, 1], [], []>} : vector<64x8xf32>, vector<8x128xf32>, vector<64x128xf32> -> vector<64x128xf32>
    %60 = arith.addf %54, %59 : vector<64x128xf32>
    %c10 = arith.constant 10 : index
    %c0_54 = arith.constant 0 : index
    %c0_55 = arith.constant 0 : index
    %61 = vector.load %arg2[%c10, %c0_54, %c0_55] : memref<16x64x256xf32, #tpu.memory_space<vmem>>, vector<1x64x256xf32>
    %62 = vector.shape_cast %61 : vector<1x64x256xf32> to vector<64x256xf32>
    %cst_56 = arith.constant dense<0.000000e+00> : vector<64x8xf32>
    %63 = tpu.matmul %62, %1, %cst_56 {dimension_numbers = #tpu.dot_dimension_numbers<[1], [0], [0], [1], [0, 0, 1, 1], [], []>} : vector<64x256xf32>, vector<256x8xf32>, vector<64x8xf32> -> vector<64x8xf32>
    %c80 = arith.constant 80 : index
    %c0_57 = arith.constant 0 : index
    %64 = vector.load %arg3[%c80, %c0_57] : memref<128x128xf32, #tpu.memory_space<vmem>>, vector<8x128xf32>
    %cst_58 = arith.constant dense<0.000000e+00> : vector<64x128xf32>
    %65 = tpu.matmul %63, %64, %cst_58 {dimension_numbers = #tpu.dot_dimension_numbers<[1], [0], [0], [1], [0, 0, 1, 1], [], []>} : vector<64x8xf32>, vector<8x128xf32>, vector<64x128xf32> -> vector<64x128xf32>
    %66 = arith.addf %60, %65 : vector<64x128xf32>
    %c11 = arith.constant 11 : index
    %c0_59 = arith.constant 0 : index
    %c0_60 = arith.constant 0 : index
    %67 = vector.load %arg2[%c11, %c0_59, %c0_60] : memref<16x64x256xf32, #tpu.memory_space<vmem>>, vector<1x64x256xf32>
    %68 = vector.shape_cast %67 : vector<1x64x256xf32> to vector<64x256xf32>
    %cst_61 = arith.constant dense<0.000000e+00> : vector<64x8xf32>
    %69 = tpu.matmul %68, %1, %cst_61 {dimension_numbers = #tpu.dot_dimension_numbers<[1], [0], [0], [1], [0, 0, 1, 1], [], []>} : vector<64x256xf32>, vector<256x8xf32>, vector<64x8xf32> -> vector<64x8xf32>
    %c88 = arith.constant 88 : index
    %c0_62 = arith.constant 0 : index
    %70 = vector.load %arg3[%c88, %c0_62] : memref<128x128xf32, #tpu.memory_space<vmem>>, vector<8x128xf32>
    %cst_63 = arith.constant dense<0.000000e+00> : vector<64x128xf32>
    %71 = tpu.matmul %69, %70, %cst_63 {dimension_numbers = #tpu.dot_dimension_numbers<[1], [0], [0], [1], [0, 0, 1, 1], [], []>} : vector<64x8xf32>, vector<8x128xf32>, vector<64x128xf32> -> vector<64x128xf32>
    %72 = arith.addf %66, %71 : vector<64x128xf32>
    %c12 = arith.constant 12 : index
    %c0_64 = arith.constant 0 : index
    %c0_65 = arith.constant 0 : index
    %73 = vector.load %arg2[%c12, %c0_64, %c0_65] : memref<16x64x256xf32, #tpu.memory_space<vmem>>, vector<1x64x256xf32>
    %74 = vector.shape_cast %73 : vector<1x64x256xf32> to vector<64x256xf32>
    %cst_66 = arith.constant dense<0.000000e+00> : vector<64x8xf32>
    %75 = tpu.matmul %74, %1, %cst_66 {dimension_numbers = #tpu.dot_dimension_numbers<[1], [0], [0], [1], [0, 0, 1, 1], [], []>} : vector<64x256xf32>, vector<256x8xf32>, vector<64x8xf32> -> vector<64x8xf32>
    %c96 = arith.constant 96 : index
    %c0_67 = arith.constant 0 : index
    %76 = vector.load %arg3[%c96, %c0_67] : memref<128x128xf32, #tpu.memory_space<vmem>>, vector<8x128xf32>
    %cst_68 = arith.constant dense<0.000000e+00> : vector<64x128xf32>
    %77 = tpu.matmul %75, %76, %cst_68 {dimension_numbers = #tpu.dot_dimension_numbers<[1], [0], [0], [1], [0, 0, 1, 1], [], []>} : vector<64x8xf32>, vector<8x128xf32>, vector<64x128xf32> -> vector<64x128xf32>
    %78 = arith.addf %72, %77 : vector<64x128xf32>
    %c13 = arith.constant 13 : index
    %c0_69 = arith.constant 0 : index
    %c0_70 = arith.constant 0 : index
    %79 = vector.load %arg2[%c13, %c0_69, %c0_70] : memref<16x64x256xf32, #tpu.memory_space<vmem>>, vector<1x64x256xf32>
    %80 = vector.shape_cast %79 : vector<1x64x256xf32> to vector<64x256xf32>
    %cst_71 = arith.constant dense<0.000000e+00> : vector<64x8xf32>
    %81 = tpu.matmul %80, %1, %cst_71 {dimension_numbers = #tpu.dot_dimension_numbers<[1], [0], [0], [1], [0, 0, 1, 1], [], []>} : vector<64x256xf32>, vector<256x8xf32>, vector<64x8xf32> -> vector<64x8xf32>
    %c104 = arith.constant 104 : index
    %c0_72 = arith.constant 0 : index
    %82 = vector.load %arg3[%c104, %c0_72] : memref<128x128xf32, #tpu.memory_space<vmem>>, vector<8x128xf32>
    %cst_73 = arith.constant dense<0.000000e+00> : vector<64x128xf32>
    %83 = tpu.matmul %81, %82, %cst_73 {dimension_numbers = #tpu.dot_dimension_numbers<[1], [0], [0], [1], [0, 0, 1, 1], [], []>} : vector<64x8xf32>, vector<8x128xf32>, vector<64x128xf32> -> vector<64x128xf32>
    %84 = arith.addf %78, %83 : vector<64x128xf32>
    %c14 = arith.constant 14 : index
    %c0_74 = arith.constant 0 : index
    %c0_75 = arith.constant 0 : index
    %85 = vector.load %arg2[%c14, %c0_74, %c0_75] : memref<16x64x256xf32, #tpu.memory_space<vmem>>, vector<1x64x256xf32>
    %86 = vector.shape_cast %85 : vector<1x64x256xf32> to vector<64x256xf32>
    %cst_76 = arith.constant dense<0.000000e+00> : vector<64x8xf32>
    %87 = tpu.matmul %86, %1, %cst_76 {dimension_numbers = #tpu.dot_dimension_numbers<[1], [0], [0], [1], [0, 0, 1, 1], [], []>} : vector<64x256xf32>, vector<256x8xf32>, vector<64x8xf32> -> vector<64x8xf32>
    %c112 = arith.constant 112 : index
    %c0_77 = arith.constant 0 : index
    %88 = vector.load %arg3[%c112, %c0_77] : memref<128x128xf32, #tpu.memory_space<vmem>>, vector<8x128xf32>
    %cst_78 = arith.constant dense<0.000000e+00> : vector<64x128xf32>
    %89 = tpu.matmul %87, %88, %cst_78 {dimension_numbers = #tpu.dot_dimension_numbers<[1], [0], [0], [1], [0, 0, 1, 1], [], []>} : vector<64x8xf32>, vector<8x128xf32>, vector<64x128xf32> -> vector<64x128xf32>
    %90 = arith.addf %84, %89 : vector<64x128xf32>
    %c15 = arith.constant 15 : index
    %c0_79 = arith.constant 0 : index
    %c0_80 = arith.constant 0 : index
    %91 = vector.load %arg2[%c15, %c0_79, %c0_80] : memref<16x64x256xf32, #tpu.memory_space<vmem>>, vector<1x64x256xf32>
    %92 = vector.shape_cast %91 : vector<1x64x256xf32> to vector<64x256xf32>
    %cst_81 = arith.constant dense<0.000000e+00> : vector<64x8xf32>
    %93 = tpu.matmul %92, %1, %cst_81 {dimension_numbers = #tpu.dot_dimension_numbers<[1], [0], [0], [1], [0, 0, 1, 1], [], []>} : vector<64x256xf32>, vector<256x8xf32>, vector<64x8xf32> -> vector<64x8xf32>
    %c120 = arith.constant 120 : index
    %c0_82 = arith.constant 0 : index
    %94 = vector.load %arg3[%c120, %c0_82] : memref<128x128xf32, #tpu.memory_space<vmem>>, vector<8x128xf32>
    %cst_83 = arith.constant dense<0.000000e+00> : vector<64x128xf32>
    %95 = tpu.matmul %93, %94, %cst_83 {dimension_numbers = #tpu.dot_dimension_numbers<[1], [0], [0], [1], [0, 0, 1, 1], [], []>} : vector<64x8xf32>, vector<8x128xf32>, vector<64x128xf32> -> vector<64x128xf32>
    %96 = arith.addf %90, %95 : vector<64x128xf32>
    %c0_84 = arith.constant 0 : index
    %c0_85 = arith.constant 0 : index
    %97 = vector.load %arg4[%c0_84, %c0_85] : memref<1x128xf32, #tpu.memory_space<vmem>>, vector<1x128xf32>
    %98 = vector.broadcast %97 : vector<1x128xf32> to vector<64x128xf32>
    %99 = arith.addf %96, %98 : vector<64x128xf32>
    %cst_86 = arith.constant 0.000000e+00 : f32
    %100 = vector.broadcast %cst_86 : f32 to vector<64x128xf32>
    %101 = arith.maximumf %99, %100 : vector<64x128xf32>
    %c0_87 = arith.constant 0 : index
    %c0_88 = arith.constant 0 : index
    %c0_89 = arith.constant 0 : index
    %102 = vector.load %arg11[%c0_87, %c0_88, %c0_89] : memref<1x64x128xf32, #tpu.memory_space<vmem>>, vector<1x64x128xf32>
    %103 = vector.shape_cast %102 : vector<1x64x128xf32> to vector<64x128xf32>
    %104 = vector.shape_cast %101 : vector<64x128xf32> to vector<1x64x128xf32>
    tpu.vector_store %arg11[%c0_87, %c0_88, %c0_89], %104 {strides = array<i32>} : memref<1x64x128xf32, #tpu.memory_space<vmem>>, vector<1x64x128xf32>,
    %105 = vector.extract_strided_slice %101 {offsets = [0, 0], sizes = [64, 16], strides = [1, 1]} : vector<64x128xf32> to vector<64x16xf32>
    %c0_90 = arith.constant 0 : index
    %c0_91 = arith.constant 0 : index
    %c0_92 = arith.constant 0 : index
    %106 = vector.load %arg5[%c0_90, %c0_91, %c0_92] : memref<16x16x64xf32, #tpu.memory_space<vmem>>, vector<1x16x64xf32>
    %107 = vector.shape_cast %106 : vector<1x16x64xf32> to vector<16x64xf32>
    %cst_93 = arith.constant dense<0.000000e+00> : vector<16x16xf32>
    %108 = tpu.matmul %107, %105, %cst_93 {dimension_numbers = #tpu.dot_dimension_numbers<[1], [0], [0], [1], [0, 0, 1, 1], [], []>} : vector<16x64xf32>, vector<64x16xf32>, vector<16x16xf32> -> vector<16x16xf32>
    %c0_94 = arith.constant 0 : index
    %c0_95 = arith.constant 0 : index
    %109 = vector.load %arg6[%c0_94, %c0_95] : memref<256x128xf32, #tpu.memory_space<vmem>>, vector<16x128xf32>
    %cst_96 = arith.constant dense<0.000000e+00> : vector<16x128xf32>
    %110 = tpu.matmul %108, %109, %cst_96 {dimension_numbers = #tpu.dot_dimension_numbers<[1], [0], [0], [1], [0, 0, 1, 1], [], []>} : vector<16x16xf32>, vector<16x128xf32>, vector<16x128xf32> -> vector<16x128xf32>
    %c1_97 = arith.constant 1 : index
    %c0_98 = arith.constant 0 : index
    %c0_99 = arith.constant 0 : index
    %111 = vector.load %arg5[%c1_97, %c0_98, %c0_99] : memref<16x16x64xf32, #tpu.memory_space<vmem>>, vector<1x16x64xf32>
    %112 = vector.shape_cast %111 : vector<1x16x64xf32> to vector<16x64xf32>
    %cst_100 = arith.constant dense<0.000000e+00> : vector<16x16xf32>
    %113 = tpu.matmul %112, %105, %cst_100 {dimension_numbers = #tpu.dot_dimension_numbers<[1], [0], [0], [1], [0, 0, 1, 1], [], []>} : vector<16x64xf32>, vector<64x16xf32>, vector<16x16xf32> -> vector<16x16xf32>
    %c16_101 = arith.constant 16 : index
    %c0_102 = arith.constant 0 : index
    %114 = vector.load %arg6[%c16_101, %c0_102] : memref<256x128xf32, #tpu.memory_space<vmem>>, vector<16x128xf32>
    %cst_103 = arith.constant dense<0.000000e+00> : vector<16x128xf32>
    %115 = tpu.matmul %113, %114, %cst_103 {dimension_numbers = #tpu.dot_dimension_numbers<[1], [0], [0], [1], [0, 0, 1, 1], [], []>} : vector<16x16xf32>, vector<16x128xf32>, vector<16x128xf32> -> vector<16x128xf32>
    %116 = arith.addf %110, %115 : vector<16x128xf32>
    %c2_104 = arith.constant 2 : index
    %c0_105 = arith.constant 0 : index
    %c0_106 = arith.constant 0 : index
    %117 = vector.load %arg5[%c2_104, %c0_105, %c0_106] : memref<16x16x64xf32, #tpu.memory_space<vmem>>, vector<1x16x64xf32>
    %118 = vector.shape_cast %117 : vector<1x16x64xf32> to vector<16x64xf32>
    %cst_107 = arith.constant dense<0.000000e+00> : vector<16x16xf32>
    %119 = tpu.matmul %118, %105, %cst_107 {dimension_numbers = #tpu.dot_dimension_numbers<[1], [0], [0], [1], [0, 0, 1, 1], [], []>} : vector<16x64xf32>, vector<64x16xf32>, vector<16x16xf32> -> vector<16x16xf32>
    %c32_108 = arith.constant 32 : index
    %c0_109 = arith.constant 0 : index
    %120 = vector.load %arg6[%c32_108, %c0_109] : memref<256x128xf32, #tpu.memory_space<vmem>>, vector<16x128xf32>
    %cst_110 = arith.constant dense<0.000000e+00> : vector<16x128xf32>
    %121 = tpu.matmul %119, %120, %cst_110 {dimension_numbers = #tpu.dot_dimension_numbers<[1], [0], [0], [1], [0, 0, 1, 1], [], []>} : vector<16x16xf32>, vector<16x128xf32>, vector<16x128xf32> -> vector<16x128xf32>
    %122 = arith.addf %116, %121 : vector<16x128xf32>
    %c3_111 = arith.constant 3 : index
    %c0_112 = arith.constant 0 : index
    %c0_113 = arith.constant 0 : index
    %123 = vector.load %arg5[%c3_111, %c0_112, %c0_113] : memref<16x16x64xf32, #tpu.memory_space<vmem>>, vector<1x16x64xf32>
    %124 = vector.shape_cast %123 : vector<1x16x64xf32> to vector<16x64xf32>
    %cst_114 = arith.constant dense<0.000000e+00> : vector<16x16xf32>
    %125 = tpu.matmul %124, %105, %cst_114 {dimension_numbers = #tpu.dot_dimension_numbers<[1], [0], [0], [1], [0, 0, 1, 1], [], []>} : vector<16x64xf32>, vector<64x16xf32>, vector<16x16xf32> -> vector<16x16xf32>
    %c48_115 = arith.constant 48 : index
    %c0_116 = arith.constant 0 : index
    %126 = vector.load %arg6[%c48_115, %c0_116] : memref<256x128xf32, #tpu.memory_space<vmem>>, vector<16x128xf32>
    %cst_117 = arith.constant dense<0.000000e+00> : vector<16x128xf32>
    %127 = tpu.matmul %125, %126, %cst_117 {dimension_numbers = #tpu.dot_dimension_numbers<[1], [0], [0], [1], [0, 0, 1, 1], [], []>} : vector<16x16xf32>, vector<16x128xf32>, vector<16x128xf32> -> vector<16x128xf32>
    %128 = arith.addf %122, %127 : vector<16x128xf32>
    %c4_118 = arith.constant 4 : index
    %c0_119 = arith.constant 0 : index
    %c0_120 = arith.constant 0 : index
    %129 = vector.load %arg5[%c4_118, %c0_119, %c0_120] : memref<16x16x64xf32, #tpu.memory_space<vmem>>, vector<1x16x64xf32>
    %130 = vector.shape_cast %129 : vector<1x16x64xf32> to vector<16x64xf32>
    %cst_121 = arith.constant dense<0.000000e+00> : vector<16x16xf32>
    %131 = tpu.matmul %130, %105, %cst_121 {dimension_numbers = #tpu.dot_dimension_numbers<[1], [0], [0], [1], [0, 0, 1, 1], [], []>} : vector<16x64xf32>, vector<64x16xf32>, vector<16x16xf32> -> vector<16x16xf32>
    %c64_122 = arith.constant 64 : index
    %c0_123 = arith.constant 0 : index
    %132 = vector.load %arg6[%c64_122, %c0_123] : memref<256x128xf32, #tpu.memory_space<vmem>>, vector<16x128xf32>
    %cst_124 = arith.constant dense<0.000000e+00> : vector<16x128xf32>
    %133 = tpu.matmul %131, %132, %cst_124 {dimension_numbers = #tpu.dot_dimension_numbers<[1], [0], [0], [1], [0, 0, 1, 1], [], []>} : vector<16x16xf32>, vector<16x128xf32>, vector<16x128xf32> -> vector<16x128xf32>
    %134 = arith.addf %128, %133 : vector<16x128xf32>
    %c5_125 = arith.constant 5 : index
    %c0_126 = arith.constant 0 : index
    %c0_127 = arith.constant 0 : index
    %135 = vector.load %arg5[%c5_125, %c0_126, %c0_127] : memref<16x16x64xf32, #tpu.memory_space<vmem>>, vector<1x16x64xf32>
    %136 = vector.shape_cast %135 : vector<1x16x64xf32> to vector<16x64xf32>
    %cst_128 = arith.constant dense<0.000000e+00> : vector<16x16xf32>
    %137 = tpu.matmul %136, %105, %cst_128 {dimension_numbers = #tpu.dot_dimension_numbers<[1], [0], [0], [1], [0, 0, 1, 1], [], []>} : vector<16x64xf32>, vector<64x16xf32>, vector<16x16xf32> -> vector<16x16xf32>
    %c80_129 = arith.constant 80 : index
    %c0_130 = arith.constant 0 : index
    %138 = vector.load %arg6[%c80_129, %c0_130] : memref<256x128xf32, #tpu.memory_space<vmem>>, vector<16x128xf32>
    %cst_131 = arith.constant dense<0.000000e+00> : vector<16x128xf32>
    %139 = tpu.matmul %137, %138, %cst_131 {dimension_numbers = #tpu.dot_dimension_numbers<[1], [0], [0], [1], [0, 0, 1, 1], [], []>} : vector<16x16xf32>, vector<16x128xf32>, vector<16x128xf32> -> vector<16x128xf32>
    %140 = arith.addf %134, %139 : vector<16x128xf32>
    %c6_132 = arith.constant 6 : index
    %c0_133 = arith.constant 0 : index
    %c0_134 = arith.constant 0 : index
    %141 = vector.load %arg5[%c6_132, %c0_133, %c0_134] : memref<16x16x64xf32, #tpu.memory_space<vmem>>, vector<1x16x64xf32>
    %142 = vector.shape_cast %141 : vector<1x16x64xf32> to vector<16x64xf32>
    %cst_135 = arith.constant dense<0.000000e+00> : vector<16x16xf32>
    %143 = tpu.matmul %142, %105, %cst_135 {dimension_numbers = #tpu.dot_dimension_numbers<[1], [0], [0], [1], [0, 0, 1, 1], [], []>} : vector<16x64xf32>, vector<64x16xf32>, vector<16x16xf32> -> vector<16x16xf32>
    %c96_136 = arith.constant 96 : index
    %c0_137 = arith.constant 0 : index
    %144 = vector.load %arg6[%c96_136, %c0_137] : memref<256x128xf32, #tpu.memory_space<vmem>>, vector<16x128xf32>
    %cst_138 = arith.constant dense<0.000000e+00> : vector<16x128xf32>
    %145 = tpu.matmul %143, %144, %cst_138 {dimension_numbers = #tpu.dot_dimension_numbers<[1], [0], [0], [1], [0, 0, 1, 1], [], []>} : vector<16x16xf32>, vector<16x128xf32>, vector<16x128xf32> -> vector<16x128xf32>
    %146 = arith.addf %140, %145 : vector<16x128xf32>
    %c7_139 = arith.constant 7 : index
    %c0_140 = arith.constant 0 : index
    %c0_141 = arith.constant 0 : index
    %147 = vector.load %arg5[%c7_139, %c0_140, %c0_141] : memref<16x16x64xf32, #tpu.memory_space<vmem>>, vector<1x16x64xf32>
    %148 = vector.shape_cast %147 : vector<1x16x64xf32> to vector<16x64xf32>
    %cst_142 = arith.constant dense<0.000000e+00> : vector<16x16xf32>
    %149 = tpu.matmul %148, %105, %cst_142 {dimension_numbers = #tpu.dot_dimension_numbers<[1], [0], [0], [1], [0, 0, 1, 1], [], []>} : vector<16x64xf32>, vector<64x16xf32>, vector<16x16xf32> -> vector<16x16xf32>
    %c112_143 = arith.constant 112 : index
    %c0_144 = arith.constant 0 : index
    %150 = vector.load %arg6[%c112_143, %c0_144] : memref<256x128xf32, #tpu.memory_space<vmem>>, vector<16x128xf32>
    %cst_145 = arith.constant dense<0.000000e+00> : vector<16x128xf32>
    %151 = tpu.matmul %149, %150, %cst_145 {dimension_numbers = #tpu.dot_dimension_numbers<[1], [0], [0], [1], [0, 0, 1, 1], [], []>} : vector<16x16xf32>, vector<16x128xf32>, vector<16x128xf32> -> vector<16x128xf32>
    %152 = arith.addf %146, %151 : vector<16x128xf32>
    %c8_146 = arith.constant 8 : index
    %c0_147 = arith.constant 0 : index
    %c0_148 = arith.constant 0 : index
    %153 = vector.load %arg5[%c8_146, %c0_147, %c0_148] : memref<16x16x64xf32, #tpu.memory_space<vmem>>, vector<1x16x64xf32>
    %154 = vector.shape_cast %153 : vector<1x16x64xf32> to vector<16x64xf32>
    %cst_149 = arith.constant dense<0.000000e+00> : vector<16x16xf32>
    %155 = tpu.matmul %154, %105, %cst_149 {dimension_numbers = #tpu.dot_dimension_numbers<[1], [0], [0], [1], [0, 0, 1, 1], [], []>} : vector<16x64xf32>, vector<64x16xf32>, vector<16x16xf32> -> vector<16x16xf32>
    %c128 = arith.constant 128 : index
    %c0_150 = arith.constant 0 : index
    %156 = vector.load %arg6[%c128, %c0_150] : memref<256x128xf32, #tpu.memory_space<vmem>>, vector<16x128xf32>
    %cst_151 = arith.constant dense<0.000000e+00> : vector<16x128xf32>
    %157 = tpu.matmul %155, %156, %cst_151 {dimension_numbers = #tpu.dot_dimension_numbers<[1], [0], [0], [1], [0, 0, 1, 1], [], []>} : vector<16x16xf32>, vector<16x128xf32>, vector<16x128xf32> -> vector<16x128xf32>
    %158 = arith.addf %152, %157 : vector<16x128xf32>
    %c9_152 = arith.constant 9 : index
    %c0_153 = arith.constant 0 : index
    %c0_154 = arith.constant 0 : index
    %159 = vector.load %arg5[%c9_152, %c0_153, %c0_154] : memref<16x16x64xf32, #tpu.memory_space<vmem>>, vector<1x16x64xf32>
    %160 = vector.shape_cast %159 : vector<1x16x64xf32> to vector<16x64xf32>
    %cst_155 = arith.constant dense<0.000000e+00> : vector<16x16xf32>
    %161 = tpu.matmul %160, %105, %cst_155 {dimension_numbers = #tpu.dot_dimension_numbers<[1], [0], [0], [1], [0, 0, 1, 1], [], []>} : vector<16x64xf32>, vector<64x16xf32>, vector<16x16xf32> -> vector<16x16xf32>
    %c144 = arith.constant 144 : index
    %c0_156 = arith.constant 0 : index
    %162 = vector.load %arg6[%c144, %c0_156] : memref<256x128xf32, #tpu.memory_space<vmem>>, vector<16x128xf32>
    %cst_157 = arith.constant dense<0.000000e+00> : vector<16x128xf32>
    %163 = tpu.matmul %161, %162, %cst_157 {dimension_numbers = #tpu.dot_dimension_numbers<[1], [0], [0], [1], [0, 0, 1, 1], [], []>} : vector<16x16xf32>, vector<16x128xf32>, vector<16x128xf32> -> vector<16x128xf32>
    %164 = arith.addf %158, %163 : vector<16x128xf32>
    %c10_158 = arith.constant 10 : index
    %c0_159 = arith.constant 0 : index
    %c0_160 = arith.constant 0 : index
    %165 = vector.load %arg5[%c10_158, %c0_159, %c0_160] : memref<16x16x64xf32, #tpu.memory_space<vmem>>, vector<1x16x64xf32>
    %166 = vector.shape_cast %165 : vector<1x16x64xf32> to vector<16x64xf32>
    %cst_161 = arith.constant dense<0.000000e+00> : vector<16x16xf32>
    %167 = tpu.matmul %166, %105, %cst_161 {dimension_numbers = #tpu.dot_dimension_numbers<[1], [0], [0], [1], [0, 0, 1, 1], [], []>} : vector<16x64xf32>, vector<64x16xf32>, vector<16x16xf32> -> vector<16x16xf32>
    %c160 = arith.constant 160 : index
    %c0_162 = arith.constant 0 : index
    %168 = vector.load %arg6[%c160, %c0_162] : memref<256x128xf32, #tpu.memory_space<vmem>>, vector<16x128xf32>
    %cst_163 = arith.constant dense<0.000000e+00> : vector<16x128xf32>
    %169 = tpu.matmul %167, %168, %cst_163 {dimension_numbers = #tpu.dot_dimension_numbers<[1], [0], [0], [1], [0, 0, 1, 1], [], []>} : vector<16x16xf32>, vector<16x128xf32>, vector<16x128xf32> -> vector<16x128xf32>
    %170 = arith.addf %164, %169 : vector<16x128xf32>
    %c11_164 = arith.constant 11 : index
    %c0_165 = arith.constant 0 : index
    %c0_166 = arith.constant 0 : index
    %171 = vector.load %arg5[%c11_164, %c0_165, %c0_166] : memref<16x16x64xf32, #tpu.memory_space<vmem>>, vector<1x16x64xf32>
    %172 = vector.shape_cast %171 : vector<1x16x64xf32> to vector<16x64xf32>
    %cst_167 = arith.constant dense<0.000000e+00> : vector<16x16xf32>
    %173 = tpu.matmul %172, %105, %cst_167 {dimension_numbers = #tpu.dot_dimension_numbers<[1], [0], [0], [1], [0, 0, 1, 1], [], []>} : vector<16x64xf32>, vector<64x16xf32>, vector<16x16xf32> -> vector<16x16xf32>
    %c176 = arith.constant 176 : index
    %c0_168 = arith.constant 0 : index
    %174 = vector.load %arg6[%c176, %c0_168] : memref<256x128xf32, #tpu.memory_space<vmem>>, vector<16x128xf32>
    %cst_169 = arith.constant dense<0.000000e+00> : vector<16x128xf32>
    %175 = tpu.matmul %173, %174, %cst_169 {dimension_numbers = #tpu.dot_dimension_numbers<[1], [0], [0], [1], [0, 0, 1, 1], [], []>} : vector<16x16xf32>, vector<16x128xf32>, vector<16x128xf32> -> vector<16x128xf32>
    %176 = arith.addf %170, %175 : vector<16x128xf32>
    %c12_170 = arith.constant 12 : index
    %c0_171 = arith.constant 0 : index
    %c0_172 = arith.constant 0 : index
    %177 = vector.load %arg5[%c12_170, %c0_171, %c0_172] : memref<16x16x64xf32, #tpu.memory_space<vmem>>, vector<1x16x64xf32>
    %178 = vector.shape_cast %177 : vector<1x16x64xf32> to vector<16x64xf32>
    %cst_173 = arith.constant dense<0.000000e+00> : vector<16x16xf32>
    %179 = tpu.matmul %178, %105, %cst_173 {dimension_numbers = #tpu.dot_dimension_numbers<[1], [0], [0], [1], [0, 0, 1, 1], [], []>} : vector<16x64xf32>, vector<64x16xf32>, vector<16x16xf32> -> vector<16x16xf32>
    %c192 = arith.constant 192 : index
    %c0_174 = arith.constant 0 : index
    %180 = vector.load %arg6[%c192, %c0_174] : memref<256x128xf32, #tpu.memory_space<vmem>>, vector<16x128xf32>
    %cst_175 = arith.constant dense<0.000000e+00> : vector<16x128xf32>
    %181 = tpu.matmul %179, %180, %cst_175 {dimension_numbers = #tpu.dot_dimension_numbers<[1], [0], [0], [1], [0, 0, 1, 1], [], []>} : vector<16x16xf32>, vector<16x128xf32>, vector<16x128xf32> -> vector<16x128xf32>
    %182 = arith.addf %176, %181 : vector<16x128xf32>
    %c13_176 = arith.constant 13 : index
    %c0_177 = arith.constant 0 : index
    %c0_178 = arith.constant 0 : index
    %183 = vector.load %arg5[%c13_176, %c0_177, %c0_178] : memref<16x16x64xf32, #tpu.memory_space<vmem>>, vector<1x16x64xf32>
    %184 = vector.shape_cast %183 : vector<1x16x64xf32> to vector<16x64xf32>
    %cst_179 = arith.constant dense<0.000000e+00> : vector<16x16xf32>
    %185 = tpu.matmul %184, %105, %cst_179 {dimension_numbers = #tpu.dot_dimension_numbers<[1], [0], [0], [1], [0, 0, 1, 1], [], []>} : vector<16x64xf32>, vector<64x16xf32>, vector<16x16xf32> -> vector<16x16xf32>
    %c208 = arith.constant 208 : index
    %c0_180 = arith.constant 0 : index
    %186 = vector.load %arg6[%c208, %c0_180] : memref<256x128xf32, #tpu.memory_space<vmem>>, vector<16x128xf32>
    %cst_181 = arith.constant dense<0.000000e+00> : vector<16x128xf32>
    %187 = tpu.matmul %185, %186, %cst_181 {dimension_numbers = #tpu.dot_dimension_numbers<[1], [0], [0], [1], [0, 0, 1, 1], [], []>} : vector<16x16xf32>, vector<16x128xf32>, vector<16x128xf32> -> vector<16x128xf32>
    %188 = arith.addf %182, %187 : vector<16x128xf32>
    %c14_182 = arith.constant 14 : index
    %c0_183 = arith.constant 0 : index
    %c0_184 = arith.constant 0 : index
    %189 = vector.load %arg5[%c14_182, %c0_183, %c0_184] : memref<16x16x64xf32, #tpu.memory_space<vmem>>, vector<1x16x64xf32>
    %190 = vector.shape_cast %189 : vector<1x16x64xf32> to vector<16x64xf32>
    %cst_185 = arith.constant dense<0.000000e+00> : vector<16x16xf32>
    %191 = tpu.matmul %190, %105, %cst_185 {dimension_numbers = #tpu.dot_dimension_numbers<[1], [0], [0], [1], [0, 0, 1, 1], [], []>} : vector<16x64xf32>, vector<64x16xf32>, vector<16x16xf32> -> vector<16x16xf32>
    %c224 = arith.constant 224 : index
    %c0_186 = arith.constant 0 : index
    %192 = vector.load %arg6[%c224, %c0_186] : memref<256x128xf32, #tpu.memory_space<vmem>>, vector<16x128xf32>
    %cst_187 = arith.constant dense<0.000000e+00> : vector<16x128xf32>
    %193 = tpu.matmul %191, %192, %cst_187 {dimension_numbers = #tpu.dot_dimension_numbers<[1], [0], [0], [1], [0, 0, 1, 1], [], []>} : vector<16x16xf32>, vector<16x128xf32>, vector<16x128xf32> -> vector<16x128xf32>
    %194 = arith.addf %188, %193 : vector<16x128xf32>
    %c15_188 = arith.constant 15 : index
    %c0_189 = arith.constant 0 : index
    %c0_190 = arith.constant 0 : index
    %195 = vector.load %arg5[%c15_188, %c0_189, %c0_190] : memref<16x16x64xf32, #tpu.memory_space<vmem>>, vector<1x16x64xf32>
    %196 = vector.shape_cast %195 : vector<1x16x64xf32> to vector<16x64xf32>
    %cst_191 = arith.constant dense<0.000000e+00> : vector<16x16xf32>
    %197 = tpu.matmul %196, %105, %cst_191 {dimension_numbers = #tpu.dot_dimension_numbers<[1], [0], [0], [1], [0, 0, 1, 1], [], []>} : vector<16x64xf32>, vector<64x16xf32>, vector<16x16xf32> -> vector<16x16xf32>
    %c240 = arith.constant 240 : index
    %c0_192 = arith.constant 0 : index
    %198 = vector.load %arg6[%c240, %c0_192] : memref<256x128xf32, #tpu.memory_space<vmem>>, vector<16x128xf32>
    %cst_193 = arith.constant dense<0.000000e+00> : vector<16x128xf32>
    %199 = tpu.matmul %197, %198, %cst_193 {dimension_numbers = #tpu.dot_dimension_numbers<[1], [0], [0], [1], [0, 0, 1, 1], [], []>} : vector<16x16xf32>, vector<16x128xf32>, vector<16x128xf32> -> vector<16x128xf32>
    %200 = arith.addf %194, %199 : vector<16x128xf32>
    %c0_194 = arith.constant 0 : index
    %c0_195 = arith.constant 0 : index
    %201 = vector.load %arg7[%c0_194, %c0_195] : memref<1x128xf32, #tpu.memory_space<vmem>>, vector<1x128xf32>
    %202 = vector.broadcast %201 : vector<1x128xf32> to vector<16x128xf32>
    %203 = arith.addf %200, %202 : vector<16x128xf32>
    %cst_196 = arith.constant 0.000000e+00 : f32
    %204 = vector.broadcast %cst_196 : f32 to vector<16x128xf32>
    %205 = arith.maximumf %203, %204 : vector<16x128xf32>
    %c0_197 = arith.constant 0 : index
    %c0_198 = arith.constant 0 : index
    %c0_199 = arith.constant 0 : index
    %206 = vector.load %arg12[%c0_197, %c0_198, %c0_199] : memref<1x16x128xf32, #tpu.memory_space<vmem>>, vector<1x16x128xf32>
    %207 = vector.shape_cast %206 : vector<1x16x128xf32> to vector<16x128xf32>
    %208 = vector.shape_cast %205 : vector<16x128xf32> to vector<1x16x128xf32>
    tpu.vector_store %arg12[%c0_197, %c0_198, %c0_199], %208 {strides = array<i32>} : memref<1x16x128xf32, #tpu.memory_space<vmem>>, vector<1x16x128xf32>,
    %209 = vector.extract_strided_slice %205 {offsets = [0, 0], sizes = [16, 32], strides = [1, 1]} : vector<16x128xf32> to vector<16x32xf32>
    %c0_200 = arith.constant 0 : index
    %c0_201 = arith.constant 0 : index
    %c0_202 = arith.constant 0 : index
    %210 = vector.load %arg8[%c0_200, %c0_201, %c0_202] : memref<16x4x16xf32, #tpu.memory_space<vmem>>, vector<1x4x16xf32>
    %211 = vector.shape_cast %210 : vector<1x4x16xf32> to vector<4x16xf32>
    %cst_203 = arith.constant dense<0.000000e+00> : vector<4x32xf32>
    %212 = tpu.matmul %211, %209, %cst_203 {dimension_numbers = #tpu.dot_dimension_numbers<[1], [0], [0], [1], [0, 0, 1, 1], [], []>} : vector<4x16xf32>, vector<16x32xf32>, vector<4x32xf32> -> vector<4x32xf32>
    %c0_204 = arith.constant 0 : index
    %c0_205 = arith.constant 0 : index
    %213 = vector.load %arg9[%c0_204, %c0_205] : memref<512x128xf32, #tpu.memory_space<vmem>>, vector<32x128xf32>
    %cst_206 = arith.constant dense<0.000000e+00> : vector<4x128xf32>
    %214 = tpu.matmul %212, %213, %cst_206 {dimension_numbers = #tpu.dot_dimension_numbers<[1], [0], [0], [1], [0, 0, 1, 1], [], []>} : vector<4x32xf32>, vector<32x128xf32>, vector<4x128xf32> -> vector<4x128xf32>
    %c1_207 = arith.constant 1 : index
    %c0_208 = arith.constant 0 : index
    %c0_209 = arith.constant 0 : index
    %215 = vector.load %arg8[%c1_207, %c0_208, %c0_209] : memref<16x4x16xf32, #tpu.memory_space<vmem>>, vector<1x4x16xf32>
    %216 = vector.shape_cast %215 : vector<1x4x16xf32> to vector<4x16xf32>
    %cst_210 = arith.constant dense<0.000000e+00> : vector<4x32xf32>
    %217 = tpu.matmul %216, %209, %cst_210 {dimension_numbers = #tpu.dot_dimension_numbers<[1], [0], [0], [1], [0, 0, 1, 1], [], []>} : vector<4x16xf32>, vector<16x32xf32>, vector<4x32xf32> -> vector<4x32xf32>
    %c32_211 = arith.constant 32 : index
    %c0_212 = arith.constant 0 : index
    %218 = vector.load %arg9[%c32_211, %c0_212] : memref<512x128xf32, #tpu.memory_space<vmem>>, vector<32x128xf32>
    %cst_213 = arith.constant dense<0.000000e+00> : vector<4x128xf32>
    %219 = tpu.matmul %217, %218, %cst_213 {dimension_numbers = #tpu.dot_dimension_numbers<[1], [0], [0], [1], [0, 0, 1, 1], [], []>} : vector<4x32xf32>, vector<32x128xf32>, vector<4x128xf32> -> vector<4x128xf32>
    %220 = arith.addf %214, %219 : vector<4x128xf32>
    %c2_214 = arith.constant 2 : index
    %c0_215 = arith.constant 0 : index
    %c0_216 = arith.constant 0 : index
    %221 = vector.load %arg8[%c2_214, %c0_215, %c0_216] : memref<16x4x16xf32, #tpu.memory_space<vmem>>, vector<1x4x16xf32>
    %222 = vector.shape_cast %221 : vector<1x4x16xf32> to vector<4x16xf32>
    %cst_217 = arith.constant dense<0.000000e+00> : vector<4x32xf32>
    %223 = tpu.matmul %222, %209, %cst_217 {dimension_numbers = #tpu.dot_dimension_numbers<[1], [0], [0], [1], [0, 0, 1, 1], [], []>} : vector<4x16xf32>, vector<16x32xf32>, vector<4x32xf32> -> vector<4x32xf32>
    %c64_218 = arith.constant 64 : index
    %c0_219 = arith.constant 0 : index
    %224 = vector.load %arg9[%c64_218, %c0_219] : memref<512x128xf32, #tpu.memory_space<vmem>>, vector<32x128xf32>
    %cst_220 = arith.constant dense<0.000000e+00> : vector<4x128xf32>
    %225 = tpu.matmul %223, %224, %cst_220 {dimension_numbers = #tpu.dot_dimension_numbers<[1], [0], [0], [1], [0, 0, 1, 1], [], []>} : vector<4x32xf32>, vector<32x128xf32>, vector<4x128xf32> -> vector<4x128xf32>
    %226 = arith.addf %220, %225 : vector<4x128xf32>
    %c3_221 = arith.constant 3 : index
    %c0_222 = arith.constant 0 : index
    %c0_223 = arith.constant 0 : index
    %227 = vector.load %arg8[%c3_221, %c0_222, %c0_223] : memref<16x4x16xf32, #tpu.memory_space<vmem>>, vector<1x4x16xf32>
    %228 = vector.shape_cast %227 : vector<1x4x16xf32> to vector<4x16xf32>
    %cst_224 = arith.constant dense<0.000000e+00> : vector<4x32xf32>
    %229 = tpu.matmul %228, %209, %cst_224 {dimension_numbers = #tpu.dot_dimension_numbers<[1], [0], [0], [1], [0, 0, 1, 1], [], []>} : vector<4x16xf32>, vector<16x32xf32>, vector<4x32xf32> -> vector<4x32xf32>
    %c96_225 = arith.constant 96 : index
    %c0_226 = arith.constant 0 : index
    %230 = vector.load %arg9[%c96_225, %c0_226] : memref<512x128xf32, #tpu.memory_space<vmem>>, vector<32x128xf32>
    %cst_227 = arith.constant dense<0.000000e+00> : vector<4x128xf32>
    %231 = tpu.matmul %229, %230, %cst_227 {dimension_numbers = #tpu.dot_dimension_numbers<[1], [0], [0], [1], [0, 0, 1, 1], [], []>} : vector<4x32xf32>, vector<32x128xf32>, vector<4x128xf32> -> vector<4x128xf32>
    %232 = arith.addf %226, %231 : vector<4x128xf32>
    %c4_228 = arith.constant 4 : index
    %c0_229 = arith.constant 0 : index
    %c0_230 = arith.constant 0 : index
    %233 = vector.load %arg8[%c4_228, %c0_229, %c0_230] : memref<16x4x16xf32, #tpu.memory_space<vmem>>, vector<1x4x16xf32>
    %234 = vector.shape_cast %233 : vector<1x4x16xf32> to vector<4x16xf32>
    %cst_231 = arith.constant dense<0.000000e+00> : vector<4x32xf32>
    %235 = tpu.matmul %234, %209, %cst_231 {dimension_numbers = #tpu.dot_dimension_numbers<[1], [0], [0], [1], [0, 0, 1, 1], [], []>} : vector<4x16xf32>, vector<16x32xf32>, vector<4x32xf32> -> vector<4x32xf32>
    %c128_232 = arith.constant 128 : index
    %c0_233 = arith.constant 0 : index
    %236 = vector.load %arg9[%c128_232, %c0_233] : memref<512x128xf32, #tpu.memory_space<vmem>>, vector<32x128xf32>
    %cst_234 = arith.constant dense<0.000000e+00> : vector<4x128xf32>
    %237 = tpu.matmul %235, %236, %cst_234 {dimension_numbers = #tpu.dot_dimension_numbers<[1], [0], [0], [1], [0, 0, 1, 1], [], []>} : vector<4x32xf32>, vector<32x128xf32>, vector<4x128xf32> -> vector<4x128xf32>
    %238 = arith.addf %232, %237 : vector<4x128xf32>
    %c5_235 = arith.constant 5 : index
    %c0_236 = arith.constant 0 : index
    %c0_237 = arith.constant 0 : index
    %239 = vector.load %arg8[%c5_235, %c0_236, %c0_237] : memref<16x4x16xf32, #tpu.memory_space<vmem>>, vector<1x4x16xf32>
    %240 = vector.shape_cast %239 : vector<1x4x16xf32> to vector<4x16xf32>
    %cst_238 = arith.constant dense<0.000000e+00> : vector<4x32xf32>
    %241 = tpu.matmul %240, %209, %cst_238 {dimension_numbers = #tpu.dot_dimension_numbers<[1], [0], [0], [1], [0, 0, 1, 1], [], []>} : vector<4x16xf32>, vector<16x32xf32>, vector<4x32xf32> -> vector<4x32xf32>
    %c160_239 = arith.constant 160 : index
    %c0_240 = arith.constant 0 : index
    %242 = vector.load %arg9[%c160_239, %c0_240] : memref<512x128xf32, #tpu.memory_space<vmem>>, vector<32x128xf32>
    %cst_241 = arith.constant dense<0.000000e+00> : vector<4x128xf32>
    %243 = tpu.matmul %241, %242, %cst_241 {dimension_numbers = #tpu.dot_dimension_numbers<[1], [0], [0], [1], [0, 0, 1, 1], [], []>} : vector<4x32xf32>, vector<32x128xf32>, vector<4x128xf32> -> vector<4x128xf32>
    %244 = arith.addf %238, %243 : vector<4x128xf32>
    %c6_242 = arith.constant 6 : index
    %c0_243 = arith.constant 0 : index
    %c0_244 = arith.constant 0 : index
    %245 = vector.load %arg8[%c6_242, %c0_243, %c0_244] : memref<16x4x16xf32, #tpu.memory_space<vmem>>, vector<1x4x16xf32>
    %246 = vector.shape_cast %245 : vector<1x4x16xf32> to vector<4x16xf32>
    %cst_245 = arith.constant dense<0.000000e+00> : vector<4x32xf32>
    %247 = tpu.matmul %246, %209, %cst_245 {dimension_numbers = #tpu.dot_dimension_numbers<[1], [0], [0], [1], [0, 0, 1, 1], [], []>} : vector<4x16xf32>, vector<16x32xf32>, vector<4x32xf32> -> vector<4x32xf32>
    %c192_246 = arith.constant 192 : index
    %c0_247 = arith.constant 0 : index
    %248 = vector.load %arg9[%c192_246, %c0_247] : memref<512x128xf32, #tpu.memory_space<vmem>>, vector<32x128xf32>
    %cst_248 = arith.constant dense<0.000000e+00> : vector<4x128xf32>
    %249 = tpu.matmul %247, %248, %cst_248 {dimension_numbers = #tpu.dot_dimension_numbers<[1], [0], [0], [1], [0, 0, 1, 1], [], []>} : vector<4x32xf32>, vector<32x128xf32>, vector<4x128xf32> -> vector<4x128xf32>
    %250 = arith.addf %244, %249 : vector<4x128xf32>
    %c7_249 = arith.constant 7 : index
    %c0_250 = arith.constant 0 : index
    %c0_251 = arith.constant 0 : index
    %251 = vector.load %arg8[%c7_249, %c0_250, %c0_251] : memref<16x4x16xf32, #tpu.memory_space<vmem>>, vector<1x4x16xf32>
    %252 = vector.shape_cast %251 : vector<1x4x16xf32> to vector<4x16xf32>
    %cst_252 = arith.constant dense<0.000000e+00> : vector<4x32xf32>
    %253 = tpu.matmul %252, %209, %cst_252 {dimension_numbers = #tpu.dot_dimension_numbers<[1], [0], [0], [1], [0, 0, 1, 1], [], []>} : vector<4x16xf32>, vector<16x32xf32>, vector<4x32xf32> -> vector<4x32xf32>
    %c224_253 = arith.constant 224 : index
    %c0_254 = arith.constant 0 : index
    %254 = vector.load %arg9[%c224_253, %c0_254] : memref<512x128xf32, #tpu.memory_space<vmem>>, vector<32x128xf32>
    %cst_255 = arith.constant dense<0.000000e+00> : vector<4x128xf32>
    %255 = tpu.matmul %253, %254, %cst_255 {dimension_numbers = #tpu.dot_dimension_numbers<[1], [0], [0], [1], [0, 0, 1, 1], [], []>} : vector<4x32xf32>, vector<32x128xf32>, vector<4x128xf32> -> vector<4x128xf32>
    %256 = arith.addf %250, %255 : vector<4x128xf32>
    %c8_256 = arith.constant 8 : index
    %c0_257 = arith.constant 0 : index
    %c0_258 = arith.constant 0 : index
    %257 = vector.load %arg8[%c8_256, %c0_257, %c0_258] : memref<16x4x16xf32, #tpu.memory_space<vmem>>, vector<1x4x16xf32>
    %258 = vector.shape_cast %257 : vector<1x4x16xf32> to vector<4x16xf32>
    %cst_259 = arith.constant dense<0.000000e+00> : vector<4x32xf32>
    %259 = tpu.matmul %258, %209, %cst_259 {dimension_numbers = #tpu.dot_dimension_numbers<[1], [0], [0], [1], [0, 0, 1, 1], [], []>} : vector<4x16xf32>, vector<16x32xf32>, vector<4x32xf32> -> vector<4x32xf32>
    %c256 = arith.constant 256 : index
    %c0_260 = arith.constant 0 : index
    %260 = vector.load %arg9[%c256, %c0_260] : memref<512x128xf32, #tpu.memory_space<vmem>>, vector<32x128xf32>
    %cst_261 = arith.constant dense<0.000000e+00> : vector<4x128xf32>
    %261 = tpu.matmul %259, %260, %cst_261 {dimension_numbers = #tpu.dot_dimension_numbers<[1], [0], [0], [1], [0, 0, 1, 1], [], []>} : vector<4x32xf32>, vector<32x128xf32>, vector<4x128xf32> -> vector<4x128xf32>
    %262 = arith.addf %256, %261 : vector<4x128xf32>
    %c9_262 = arith.constant 9 : index
    %c0_263 = arith.constant 0 : index
    %c0_264 = arith.constant 0 : index
    %263 = vector.load %arg8[%c9_262, %c0_263, %c0_264] : memref<16x4x16xf32, #tpu.memory_space<vmem>>, vector<1x4x16xf32>
    %264 = vector.shape_cast %263 : vector<1x4x16xf32> to vector<4x16xf32>
    %cst_265 = arith.constant dense<0.000000e+00> : vector<4x32xf32>
    %265 = tpu.matmul %264, %209, %cst_265 {dimension_numbers = #tpu.dot_dimension_numbers<[1], [0], [0], [1], [0, 0, 1, 1], [], []>} : vector<4x16xf32>, vector<16x32xf32>, vector<4x32xf32> -> vector<4x32xf32>
    %c288 = arith.constant 288 : index
    %c0_266 = arith.constant 0 : index
    %266 = vector.load %arg9[%c288, %c0_266] : memref<512x128xf32, #tpu.memory_space<vmem>>, vector<32x128xf32>
    %cst_267 = arith.constant dense<0.000000e+00> : vector<4x128xf32>
    %267 = tpu.matmul %265, %266, %cst_267 {dimension_numbers = #tpu.dot_dimension_numbers<[1], [0], [0], [1], [0, 0, 1, 1], [], []>} : vector<4x32xf32>, vector<32x128xf32>, vector<4x128xf32> -> vector<4x128xf32>
    %268 = arith.addf %262, %267 : vector<4x128xf32>
    %c10_268 = arith.constant 10 : index
    %c0_269 = arith.constant 0 : index
    %c0_270 = arith.constant 0 : index
    %269 = vector.load %arg8[%c10_268, %c0_269, %c0_270] : memref<16x4x16xf32, #tpu.memory_space<vmem>>, vector<1x4x16xf32>
    %270 = vector.shape_cast %269 : vector<1x4x16xf32> to vector<4x16xf32>
    %cst_271 = arith.constant dense<0.000000e+00> : vector<4x32xf32>
    %271 = tpu.matmul %270, %209, %cst_271 {dimension_numbers = #tpu.dot_dimension_numbers<[1], [0], [0], [1], [0, 0, 1, 1], [], []>} : vector<4x16xf32>, vector<16x32xf32>, vector<4x32xf32> -> vector<4x32xf32>
    %c320 = arith.constant 320 : index
    %c0_272 = arith.constant 0 : index
    %272 = vector.load %arg9[%c320, %c0_272] : memref<512x128xf32, #tpu.memory_space<vmem>>, vector<32x128xf32>
    %cst_273 = arith.constant dense<0.000000e+00> : vector<4x128xf32>
    %273 = tpu.matmul %271, %272, %cst_273 {dimension_numbers = #tpu.dot_dimension_numbers<[1], [0], [0], [1], [0, 0, 1, 1], [], []>} : vector<4x32xf32>, vector<32x128xf32>, vector<4x128xf32> -> vector<4x128xf32>
    %274 = arith.addf %268, %273 : vector<4x128xf32>
    %c11_274 = arith.constant 11 : index
    %c0_275 = arith.constant 0 : index
    %c0_276 = arith.constant 0 : index
    %275 = vector.load %arg8[%c11_274, %c0_275, %c0_276] : memref<16x4x16xf32, #tpu.memory_space<vmem>>, vector<1x4x16xf32>
    %276 = vector.shape_cast %275 : vector<1x4x16xf32> to vector<4x16xf32>
    %cst_277 = arith.constant dense<0.000000e+00> : vector<4x32xf32>
    %277 = tpu.matmul %276, %209, %cst_277 {dimension_numbers = #tpu.dot_dimension_numbers<[1], [0], [0], [1], [0, 0, 1, 1], [], []>} : vector<4x16xf32>, vector<16x32xf32>, vector<4x32xf32> -> vector<4x32xf32>
    %c352 = arith.constant 352 : index
    %c0_278 = arith.constant 0 : index
    %278 = vector.load %arg9[%c352, %c0_278] : memref<512x128xf32, #tpu.memory_space<vmem>>, vector<32x128xf32>
    %cst_279 = arith.constant dense<0.000000e+00> : vector<4x128xf32>
    %279 = tpu.matmul %277, %278, %cst_279 {dimension_numbers = #tpu.dot_dimension_numbers<[1], [0], [0], [1], [0, 0, 1, 1], [], []>} : vector<4x32xf32>, vector<32x128xf32>, vector<4x128xf32> -> vector<4x128xf32>
    %280 = arith.addf %274, %279 : vector<4x128xf32>
    %c12_280 = arith.constant 12 : index
    %c0_281 = arith.constant 0 : index
    %c0_282 = arith.constant 0 : index
    %281 = vector.load %arg8[%c12_280, %c0_281, %c0_282] : memref<16x4x16xf32, #tpu.memory_space<vmem>>, vector<1x4x16xf32>
    %282 = vector.shape_cast %281 : vector<1x4x16xf32> to vector<4x16xf32>
    %cst_283 = arith.constant dense<0.000000e+00> : vector<4x32xf32>
    %283 = tpu.matmul %282, %209, %cst_283 {dimension_numbers = #tpu.dot_dimension_numbers<[1], [0], [0], [1], [0, 0, 1, 1], [], []>} : vector<4x16xf32>, vector<16x32xf32>, vector<4x32xf32> -> vector<4x32xf32>
    %c384 = arith.constant 384 : index
    %c0_284 = arith.constant 0 : index
    %284 = vector.load %arg9[%c384, %c0_284] : memref<512x128xf32, #tpu.memory_space<vmem>>, vector<32x128xf32>
    %cst_285 = arith.constant dense<0.000000e+00> : vector<4x128xf32>
    %285 = tpu.matmul %283, %284, %cst_285 {dimension_numbers = #tpu.dot_dimension_numbers<[1], [0], [0], [1], [0, 0, 1, 1], [], []>} : vector<4x32xf32>, vector<32x128xf32>, vector<4x128xf32> -> vector<4x128xf32>
    %286 = arith.addf %280, %285 : vector<4x128xf32>
    %c13_286 = arith.constant 13 : index
    %c0_287 = arith.constant 0 : index
    %c0_288 = arith.constant 0 : index
    %287 = vector.load %arg8[%c13_286, %c0_287, %c0_288] : memref<16x4x16xf32, #tpu.memory_space<vmem>>, vector<1x4x16xf32>
    %288 = vector.shape_cast %287 : vector<1x4x16xf32> to vector<4x16xf32>
    %cst_289 = arith.constant dense<0.000000e+00> : vector<4x32xf32>
    %289 = tpu.matmul %288, %209, %cst_289 {dimension_numbers = #tpu.dot_dimension_numbers<[1], [0], [0], [1], [0, 0, 1, 1], [], []>} : vector<4x16xf32>, vector<16x32xf32>, vector<4x32xf32> -> vector<4x32xf32>
    %c416 = arith.constant 416 : index
    %c0_290 = arith.constant 0 : index
    %290 = vector.load %arg9[%c416, %c0_290] : memref<512x128xf32, #tpu.memory_space<vmem>>, vector<32x128xf32>
    %cst_291 = arith.constant dense<0.000000e+00> : vector<4x128xf32>
    %291 = tpu.matmul %289, %290, %cst_291 {dimension_numbers = #tpu.dot_dimension_numbers<[1], [0], [0], [1], [0, 0, 1, 1], [], []>} : vector<4x32xf32>, vector<32x128xf32>, vector<4x128xf32> -> vector<4x128xf32>
    %292 = arith.addf %286, %291 : vector<4x128xf32>
    %c14_292 = arith.constant 14 : index
    %c0_293 = arith.constant 0 : index
    %c0_294 = arith.constant 0 : index
    %293 = vector.load %arg8[%c14_292, %c0_293, %c0_294] : memref<16x4x16xf32, #tpu.memory_space<vmem>>, vector<1x4x16xf32>
    %294 = vector.shape_cast %293 : vector<1x4x16xf32> to vector<4x16xf32>
    %cst_295 = arith.constant dense<0.000000e+00> : vector<4x32xf32>
    %295 = tpu.matmul %294, %209, %cst_295 {dimension_numbers = #tpu.dot_dimension_numbers<[1], [0], [0], [1], [0, 0, 1, 1], [], []>} : vector<4x16xf32>, vector<16x32xf32>, vector<4x32xf32> -> vector<4x32xf32>
    %c448 = arith.constant 448 : index
    %c0_296 = arith.constant 0 : index
    %296 = vector.load %arg9[%c448, %c0_296] : memref<512x128xf32, #tpu.memory_space<vmem>>, vector<32x128xf32>
    %cst_297 = arith.constant dense<0.000000e+00> : vector<4x128xf32>
    %297 = tpu.matmul %295, %296, %cst_297 {dimension_numbers = #tpu.dot_dimension_numbers<[1], [0], [0], [1], [0, 0, 1, 1], [], []>} : vector<4x32xf32>, vector<32x128xf32>, vector<4x128xf32> -> vector<4x128xf32>
    %298 = arith.addf %292, %297 : vector<4x128xf32>
    %c15_298 = arith.constant 15 : index
    %c0_299 = arith.constant 0 : index
    %c0_300 = arith.constant 0 : index
    %299 = vector.load %arg8[%c15_298, %c0_299, %c0_300] : memref<16x4x16xf32, #tpu.memory_space<vmem>>, vector<1x4x16xf32>
    %300 = vector.shape_cast %299 : vector<1x4x16xf32> to vector<4x16xf32>
    %cst_301 = arith.constant dense<0.000000e+00> : vector<4x32xf32>
    %301 = tpu.matmul %300, %209, %cst_301 {dimension_numbers = #tpu.dot_dimension_numbers<[1], [0], [0], [1], [0, 0, 1, 1], [], []>} : vector<4x16xf32>, vector<16x32xf32>, vector<4x32xf32> -> vector<4x32xf32>
    %c480 = arith.constant 480 : index
    %c0_302 = arith.constant 0 : index
    %302 = vector.load %arg9[%c480, %c0_302] : memref<512x128xf32, #tpu.memory_space<vmem>>, vector<32x128xf32>
    %cst_303 = arith.constant dense<0.000000e+00> : vector<4x128xf32>
    %303 = tpu.matmul %301, %302, %cst_303 {dimension_numbers = #tpu.dot_dimension_numbers<[1], [0], [0], [1], [0, 0, 1, 1], [], []>} : vector<4x32xf32>, vector<32x128xf32>, vector<4x128xf32> -> vector<4x128xf32>
    %304 = arith.addf %298, %303 : vector<4x128xf32>
    %c0_304 = arith.constant 0 : index
    %c0_305 = arith.constant 0 : index
    %305 = vector.load %arg10[%c0_304, %c0_305] : memref<1x128xf32, #tpu.memory_space<vmem>>, vector<1x128xf32>
    %306 = vector.broadcast %305 : vector<1x128xf32> to vector<4x128xf32>
    %307 = arith.addf %304, %306 : vector<4x128xf32>
    %cst_306 = arith.constant 0.000000e+00 : f32
    %308 = vector.broadcast %cst_306 : f32 to vector<4x128xf32>
    %309 = arith.maximumf %307, %308 : vector<4x128xf32>
    %c0_307 = arith.constant 0 : index
    %c0_308 = arith.constant 0 : index
    %c0_309 = arith.constant 0 : index
    %310 = vector.load %arg13[%c0_307, %c0_308, %c0_309] : memref<1x4x128xf32, #tpu.memory_space<vmem>>, vector<1x4x128xf32>
    %311 = vector.shape_cast %310 : vector<1x4x128xf32> to vector<4x128xf32>
    %312 = vector.shape_cast %309 : vector<4x128xf32> to vector<1x4x128xf32>
    tpu.vector_store %arg13[%c0_307, %c0_308, %c0_309], %312 {strides = array<i32>} : memref<1x4x128xf32, #tpu.memory_space<vmem>>, vector<1x4x128xf32>,
    return
  }
  func.func @transform_0(%arg0: i32) -> (i32, i32, i32) {
    %c0_i32 = arith.constant 0 : i32
    %c0_i32_0 = arith.constant 0 : i32
    %c0_i32_1 = arith.constant 0 : i32
    return %arg0, %c0_i32, %c0_i32_0 : i32, i32, i32
  }
  func.func @transform_1(%arg0: i32) -> (i32, i32, i32) {
    %c0_i32 = arith.constant 0 : i32
    %c0_i32_0 = arith.constant 0 : i32
    %c0_i32_1 = arith.constant 0 : i32
    %c0_i32_2 = arith.constant 0 : i32
    return %c0_i32, %c0_i32_0, %c0_i32_1 : i32, i32, i32
  }
  func.func @transform_2(%arg0: i32) -> (i32, i32) {
    %c0_i32 = arith.constant 0 : i32
    %c0_i32_0 = arith.constant 0 : i32
    %c0_i32_1 = arith.constant 0 : i32
    return %c0_i32, %c0_i32_0 : i32, i32
  }
  func.func @transform_3(%arg0: i32) -> (i32, i32) {
    %c0_i32 = arith.constant 0 : i32
    %c0_i32_0 = arith.constant 0 : i32
    %c0_i32_1 = arith.constant 0 : i32
    return %c0_i32, %c0_i32_0 : i32, i32
  }
  func.func @transform_4(%arg0: i32) -> (i32, i32, i32) {
    %c0_i32 = arith.constant 0 : i32
    %c0_i32_0 = arith.constant 0 : i32
    %c0_i32_1 = arith.constant 0 : i32
    %c0_i32_2 = arith.constant 0 : i32
    return %c0_i32, %c0_i32_0, %c0_i32_1 : i32, i32, i32
  }
  func.func @transform_5(%arg0: i32) -> (i32, i32) {
    %c0_i32 = arith.constant 0 : i32
    %c0_i32_0 = arith.constant 0 : i32
    %c0_i32_1 = arith.constant 0 : i32
    return %c0_i32, %c0_i32_0 : i32, i32
  }
  func.func @transform_6(%arg0: i32) -> (i32, i32) {
    %c0_i32 = arith.constant 0 : i32
    %c0_i32_0 = arith.constant 0 : i32
    %c0_i32_1 = arith.constant 0 : i32
    return %c0_i32, %c0_i32_0 : i32, i32
  }
  func.func @transform_7(%arg0: i32) -> (i32, i32, i32) {
    %c0_i32 = arith.constant 0 : i32
    %c0_i32_0 = arith.constant 0 : i32
    %c0_i32_1 = arith.constant 0 : i32
    %c0_i32_2 = arith.constant 0 : i32
    return %c0_i32, %c0_i32_0, %c0_i32_1 : i32, i32, i32
  }
  func.func @transform_8(%arg0: i32) -> (i32, i32) {
    %c0_i32 = arith.constant 0 : i32
    %c0_i32_0 = arith.constant 0 : i32
    %c0_i32_1 = arith.constant 0 : i32
    return %c0_i32, %c0_i32_0 : i32, i32
  }
  func.func @transform_9(%arg0: i32) -> (i32, i32) {
    %c0_i32 = arith.constant 0 : i32
    %c0_i32_0 = arith.constant 0 : i32
    %c0_i32_1 = arith.constant 0 : i32
    return %c0_i32, %c0_i32_0 : i32, i32
  }
  func.func @transform_10(%arg0: i32) -> (i32, i32, i32) {
    %c0_i32 = arith.constant 0 : i32
    %c0_i32_0 = arith.constant 0 : i32
    %c0_i32_1 = arith.constant 0 : i32
    return %arg0, %c0_i32, %c0_i32_0 : i32, i32, i32
  }
  func.func @transform_11(%arg0: i32) -> (i32, i32, i32) {
    %c0_i32 = arith.constant 0 : i32
    %c0_i32_0 = arith.constant 0 : i32
    %c0_i32_1 = arith.constant 0 : i32
    return %arg0, %c0_i32, %c0_i32_0 : i32, i32, i32
  }
  func.func @transform_12(%arg0: i32) -> (i32, i32, i32) {
    %c0_i32 = arith.constant 0 : i32
    %c0_i32_0 = arith.constant 0 : i32
    %c0_i32_1 = arith.constant 0 : i32
    return %arg0, %c0_i32, %c0_i32_0 : i32, i32, i32
  }
}

</mosaic_0001>

<llo_original>
// kernel: cnn_features_forward.1
$region0: #{cnn_features_forward.1}
  #allocation0 [shape = 'u32[]', space=smem, size = 0x4, offset = 0x4, fixed_abs, tag = 'smem constant byte address 0x4 - core index']
  #allocation1 [shape = 'u32[144,128]{1,0:T(1,128)}', space=vmem, size = 0x12000, scoped, tag = 'internal scratch']
  %s0 = inlined_call_operand.vmem [shape: f32[2,256,8], index: 0, kind: input, shape index: {}]
  %s1 = inlined_call_operand.vmem [shape: f32[16,64,256], index: 1, kind: input, shape index: {}]
  %s2 = inlined_call_operand.vmem [shape: f32[128,128], index: 2, kind: input, shape index: {}]
  %s3 = inlined_call_operand.vmem [shape: f32[1,128], index: 3, kind: input, shape index: {}]
  %s4 = inlined_call_operand.vmem [shape: f32[16,16,64], index: 4, kind: input, shape index: {}]
  %s5 = inlined_call_operand.vmem [shape: f32[256,128], index: 5, kind: input, shape index: {}]
  %s6 = inlined_call_operand.vmem [shape: f32[1,128], index: 6, kind: input, shape index: {}]
  %s7 = inlined_call_operand.vmem [shape: f32[16,4,16], index: 7, kind: input, shape index: {}]
  %s8 = inlined_call_operand.vmem [shape: f32[512,128], index: 8, kind: input, shape index: {}]
  %s9 = inlined_call_operand.vmem [shape: f32[1,128], index: 9, kind: input, shape index: {}]
  %s10 = inlined_call_operand.vmem [shape: f32[2,64,128], index: 10, kind: output, shape index: {0}]
  %s11 = inlined_call_operand.hbm [shape: f32[2,16,128], index: 11, kind: output, shape index: {1}]
  %s12 = inlined_call_operand.vmem [shape: f32[2,4,128], index: 12, kind: output, shape index: {2}]
  %13 = xla_tuple %s10, %s11, %s12
  %s14 = sld [smem:[#allocation0]]
  $region89: #{cnn_features_forward.1} parent=0
    _
  %s16 = ssub.s32 1, %s14
  %s17 = scalar_select 0, %s16, %s14
  $region1: #{cnn_features_forward.1} parent=0
    #allocation2 [shape = 'u8[16384]{0}', space=vmem, size = 0x4000, scoped, tag = 'output window, operand 1']
    #allocation3 [shape = 's32[2]{0}', space=sflag, size = 0x8, scoped, tag = 'scoped memory for cnn_features_forward.1']
    %18 = vsyncpa [#allocation3], 0
    %s19 = scalar_lea.sflag [#allocation3], 1
    %20 = vsyncpa %s19, 0
    loop: start=0, step=1, limit=4
    $region2: #{cnn_features_forward.1} parent=1 // loop_pre_header
      _
    $region3: #{cnn_features_forward.1} parent=1 // loop_header
      %s22 = sphi 0, %s26
      %p23 = scmp.ge.s32.totalorder %s22, 4
      %s32 = sphi 0, %s34
      %s35 = sphi 0, %s32
      %s36 = sphi 0, %s35
      %s52 = sphi 0, %s36
      %s56 = sphi 0, %s56
      %s58 = sphi 0, %s56
      %s59 = sphi 0, %s58
      %s73 = sphi 0, %s59
      %s77 = sphi 0, %s77
      %s79 = sphi 0, %s77
      %s80 = sphi 0, %s79
      %s94 = sphi 0, %s80
      %s98 = sphi 0, %s98
      %s100 = sphi 0, %s98
      %s101 = sphi 0, %s100
      %s115 = sphi 0, %s101
      %s119 = sphi 0, %s119
      %s121 = sphi 0, %s119
      %s122 = sphi 0, %s121
      %s136 = sphi 0, %s122
      %s140 = sphi 0, %s140
      %s142 = sphi 0, %s140
      %s143 = sphi 0, %s142
      %s157 = sphi 0, %s143
      %s161 = sphi 0, %s161
      %s163 = sphi 0, %s161
      %s164 = sphi 0, %s163
      %s178 = sphi 0, %s164
      %s182 = sphi 0, %s182
      %s184 = sphi 0, %s182
      %s185 = sphi 0, %s184
      %s199 = sphi 0, %s185
      %s203 = sphi 0, %s203
      %s205 = sphi 0, %s203
      %s206 = sphi 0, %s205
      %s220 = sphi 0, %s206
      %s224 = sphi 0, %s224
      %s226 = sphi 0, %s224
      %s227 = sphi 0, %s226
      %s241 = sphi 0, %s227
      %s247 = sphi 0, %s249
      %s250 = sphi 0, %s247
      %s251 = sphi 0, %s250
      %s267 = sphi 0, %s251
      %s273 = sphi 0, %s275
      %s276 = sphi 0, %s273
      %s277 = sphi 0, %s276
      %s293 = sphi 0, %s277
      %s299 = sphi 0, %s301
      %s302 = sphi 0, %s299
      %s303 = sphi 0, %s302
      %s319 = sphi 0, %s303
    $region4: #{cnn_features_forward.1} parent=1 // loop_header_branch
      %25 = sbr.rel (%p23) target = $region8
    $region5: #{cnn_features_forward.1} parent=1 // loop_body
      %s27 = ssub.s32 %s22, 1
      %s28 = ssub.s32 %s22, 2
      %s29 = sadd.s32 %s22, 1
      %s30 = ssub.s32 %s22, %s29
      %p31 = scmp.eq.s32.totalorder %s30, 0
      %s33 = sadd.s32 %s32, 1
      %s34 = scalar_select %p31, %s32, %s33
      %p37 = pneg %p31
      %p38 = scmp.eq.s32.totalorder %s22, 1
      %p39 = por %p37, %p38
      %p40 = scmp.ne.s32.totalorder %s32, %s35
      %p41 = scmp.eq.s32.totalorder %s22, 0
      %p42 = por %p40, %p41
      %p43 = scmp.ne.s32.totalorder %s32, %s35
      %p44 = scmp.eq.s32.totalorder %s27, 1
      %p45 = por %p43, %p44
      %p46 = scmp.ne.s32.totalorder %s35, %s36
      %p47 = scmp.eq.s32.totalorder %s27, 0
      %p48 = por %p46, %p47
      %p49 = scmp.ne.s32.totalorder %s35, %s36
      %p50 = scmp.eq.s32.totalorder %s28, 1
      %p51 = por %p49, %p50
      %p53 = scmp.ne.s32.totalorder %s36, %s52
      %p54 = scmp.eq.s32.totalorder %s28, 0
      %p55 = por %p53, %p54
      %s57 = sadd.s32 %s56, 1
      %p60 = scmp.eq.s32.totalorder %s22, 1
      %p61 = scmp.ne.s32.totalorder %s56, %s58
      %p62 = scmp.eq.s32.totalorder %s22, 0
      %p63 = por %p61, %p62
      %p64 = scmp.ne.s32.totalorder %s56, %s58
      %p65 = scmp.eq.s32.totalorder %s27, 1
      %p66 = por %p64, %p65
      %p67 = scmp.ne.s32.totalorder %s58, %s59
      %p68 = scmp.eq.s32.totalorder %s27, 0
      %p69 = por %p67, %p68
      %p70 = scmp.ne.s32.totalorder %s58, %s59
      %p71 = scmp.eq.s32.totalorder %s28, 1
      %p72 = por %p70, %p71
      %p74 = scmp.ne.s32.totalorder %s59, %s73
      %p75 = scmp.eq.s32.totalorder %s28, 0
      %p76 = por %p74, %p75
      %s78 = sadd.s32 %s77, 1
      %p81 = scmp.eq.s32.totalorder %s22, 1
      %p82 = scmp.ne.s32.totalorder %s77, %s79
      %p83 = scmp.eq.s32.totalorder %s22, 0
      %p84 = por %p82, %p83
      %p85 = scmp.ne.s32.totalorder %s77, %s79
      %p86 = scmp.eq.s32.totalorder %s27, 1
      %p87 = por %p85, %p86
      %p88 = scmp.ne.s32.totalorder %s79, %s80
      %p89 = scmp.eq.s32.totalorder %s27, 0
      %p90 = por %p88, %p89
      %p91 = scmp.ne.s32.totalorder %s79, %s80
      %p92 = scmp.eq.s32.totalorder %s28, 1
      %p93 = por %p91, %p92
      %p95 = scmp.ne.s32.totalorder %s80, %s94
      %p96 = scmp.eq.s32.totalorder %s28, 0
      %p97 = por %p95, %p96
      %s99 = sadd.s32 %s98, 1
      %p102 = scmp.eq.s32.totalorder %s22, 1
      %p103 = scmp.ne.s32.totalorder %s98, %s100
      %p104 = scmp.eq.s32.totalorder %s22, 0
      %p105 = por %p103, %p104
      %p106 = scmp.ne.s32.totalorder %s98, %s100
      %p107 = scmp.eq.s32.totalorder %s27, 1
      %p108 = por %p106, %p107
      %p109 = scmp.ne.s32.totalorder %s100, %s101
      %p110 = scmp.eq.s32.totalorder %s27, 0
      %p111 = por %p109, %p110
      %p112 = scmp.ne.s32.totalorder %s100, %s101
      %p113 = scmp.eq.s32.totalorder %s28, 1
      %p114 = por %p112, %p113
      %p116 = scmp.ne.s32.totalorder %s101, %s115
      %p117 = scmp.eq.s32.totalorder %s28, 0
      %p118 = por %p116, %p117
      %s120 = sadd.s32 %s119, 1
      %p123 = scmp.eq.s32.totalorder %s22, 1
      %p124 = scmp.ne.s32.totalorder %s119, %s121
      %p125 = scmp.eq.s32.totalorder %s22, 0
      %p126 = por %p124, %p125
      %p127 = scmp.ne.s32.totalorder %s119, %s121
      %p128 = scmp.eq.s32.totalorder %s27, 1
      %p129 = por %p127, %p128
      %p130 = scmp.ne.s32.totalorder %s121, %s122
      %p131 = scmp.eq.s32.totalorder %s27, 0
      %p132 = por %p130, %p131
      %p133 = scmp.ne.s32.totalorder %s121, %s122
      %p134 = scmp.eq.s32.totalorder %s28, 1
      %p135 = por %p133, %p134
      %p137 = scmp.ne.s32.totalorder %s122, %s136
      %p138 = scmp.eq.s32.totalorder %s28, 0
      %p139 = por %p137, %p138
      %s141 = sadd.s32 %s140, 1
      %p144 = scmp.eq.s32.totalorder %s22, 1
      %p145 = scmp.ne.s32.totalorder %s140, %s142
      %p146 = scmp.eq.s32.totalorder %s22, 0
      %p147 = por %p145, %p146
      %p148 = scmp.ne.s32.totalorder %s140, %s142
      %p149 = scmp.eq.s32.totalorder %s27, 1
      %p150 = por %p148, %p149
      %p151 = scmp.ne.s32.totalorder %s142, %s143
      %p152 = scmp.eq.s32.totalorder %s27, 0
      %p153 = por %p151, %p152
      %p154 = scmp.ne.s32.totalorder %s142, %s143
      %p155 = scmp.eq.s32.totalorder %s28, 1
      %p156 = por %p154, %p155
      %p158 = scmp.ne.s32.totalorder %s143, %s157
      %p159 = scmp.eq.s32.totalorder %s28, 0
      %p160 = por %p158, %p159
      %s162 = sadd.s32 %s161, 1
      %p165 = scmp.eq.s32.totalorder %s22, 1
      %p166 = scmp.ne.s32.totalorder %s161, %s163
      %p167 = scmp.eq.s32.totalorder %s22, 0
      %p168 = por %p166, %p167
      %p169 = scmp.ne.s32.totalorder %s161, %s163
      %p170 = scmp.eq.s32.totalorder %s27, 1
      %p171 = por %p169, %p170
      %p172 = scmp.ne.s32.totalorder %s163, %s164
      %p173 = scmp.eq.s32.totalorder %s27, 0
      %p174 = por %p172, %p173
      %p175 = scmp.ne.s32.totalorder %s163, %s164
      %p176 = scmp.eq.s32.totalorder %s28, 1
      %p177 = por %p175, %p176
      %p179 = scmp.ne.s32.totalorder %s164, %s178
      %p180 = scmp.eq.s32.totalorder %s28, 0
      %p181 = por %p179, %p180
      %s183 = sadd.s32 %s182, 1
      %p186 = scmp.eq.s32.totalorder %s22, 1
      %p187 = scmp.ne.s32.totalorder %s182, %s184
      %p188 = scmp.eq.s32.totalorder %s22, 0
      %p189 = por %p187, %p188
      %p190 = scmp.ne.s32.totalorder %s182, %s184
      %p191 = scmp.eq.s32.totalorder %s27, 1
      %p192 = por %p190, %p191
      %p193 = scmp.ne.s32.totalorder %s184, %s185
      %p194 = scmp.eq.s32.totalorder %s27, 0
      %p195 = por %p193, %p194
      %p196 = scmp.ne.s32.totalorder %s184, %s185
      %p197 = scmp.eq.s32.totalorder %s28, 1
      %p198 = por %p196, %p197
      %p200 = scmp.ne.s32.totalorder %s185, %s199
      %p201 = scmp.eq.s32.totalorder %s28, 0
      %p202 = por %p200, %p201
      %s204 = sadd.s32 %s203, 1
      %p207 = scmp.eq.s32.totalorder %s22, 1
      %p208 = scmp.ne.s32.totalorder %s203, %s205
      %p209 = scmp.eq.s32.totalorder %s22, 0
      %p210 = por %p208, %p209
      %p211 = scmp.ne.s32.totalorder %s203, %s205
      %p212 = scmp.eq.s32.totalorder %s27, 1
      %p213 = por %p211, %p212
      %p214 = scmp.ne.s32.totalorder %s205, %s206
      %p215 = scmp.eq.s32.totalorder %s27, 0
      %p216 = por %p214, %p215
      %p217 = scmp.ne.s32.totalorder %s205, %s206
      %p218 = scmp.eq.s32.totalorder %s28, 1
      %p219 = por %p217, %p218
      %p221 = scmp.ne.s32.totalorder %s206, %s220
      %p222 = scmp.eq.s32.totalorder %s28, 0
      %p223 = por %p221, %p222
      %s225 = sadd.s32 %s224, 1
      %p228 = scmp.eq.s32.totalorder %s22, 1
      %p229 = scmp.ne.s32.totalorder %s224, %s226
      %p230 = scmp.eq.s32.totalorder %s22, 0
      %p231 = por %p229, %p230
      %p232 = scmp.ne.s32.totalorder %s224, %s226
      %p233 = scmp.eq.s32.totalorder %s27, 1
      %p234 = por %p232, %p233
      %p235 = scmp.ne.s32.totalorder %s226, %s227
      %p236 = scmp.eq.s32.totalorder %s27, 0
      %p237 = por %p235, %p236
      %p238 = scmp.ne.s32.totalorder %s226, %s227
      %p239 = scmp.eq.s32.totalorder %s28, 1
      %p240 = por %p238, %p239
      %p242 = scmp.ne.s32.totalorder %s227, %s241
      %p243 = scmp.eq.s32.totalorder %s28, 0
      %p244 = por %p242, %p243
      %s245 = ssub.s32 %s22, %s29
      %p246 = scmp.eq.s32.totalorder %s245, 0
      %s248 = sadd.s32 %s247, 1
      %s249 = scalar_select %p246, %s247, %s248
      %p252 = pneg %p246
      %p253 = scmp.eq.s32.totalorder %s22, 1
      %p254 = por %p252, %p253
      %p255 = scmp.ne.s32.totalorder %s247, %s250
      %p256 = scmp.eq.s32.totalorder %s22, 0
      %p257 = por %p255, %p256
      %p258 = scmp.ne.s32.totalorder %s247, %s250
      %p259 = scmp.eq.s32.totalorder %s27, 1
      %p260 = por %p258, %p259
      %p261 = scmp.ne.s32.totalorder %s250, %s251
      %p262 = scmp.eq.s32.totalorder %s27, 0
      %p263 = por %p261, %p262
      %p264 = scmp.ne.s32.totalorder %s250, %s251
      %p265 = scmp.eq.s32.totalorder %s28, 1
      %p266 = por %p264, %p265
      %p268 = scmp.ne.s32.totalorder %s251, %s267
      %p269 = scmp.eq.s32.totalorder %s28, 0
      %p270 = por %p268, %p269
      %s271 = ssub.s32 %s22, %s29
      %p272 = scmp.eq.s32.totalorder %s271, 0
      %s274 = sadd.s32 %s273, 1
      %s275 = scalar_select %p272, %s273, %s274
      %p278 = pneg %p272
      %p279 = scmp.eq.s32.totalorder %s22, 1
      %p280 = por %p278, %p279
      %p281 = scmp.ne.s32.totalorder %s273, %s276
      %p282 = scmp.eq.s32.totalorder %s22, 0
      %p283 = por %p281, %p282
      %p284 = scmp.ne.s32.totalorder %s273, %s276
      %p285 = scmp.eq.s32.totalorder %s27, 1
      %p286 = por %p284, %p285
      %p287 = scmp.ne.s32.totalorder %s276, %s277
      %p288 = scmp.eq.s32.totalorder %s27, 0
      %p289 = por %p287, %p288
      %p290 = scmp.ne.s32.totalorder %s276, %s277
      %p291 = scmp.eq.s32.totalorder %s28, 1
      %p292 = por %p290, %p291
      %p294 = scmp.ne.s32.totalorder %s277, %s293
      %p295 = scmp.eq.s32.totalorder %s28, 0
      %p296 = por %p294, %p295
      %s297 = ssub.s32 %s22, %s29
      %p298 = scmp.eq.s32.totalorder %s297, 0
      %s300 = sadd.s32 %s299, 1
      %s301 = scalar_select %p298, %s299, %s300
      %p304 = pneg %p298
      %p305 = scmp.eq.s32.totalorder %s22, 1
      %p306 = por %p304, %p305
      %p307 = scmp.ne.s32.totalorder %s299, %s302
      %p308 = scmp.eq.s32.totalorder %s22, 0
      %p309 = por %p307, %p308
      %p310 = scmp.ne.s32.totalorder %s299, %s302
      %p311 = scmp.eq.s32.totalorder %s27, 1
      %p312 = por %p310, %p311
      %p313 = scmp.ne.s32.totalorder %s302, %s303
      %p314 = scmp.eq.s32.totalorder %s27, 0
      %p315 = por %p313, %p314
      %p316 = scmp.ne.s32.totalorder %s302, %s303
      %p317 = scmp.eq.s32.totalorder %s28, 1
      %p318 = por %p316, %p317
      %p320 = scmp.ne.s32.totalorder %s303, %s319
      %p321 = scmp.eq.s32.totalorder %s28, 0
      %p322 = por %p320, %p321
      %p323 = scmp.le.s32.totalorder 1, %s22
      %p324 = scmp.lt.s32.totalorder %s22, 3
      %p325 = pnand %p323, %p324
      %p326 = pneg %p325
      // Predicated region
      $region9: #{cnn_features_forward.1} parent=5 // pred_check
        _
      $region10: #{cnn_features_forward.1} parent=5 // pred_check_branch
        %328 = sbr.rel (%p325) target = $region12
      $region11: #{cnn_features_forward.1} parent=5 // pred_region
        %s329 = ssub.s32 %s22, 1
        // Predicated region
        $region13: #{cnn_features_forward.1} parent=11 // pred_check
          %p330 = pneg %p69
        $region14: #{cnn_features_forward.1} parent=11 // pred_check_branch
          %332 = sbr.rel (%p330) target = $region16
        $region15: #{cnn_features_forward.1} parent=11 // pred_region
          _
        $region16: #{cnn_features_forward.1} parent=11 // pred_fallthru
          _
        // Predicated region
        $region17: #{cnn_features_forward.1} parent=11 // pred_check
          %p333 = pneg %p90
        $region18: #{cnn_features_forward.1} parent=11 // pred_check_branch
          %335 = sbr.rel (%p333) target = $region20
        $region19: #{cnn_features_forward.1} parent=11 // pred_region
          _
        $region20: #{cnn_features_forward.1} parent=11 // pred_fallthru
          _
        // Predicated region
        $region21: #{cnn_features_forward.1} parent=11 // pred_check
          %p336 = pneg %p111
        $region22: #{cnn_features_forward.1} parent=11 // pred_check_branch
          %338 = sbr.rel (%p336) target = $region24
        $region23: #{cnn_features_forward.1} parent=11 // pred_region
          _
        $region24: #{cnn_features_forward.1} parent=11 // pred_fallthru
          _
        // Predicated region
        $region25: #{cnn_features_forward.1} parent=11 // pred_check
          %p339 = pneg %p132
        $region26: #{cnn_features_forward.1} parent=11 // pred_check_branch
          %341 = sbr.rel (%p339) target = $region28
        $region27: #{cnn_features_forward.1} parent=11 // pred_region
          _
        $region28: #{cnn_features_forward.1} parent=11 // pred_fallthru
          _
        // Predicated region
        $region29: #{cnn_features_forward.1} parent=11 // pred_check
          %p342 = pneg %p153
        $region30: #{cnn_features_forward.1} parent=11 // pred_check_branch
          %344 = sbr.rel (%p342) target = $region32
        $region31: #{cnn_features_forward.1} parent=11 // pred_region
          _
        $region32: #{cnn_features_forward.1} parent=11 // pred_fallthru
          _
        // Predicated region
        $region33: #{cnn_features_forward.1} parent=11 // pred_check
          %p345 = pneg %p174
        $region34: #{cnn_features_forward.1} parent=11 // pred_check_branch
          %347 = sbr.rel (%p345) target = $region36
        $region35: #{cnn_features_forward.1} parent=11 // pred_region
          _
        $region36: #{cnn_features_forward.1} parent=11 // pred_fallthru
          _
        // Predicated region
        $region37: #{cnn_features_forward.1} parent=11 // pred_check
          %p348 = pneg %p195
        $region38: #{cnn_features_forward.1} parent=11 // pred_check_branch
          %350 = sbr.rel (%p348) target = $region40
        $region39: #{cnn_features_forward.1} parent=11 // pred_region
          _
        $region40: #{cnn_features_forward.1} parent=11 // pred_fallthru
          _
        // Predicated region
        $region41: #{cnn_features_forward.1} parent=11 // pred_check
          %p351 = pneg %p216
        $region42: #{cnn_features_forward.1} parent=11 // pred_check_branch
          %353 = sbr.rel (%p351) target = $region44
        $region43: #{cnn_features_forward.1} parent=11 // pred_region
          _
        $region44: #{cnn_features_forward.1} parent=11 // pred_fallthru
          _
        // Predicated region
        $region45: #{cnn_features_forward.1} parent=11 // pred_check
          %p354 = pneg %p237
        $region46: #{cnn_features_forward.1} parent=11 // pred_check_branch
          %356 = sbr.rel (%p354) target = $region48
        $region47: #{cnn_features_forward.1} parent=11 // pred_region
          _
        $region48: #{cnn_features_forward.1} parent=11 // pred_fallthru
          _
      $region12: #{cnn_features_forward.1} parent=5 // pred_fallthru
        _
      %p357 = scmp.lt.s32.totalorder %s22, 2
      // Predicated region
      $region49: #{cnn_features_forward.1} parent=5 // pred_check
        %p358 = pneg %p357
      $region50: #{cnn_features_forward.1} parent=5 // pred_check_branch
        %360 = sbr.rel (%p358) target = $region52
      $region51: #{cnn_features_forward.1} parent=5 // pred_region
        // Predicated region
        $region53: #{cnn_features_forward.1} parent=51 // pred_check
          %p361 = pneg %p42
        $region54: #{cnn_features_forward.1} parent=51 // pred_check_branch
          %363 = sbr.rel (%p361) target = $region56
        $region55: #{cnn_features_forward.1} parent=51 // pred_region
          %p364 = scmp.lt.s32.totalorder %s22, 1
          %s365 = scalar_select %p364, %s22, 1
          %s366 = smul.addr %s365, 32
          %s367 = smul.addr %s366, 8
          %s368 = scalar_lea.vmem %s0, %s367
        $region56: #{cnn_features_forward.1} parent=51 // pred_fallthru
          _
      $region52: #{cnn_features_forward.1} parent=5 // pred_fallthru
        _
      %p369 = scmp.le.s32.totalorder 1, %s22
      %p370 = scmp.lt.s32.totalorder %s22, 3
      %p371 = pnand %p369, %p370
      %p372 = pneg %p371
      // Predicated region
      $region57: #{cnn_features_forward.1} parent=5 // pred_check
        _
      $region58: #{cnn_features_forward.1} parent=5 // pred_check_branch
        %374 = sbr.rel (%p371) target = $region60
      $region59: #{cnn_features_forward.1} parent=5 // pred_region
        %s375 = ssub.s32 %s22, 1
        %p376 = scmp.lt.s32.totalorder %s27, 1
        %s377 = scalar_select %p376, %s27, 1
        %s378 = smul.addr %s377, 32
        %s379 = smul.addr %s378, 8
        %s380 = scalar_lea.vmem %s0, %s379
        %p381 = pneg %p48
        %p382 = pneg %p45
        %p383 = pneg %p69
        %p384 = pneg %p66
        %p385 = pneg %p90
        %p386 = pneg %p87
        %p387 = pneg %p111
        %p388 = pneg %p108
        %p389 = pneg %p132
        %p390 = pneg %p129
        %p391 = pneg %p153
        %p392 = pneg %p150
        %p393 = pneg %p174
        %p394 = pneg %p171
        %p395 = pneg %p195
        %p396 = pneg %p192
        %p397 = pneg %p216
        %p398 = pneg %p213
        %p399 = pneg %p237
        %p400 = pneg %p234
        %p401 = pneg %p263
        %p402 = pneg %p260
        %p403 = scmp.lt.s32.totalorder %s27, 1
        %s404 = scalar_select %p403, %s27, 1
        %s405 = smul.addr %s404, 8
        %s406 = smul.addr %s405, 8
        %s407 = scalar_lea.vmem %s10, %s406
        %p408 = pneg %p289
        %p409 = pneg %p286
        %s410 = sand.u32 %s276, 1
        %s411 = scalar_lea.sflag [#allocation3], %s410
        %s412 = sand.u32 %s276, 1
        %s413 = smul.addr %s412, 16
        %s414 = scalar_lea.vmem [#allocation2], %s413
        %p415 = pneg %p315
        %p416 = pneg %p312
        %p417 = scmp.lt.s32.totalorder %s27, 1
        %s418 = scalar_select %p417, %s27, 1
        %s419 = smul.addr %s418, 4
        %s420 = scalar_lea.vmem %s12, %s419
        %p421 = scmp.lt.s32.totalorder %s27, 1
        %s422 = scalar_select %p421, %s27, 1
        %s423 = smul.addr %s422, 32
        %s424 = smul.addr %s423, 8
        %s425 = scalar_lea.vmem %s0, %s424
        %p426 = scmp.lt.s32.totalorder %s27, 1
        %s427 = scalar_select %p426, %s27, 1
        %s428 = smul.addr %s427, 8
        %s429 = smul.addr %s428, 8
        %s430 = scalar_lea.vmem %s10, %s429
        %p431 = scmp.lt.s32.totalorder %s27, 1
        %s432 = scalar_select %p431, %s27, 1
        %s433 = smul.addr %s432, 4
        %s434 = scalar_lea.vmem %s12, %s433
        %v435 = vld [vmem:[%s425] sm:$0xff]
        %v436 = vld [vmem:[%s425 + $0x8] sm:$0xff]
        %v437 = vld [vmem:[%s425 + $0x10] sm:$0xff]
        %v438 = vld [vmem:[%s425 + $0x18] sm:$0xff]
        %v439 = vld [vmem:[%s425 + $0x20] sm:$0xff]
        %v440 = vld [vmem:[%s425 + $0x28] sm:$0xff]
        %v441 = vld [vmem:[%s425 + $0x30] sm:$0xff]
        %v442 = vld [vmem:[%s425 + $0x38] sm:$0xff]
        %v443 = vld [vmem:[%s425 + $0x40] sm:$0xff]
        %v444 = vld [vmem:[%s425 + $0x48] sm:$0xff]
        %v445 = vld [vmem:[%s425 + $0x50] sm:$0xff]
        %v446 = vld [vmem:[%s425 + $0x58] sm:$0xff]
        %v447 = vld [vmem:[%s425 + $0x60] sm:$0xff]
        %v448 = vld [vmem:[%s425 + $0x68] sm:$0xff]
        %v449 = vld [vmem:[%s425 + $0x70] sm:$0xff]
        %v450 = vld [vmem:[%s425 + $0x78] sm:$0xff]
        %v451 = vld [vmem:[%s425 + $0x80] sm:$0xff]
        %v452 = vld [vmem:[%s425 + $0x88] sm:$0xff]
        %v453 = vld [vmem:[%s425 + $0x90] sm:$0xff]
        %v454 = vld [vmem:[%s425 + $0x98] sm:$0xff]
        %v455 = vld [vmem:[%s425 + $0xa0] sm:$0xff]
        %v456 = vld [vmem:[%s425 + $0xa8] sm:$0xff]
        %v457 = vld [vmem:[%s425 + $0xb0] sm:$0xff]
        %v458 = vld [vmem:[%s425 + $0xb8] sm:$0xff]
        %v459 = vld [vmem:[%s425 + $0xc0] sm:$0xff]
        %v460 = vld [vmem:[%s425 + $0xc8] sm:$0xff]
        %v461 = vld [vmem:[%s425 + $0xd0] sm:$0xff]
        %v462 = vld [vmem:[%s425 + $0xd8] sm:$0xff]
        %v463 = vld [vmem:[%s425 + $0xe0] sm:$0xff]
        %v464 = vld [vmem:[%s425 + $0xe8] sm:$0xff]
        %v465 = vld [vmem:[%s425 + $0xf0] sm:$0xff]
        %v466 = vld [vmem:[%s425 + $0xf8] sm:$0xff]
        %v467 = vld [vmem:[%s1] sm:$0xff]
        %v468 = vld [vmem:[%s1 + $0x8] sm:$0xff]
        %v469 = vld [vmem:[%s1 + $0x10] sm:$0xff]
        %v470 = vld [vmem:[%s1 + $0x18] sm:$0xff]
        %v471 = vld [vmem:[%s1 + $0x20] sm:$0xff]
        %v472 = vld [vmem:[%s1 + $0x28] sm:$0xff]
        %v473 = vld [vmem:[%s1 + $0x30] sm:$0xff]
        %v474 = vld [vmem:[%s1 + $0x38] sm:$0xff]
        %v475 = vld [vmem:[%s1 + $0x40] sm:$0xff]
        %v476 = vld [vmem:[%s1 + $0x48] sm:$0xff]
        %v477 = vld [vmem:[%s1 + $0x50] sm:$0xff]
        %v478 = vld [vmem:[%s1 + $0x58] sm:$0xff]
        %v479 = vld [vmem:[%s1 + $0x60] sm:$0xff]
        %v480 = vld [vmem:[%s1 + $0x68] sm:$0xff]
        %v481 = vld [vmem:[%s1 + $0x70] sm:$0xff]
        %v482 = vld [vmem:[%s1 + $0x78] sm:$0xff]
        %483 = vmatprep.subr.mxu0 0.0
        %484 = vmatpush1.msra.mxu0 %v450
        %485 = vmatprep.subr.mxu0 0.0
        %486 = vmatpush1.msra.mxu0 %v449
        %487 = vmatprep.subr.mxu0 0.0
        %488 = vmatpush1.msra.mxu0 %v448
        %489 = vmatprep.subr.mxu0 0.0
        %490 = vmatpush1.msra.mxu0 %v447
        %491 = vmatprep.subr.mxu0 0.0
        %492 = vmatpush1.msra.mxu0 %v446
        %493 = vmatprep.subr.mxu0 0.0
        %494 = vmatpush1.msra.mxu0 %v445
        %495 = vmatprep.subr.mxu0 0.0
        %496 = vmatpush1.msra.mxu0 %v444
        %497 = vmatprep.subr.mxu0 0.0
        %498 = vmatpush1.msra.mxu0 %v443
        %499 = vmatprep.subr.mxu0 0.0
        %500 = vmatpush1.msra.mxu0 %v442
        %501 = vmatprep.subr.mxu0 0.0
        %502 = vmatpush1.msra.mxu0 %v441
        %503 = vmatprep.subr.mxu0 0.0
        %504 = vmatpush1.msra.mxu0 %v440
        %505 = vmatprep.subr.mxu0 0.0
        %506 = vmatpush1.msra.mxu0 %v439
        %507 = vmatprep.subr.mxu0 0.0
        %508 = vmatpush1.msra.mxu0 %v438
        %509 = vmatprep.subr.mxu0 0.0
        %510 = vmatpush1.msra.mxu0 %v437
        %511 = vmatprep.subr.mxu0 0.0
        %512 = vmatpush1.msra.mxu0 %v436
        %513 = vmatprep.subr.mxu0 0.0
        %514 = vmatpush1.msra.mxu0 %v435
        %515 = vmatprep.subr.mxu0 0.0
        %516 = vmatpush2.msra.mxu0 %v466
        %517 = vmatprep.subr.mxu0 0.0
        %518 = vmatpush2.msra.mxu0 %v465
        %519 = vmatprep.subr.mxu0 0.0
        %520 = vmatpush2.msra.mxu0 %v464
        %521 = vmatprep.subr.mxu0 0.0
        %522 = vmatpush2.msra.mxu0 %v463
        %523 = vmatprep.subr.mxu0 0.0
        %524 = vmatpush2.msra.mxu0 %v462
        %525 = vmatprep.subr.mxu0 0.0
        %526 = vmatpush2.msra.mxu0 %v461
        %527 = vmatprep.subr.mxu0 0.0
        %528 = vmatpush2.msra.mxu0 %v460
        %529 = vmatprep.subr.mxu0 0.0
        %530 = vmatpush2.msra.mxu0 %v459
        %531 = vmatprep.subr.mxu0 0.0
        %532 = vmatpush2.msra.mxu0 %v458
        %533 = vmatprep.subr.mxu0 0.0
        %534 = vmatpush2.msra.mxu0 %v457
        %535 = vmatprep.subr.mxu0 0.0
        %536 = vmatpush2.msra.mxu0 %v456
        %537 = vmatprep.subr.mxu0 0.0
        %538 = vmatpush2.msra.mxu0 %v455
        %539 = vmatprep.subr.mxu0 0.0
        %540 = vmatpush2.msra.mxu0 %v454
        %541 = vmatprep.subr.mxu0 0.0
        %542 = vmatpush2.msra.mxu0 %v453
        %543 = vmatprep.subr.mxu0 0.0
        %544 = vmatpush2.msra.mxu0 %v452
        %545 = vmatprep.subr.mxu0 0.0
        %546 = vmatpush2.msra.mxu0 %v451
        %547 = vmatprep.mubr.f32.mxu0 %v468
        %548 = vmatmul.mubr.f32.gmra.mxu0 %v467
        %v549 = vpop.f32.mrf.mxu0
        %v550 = vadd.f32 0.0, %v549
        %v551 = vpop.f32.mrf.mxu0
        %552 = vmatprep.mubr.f32.mxu0 %v470
        %553 = vmatmul.mubr.f32.gmra.mxu0 %v469
        %v554 = vpop.f32.mrf.mxu0
        %v555 = vadd.f32 0.0, %v554
        %v556 = vpop.f32.mrf.mxu0
        %557 = vmatprep.mubr.f32.mxu0 %v472
        %558 = vmatmul.mubr.f32.gmra.mxu0 %v471
        %v559 = vpop.f32.mrf.mxu0
        %v560 = vadd.f32 0.0, %v559
        %v561 = vpop.f32.mrf.mxu0
        %562 = vmatprep.mubr.f32.mxu0 %v474
        %563 = vmatmul.mubr.f32.gmra.mxu0 %v473
        %v564 = vpop.f32.mrf.mxu0
        %v565 = vadd.f32 0.0, %v564
        %v566 = vpop.f32.mrf.mxu0
        %567 = vmatprep.mubr.f32.mxu0 %v476
        %568 = vmatmul.mubr.f32.gmra.mxu0 %v475
        %v569 = vpop.f32.mrf.mxu0
        %v570 = vadd.f32 0.0, %v569
        %v571 = vpop.f32.mrf.mxu0
        %572 = vmatprep.mubr.f32.mxu0 %v478
        %573 = vmatmul.mubr.f32.gmra.mxu0 %v477
        %v574 = vpop.f32.mrf.mxu0
        %v575 = vadd.f32 0.0, %v574
        %v576 = vpop.f32.mrf.mxu0
        %577 = vmatprep.mubr.f32.mxu0 %v480
        %578 = vmatmul.mubr.f32.gmra.mxu0 %v479
        %v579 = vpop.f32.mrf.mxu0
        %v580 = vadd.f32 0.0, %v579
        %v581 = vpop.f32.mrf.mxu0
        %582 = vmatprep.mubr.f32.mxu0 %v482
        %583 = vmatmul.mubr.f32.gmra.mxu0 %v481
        %v584 = vpop.f32.mrf.mxu0
        %v585 = vadd.f32 0.0, %v584
        %v586 = vpop.f32.mrf.mxu0
        %587 = vdwg.mxu0
        %v588 = vld [vmem:[%s2] sm:$0xff]
        %s589 = scalar_lea.vmem %s1, 128
        %v590 = vld [vmem:[%s589] sm:$0xff]
        %v591 = vld [vmem:[%s589 + $0x8] sm:$0xff]
        %v592 = vld [vmem:[%s589 + $0x10] sm:$0xff]
        %v593 = vld [vmem:[%s589 + $0x18] sm:$0xff]
        %v594 = vld [vmem:[%s589 + $0x20] sm:$0xff]
        %v595 = vld [vmem:[%s589 + $0x28] sm:$0xff]
        %v596 = vld [vmem:[%s589 + $0x30] sm:$0xff]
        %v597 = vld [vmem:[%s589 + $0x38] sm:$0xff]
        %v598 = vld [vmem:[%s589 + $0x40] sm:$0xff]
        %v599 = vld [vmem:[%s589 + $0x48] sm:$0xff]
        %v600 = vld [vmem:[%s589 + $0x50] sm:$0xff]
        %v601 = vld [vmem:[%s589 + $0x58] sm:$0xff]
        %v602 = vld [vmem:[%s589 + $0x60] sm:$0xff]
        %v603 = vld [vmem:[%s589 + $0x68] sm:$0xff]
        %v604 = vld [vmem:[%s589 + $0x70] sm:$0xff]
        %v605 = vld [vmem:[%s589 + $0x78] sm:$0xff]
        %606 = vmatprep.subr.mxu0 0.0
        %607 = vmatpush1.msra.mxu0 %v450
        %608 = vmatprep.subr.mxu0 0.0
        %609 = vmatpush1.msra.mxu0 %v449
        %610 = vmatprep.subr.mxu0 0.0
        %611 = vmatpush1.msra.mxu0 %v448
        %612 = vmatprep.subr.mxu0 0.0
        %613 = vmatpush1.msra.mxu0 %v447
        %614 = vmatprep.subr.mxu0 0.0
        %615 = vmatpush1.msra.mxu0 %v446
        %616 = vmatprep.subr.mxu0 0.0
        %617 = vmatpush1.msra.mxu0 %v445
        %618 = vmatprep.subr.mxu0 0.0
        %619 = vmatpush1.msra.mxu0 %v444
        %620 = vmatprep.subr.mxu0 0.0
        %621 = vmatpush1.msra.mxu0 %v443
        %622 = vmatprep.subr.mxu0 0.0
        %623 = vmatpush1.msra.mxu0 %v442
        %624 = vmatprep.subr.mxu0 0.0
        %625 = vmatpush1.msra.mxu0 %v441
        %626 = vmatprep.subr.mxu0 0.0
        %627 = vmatpush1.msra.mxu0 %v440
        %628 = vmatprep.subr.mxu0 0.0
        %629 = vmatpush1.msra.mxu0 %v439
        %630 = vmatprep.subr.mxu0 0.0
        %631 = vmatpush1.msra.mxu0 %v438
        %632 = vmatprep.subr.mxu0 0.0
        %633 = vmatpush1.msra.mxu0 %v437
        %634 = vmatprep.subr.mxu0 0.0
        %635 = vmatpush1.msra.mxu0 %v436
        %636 = vmatprep.subr.mxu0 0.0
        %637 = vmatpush1.msra.mxu0 %v435
        %638 = vmatprep.subr.mxu0 0.0
        %639 = vmatpush2.msra.mxu0 %v466
        %640 = vmatprep.subr.mxu0 0.0
        %641 = vmatpush2.msra.mxu0 %v465
        %642 = vmatprep.subr.mxu0 0.0
        %643 = vmatpush2.msra.mxu0 %v464
        %644 = vmatprep.subr.mxu0 0.0
        %645 = vmatpush2.msra.mxu0 %v463
        %646 = vmatprep.subr.mxu0 0.0
        %647 = vmatpush2.msra.mxu0 %v462
        %648 = vmatprep.subr.mxu0 0.0
        %649 = vmatpush2.msra.mxu0 %v461
        %650 = vmatprep.subr.mxu0 0.0
        %651 = vmatpush2.msra.mxu0 %v460
        %652 = vmatprep.subr.mxu0 0.0
        %653 = vmatpush2.msra.mxu0 %v459
        %654 = vmatprep.subr.mxu0 0.0
        %655 = vmatpush2.msra.mxu0 %v458
        %656 = vmatprep.subr.mxu0 0.0
        %657 = vmatpush2.msra.mxu0 %v457
        %658 = vmatprep.subr.mxu0 0.0
        %659 = vmatpush2.msra.mxu0 %v456
        %660 = vmatprep.subr.mxu0 0.0
        %661 = vmatpush2.msra.mxu0 %v455
        %662 = vmatprep.subr.mxu0 0.0
        %663 = vmatpush2.msra.mxu0 %v454
        %664 = vmatprep.subr.mxu0 0.0
        %665 = vmatpush2.msra.mxu0 %v453
        %666 = vmatprep.subr.mxu0 0.0
        %667 = vmatpush2.msra.mxu0 %v452
        %668 = vmatprep.subr.mxu0 0.0
        %669 = vmatpush2.msra.mxu0 %v451
        %670 = vmatprep.mubr.f32.mxu0 %v591
        %671 = vmatmul.mubr.f32.gmra.mxu0 %v590
        %v672 = vpop.f32.mrf.mxu0
        %v673 = vadd.f32 0.0, %v672
        %v674 = vpop.f32.mrf.mxu0
        %675 = vmatprep.mubr.f32.mxu0 %v593
        %676 = vmatmul.mubr.f32.gmra.mxu0 %v592
        %v677 = vpop.f32.mrf.mxu0
        %v678 = vadd.f32 0.0, %v677
        %v679 = vpop.f32.mrf.mxu0
        %680 = vmatprep.mubr.f32.mxu0 %v595
        %681 = vmatmul.mubr.f32.gmra.mxu0 %v594
        %v682 = vpop.f32.mrf.mxu0
        %v683 = vadd.f32 0.0, %v682
        %v684 = vpop.f32.mrf.mxu0
        %685 = vmatprep.mubr.f32.mxu0 %v597
        %686 = vmatmul.mubr.f32.gmra.mxu0 %v596
        %v687 = vpop.f32.mrf.mxu0
        %v688 = vadd.f32 0.0, %v687
        %v689 = vpop.f32.mrf.mxu0
        %690 = vmatprep.mubr.f32.mxu0 %v599
        %691 = vmatmul.mubr.f32.gmra.mxu0 %v598
        %v692 = vpop.f32.mrf.mxu0
        %v693 = vadd.f32 0.0, %v692
        %v694 = vpop.f32.mrf.mxu0
        %695 = vmatprep.mubr.f32.mxu0 %v601
        %696 = vmatmul.mubr.f32.gmra.mxu0 %v600
        %v697 = vpop.f32.mrf.mxu0
        %v698 = vadd.f32 0.0, %v697
        %v699 = vpop.f32.mrf.mxu0
        %700 = vmatprep.mubr.f32.mxu0 %v603
        %701 = vmatmul.mubr.f32.gmra.mxu0 %v602
        %v702 = vpop.f32.mrf.mxu0
        %v703 = vadd.f32 0.0, %v702
        %v704 = vpop.f32.mrf.mxu0
        %705 = vmatprep.mubr.f32.mxu0 %v605
        %706 = vmatmul.mubr.f32.gmra.mxu0 %v604
        %v707 = vpop.f32.mrf.mxu0
        %v708 = vadd.f32 0.0, %v707
        %v709 = vpop.f32.mrf.mxu0
        %710 = vdwg.mxu0
        %v711 = vld [vmem:[%s2 + $0x8] sm:$0xff]
        %vm712 = vcmask 64512
        %v714 = vsel %vm712, %v673, 0
        %v717 = vsel %vm712, %v678, 0
        %v720 = vsel %vm712, %v683, 0
        %v723 = vsel %vm712, %v688, 0
        %v726 = vsel %vm712, %v693, 0
        %v729 = vsel %vm712, %v698, 0
        %v732 = vsel %vm712, %v703, 0
        %v735 = vsel %vm712, %v708, 0
        %737 = vmatprep.subr.mxu0 0.0
        %738 = vmatpush1.msra.mxu0 0.0
        %739 = vmatprep.subr.mxu0 0.0
        %740 = vmatpush1.msra.mxu0 0.0
        %741 = vmatprep.subr.mxu0 0.0
        %742 = vmatpush1.msra.mxu0 0.0
        %743 = vmatprep.subr.mxu0 0.0
        %744 = vmatpush1.msra.mxu0 0.0
        %745 = vmatprep.subr.mxu0 0.0
        %746 = vmatpush1.msra.mxu0 0.0
        %747 = vmatprep.subr.mxu0 0.0
        %748 = vmatpush1.msra.mxu0 0.0
        %749 = vmatprep.subr.mxu0 0.0
        %750 = vmatpush1.msra.mxu0 0.0
        %751 = vmatprep.subr.mxu0 0.0
        %752 = vmatpush1.msra.mxu0 0.0
        %753 = vmatprep.subr.mxu0 0.0
        %754 = vmatpush1.msra.mxu0 0.0
        %755 = vmatprep.subr.mxu0 0.0
        %756 = vmatpush1.msra.mxu0 0.0
        %757 = vmatprep.subr.mxu0 0.0
        %758 = vmatpush1.msra.mxu0 0.0
        %759 = vmatprep.subr.mxu0 0.0
        %760 = vmatpush1.msra.mxu0 0.0
        %761 = vmatprep.subr.mxu0 0.0
        %762 = vmatpush1.msra.mxu0 0.0
        %763 = vmatprep.subr.mxu0 0.0
        %764 = vmatpush1.msra.mxu0 0.0
        %765 = vmatprep.subr.mxu0 0.0
        %766 = vmatpush1.msra.mxu0 0.0
        %767 = vmatprep.subr.mxu0 0.0
        %768 = vmatpush1.msra.mxu0 %v711
        %769 = vmatprep.subr.mxu0 0.0
        %770 = vmatpush2.msra.mxu0 0.0
        %771 = vmatprep.subr.mxu0 0.0
        %772 = vmatpush2.msra.mxu0 0.0
        %773 = vmatprep.subr.mxu0 0.0
        %774 = vmatpush2.msra.mxu0 0.0
        %775 = vmatprep.subr.mxu0 0.0
        %776 = vmatpush2.msra.mxu0 0.0
        %777 = vmatprep.subr.mxu0 0.0
        %778 = vmatpush2.msra.mxu0 0.0
        %779 = vmatprep.subr.mxu0 0.0
        %780 = vmatpush2.msra.mxu0 0.0
        %781 = vmatprep.subr.mxu0 0.0
        %782 = vmatpush2.msra.mxu0 0.0
        %783 = vmatprep.subr.mxu0 0.0
        %784 = vmatpush2.msra.mxu0 0.0
        %785 = vmatprep.subr.mxu0 0.0
        %786 = vmatpush2.msra.mxu0 0.0
        %787 = vmatprep.subr.mxu0 0.0
        %788 = vmatpush2.msra.mxu0 0.0
        %789 = vmatprep.subr.mxu0 0.0
        %790 = vmatpush2.msra.mxu0 0.0
        %791 = vmatprep.subr.mxu0 0.0
        %792 = vmatpush2.msra.mxu0 0.0
        %793 = vmatprep.subr.mxu0 0.0
        %794 = vmatpush2.msra.mxu0 0.0
        %795 = vmatprep.subr.mxu0 0.0
        %796 = vmatpush2.msra.mxu0 0.0
        %797 = vmatprep.subr.mxu0 0.0
        %798 = vmatpush2.msra.mxu0 0.0
        %799 = vmatprep.subr.mxu0 0.0
        %800 = vmatpush2.msra.mxu0 0.0
        %801 = vmatprep.mubr.f32.mxu0 0.0
        %802 = vmatmul.mubr.f32.gmra.mxu0 %v714
        %v803 = vpop.f32.mrf.mxu0
        %v804 = vadd.f32 0.0, %v803
        %v805 = vpop.f32.mrf.mxu0
        %806 = vmatprep.mubr.f32.mxu0 0.0
        %807 = vmatmul.mubr.f32.gmra.mxu0 %v717
        %v808 = vpop.f32.mrf.mxu0
        %v809 = vadd.f32 0.0, %v808
        %v810 = vpop.f32.mrf.mxu0
        %811 = vmatprep.mubr.f32.mxu0 0.0
        %812 = vmatmul.mubr.f32.gmra.mxu0 %v720
        %v813 = vpop.f32.mrf.mxu0
        %v814 = vadd.f32 0.0, %v813
        %v815 = vpop.f32.mrf.mxu0
        %816 = vmatprep.mubr.f32.mxu0 0.0
        %817 = vmatmul.mubr.f32.gmra.mxu0 %v723
        %v818 = vpop.f32.mrf.mxu0
        %v819 = vadd.f32 0.0, %v818
        %v820 = vpop.f32.mrf.mxu0
        %821 = vmatprep.mubr.f32.mxu0 0.0
        %822 = vmatmul.mubr.f32.gmra.mxu0 %v726
        %v823 = vpop.f32.mrf.mxu0
        %v824 = vadd.f32 0.0, %v823
        %v825 = vpop.f32.mrf.mxu0
        %826 = vmatprep.mubr.f32.mxu0 0.0
        %827 = vmatmul.mubr.f32.gmra.mxu0 %v729
        %v828 = vpop.f32.mrf.mxu0
        %v829 = vadd.f32 0.0, %v828
        %v830 = vpop.f32.mrf.mxu0
        %831 = vmatprep.mubr.f32.mxu0 0.0
        %832 = vmatmul.mubr.f32.gmra.mxu0 %v732
        %v833 = vpop.f32.mrf.mxu0
        %v834 = vadd.f32 0.0, %v833
        %v835 = vpop.f32.mrf.mxu0
        %836 = vmatprep.mubr.f32.mxu0 0.0
        %837 = vmatmul.mubr.f32.gmra.mxu0 %v735
        %v838 = vpop.f32.mrf.mxu0
        %v839 = vadd.f32 0.0, %v838
        %v840 = vpop.f32.mrf.mxu0
        %841 = vdwg.mxu0
        %v843 = vsel %vm712, %v550, 0
        %v846 = vsel %vm712, %v555, 0
        %v849 = vsel %vm712, %v560, 0
        %v852 = vsel %vm712, %v565, 0
        %v855 = vsel %vm712, %v570, 0
        %v858 = vsel %vm712, %v575, 0
        %v861 = vsel %vm712, %v580, 0
        %v864 = vsel %vm712, %v585, 0
        %866 = vmatprep.subr.mxu0 0.0
        %867 = vmatpush1.msra.mxu0 0.0
        %868 = vmatprep.subr.mxu0 0.0
        %869 = vmatpush1.msra.mxu0 0.0
        %870 = vmatprep.subr.mxu0 0.0
        %871 = vmatpush1.msra.mxu0 0.0
        %872 = vmatprep.subr.mxu0 0.0
        %873 = vmatpush1.msra.mxu0 0.0
        %874 = vmatprep.subr.mxu0 0.0
        %875 = vmatpush1.msra.mxu0 0.0
        %876 = vmatprep.subr.mxu0 0.0
        %877 = vmatpush1.msra.mxu0 0.0
        %878 = vmatprep.subr.mxu0 0.0
        %879 = vmatpush1.msra.mxu0 0.0
        %880 = vmatprep.subr.mxu0 0.0
        %881 = vmatpush1.msra.mxu0 0.0
        %882 = vmatprep.subr.mxu0 0.0
        %883 = vmatpush1.msra.mxu0 0.0
        %884 = vmatprep.subr.mxu0 0.0
        %885 = vmatpush1.msra.mxu0 0.0
        %886 = vmatprep.subr.mxu0 0.0
        %887 = vmatpush1.msra.mxu0 0.0
        %888 = vmatprep.subr.mxu0 0.0
        %889 = vmatpush1.msra.mxu0 0.0
        %890 = vmatprep.subr.mxu0 0.0
        %891 = vmatpush1.msra.mxu0 0.0
        %892 = vmatprep.subr.mxu0 0.0
        %893 = vmatpush1.msra.mxu0 0.0
        %894 = vmatprep.subr.mxu0 0.0
        %895 = vmatpush1.msra.mxu0 0.0
        %896 = vmatprep.subr.mxu0 0.0
        %897 = vmatpush1.msra.mxu0 %v588
        %898 = vmatprep.subr.mxu0 0.0
        %899 = vmatpush2.msra.mxu0 0.0
        %900 = vmatprep.subr.mxu0 0.0
        %901 = vmatpush2.msra.mxu0 0.0
        %902 = vmatprep.subr.mxu0 0.0
        %903 = vmatpush2.msra.mxu0 0.0
        %904 = vmatprep.subr.mxu0 0.0
        %905 = vmatpush2.msra.mxu0 0.0
        %906 = vmatprep.subr.mxu0 0.0
        %907 = vmatpush2.msra.mxu0 0.0
        %908 = vmatprep.subr.mxu0 0.0
        %909 = vmatpush2.msra.mxu0 0.0
        %910 = vmatprep.subr.mxu0 0.0
        %911 = vmatpush2.msra.mxu0 0.0
        %912 = vmatprep.subr.mxu0 0.0
        %913 = vmatpush2.msra.mxu0 0.0
        %914 = vmatprep.subr.mxu0 0.0
        %915 = vmatpush2.msra.mxu0 0.0
        %916 = vmatprep.subr.mxu0 0.0
        %917 = vmatpush2.msra.mxu0 0.0
        %918 = vmatprep.subr.mxu0 0.0
        %919 = vmatpush2.msra.mxu0 0.0
        %920 = vmatprep.subr.mxu0 0.0
        %921 = vmatpush2.msra.mxu0 0.0
        %922 = vmatprep.subr.mxu0 0.0
        %923 = vmatpush2.msra.mxu0 0.0
        %924 = vmatprep.subr.mxu0 0.0
        %925 = vmatpush2.msra.mxu0 0.0
        %926 = vmatprep.subr.mxu0 0.0
        %927 = vmatpush2.msra.mxu0 0.0
        %928 = vmatprep.subr.mxu0 0.0
        %929 = vmatpush2.msra.mxu0 0.0
        %930 = vmatprep.mubr.f32.mxu0 0.0
        %931 = vmatmul.mubr.f32.gmra.mxu0 %v843
        %v932 = vpop.f32.mrf.mxu0
        %v933 = vadd.f32 %v804, %v932
        %v934 = vpop.f32.mrf.mxu0
        %935 = vmatprep.mubr.f32.mxu0 0.0
        %936 = vmatmul.mubr.f32.gmra.mxu0 %v846
        %v937 = vpop.f32.mrf.mxu0
        %v938 = vadd.f32 %v809, %v937
        %v939 = vpop.f32.mrf.mxu0
        %940 = vmatprep.mubr.f32.mxu0 0.0
        %941 = vmatmul.mubr.f32.gmra.mxu0 %v849
        %v942 = vpop.f32.mrf.mxu0
        %v943 = vadd.f32 %v814, %v942
        %v944 = vpop.f32.mrf.mxu0
        %945 = vmatprep.mubr.f32.mxu0 0.0
        %946 = vmatmul.mubr.f32.gmra.mxu0 %v852
        %v947 = vpop.f32.mrf.mxu0
        %v948 = vadd.f32 %v819, %v947
        %v949 = vpop.f32.mrf.mxu0
        %950 = vmatprep.mubr.f32.mxu0 0.0
        %951 = vmatmul.mubr.f32.gmra.mxu0 %v855
        %v952 = vpop.f32.mrf.mxu0
        %v953 = vadd.f32 %v824, %v952
        %v954 = vpop.f32.mrf.mxu0
        %955 = vmatprep.mubr.f32.mxu0 0.0
        %956 = vmatmul.mubr.f32.gmra.mxu0 %v858
        %v957 = vpop.f32.mrf.mxu0
        %v958 = vadd.f32 %v829, %v957
        %v959 = vpop.f32.mrf.mxu0
        %960 = vmatprep.mubr.f32.mxu0 0.0
        %961 = vmatmul.mubr.f32.gmra.mxu0 %v861
        %v962 = vpop.f32.mrf.mxu0
        %v963 = vadd.f32 %v834, %v962
        %v964 = vpop.f32.mrf.mxu0
        %965 = vmatprep.mubr.f32.mxu0 0.0
        %966 = vmatmul.mubr.f32.gmra.mxu0 %v864
        %v967 = vpop.f32.mrf.mxu0
        %v968 = vadd.f32 %v839, %v967
        %v969 = vpop.f32.mrf.mxu0
        %970 = vdwg.mxu0
        %s971 = scalar_lea.vmem %s1, 256
        %v972 = vld [vmem:[%s971] sm:$0xff]
        %v973 = vld [vmem:[%s971 + $0x8] sm:$0xff]
        %v974 = vld [vmem:[%s971 + $0x10] sm:$0xff]
        %v975 = vld [vmem:[%s971 + $0x18] sm:$0xff]
        %v976 = vld [vmem:[%s971 + $0x20] sm:$0xff]
        %v977 = vld [vmem:[%s971 + $0x28] sm:$0xff]
        %v978 = vld [vmem:[%s971 + $0x30] sm:$0xff]
        %v979 = vld [vmem:[%s971 + $0x38] sm:$0xff]
        %v980 = vld [vmem:[%s971 + $0x40] sm:$0xff]
        %v981 = vld [vmem:[%s971 + $0x48] sm:$0xff]
        %v982 = vld [vmem:[%s971 + $0x50] sm:$0xff]
        %v983 = vld [vmem:[%s971 + $0x58] sm:$0xff]
        %v984 = vld [vmem:[%s971 + $0x60] sm:$0xff]
        %v985 = vld [vmem:[%s971 + $0x68] sm:$0xff]
        %v986 = vld [vmem:[%s971 + $0x70] sm:$0xff]
        %v987 = vld [vmem:[%s971 + $0x78] sm:$0xff]
        %988 = vmatprep.subr.mxu0 0.0
        %989 = vmatpush1.msra.mxu0 %v450
        %990 = vmatprep.subr.mxu0 0.0
        %991 = vmatpush1.msra.mxu0 %v449
        %992 = vmatprep.subr.mxu0 0.0
        %993 = vmatpush1.msra.mxu0 %v448
        %994 = vmatprep.subr.mxu0 0.0
        %995 = vmatpush1.msra.mxu0 %v447
        %996 = vmatprep.subr.mxu0 0.0
        %997 = vmatpush1.msra.mxu0 %v446
        %998 = vmatprep.subr.mxu0 0.0
        %999 = vmatpush1.msra.mxu0 %v445
        %1000 = vmatprep.subr.mxu0 0.0
        %1001 = vmatpush1.msra.mxu0 %v444
        %1002 = vmatprep.subr.mxu0 0.0
        %1003 = vmatpush1.msra.mxu0 %v443
        %1004 = vmatprep.subr.mxu0 0.0
        %1005 = vmatpush1.msra.mxu0 %v442
        %1006 = vmatprep.subr.mxu0 0.0
        %1007 = vmatpush1.msra.mxu0 %v441
        %1008 = vmatprep.subr.mxu0 0.0
        %1009 = vmatpush1.msra.mxu0 %v440
        %1010 = vmatprep.subr.mxu0 0.0
        %1011 = vmatpush1.msra.mxu0 %v439
        %1012 = vmatprep.subr.mxu0 0.0
        %1013 = vmatpush1.msra.mxu0 %v438
        %1014 = vmatprep.subr.mxu0 0.0
        %1015 = vmatpush1.msra.mxu0 %v437
        %1016 = vmatprep.subr.mxu0 0.0
        %1017 = vmatpush1.msra.mxu0 %v436
        %1018 = vmatprep.subr.mxu0 0.0
        %1019 = vmatpush1.msra.mxu0 %v435
        %1020 = vmatprep.subr.mxu0 0.0
        %1021 = vmatpush2.msra.mxu0 %v466
        %1022 = vmatprep.subr.mxu0 0.0
        %1023 = vmatpush2.msra.mxu0 %v465
        %1024 = vmatprep.subr.mxu0 0.0
        %1025 = vmatpush2.msra.mxu0 %v464
        %1026 = vmatprep.subr.mxu0 0.0
        %1027 = vmatpush2.msra.mxu0 %v463
        %1028 = vmatprep.subr.mxu0 0.0
        %1029 = vmatpush2.msra.mxu0 %v462
        %1030 = vmatprep.subr.mxu0 0.0
        %1031 = vmatpush2.msra.mxu0 %v461
        %1032 = vmatprep.subr.mxu0 0.0
        %1033 = vmatpush2.msra.mxu0 %v460
        %1034 = vmatprep.subr.mxu0 0.0
        %1035 = vmatpush2.msra.mxu0 %v459
        %1036 = vmatprep.subr.mxu0 0.0
        %1037 = vmatpush2.msra.mxu0 %v458
        %1038 = vmatprep.subr.mxu0 0.0
        %1039 = vmatpush2.msra.mxu0 %v457
        %1040 = vmatprep.subr.mxu0 0.0
        %1041 = vmatpush2.msra.mxu0 %v456
        %1042 = vmatprep.subr.mxu0 0.0
        %1043 = vmatpush2.msra.mxu0 %v455
        %1044 = vmatprep.subr.mxu0 0.0
        %1045 = vmatpush2.msra.mxu0 %v454
        %1046 = vmatprep.subr.mxu0 0.0
        %1047 = vmatpush2.msra.mxu0 %v453
        %1048 = vmatprep.subr.mxu0 0.0
        %1049 = vmatpush2.msra.mxu0 %v452
        %1050 = vmatprep.subr.mxu0 0.0
        %1051 = vmatpush2.msra.mxu0 %v451
        %1052 = vmatprep.mubr.f32.mxu0 %v973
        %1053 = vmatmul.mubr.f32.gmra.mxu0 %v972
        %v1054 = vpop.f32.mrf.mxu0
        %v1055 = vadd.f32 0.0, %v1054
        %v1056 = vpop.f32.mrf.mxu0
        %1057 = vmatprep.mubr.f32.mxu0 %v975
        %1058 = vmatmul.mubr.f32.gmra.mxu0 %v974
        %v1059 = vpop.f32.mrf.mxu0
        %v1060 = vadd.f32 0.0, %v1059
        %v1061 = vpop.f32.mrf.mxu0
        %1062 = vmatprep.mubr.f32.mxu0 %v977
        %1063 = vmatmul.mubr.f32.gmra.mxu0 %v976
        %v1064 = vpop.f32.mrf.mxu0
        %v1065 = vadd.f32 0.0, %v1064
        %v1066 = vpop.f32.mrf.mxu0
        %1067 = vmatprep.mubr.f32.mxu0 %v979
        %1068 = vmatmul.mubr.f32.gmra.mxu0 %v978
        %v1069 = vpop.f32.mrf.mxu0
        %v1070 = vadd.f32 0.0, %v1069
        %v1071 = vpop.f32.mrf.mxu0
        %1072 = vmatprep.mubr.f32.mxu0 %v981
        %1073 = vmatmul.mubr.f32.gmra.mxu0 %v980
        %v1074 = vpop.f32.mrf.mxu0
        %v1075 = vadd.f32 0.0, %v1074
        %v1076 = vpop.f32.mrf.mxu0
        %1077 = vmatprep.mubr.f32.mxu0 %v983
        %1078 = vmatmul.mubr.f32.gmra.mxu0 %v982
        %v1079 = vpop.f32.mrf.mxu0
        %v1080 = vadd.f32 0.0, %v1079
        %v1081 = vpop.f32.mrf.mxu0
        %1082 = vmatprep.mubr.f32.mxu0 %v985
        %1083 = vmatmul.mubr.f32.gmra.mxu0 %v984
        %v1084 = vpop.f32.mrf.mxu0
        %v1085 = vadd.f32 0.0, %v1084
        %v1086 = vpop.f32.mrf.mxu0
        %1087 = vmatprep.mubr.f32.mxu0 %v987
        %1088 = vmatmul.mubr.f32.gmra.mxu0 %v986
        %v1089 = vpop.f32.mrf.mxu0
        %v1090 = vadd.f32 0.0, %v1089
        %v1091 = vpop.f32.mrf.mxu0
        %1092 = vdwg.mxu0
        %v1093 = vld [vmem:[%s2 + $0x10] sm:$0xff]
        %v1095 = vsel %vm712, %v1055, 0
        %v1098 = vsel %vm712, %v1060, 0
        %v1101 = vsel %vm712, %v1065, 0
        %v1104 = vsel %vm712, %v1070, 0
        %v1107 = vsel %vm712, %v1075, 0
        %v1110 = vsel %vm712, %v1080, 0
        %v1113 = vsel %vm712, %v1085, 0
        %v1116 = vsel %vm712, %v1090, 0
        %1118 = vmatprep.subr.mxu0 0.0
        %1119 = vmatpush1.msra.mxu0 0.0
        %1120 = vmatprep.subr.mxu0 0.0
        %1121 = vmatpush1.msra.mxu0 0.0
        %1122 = vmatprep.subr.mxu0 0.0
        %1123 = vmatpush1.msra.mxu0 0.0
        %1124 = vmatprep.subr.mxu0 0.0
        %1125 = vmatpush1.msra.mxu0 0.0
        %1126 = vmatprep.subr.mxu0 0.0
        %1127 = vmatpush1.msra.mxu0 0.0
        %1128 = vmatprep.subr.mxu0 0.0
        %1129 = vmatpush1.msra.mxu0 0.0
        %1130 = vmatprep.subr.mxu0 0.0
        %1131 = vmatpush1.msra.mxu0 0.0
        %1132 = vmatprep.subr.mxu0 0.0
        %1133 = vmatpush1.msra.mxu0 0.0
        %1134 = vmatprep.subr.mxu0 0.0
        %1135 = vmatpush1.msra.mxu0 0.0
        %1136 = vmatprep.subr.mxu0 0.0
        %1137 = vmatpush1.msra.mxu0 0.0
        %1138 = vmatprep.subr.mxu0 0.0
        %1139 = vmatpush1.msra.mxu0 0.0
        %1140 = vmatprep.subr.mxu0 0.0
        %1141 = vmatpush1.msra.mxu0 0.0
        %1142 = vmatprep.subr.mxu0 0.0
        %1143 = vmatpush1.msra.mxu0 0.0
        %1144 = vmatprep.subr.mxu0 0.0
        %1145 = vmatpush1.msra.mxu0 0.0
        %1146 = vmatprep.subr.mxu0 0.0
        %1147 = vmatpush1.msra.mxu0 0.0
        %1148 = vmatprep.subr.mxu0 0.0
        %1149 = vmatpush1.msra.mxu0 %v1093
        %1150 = vmatprep.subr.mxu0 0.0
        %1151 = vmatpush2.msra.mxu0 0.0
        %1152 = vmatprep.subr.mxu0 0.0
        %1153 = vmatpush2.msra.mxu0 0.0
        %1154 = vmatprep.subr.mxu0 0.0
        %1155 = vmatpush2.msra.mxu0 0.0
        %1156 = vmatprep.subr.mxu0 0.0
        %1157 = vmatpush2.msra.mxu0 0.0
        %1158 = vmatprep.subr.mxu0 0.0
        %1159 = vmatpush2.msra.mxu0 0.0
        %1160 = vmatprep.subr.mxu0 0.0
        %1161 = vmatpush2.msra.mxu0 0.0
        %1162 = vmatprep.subr.mxu0 0.0
        %1163 = vmatpush2.msra.mxu0 0.0
        %1164 = vmatprep.subr.mxu0 0.0
        %1165 = vmatpush2.msra.mxu0 0.0
        %1166 = vmatprep.subr.mxu0 0.0
        %1167 = vmatpush2.msra.mxu0 0.0
        %1168 = vmatprep.subr.mxu0 0.0
        %1169 = vmatpush2.msra.mxu0 0.0
        %1170 = vmatprep.subr.mxu0 0.0
        %1171 = vmatpush2.msra.mxu0 0.0
        %1172 = vmatprep.subr.mxu0 0.0
        %1173 = vmatpush2.msra.mxu0 0.0
        %1174 = vmatprep.subr.mxu0 0.0
        %1175 = vmatpush2.msra.mxu0 0.0
        %1176 = vmatprep.subr.mxu0 0.0
        %1177 = vmatpush2.msra.mxu0 0.0
        %1178 = vmatprep.subr.mxu0 0.0
        %1179 = vmatpush2.msra.mxu0 0.0
        %1180 = vmatprep.subr.mxu0 0.0
        %1181 = vmatpush2.msra.mxu0 0.0
        %1182 = vmatprep.mubr.f32.mxu0 0.0
        %1183 = vmatmul.mubr.f32.gmra.mxu0 %v1095
        %v1184 = vpop.f32.mrf.mxu0
        %v1185 = vadd.f32 0.0, %v1184
        %v1186 = vpop.f32.mrf.mxu0
        %1187 = vmatprep.mubr.f32.mxu0 0.0
        %1188 = vmatmul.mubr.f32.gmra.mxu0 %v1098
        %v1189 = vpop.f32.mrf.mxu0
        %v1190 = vadd.f32 0.0, %v1189
        %v1191 = vpop.f32.mrf.mxu0
        %1192 = vmatprep.mubr.f32.mxu0 0.0
        %1193 = vmatmul.mubr.f32.gmra.mxu0 %v1101
        %v1194 = vpop.f32.mrf.mxu0
        %v1195 = vadd.f32 0.0, %v1194
        %v1196 = vpop.f32.mrf.mxu0
        %1197 = vmatprep.mubr.f32.mxu0 0.0
        %1198 = vmatmul.mubr.f32.gmra.mxu0 %v1104
        %v1199 = vpop.f32.mrf.mxu0
        %v1200 = vadd.f32 0.0, %v1199
        %v1201 = vpop.f32.mrf.mxu0
        %1202 = vmatprep.mubr.f32.mxu0 0.0
        %1203 = vmatmul.mubr.f32.gmra.mxu0 %v1107
        %v1204 = vpop.f32.mrf.mxu0
        %v1205 = vadd.f32 0.0, %v1204
        %v1206 = vpop.f32.mrf.mxu0
        %1207 = vmatprep.mubr.f32.mxu0 0.0
        %1208 = vmatmul.mubr.f32.gmra.mxu0 %v1110
        %v1209 = vpop.f32.mrf.mxu0
        %v1210 = vadd.f32 0.0, %v1209
        %v1211 = vpop.f32.mrf.mxu0
        %1212 = vmatprep.mubr.f32.mxu0 0.0
        %1213 = vmatmul.mubr.f32.gmra.mxu0 %v1113
        %v1214 = vpop.f32.mrf.mxu0
        %v1215 = vadd.f32 0.0, %v1214
        %v1216 = vpop.f32.mrf.mxu0
        %1217 = vmatprep.mubr.f32.mxu0 0.0
        %1218 = vmatmul.mubr.f32.gmra.mxu0 %v1116
        %v1219 = vpop.f32.mrf.mxu0
        %v1220 = vadd.f32 0.0, %v1219
        %v1221 = vpop.f32.mrf.mxu0
        %1222 = vdwg.mxu0
        %v1223 = vadd.f32 %v933, %v1185
        %v1224 = vadd.f32 %v938, %v1190
        %v1225 = vadd.f32 %v943, %v1195
        %v1226 = vadd.f32 %v948, %v1200
        %v1227 = vadd.f32 %v953, %v1205
        %v1228 = vadd.f32 %v958, %v1210
        %v1229 = vadd.f32 %v963, %v1215
        %v1230 = vadd.f32 %v968, %v1220
        %s1231 = scalar_lea.vmem %s1, 384
        %v1232 = vld [vmem:[%s1231] sm:$0xff]
        %v1233 = vld [vmem:[%s1231 + $0x8] sm:$0xff]
        %v1234 = vld [vmem:[%s1231 + $0x10] sm:$0xff]
        %v1235 = vld [vmem:[%s1231 + $0x18] sm:$0xff]
        %v1236 = vld [vmem:[%s1231 + $0x20] sm:$0xff]
        %v1237 = vld [vmem:[%s1231 + $0x28] sm:$0xff]
        %v1238 = vld [vmem:[%s1231 + $0x30] sm:$0xff]
        %v1239 = vld [vmem:[%s1231 + $0x38] sm:$0xff]
        %v1240 = vld [vmem:[%s1231 + $0x40] sm:$0xff]
        %v1241 = vld [vmem:[%s1231 + $0x48] sm:$0xff]
        %v1242 = vld [vmem:[%s1231 + $0x50] sm:$0xff]
        %v1243 = vld [vmem:[%s1231 + $0x58] sm:$0xff]
        %v1244 = vld [vmem:[%s1231 + $0x60] sm:$0xff]
        %v1245 = vld [vmem:[%s1231 + $0x68] sm:$0xff]
        %v1246 = vld [vmem:[%s1231 + $0x70] sm:$0xff]
        %v1247 = vld [vmem:[%s1231 + $0x78] sm:$0xff]
        %1248 = vmatprep.subr.mxu0 0.0
        %1249 = vmatpush1.msra.mxu0 %v450
        %1250 = vmatprep.subr.mxu0 0.0
        %1251 = vmatpush1.msra.mxu0 %v449
        %1252 = vmatprep.subr.mxu0 0.0
        %1253 = vmatpush1.msra.mxu0 %v448
        %1254 = vmatprep.subr.mxu0 0.0
        %1255 = vmatpush1.msra.mxu0 %v447
        %1256 = vmatprep.subr.mxu0 0.0
        %1257 = vmatpush1.msra.mxu0 %v446
        %1258 = vmatprep.subr.mxu0 0.0
        %1259 = vmatpush1.msra.mxu0 %v445
        %1260 = vmatprep.subr.mxu0 0.0
        %1261 = vmatpush1.msra.mxu0 %v444
        %1262 = vmatprep.subr.mxu0 0.0
        %1263 = vmatpush1.msra.mxu0 %v443
        %1264 = vmatprep.subr.mxu0 0.0
        %1265 = vmatpush1.msra.mxu0 %v442
        %1266 = vmatprep.subr.mxu0 0.0
        %1267 = vmatpush1.msra.mxu0 %v441
        %1268 = vmatprep.subr.mxu0 0.0
        %1269 = vmatpush1.msra.mxu0 %v440
        %1270 = vmatprep.subr.mxu0 0.0
        %1271 = vmatpush1.msra.mxu0 %v439
        %1272 = vmatprep.subr.mxu0 0.0
        %1273 = vmatpush1.msra.mxu0 %v438
        %1274 = vmatprep.subr.mxu0 0.0
        %1275 = vmatpush1.msra.mxu0 %v437
        %1276 = vmatprep.subr.mxu0 0.0
        %1277 = vmatpush1.msra.mxu0 %v436
        %1278 = vmatprep.subr.mxu0 0.0
        %1279 = vmatpush1.msra.mxu0 %v435
        %1280 = vmatprep.subr.mxu0 0.0
        %1281 = vmatpush2.msra.mxu0 %v466
        %1282 = vmatprep.subr.mxu0 0.0
        %1283 = vmatpush2.msra.mxu0 %v465
        %1284 = vmatprep.subr.mxu0 0.0
        %1285 = vmatpush2.msra.mxu0 %v464
        %1286 = vmatprep.subr.mxu0 0.0
        %1287 = vmatpush2.msra.mxu0 %v463
        %1288 = vmatprep.subr.mxu0 0.0
        %1289 = vmatpush2.msra.mxu0 %v462
        %1290 = vmatprep.subr.mxu0 0.0
        %1291 = vmatpush2.msra.mxu0 %v461
        %1292 = vmatprep.subr.mxu0 0.0
        %1293 = vmatpush2.msra.mxu0 %v460
        %1294 = vmatprep.subr.mxu0 0.0
        %1295 = vmatpush2.msra.mxu0 %v459
        %1296 = vmatprep.subr.mxu0 0.0
        %1297 = vmatpush2.msra.mxu0 %v458
        %1298 = vmatprep.subr.mxu0 0.0
        %1299 = vmatpush2.msra.mxu0 %v457
        %1300 = vmatprep.subr.mxu0 0.0
        %1301 = vmatpush2.msra.mxu0 %v456
        %1302 = vmatprep.subr.mxu0 0.0
        %1303 = vmatpush2.msra.mxu0 %v455
        %1304 = vmatprep.subr.mxu0 0.0
        %1305 = vmatpush2.msra.mxu0 %v454
        %1306 = vmatprep.subr.mxu0 0.0
        %1307 = vmatpush2.msra.mxu0 %v453
        %1308 = vmatprep.subr.mxu0 0.0
        %1309 = vmatpush2.msra.mxu0 %v452
        %1310 = vmatprep.subr.mxu0 0.0
        %1311 = vmatpush2.msra.mxu0 %v451
        %1312 = vmatprep.mubr.f32.mxu0 %v1233
        %1313 = vmatmul.mubr.f32.gmra.mxu0 %v1232
        %v1314 = vpop.f32.mrf.mxu0
        %v1315 = vadd.f32 0.0, %v1314
        %v1316 = vpop.f32.mrf.mxu0
        %1317 = vmatprep.mubr.f32.mxu0 %v1235
        %1318 = vmatmul.mubr.f32.gmra.mxu0 %v1234
        %v1319 = vpop.f32.mrf.mxu0
        %v1320 = vadd.f32 0.0, %v1319
        %v1321 = vpop.f32.mrf.mxu0
        %1322 = vmatprep.mubr.f32.mxu0 %v1237
        %1323 = vmatmul.mubr.f32.gmra.mxu0 %v1236
        %v1324 = vpop.f32.mrf.mxu0
        %v1325 = vadd.f32 0.0, %v1324
        %v1326 = vpop.f32.mrf.mxu0
        %1327 = vmatprep.mubr.f32.mxu0 %v1239
        %1328 = vmatmul.mubr.f32.gmra.mxu0 %v1238
        %v1329 = vpop.f32.mrf.mxu0
        %v1330 = vadd.f32 0.0, %v1329
        %v1331 = vpop.f32.mrf.mxu0
        %1332 = vmatprep.mubr.f32.mxu0 %v1241
        %1333 = vmatmul.mubr.f32.gmra.mxu0 %v1240
        %v1334 = vpop.f32.mrf.mxu0
        %v1335 = vadd.f32 0.0, %v1334
        %v1336 = vpop.f32.mrf.mxu0
        %1337 = vmatprep.mubr.f32.mxu0 %v1243
        %1338 = vmatmul.mubr.f32.gmra.mxu0 %v1242
        %v1339 = vpop.f32.mrf.mxu0
        %v1340 = vadd.f32 0.0, %v1339
        %v1341 = vpop.f32.mrf.mxu0
        %1342 = vmatprep.mubr.f32.mxu0 %v1245
        %1343 = vmatmul.mubr.f32.gmra.mxu0 %v1244
        %v1344 = vpop.f32.mrf.mxu0
        %v1345 = vadd.f32 0.0, %v1344
        %v1346 = vpop.f32.mrf.mxu0
        %1347 = vmatprep.mubr.f32.mxu0 %v1247
        %1348 = vmatmul.mubr.f32.gmra.mxu0 %v1246
        %v1349 = vpop.f32.mrf.mxu0
        %v1350 = vadd.f32 0.0, %v1349
        %v1351 = vpop.f32.mrf.mxu0
        %1352 = vdwg.mxu0
        %v1353 = vld [vmem:[%s2 + $0x18] sm:$0xff]
        %v1355 = vsel %vm712, %v1315, 0
        %v1358 = vsel %vm712, %v1320, 0
        %v1361 = vsel %vm712, %v1325, 0
        %v1364 = vsel %vm712, %v1330, 0
        %v1367 = vsel %vm712, %v1335, 0
        %v1370 = vsel %vm712, %v1340, 0
        %v1373 = vsel %vm712, %v1345, 0
        %v1376 = vsel %vm712, %v1350, 0
        %1378 = vmatprep.subr.mxu0 0.0
        %1379 = vmatpush1.msra.mxu0 0.0
        %1380 = vmatprep.subr.mxu0 0.0
        %1381 = vmatpush1.msra.mxu0 0.0
        %1382 = vmatprep.subr.mxu0 0.0
        %1383 = vmatpush1.msra.mxu0 0.0
        %1384 = vmatprep.subr.mxu0 0.0
        %1385 = vmatpush1.msra.mxu0 0.0
        %1386 = vmatprep.subr.mxu0 0.0
        %1387 = vmatpush1.msra.mxu0 0.0
        %1388 = vmatprep.subr.mxu0 0.0
        %1389 = vmatpush1.msra.mxu0 0.0
        %1390 = vmatprep.subr.mxu0 0.0
        %1391 = vmatpush1.msra.mxu0 0.0
        %1392 = vmatprep.subr.mxu0 0.0
        %1393 = vmatpush1.msra.mxu0 0.0
        %1394 = vmatprep.subr.mxu0 0.0
        %1395 = vmatpush1.msra.mxu0 0.0
        %1396 = vmatprep.subr.mxu0 0.0
        %1397 = vmatpush1.msra.mxu0 0.0
        %1398 = vmatprep.subr.mxu0 0.0
        %1399 = vmatpush1.msra.mxu0 0.0
        %1400 = vmatprep.subr.mxu0 0.0
        %1401 = vmatpush1.msra.mxu0 0.0
        %1402 = vmatprep.subr.mxu0 0.0
        %1403 = vmatpush1.msra.mxu0 0.0
        %1404 = vmatprep.subr.mxu0 0.0
        %1405 = vmatpush1.msra.mxu0 0.0
        %1406 = vmatprep.subr.mxu0 0.0
        %1407 = vmatpush1.msra.mxu0 0.0
        %1408 = vmatprep.subr.mxu0 0.0
        %1409 = vmatpush1.msra.mxu0 %v1353
        %1410 = vmatprep.subr.mxu0 0.0
        %1411 = vmatpush2.msra.mxu0 0.0
        %1412 = vmatprep.subr.mxu0 0.0
        %1413 = vmatpush2.msra.mxu0 0.0
        %1414 = vmatprep.subr.mxu0 0.0
        %1415 = vmatpush2.msra.mxu0 0.0
        %1416 = vmatprep.subr.mxu0 0.0
        %1417 = vmatpush2.msra.mxu0 0.0
        %1418 = vmatprep.subr.mxu0 0.0
        %1419 = vmatpush2.msra.mxu0 0.0
        %1420 = vmatprep.subr.mxu0 0.0
        %1421 = vmatpush2.msra.mxu0 0.0
        %1422 = vmatprep.subr.mxu0 0.0
        %1423 = vmatpush2.msra.mxu0 0.0
        %1424 = vmatprep.subr.mxu0 0.0
        %1425 = vmatpush2.msra.mxu0 0.0
        %1426 = vmatprep.subr.mxu0 0.0
        %1427 = vmatpush2.msra.mxu0 0.0
        %1428 = vmatprep.subr.mxu0 0.0
        %1429 = vmatpush2.msra.mxu0 0.0
        %1430 = vmatprep.subr.mxu0 0.0
        %1431 = vmatpush2.msra.mxu0 0.0
        %1432 = vmatprep.subr.mxu0 0.0
        %1433 = vmatpush2.msra.mxu0 0.0
        %1434 = vmatprep.subr.mxu0 0.0
        %1435 = vmatpush2.msra.mxu0 0.0
        %1436 = vmatprep.subr.mxu0 0.0
        %1437 = vmatpush2.msra.mxu0 0.0
        %1438 = vmatprep.subr.mxu0 0.0
        %1439 = vmatpush2.msra.mxu0 0.0
        %1440 = vmatprep.subr.mxu0 0.0
        %1441 = vmatpush2.msra.mxu0 0.0
        %1442 = vmatprep.mubr.f32.mxu0 0.0
        %1443 = vmatmul.mubr.f32.gmra.mxu0 %v1355
        %v1444 = vpop.f32.mrf.mxu0
        %v1445 = vadd.f32 0.0, %v1444
        %v1446 = vpop.f32.mrf.mxu0
        %1447 = vmatprep.mubr.f32.mxu0 0.0
        %1448 = vmatmul.mubr.f32.gmra.mxu0 %v1358
        %v1449 = vpop.f32.mrf.mxu0
        %v1450 = vadd.f32 0.0, %v1449
        %v1451 = vpop.f32.mrf.mxu0
        %1452 = vmatprep.mubr.f32.mxu0 0.0
        %1453 = vmatmul.mubr.f32.gmra.mxu0 %v1361
        %v1454 = vpop.f32.mrf.mxu0
        %v1455 = vadd.f32 0.0, %v1454
        %v1456 = vpop.f32.mrf.mxu0
        %1457 = vmatprep.mubr.f32.mxu0 0.0
        %1458 = vmatmul.mubr.f32.gmra.mxu0 %v1364
        %v1459 = vpop.f32.mrf.mxu0
        %v1460 = vadd.f32 0.0, %v1459
        %v1461 = vpop.f32.mrf.mxu0
        %1462 = vmatprep.mubr.f32.mxu0 0.0
        %1463 = vmatmul.mubr.f32.gmra.mxu0 %v1367
        %v1464 = vpop.f32.mrf.mxu0
        %v1465 = vadd.f32 0.0, %v1464
        %v1466 = vpop.f32.mrf.mxu0
        %1467 = vmatprep.mubr.f32.mxu0 0.0
        %1468 = vmatmul.mubr.f32.gmra.mxu0 %v1370
        %v1469 = vpop.f32.mrf.mxu0
        %v1470 = vadd.f32 0.0, %v1469
        %v1471 = vpop.f32.mrf.mxu0
        %1472 = vmatprep.mubr.f32.mxu0 0.0
        %1473 = vmatmul.mubr.f32.gmra.mxu0 %v1373
        %v1474 = vpop.f32.mrf.mxu0
        %v1475 = vadd.f32 0.0, %v1474
        %v1476 = vpop.f32.mrf.mxu0
        %1477 = vmatprep.mubr.f32.mxu0 0.0
        %1478 = vmatmul.mubr.f32.gmra.mxu0 %v1376
        %v1479 = vpop.f32.mrf.mxu0
        %v1480 = vadd.f32 0.0, %v1479
        %v1481 = vpop.f32.mrf.mxu0
        %1482 = vdwg.mxu0
        %v1483 = vadd.f32 %v1223, %v1445
        %v1484 = vadd.f32 %v1224, %v1450
        %v1485 = vadd.f32 %v1225, %v1455
        %v1486 = vadd.f32 %v1226, %v1460
        %v1487 = vadd.f32 %v1227, %v1465
        %v1488 = vadd.f32 %v1228, %v1470
        %v1489 = vadd.f32 %v1229, %v1475
        %v1490 = vadd.f32 %v1230, %v1480
        %s1491 = scalar_lea.vmem %s1, 512
        %v1492 = vld [vmem:[%s1491] sm:$0xff]
        %v1493 = vld [vmem:[%s1491 + $0x8] sm:$0xff]
        %v1494 = vld [vmem:[%s1491 + $0x10] sm:$0xff]
        %v1495 = vld [vmem:[%s1491 + $0x18] sm:$0xff]
        %v1496 = vld [vmem:[%s1491 + $0x20] sm:$0xff]
        %v1497 = vld [vmem:[%s1491 + $0x28] sm:$0xff]
        %v1498 = vld [vmem:[%s1491 + $0x30] sm:$0xff]
        %v1499 = vld [vmem:[%s1491 + $0x38] sm:$0xff]
        %v1500 = vld [vmem:[%s1491 + $0x40] sm:$0xff]
        %v1501 = vld [vmem:[%s1491 + $0x48] sm:$0xff]
        %v1502 = vld [vmem:[%s1491 + $0x50] sm:$0xff]
        %v1503 = vld [vmem:[%s1491 + $0x58] sm:$0xff]
        %v1504 = vld [vmem:[%s1491 + $0x60] sm:$0xff]
        %v1505 = vld [vmem:[%s1491 + $0x68] sm:$0xff]
        %v1506 = vld [vmem:[%s1491 + $0x70] sm:$0xff]
        %v1507 = vld [vmem:[%s1491 + $0x78] sm:$0xff]
        %1508 = vmatprep.subr.mxu0 0.0
        %1509 = vmatpush1.msra.mxu0 %v450
        %1510 = vmatprep.subr.mxu0 0.0
        %1511 = vmatpush1.msra.mxu0 %v449
        %1512 = vmatprep.subr.mxu0 0.0
        %1513 = vmatpush1.msra.mxu0 %v448
        %1514 = vmatprep.subr.mxu0 0.0
        %1515 = vmatpush1.msra.mxu0 %v447
        %1516 = vmatprep.subr.mxu0 0.0
        %1517 = vmatpush1.msra.mxu0 %v446
        %1518 = vmatprep.subr.mxu0 0.0
        %1519 = vmatpush1.msra.mxu0 %v445
        %1520 = vmatprep.subr.mxu0 0.0
        %1521 = vmatpush1.msra.mxu0 %v444
        %1522 = vmatprep.subr.mxu0 0.0
        %1523 = vmatpush1.msra.mxu0 %v443
        %1524 = vmatprep.subr.mxu0 0.0
        %1525 = vmatpush1.msra.mxu0 %v442
        %1526 = vmatprep.subr.mxu0 0.0
        %1527 = vmatpush1.msra.mxu0 %v441
        %1528 = vmatprep.subr.mxu0 0.0
        %1529 = vmatpush1.msra.mxu0 %v440
        %1530 = vmatprep.subr.mxu0 0.0
        %1531 = vmatpush1.msra.mxu0 %v439
        %1532 = vmatprep.subr.mxu0 0.0
        %1533 = vmatpush1.msra.mxu0 %v438
        %1534 = vmatprep.subr.mxu0 0.0
        %1535 = vmatpush1.msra.mxu0 %v437
        %1536 = vmatprep.subr.mxu0 0.0
        %1537 = vmatpush1.msra.mxu0 %v436
        %1538 = vmatprep.subr.mxu0 0.0
        %1539 = vmatpush1.msra.mxu0 %v435
        %1540 = vmatprep.subr.mxu0 0.0
        %1541 = vmatpush2.msra.mxu0 %v466
        %1542 = vmatprep.subr.mxu0 0.0
        %1543 = vmatpush2.msra.mxu0 %v465
        %1544 = vmatprep.subr.mxu0 0.0
        %1545 = vmatpush2.msra.mxu0 %v464
        %1546 = vmatprep.subr.mxu0 0.0
        %1547 = vmatpush2.msra.mxu0 %v463
        %1548 = vmatprep.subr.mxu0 0.0
        %1549 = vmatpush2.msra.mxu0 %v462
        %1550 = vmatprep.subr.mxu0 0.0
        %1551 = vmatpush2.msra.mxu0 %v461
        %1552 = vmatprep.subr.mxu0 0.0
        %1553 = vmatpush2.msra.mxu0 %v460
        %1554 = vmatprep.subr.mxu0 0.0
        %1555 = vmatpush2.msra.mxu0 %v459
        %1556 = vmatprep.subr.mxu0 0.0
        %1557 = vmatpush2.msra.mxu0 %v458
        %1558 = vmatprep.subr.mxu0 0.0
        %1559 = vmatpush2.msra.mxu0 %v457
        %1560 = vmatprep.subr.mxu0 0.0
        %1561 = vmatpush2.msra.mxu0 %v456
        %1562 = vmatprep.subr.mxu0 0.0
        %1563 = vmatpush2.msra.mxu0 %v455
        %1564 = vmatprep.subr.mxu0 0.0
        %1565 = vmatpush2.msra.mxu0 %v454
        %1566 = vmatprep.subr.mxu0 0.0
        %1567 = vmatpush2.msra.mxu0 %v453
        %1568 = vmatprep.subr.mxu0 0.0
        %1569 = vmatpush2.msra.mxu0 %v452
        %1570 = vmatprep.subr.mxu0 0.0
        %1571 = vmatpush2.msra.mxu0 %v451
        %1572 = vmatprep.mubr.f32.mxu0 %v1493
        %1573 = vmatmul.mubr.f32.gmra.mxu0 %v1492
        %v1574 = vpop.f32.mrf.mxu0
        %v1575 = vadd.f32 0.0, %v1574
        %v1576 = vpop.f32.mrf.mxu0
        %1577 = vmatprep.mubr.f32.mxu0 %v1495
        %1578 = vmatmul.mubr.f32.gmra.mxu0 %v1494
        %v1579 = vpop.f32.mrf.mxu0
        %v1580 = vadd.f32 0.0, %v1579
        %v1581 = vpop.f32.mrf.mxu0
        %1582 = vmatprep.mubr.f32.mxu0 %v1497
        %1583 = vmatmul.mubr.f32.gmra.mxu0 %v1496
        %v1584 = vpop.f32.mrf.mxu0
        %v1585 = vadd.f32 0.0, %v1584
        %v1586 = vpop.f32.mrf.mxu0
        %1587 = vmatprep.mubr.f32.mxu0 %v1499
        %1588 = vmatmul.mubr.f32.gmra.mxu0 %v1498
        %v1589 = vpop.f32.mrf.mxu0
        %v1590 = vadd.f32 0.0, %v1589
        %v1591 = vpop.f32.mrf.mxu0
        %1592 = vmatprep.mubr.f32.mxu0 %v1501
        %1593 = vmatmul.mubr.f32.gmra.mxu0 %v1500
        %v1594 = vpop.f32.mrf.mxu0
        %v1595 = vadd.f32 0.0, %v1594
        %v1596 = vpop.f32.mrf.mxu0
        %1597 = vmatprep.mubr.f32.mxu0 %v1503
        %1598 = vmatmul.mubr.f32.gmra.mxu0 %v1502
        %v1599 = vpop.f32.mrf.mxu0
        %v1600 = vadd.f32 0.0, %v1599
        %v1601 = vpop.f32.mrf.mxu0
        %1602 = vmatprep.mubr.f32.mxu0 %v1505
        %1603 = vmatmul.mubr.f32.gmra.mxu0 %v1504
        %v1604 = vpop.f32.mrf.mxu0
        %v1605 = vadd.f32 0.0, %v1604
        %v1606 = vpop.f32.mrf.mxu0
        %1607 = vmatprep.mubr.f32.mxu0 %v1507
        %1608 = vmatmul.mubr.f32.gmra.mxu0 %v1506
        %v1609 = vpop.f32.mrf.mxu0
        %v1610 = vadd.f32 0.0, %v1609
        %v1611 = vpop.f32.mrf.mxu0
        %1612 = vdwg.mxu0
        %v1613 = vld [vmem:[%s2 + $0x20] sm:$0xff]
        %v1615 = vsel %vm712, %v1575, 0
        %v1618 = vsel %vm712, %v1580, 0
        %v1621 = vsel %vm712, %v1585, 0
        %v1624 = vsel %vm712, %v1590, 0
        %v1627 = vsel %vm712, %v1595, 0
        %v1630 = vsel %vm712, %v1600, 0
        %v1633 = vsel %vm712, %v1605, 0
        %v1636 = vsel %vm712, %v1610, 0
        %1638 = vmatprep.subr.mxu0 0.0
        %1639 = vmatpush1.msra.mxu0 0.0
        %1640 = vmatprep.subr.mxu0 0.0
        %1641 = vmatpush1.msra.mxu0 0.0
        %1642 = vmatprep.subr.mxu0 0.0
        %1643 = vmatpush1.msra.mxu0 0.0
        %1644 = vmatprep.subr.mxu0 0.0
        %1645 = vmatpush1.msra.mxu0 0.0
        %1646 = vmatprep.subr.mxu0 0.0
        %1647 = vmatpush1.msra.mxu0 0.0
        %1648 = vmatprep.subr.mxu0 0.0
        %1649 = vmatpush1.msra.mxu0 0.0
        %1650 = vmatprep.subr.mxu0 0.0
        %1651 = vmatpush1.msra.mxu0 0.0
        %1652 = vmatprep.subr.mxu0 0.0
        %1653 = vmatpush1.msra.mxu0 0.0
        %1654 = vmatprep.subr.mxu0 0.0
        %1655 = vmatpush1.msra.mxu0 0.0
        %1656 = vmatprep.subr.mxu0 0.0
        %1657 = vmatpush1.msra.mxu0 0.0
        %1658 = vmatprep.subr.mxu0 0.0
        %1659 = vmatpush1.msra.mxu0 0.0
        %1660 = vmatprep.subr.mxu0 0.0
        %1661 = vmatpush1.msra.mxu0 0.0
        %1662 = vmatprep.subr.mxu0 0.0
        %1663 = vmatpush1.msra.mxu0 0.0
        %1664 = vmatprep.subr.mxu0 0.0
        %1665 = vmatpush1.msra.mxu0 0.0
        %1666 = vmatprep.subr.mxu0 0.0
        %1667 = vmatpush1.msra.mxu0 0.0
        %1668 = vmatprep.subr.mxu0 0.0
        %1669 = vmatpush1.msra.mxu0 %v1613
        %1670 = vmatprep.subr.mxu0 0.0
        %1671 = vmatpush2.msra.mxu0 0.0
        %1672 = vmatprep.subr.mxu0 0.0
        %1673 = vmatpush2.msra.mxu0 0.0
        %1674 = vmatprep.subr.mxu0 0.0
        %1675 = vmatpush2.msra.mxu0 0.0
        %1676 = vmatprep.subr.mxu0 0.0
        %1677 = vmatpush2.msra.mxu0 0.0
        %1678 = vmatprep.subr.mxu0 0.0
        %1679 = vmatpush2.msra.mxu0 0.0
        %1680 = vmatprep.subr.mxu0 0.0
        %1681 = vmatpush2.msra.mxu0 0.0
        %1682 = vmatprep.subr.mxu0 0.0
        %1683 = vmatpush2.msra.mxu0 0.0
        %1684 = vmatprep.subr.mxu0 0.0
        %1685 = vmatpush2.msra.mxu0 0.0
        %1686 = vmatprep.subr.mxu0 0.0
        %1687 = vmatpush2.msra.mxu0 0.0
        %1688 = vmatprep.subr.mxu0 0.0
        %1689 = vmatpush2.msra.mxu0 0.0
        %1690 = vmatprep.subr.mxu0 0.0
        %1691 = vmatpush2.msra.mxu0 0.0
        %1692 = vmatprep.subr.mxu0 0.0
        %1693 = vmatpush2.msra.mxu0 0.0
        %1694 = vmatprep.subr.mxu0 0.0
        %1695 = vmatpush2.msra.mxu0 0.0
        %1696 = vmatprep.subr.mxu0 0.0
        %1697 = vmatpush2.msra.mxu0 0.0
        %1698 = vmatprep.subr.mxu0 0.0
        %1699 = vmatpush2.msra.mxu0 0.0
        %1700 = vmatprep.subr.mxu0 0.0
        %1701 = vmatpush2.msra.mxu0 0.0
        %1702 = vmatprep.mubr.f32.mxu0 0.0
        %1703 = vmatmul.mubr.f32.gmra.mxu0 %v1615
        %v1704 = vpop.f32.mrf.mxu0
        %v1705 = vadd.f32 0.0, %v1704
        %v1706 = vpop.f32.mrf.mxu0
        %1707 = vmatprep.mubr.f32.mxu0 0.0
        %1708 = vmatmul.mubr.f32.gmra.mxu0 %v1618
        %v1709 = vpop.f32.mrf.mxu0
        %v1710 = vadd.f32 0.0, %v1709
        %v1711 = vpop.f32.mrf.mxu0
        %1712 = vmatprep.mubr.f32.mxu0 0.0
        %1713 = vmatmul.mubr.f32.gmra.mxu0 %v1621
        %v1714 = vpop.f32.mrf.mxu0
        %v1715 = vadd.f32 0.0, %v1714
        %v1716 = vpop.f32.mrf.mxu0
        %1717 = vmatprep.mubr.f32.mxu0 0.0
        %1718 = vmatmul.mubr.f32.gmra.mxu0 %v1624
        %v1719 = vpop.f32.mrf.mxu0
        %v1720 = vadd.f32 0.0, %v1719
        %v1721 = vpop.f32.mrf.mxu0
        %1722 = vmatprep.mubr.f32.mxu0 0.0
        %1723 = vmatmul.mubr.f32.gmra.mxu0 %v1627
        %v1724 = vpop.f32.mrf.mxu0
        %v1725 = vadd.f32 0.0, %v1724
        %v1726 = vpop.f32.mrf.mxu0
        %1727 = vmatprep.mubr.f32.mxu0 0.0
        %1728 = vmatmul.mubr.f32.gmra.mxu0 %v1630
        %v1729 = vpop.f32.mrf.mxu0
        %v1730 = vadd.f32 0.0, %v1729
        %v1731 = vpop.f32.mrf.mxu0
        %1732 = vmatprep.mubr.f32.mxu0 0.0
        %1733 = vmatmul.mubr.f32.gmra.mxu0 %v1633
        %v1734 = vpop.f32.mrf.mxu0
        %v1735 = vadd.f32 0.0, %v1734
        %v1736 = vpop.f32.mrf.mxu0
        %1737 = vmatprep.mubr.f32.mxu0 0.0
        %1738 = vmatmul.mubr.f32.gmra.mxu0 %v1636
        %v1739 = vpop.f32.mrf.mxu0
        %v1740 = vadd.f32 0.0, %v1739
        %v1741 = vpop.f32.mrf.mxu0
        %1742 = vdwg.mxu0
        %v1743 = vadd.f32 %v1483, %v1705
        %v1744 = vadd.f32 %v1484, %v1710
        %v1745 = vadd.f32 %v1485, %v1715
        %v1746 = vadd.f32 %v1486, %v1720
        %v1747 = vadd.f32 %v1487, %v1725
        %v1748 = vadd.f32 %v1488, %v1730
        %v1749 = vadd.f32 %v1489, %v1735
        %v1750 = vadd.f32 %v1490, %v1740
        %s1751 = scalar_lea.vmem %s1, 640
        %v1752 = vld [vmem:[%s1751] sm:$0xff]
        %v1753 = vld [vmem:[%s1751 + $0x8] sm:$0xff]
        %v1754 = vld [vmem:[%s1751 + $0x10] sm:$0xff]
        %v1755 = vld [vmem:[%s1751 + $0x18] sm:$0xff]
        %v1756 = vld [vmem:[%s1751 + $0x20] sm:$0xff]
        %v1757 = vld [vmem:[%s1751 + $0x28] sm:$0xff]
        %v1758 = vld [vmem:[%s1751 + $0x30] sm:$0xff]
        %v1759 = vld [vmem:[%s1751 + $0x38] sm:$0xff]
        %v1760 = vld [vmem:[%s1751 + $0x40] sm:$0xff]
        %v1761 = vld [vmem:[%s1751 + $0x48] sm:$0xff]
        %v1762 = vld [vmem:[%s1751 + $0x50] sm:$0xff]
        %v1763 = vld [vmem:[%s1751 + $0x58] sm:$0xff]
        %v1764 = vld [vmem:[%s1751 + $0x60] sm:$0xff]
        %v1765 = vld [vmem:[%s1751 + $0x68] sm:$0xff]
        %v1766 = vld [vmem:[%s1751 + $0x70] sm:$0xff]
        %v1767 = vld [vmem:[%s1751 + $0x78] sm:$0xff]
        %1768 = vmatprep.subr.mxu0 0.0
        %1769 = vmatpush1.msra.mxu0 %v450
        %1770 = vmatprep.subr.mxu0 0.0
        %1771 = vmatpush1.msra.mxu0 %v449
        %1772 = vmatprep.subr.mxu0 0.0
        %1773 = vmatpush1.msra.mxu0 %v448
        %1774 = vmatprep.subr.mxu0 0.0
        %1775 = vmatpush1.msra.mxu0 %v447
        %1776 = vmatprep.subr.mxu0 0.0
        %1777 = vmatpush1.msra.mxu0 %v446
        %1778 = vmatprep.subr.mxu0 0.0
        %1779 = vmatpush1.msra.mxu0 %v445
        %1780 = vmatprep.subr.mxu0 0.0
        %1781 = vmatpush1.msra.mxu0 %v444
        %1782 = vmatprep.subr.mxu0 0.0
        %1783 = vmatpush1.msra.mxu0 %v443
        %1784 = vmatprep.subr.mxu0 0.0
        %1785 = vmatpush1.msra.mxu0 %v442
        %1786 = vmatprep.subr.mxu0 0.0
        %1787 = vmatpush1.msra.mxu0 %v441
        %1788 = vmatprep.subr.mxu0 0.0
        %1789 = vmatpush1.msra.mxu0 %v440
        %1790 = vmatprep.subr.mxu0 0.0
        %1791 = vmatpush1.msra.mxu0 %v439
        %1792 = vmatprep.subr.mxu0 0.0
        %1793 = vmatpush1.msra.mxu0 %v438
        %1794 = vmatprep.subr.mxu0 0.0
        %1795 = vmatpush1.msra.mxu0 %v437
        %1796 = vmatprep.subr.mxu0 0.0
        %1797 = vmatpush1.msra.mxu0 %v436
        %1798 = vmatprep.subr.mxu0 0.0
        %1799 = vmatpush1.msra.mxu0 %v435
        %1800 = vmatprep.subr.mxu0 0.0
        %1801 = vmatpush2.msra.mxu0 %v466
        %1802 = vmatprep.subr.mxu0 0.0
        %1803 = vmatpush2.msra.mxu0 %v465
        %1804 = vmatprep.subr.mxu0 0.0
        %1805 = vmatpush2.msra.mxu0 %v464
        %1806 = vmatprep.subr.mxu0 0.0
        %1807 = vmatpush2.msra.mxu0 %v463
        %1808 = vmatprep.subr.mxu0 0.0
        %1809 = vmatpush2.msra.mxu0 %v462
        %1810 = vmatprep.subr.mxu0 0.0
        %1811 = vmatpush2.msra.mxu0 %v461
        %1812 = vmatprep.subr.mxu0 0.0
        %1813 = vmatpush2.msra.mxu0 %v460
        %1814 = vmatprep.subr.mxu0 0.0
        %1815 = vmatpush2.msra.mxu0 %v459
        %1816 = vmatprep.subr.mxu0 0.0
        %1817 = vmatpush2.msra.mxu0 %v458
        %1818 = vmatprep.subr.mxu0 0.0
        %1819 = vmatpush2.msra.mxu0 %v457
        %1820 = vmatprep.subr.mxu0 0.0
        %1821 = vmatpush2.msra.mxu0 %v456
        %1822 = vmatprep.subr.mxu0 0.0
        %1823 = vmatpush2.msra.mxu0 %v455
        %1824 = vmatprep.subr.mxu0 0.0
        %1825 = vmatpush2.msra.mxu0 %v454
        %1826 = vmatprep.subr.mxu0 0.0
        %1827 = vmatpush2.msra.mxu0 %v453
        %1828 = vmatprep.subr.mxu0 0.0
        %1829 = vmatpush2.msra.mxu0 %v452
        %1830 = vmatprep.subr.mxu0 0.0
        %1831 = vmatpush2.msra.mxu0 %v451
        %1832 = vmatprep.mubr.f32.mxu0 %v1753
        %1833 = vmatmul.mubr.f32.gmra.mxu0 %v1752
        %v1834 = vpop.f32.mrf.mxu0
        %v1835 = vadd.f32 0.0, %v1834
        %v1836 = vpop.f32.mrf.mxu0
        %1837 = vmatprep.mubr.f32.mxu0 %v1755
        %1838 = vmatmul.mubr.f32.gmra.mxu0 %v1754
        %v1839 = vpop.f32.mrf.mxu0
        %v1840 = vadd.f32 0.0, %v1839
        %v1841 = vpop.f32.mrf.mxu0
        %1842 = vmatprep.mubr.f32.mxu0 %v1757
        %1843 = vmatmul.mubr.f32.gmra.mxu0 %v1756
        %v1844 = vpop.f32.mrf.mxu0
        %v1845 = vadd.f32 0.0, %v1844
        %v1846 = vpop.f32.mrf.mxu0
        %1847 = vmatprep.mubr.f32.mxu0 %v1759
        %1848 = vmatmul.mubr.f32.gmra.mxu0 %v1758
        %v1849 = vpop.f32.mrf.mxu0
        %v1850 = vadd.f32 0.0, %v1849
        %v1851 = vpop.f32.mrf.mxu0
        %1852 = vmatprep.mubr.f32.mxu0 %v1761
        %1853 = vmatmul.mubr.f32.gmra.mxu0 %v1760
        %v1854 = vpop.f32.mrf.mxu0
        %v1855 = vadd.f32 0.0, %v1854
        %v1856 = vpop.f32.mrf.mxu0
        %1857 = vmatprep.mubr.f32.mxu0 %v1763
        %1858 = vmatmul.mubr.f32.gmra.mxu0 %v1762
        %v1859 = vpop.f32.mrf.mxu0
        %v1860 = vadd.f32 0.0, %v1859
        %v1861 = vpop.f32.mrf.mxu0
        %1862 = vmatprep.mubr.f32.mxu0 %v1765
        %1863 = vmatmul.mubr.f32.gmra.mxu0 %v1764
        %v1864 = vpop.f32.mrf.mxu0
        %v1865 = vadd.f32 0.0, %v1864
        %v1866 = vpop.f32.mrf.mxu0
        %1867 = vmatprep.mubr.f32.mxu0 %v1767
        %1868 = vmatmul.mubr.f32.gmra.mxu0 %v1766
        %v1869 = vpop.f32.mrf.mxu0
        %v1870 = vadd.f32 0.0, %v1869
        %v1871 = vpop.f32.mrf.mxu0
        %1872 = vdwg.mxu0
        %v1873 = vld [vmem:[%s2 + $0x28] sm:$0xff]
        %v1875 = vsel %vm712, %v1835, 0
        %v1878 = vsel %vm712, %v1840, 0
        %v1881 = vsel %vm712, %v1845, 0
        %v1884 = vsel %vm712, %v1850, 0
        %v1887 = vsel %vm712, %v1855, 0
        %v1890 = vsel %vm712, %v1860, 0
        %v1893 = vsel %vm712, %v1865, 0
        %v1896 = vsel %vm712, %v1870, 0
        %1898 = vmatprep.subr.mxu0 0.0
        %1899 = vmatpush1.msra.mxu0 0.0
        %1900 = vmatprep.subr.mxu0 0.0
        %1901 = vmatpush1.msra.mxu0 0.0
        %1902 = vmatprep.subr.mxu0 0.0
        %1903 = vmatpush1.msra.mxu0 0.0
        %1904 = vmatprep.subr.mxu0 0.0
        %1905 = vmatpush1.msra.mxu0 0.0
        %1906 = vmatprep.subr.mxu0 0.0
        %1907 = vmatpush1.msra.mxu0 0.0
        %1908 = vmatprep.subr.mxu0 0.0
        %1909 = vmatpush1.msra.mxu0 0.0
        %1910 = vmatprep.subr.mxu0 0.0
        %1911 = vmatpush1.msra.mxu0 0.0
        %1912 = vmatprep.subr.mxu0 0.0
        %1913 = vmatpush1.msra.mxu0 0.0
        %1914 = vmatprep.subr.mxu0 0.0
        %1915 = vmatpush1.msra.mxu0 0.0
        %1916 = vmatprep.subr.mxu0 0.0
        %1917 = vmatpush1.msra.mxu0 0.0
        %1918 = vmatprep.subr.mxu0 0.0
        %1919 = vmatpush1.msra.mxu0 0.0
        %1920 = vmatprep.subr.mxu0 0.0
        %1921 = vmatpush1.msra.mxu0 0.0
        %1922 = vmatprep.subr.mxu0 0.0
        %1923 = vmatpush1.msra.mxu0 0.0
        %1924 = vmatprep.subr.mxu0 0.0
        %1925 = vmatpush1.msra.mxu0 0.0
        %1926 = vmatprep.subr.mxu0 0.0
        %1927 = vmatpush1.msra.mxu0 0.0
        %1928 = vmatprep.subr.mxu0 0.0
        %1929 = vmatpush1.msra.mxu0 %v1873
        %1930 = vmatprep.subr.mxu0 0.0
        %1931 = vmatpush2.msra.mxu0 0.0
        %1932 = vmatprep.subr.mxu0 0.0
        %1933 = vmatpush2.msra.mxu0 0.0
        %1934 = vmatprep.subr.mxu0 0.0
        %1935 = vmatpush2.msra.mxu0 0.0
        %1936 = vmatprep.subr.mxu0 0.0
        %1937 = vmatpush2.msra.mxu0 0.0
        %1938 = vmatprep.subr.mxu0 0.0
        %1939 = vmatpush2.msra.mxu0 0.0
        %1940 = vmatprep.subr.mxu0 0.0
        %1941 = vmatpush2.msra.mxu0 0.0
        %1942 = vmatprep.subr.mxu0 0.0
        %1943 = vmatpush2.msra.mxu0 0.0
        %1944 = vmatprep.subr.mxu0 0.0
        %1945 = vmatpush2.msra.mxu0 0.0
        %1946 = vmatprep.subr.mxu0 0.0
        %1947 = vmatpush2.msra.mxu0 0.0
        %1948 = vmatprep.subr.mxu0 0.0
        %1949 = vmatpush2.msra.mxu0 0.0
        %1950 = vmatprep.subr.mxu0 0.0
        %1951 = vmatpush2.msra.mxu0 0.0
        %1952 = vmatprep.subr.mxu0 0.0
        %1953 = vmatpush2.msra.mxu0 0.0
        %1954 = vmatprep.subr.mxu0 0.0
        %1955 = vmatpush2.msra.mxu0 0.0
        %1956 = vmatprep.subr.mxu0 0.0
        %1957 = vmatpush2.msra.mxu0 0.0
        %1958 = vmatprep.subr.mxu0 0.0
        %1959 = vmatpush2.msra.mxu0 0.0
        %1960 = vmatprep.subr.mxu0 0.0
        %1961 = vmatpush2.msra.mxu0 0.0
        %1962 = vmatprep.mubr.f32.mxu0 0.0
        %1963 = vmatmul.mubr.f32.gmra.mxu0 %v1875
        %v1964 = vpop.f32.mrf.mxu0
        %v1965 = vadd.f32 0.0, %v1964
        %v1966 = vpop.f32.mrf.mxu0
        %1967 = vmatprep.mubr.f32.mxu0 0.0
        %1968 = vmatmul.mubr.f32.gmra.mxu0 %v1878
        %v1969 = vpop.f32.mrf.mxu0
        %v1970 = vadd.f32 0.0, %v1969
        %v1971 = vpop.f32.mrf.mxu0
        %1972 = vmatprep.mubr.f32.mxu0 0.0
        %1973 = vmatmul.mubr.f32.gmra.mxu0 %v1881
        %v1974 = vpop.f32.mrf.mxu0
        %v1975 = vadd.f32 0.0, %v1974
        %v1976 = vpop.f32.mrf.mxu0
        %1977 = vmatprep.mubr.f32.mxu0 0.0
        %1978 = vmatmul.mubr.f32.gmra.mxu0 %v1884
        %v1979 = vpop.f32.mrf.mxu0
        %v1980 = vadd.f32 0.0, %v1979
        %v1981 = vpop.f32.mrf.mxu0
        %1982 = vmatprep.mubr.f32.mxu0 0.0
        %1983 = vmatmul.mubr.f32.gmra.mxu0 %v1887
        %v1984 = vpop.f32.mrf.mxu0
        %v1985 = vadd.f32 0.0, %v1984
        %v1986 = vpop.f32.mrf.mxu0
        %1987 = vmatprep.mubr.f32.mxu0 0.0
        %1988 = vmatmul.mubr.f32.gmra.mxu0 %v1890
        %v1989 = vpop.f32.mrf.mxu0
        %v1990 = vadd.f32 0.0, %v1989
        %v1991 = vpop.f32.mrf.mxu0
        %1992 = vmatprep.mubr.f32.mxu0 0.0
        %1993 = vmatmul.mubr.f32.gmra.mxu0 %v1893
        %v1994 = vpop.f32.mrf.mxu0
        %v1995 = vadd.f32 0.0, %v1994
        %v1996 = vpop.f32.mrf.mxu0
        %1997 = vmatprep.mubr.f32.mxu0 0.0
        %1998 = vmatmul.mubr.f32.gmra.mxu0 %v1896
        %v1999 = vpop.f32.mrf.mxu0
        %v2000 = vadd.f32 0.0, %v1999
        %v2001 = vpop.f32.mrf.mxu0
        %2002 = vdwg.mxu0
        %v2003 = vadd.f32 %v1743, %v1965
        %v2004 = vadd.f32 %v1744, %v1970
        %v2005 = vadd.f32 %v1745, %v1975
        %v2006 = vadd.f32 %v1746, %v1980
        %v2007 = vadd.f32 %v1747, %v1985
        %v2008 = vadd.f32 %v1748, %v1990
        %v2009 = vadd.f32 %v1749, %v1995
        %v2010 = vadd.f32 %v1750, %v2000
        %s2011 = scalar_lea.vmem %s1, 768
        %v2012 = vld [vmem:[%s2011] sm:$0xff]
        %v2013 = vld [vmem:[%s2011 + $0x8] sm:$0xff]
        %v2014 = vld [vmem:[%s2011 + $0x10] sm:$0xff]
        %v2015 = vld [vmem:[%s2011 + $0x18] sm:$0xff]
        %v2016 = vld [vmem:[%s2011 + $0x20] sm:$0xff]
        %v2017 = vld [vmem:[%s2011 + $0x28] sm:$0xff]
        %v2018 = vld [vmem:[%s2011 + $0x30] sm:$0xff]
        %v2019 = vld [vmem:[%s2011 + $0x38] sm:$0xff]
        %v2020 = vld [vmem:[%s2011 + $0x40] sm:$0xff]
        %v2021 = vld [vmem:[%s2011 + $0x48] sm:$0xff]
        %v2022 = vld [vmem:[%s2011 + $0x50] sm:$0xff]
        %v2023 = vld [vmem:[%s2011 + $0x58] sm:$0xff]
        %v2024 = vld [vmem:[%s2011 + $0x60] sm:$0xff]
        %v2025 = vld [vmem:[%s2011 + $0x68] sm:$0xff]
        %v2026 = vld [vmem:[%s2011 + $0x70] sm:$0xff]
        %v2027 = vld [vmem:[%s2011 + $0x78] sm:$0xff]
        %2028 = vmatprep.subr.mxu0 0.0
        %2029 = vmatpush1.msra.mxu0 %v450
        %2030 = vmatprep.subr.mxu0 0.0
        %2031 = vmatpush1.msra.mxu0 %v449
        %2032 = vmatprep.subr.mxu0 0.0
        %2033 = vmatpush1.msra.mxu0 %v448
        %2034 = vmatprep.subr.mxu0 0.0
        %2035 = vmatpush1.msra.mxu0 %v447
        %2036 = vmatprep.subr.mxu0 0.0
        %2037 = vmatpush1.msra.mxu0 %v446
        %2038 = vmatprep.subr.mxu0 0.0
        %2039 = vmatpush1.msra.mxu0 %v445
        %2040 = vmatprep.subr.mxu0 0.0
        %2041 = vmatpush1.msra.mxu0 %v444
        %2042 = vmatprep.subr.mxu0 0.0
        %2043 = vmatpush1.msra.mxu0 %v443
        %2044 = vmatprep.subr.mxu0 0.0
        %2045 = vmatpush1.msra.mxu0 %v442
        %2046 = vmatprep.subr.mxu0 0.0
        %2047 = vmatpush1.msra.mxu0 %v441
        %2048 = vmatprep.subr.mxu0 0.0
        %2049 = vmatpush1.msra.mxu0 %v440
        %2050 = vmatprep.subr.mxu0 0.0
        %2051 = vmatpush1.msra.mxu0 %v439
        %2052 = vmatprep.subr.mxu0 0.0
        %2053 = vmatpush1.msra.mxu0 %v438
        %2054 = vmatprep.subr.mxu0 0.0
        %2055 = vmatpush1.msra.mxu0 %v437
        %2056 = vmatprep.subr.mxu0 0.0
        %2057 = vmatpush1.msra.mxu0 %v436
        %2058 = vmatprep.subr.mxu0 0.0
        %2059 = vmatpush1.msra.mxu0 %v435
        %2060 = vmatprep.subr.mxu0 0.0
        %2061 = vmatpush2.msra.mxu0 %v466
        %2062 = vmatprep.subr.mxu0 0.0
        %2063 = vmatpush2.msra.mxu0 %v465
        %2064 = vmatprep.subr.mxu0 0.0
        %2065 = vmatpush2.msra.mxu0 %v464
        %2066 = vmatprep.subr.mxu0 0.0
        %2067 = vmatpush2.msra.mxu0 %v463
        %2068 = vmatprep.subr.mxu0 0.0
        %2069 = vmatpush2.msra.mxu0 %v462
        %2070 = vmatprep.subr.mxu0 0.0
        %2071 = vmatpush2.msra.mxu0 %v461
        %2072 = vmatprep.subr.mxu0 0.0
        %2073 = vmatpush2.msra.mxu0 %v460
        %2074 = vmatprep.subr.mxu0 0.0
        %2075 = vmatpush2.msra.mxu0 %v459
        %2076 = vmatprep.subr.mxu0 0.0
        %2077 = vmatpush2.msra.mxu0 %v458
        %2078 = vmatprep.subr.mxu0 0.0
        %2079 = vmatpush2.msra.mxu0 %v457
        %2080 = vmatprep.subr.mxu0 0.0
        %2081 = vmatpush2.msra.mxu0 %v456
        %2082 = vmatprep.subr.mxu0 0.0
        %2083 = vmatpush2.msra.mxu0 %v455
        %2084 = vmatprep.subr.mxu0 0.0
        %2085 = vmatpush2.msra.mxu0 %v454
        %2086 = vmatprep.subr.mxu0 0.0
        %2087 = vmatpush2.msra.mxu0 %v453
        %2088 = vmatprep.subr.mxu0 0.0
        %2089 = vmatpush2.msra.mxu0 %v452
        %2090 = vmatprep.subr.mxu0 0.0
        %2091 = vmatpush2.msra.mxu0 %v451
        %2092 = vmatprep.mubr.f32.mxu0 %v2013
        %2093 = vmatmul.mubr.f32.gmra.mxu0 %v2012
        %v2094 = vpop.f32.mrf.mxu0
        %v2095 = vadd.f32 0.0, %v2094
        %v2096 = vpop.f32.mrf.mxu0
        %2097 = vmatprep.mubr.f32.mxu0 %v2015
        %2098 = vmatmul.mubr.f32.gmra.mxu0 %v2014
        %v2099 = vpop.f32.mrf.mxu0
        %v2100 = vadd.f32 0.0, %v2099
        %v2101 = vpop.f32.mrf.mxu0
        %2102 = vmatprep.mubr.f32.mxu0 %v2017
        %2103 = vmatmul.mubr.f32.gmra.mxu0 %v2016
        %v2104 = vpop.f32.mrf.mxu0
        %v2105 = vadd.f32 0.0, %v2104
        %v2106 = vpop.f32.mrf.mxu0
        %2107 = vmatprep.mubr.f32.mxu0 %v2019
        %2108 = vmatmul.mubr.f32.gmra.mxu0 %v2018
        %v2109 = vpop.f32.mrf.mxu0
        %v2110 = vadd.f32 0.0, %v2109
        %v2111 = vpop.f32.mrf.mxu0
        %2112 = vmatprep.mubr.f32.mxu0 %v2021
        %2113 = vmatmul.mubr.f32.gmra.mxu0 %v2020
        %v2114 = vpop.f32.mrf.mxu0
        %v2115 = vadd.f32 0.0, %v2114
        %v2116 = vpop.f32.mrf.mxu0
        %2117 = vmatprep.mubr.f32.mxu0 %v2023
        %2118 = vmatmul.mubr.f32.gmra.mxu0 %v2022
        %v2119 = vpop.f32.mrf.mxu0
        %v2120 = vadd.f32 0.0, %v2119
        %v2121 = vpop.f32.mrf.mxu0
        %2122 = vmatprep.mubr.f32.mxu0 %v2025
        %2123 = vmatmul.mubr.f32.gmra.mxu0 %v2024
        %v2124 = vpop.f32.mrf.mxu0
        %v2125 = vadd.f32 0.0, %v2124
        %v2126 = vpop.f32.mrf.mxu0
        %2127 = vmatprep.mubr.f32.mxu0 %v2027
        %2128 = vmatmul.mubr.f32.gmra.mxu0 %v2026
        %v2129 = vpop.f32.mrf.mxu0
        %v2130 = vadd.f32 0.0, %v2129
        %v2131 = vpop.f32.mrf.mxu0
        %2132 = vdwg.mxu0
        %v2133 = vld [vmem:[%s2 + $0x30] sm:$0xff]
        %v2135 = vsel %vm712, %v2095, 0
        %v2138 = vsel %vm712, %v2100, 0
        %v2141 = vsel %vm712, %v2105, 0
        %v2144 = vsel %vm712, %v2110, 0
        %v2147 = vsel %vm712, %v2115, 0
        %v2150 = vsel %vm712, %v2120, 0
        %v2153 = vsel %vm712, %v2125, 0
        %v2156 = vsel %vm712, %v2130, 0
        %2158 = vmatprep.subr.mxu0 0.0
        %2159 = vmatpush1.msra.mxu0 0.0
        %2160 = vmatprep.subr.mxu0 0.0
        %2161 = vmatpush1.msra.mxu0 0.0
        %2162 = vmatprep.subr.mxu0 0.0
        %2163 = vmatpush1.msra.mxu0 0.0
        %2164 = vmatprep.subr.mxu0 0.0
        %2165 = vmatpush1.msra.mxu0 0.0
        %2166 = vmatprep.subr.mxu0 0.0
        %2167 = vmatpush1.msra.mxu0 0.0
        %2168 = vmatprep.subr.mxu0 0.0
        %2169 = vmatpush1.msra.mxu0 0.0
        %2170 = vmatprep.subr.mxu0 0.0
        %2171 = vmatpush1.msra.mxu0 0.0
        %2172 = vmatprep.subr.mxu0 0.0
        %2173 = vmatpush1.msra.mxu0 0.0
        %2174 = vmatprep.subr.mxu0 0.0
        %2175 = vmatpush1.msra.mxu0 0.0
        %2176 = vmatprep.subr.mxu0 0.0
        %2177 = vmatpush1.msra.mxu0 0.0
        %2178 = vmatprep.subr.mxu0 0.0
        %2179 = vmatpush1.msra.mxu0 0.0
        %2180 = vmatprep.subr.mxu0 0.0
        %2181 = vmatpush1.msra.mxu0 0.0
        %2182 = vmatprep.subr.mxu0 0.0
        %2183 = vmatpush1.msra.mxu0 0.0
        %2184 = vmatprep.subr.mxu0 0.0
        %2185 = vmatpush1.msra.mxu0 0.0
        %2186 = vmatprep.subr.mxu0 0.0
        %2187 = vmatpush1.msra.mxu0 0.0
        %2188 = vmatprep.subr.mxu0 0.0
        %2189 = vmatpush1.msra.mxu0 %v2133
        %2190 = vmatprep.subr.mxu0 0.0
        %2191 = vmatpush2.msra.mxu0 0.0
        %2192 = vmatprep.subr.mxu0 0.0
        %2193 = vmatpush2.msra.mxu0 0.0
        %2194 = vmatprep.subr.mxu0 0.0
        %2195 = vmatpush2.msra.mxu0 0.0
        %2196 = vmatprep.subr.mxu0 0.0
        %2197 = vmatpush2.msra.mxu0 0.0
        %2198 = vmatprep.subr.mxu0 0.0
        %2199 = vmatpush2.msra.mxu0 0.0
        %2200 = vmatprep.subr.mxu0 0.0
        %2201 = vmatpush2.msra.mxu0 0.0
        %2202 = vmatprep.subr.mxu0 0.0
        %2203 = vmatpush2.msra.mxu0 0.0
        %2204 = vmatprep.subr.mxu0 0.0
        %2205 = vmatpush2.msra.mxu0 0.0
        %2206 = vmatprep.subr.mxu0 0.0
        %2207 = vmatpush2.msra.mxu0 0.0
        %2208 = vmatprep.subr.mxu0 0.0
        %2209 = vmatpush2.msra.mxu0 0.0
        %2210 = vmatprep.subr.mxu0 0.0
        %2211 = vmatpush2.msra.mxu0 0.0
        %2212 = vmatprep.subr.mxu0 0.0
        %2213 = vmatpush2.msra.mxu0 0.0
        %2214 = vmatprep.subr.mxu0 0.0
        %2215 = vmatpush2.msra.mxu0 0.0
        %2216 = vmatprep.subr.mxu0 0.0
        %2217 = vmatpush2.msra.mxu0 0.0
        %2218 = vmatprep.subr.mxu0 0.0
        %2219 = vmatpush2.msra.mxu0 0.0
        %2220 = vmatprep.subr.mxu0 0.0
        %2221 = vmatpush2.msra.mxu0 0.0
        %2222 = vmatprep.mubr.f32.mxu0 0.0
        %2223 = vmatmul.mubr.f32.gmra.mxu0 %v2135
        %v2224 = vpop.f32.mrf.mxu0
        %v2225 = vadd.f32 0.0, %v2224
        %v2226 = vpop.f32.mrf.mxu0
        %2227 = vmatprep.mubr.f32.mxu0 0.0
        %2228 = vmatmul.mubr.f32.gmra.mxu0 %v2138
        %v2229 = vpop.f32.mrf.mxu0
        %v2230 = vadd.f32 0.0, %v2229
        %v2231 = vpop.f32.mrf.mxu0
        %2232 = vmatprep.mubr.f32.mxu0 0.0
        %2233 = vmatmul.mubr.f32.gmra.mxu0 %v2141
        %v2234 = vpop.f32.mrf.mxu0
        %v2235 = vadd.f32 0.0, %v2234
        %v2236 = vpop.f32.mrf.mxu0
        %2237 = vmatprep.mubr.f32.mxu0 0.0
        %2238 = vmatmul.mubr.f32.gmra.mxu0 %v2144
        %v2239 = vpop.f32.mrf.mxu0
        %v2240 = vadd.f32 0.0, %v2239
        %v2241 = vpop.f32.mrf.mxu0
        %2242 = vmatprep.mubr.f32.mxu0 0.0
        %2243 = vmatmul.mubr.f32.gmra.mxu0 %v2147
        %v2244 = vpop.f32.mrf.mxu0
        %v2245 = vadd.f32 0.0, %v2244
        %v2246 = vpop.f32.mrf.mxu0
        %2247 = vmatprep.mubr.f32.mxu0 0.0
        %2248 = vmatmul.mubr.f32.gmra.mxu0 %v2150
        %v2249 = vpop.f32.mrf.mxu0
        %v2250 = vadd.f32 0.0, %v2249
        %v2251 = vpop.f32.mrf.mxu0
        %2252 = vmatprep.mubr.f32.mxu0 0.0
        %2253 = vmatmul.mubr.f32.gmra.mxu0 %v2153
        %v2254 = vpop.f32.mrf.mxu0
        %v2255 = vadd.f32 0.0, %v2254
        %v2256 = vpop.f32.mrf.mxu0
        %2257 = vmatprep.mubr.f32.mxu0 0.0
        %2258 = vmatmul.mubr.f32.gmra.mxu0 %v2156
        %v2259 = vpop.f32.mrf.mxu0
        %v2260 = vadd.f32 0.0, %v2259
        %v2261 = vpop.f32.mrf.mxu0
        %2262 = vdwg.mxu0
        %v2263 = vadd.f32 %v2003, %v2225
        %v2264 = vadd.f32 %v2004, %v2230
        %v2265 = vadd.f32 %v2005, %v2235
        %v2266 = vadd.f32 %v2006, %v2240
        %v2267 = vadd.f32 %v2007, %v2245
        %v2268 = vadd.f32 %v2008, %v2250
        %v2269 = vadd.f32 %v2009, %v2255
        %v2270 = vadd.f32 %v2010, %v2260
        %s2271 = scalar_lea.vmem %s1, 896
        %v2272 = vld [vmem:[%s2271] sm:$0xff]
        %v2273 = vld [vmem:[%s2271 + $0x8] sm:$0xff]
        %v2274 = vld [vmem:[%s2271 + $0x10] sm:$0xff]
        %v2275 = vld [vmem:[%s2271 + $0x18] sm:$0xff]
        %v2276 = vld [vmem:[%s2271 + $0x20] sm:$0xff]
        %v2277 = vld [vmem:[%s2271 + $0x28] sm:$0xff]
        %v2278 = vld [vmem:[%s2271 + $0x30] sm:$0xff]
        %v2279 = vld [vmem:[%s2271 + $0x38] sm:$0xff]
        %v2280 = vld [vmem:[%s2271 + $0x40] sm:$0xff]
        %v2281 = vld [vmem:[%s2271 + $0x48] sm:$0xff]
        %v2282 = vld [vmem:[%s2271 + $0x50] sm:$0xff]
        %v2283 = vld [vmem:[%s2271 + $0x58] sm:$0xff]
        %v2284 = vld [vmem:[%s2271 + $0x60] sm:$0xff]
        %v2285 = vld [vmem:[%s2271 + $0x68] sm:$0xff]
        %v2286 = vld [vmem:[%s2271 + $0x70] sm:$0xff]
        %v2287 = vld [vmem:[%s2271 + $0x78] sm:$0xff]
        %2288 = vmatprep.subr.mxu0 0.0
        %2289 = vmatpush1.msra.mxu0 %v450
        %2290 = vmatprep.subr.mxu0 0.0
        %2291 = vmatpush1.msra.mxu0 %v449
        %2292 = vmatprep.subr.mxu0 0.0
        %2293 = vmatpush1.msra.mxu0 %v448
        %2294 = vmatprep.subr.mxu0 0.0
        %2295 = vmatpush1.msra.mxu0 %v447
        %2296 = vmatprep.subr.mxu0 0.0
        %2297 = vmatpush1.msra.mxu0 %v446
        %2298 = vmatprep.subr.mxu0 0.0
        %2299 = vmatpush1.msra.mxu0 %v445
        %2300 = vmatprep.subr.mxu0 0.0
        %2301 = vmatpush1.msra.mxu0 %v444
        %2302 = vmatprep.subr.mxu0 0.0
        %2303 = vmatpush1.msra.mxu0 %v443
        %2304 = vmatprep.subr.mxu0 0.0
        %2305 = vmatpush1.msra.mxu0 %v442
        %2306 = vmatprep.subr.mxu0 0.0
        %2307 = vmatpush1.msra.mxu0 %v441
        %2308 = vmatprep.subr.mxu0 0.0
        %2309 = vmatpush1.msra.mxu0 %v440
        %2310 = vmatprep.subr.mxu0 0.0
        %2311 = vmatpush1.msra.mxu0 %v439
        %2312 = vmatprep.subr.mxu0 0.0
        %2313 = vmatpush1.msra.mxu0 %v438
        %2314 = vmatprep.subr.mxu0 0.0
        %2315 = vmatpush1.msra.mxu0 %v437
        %2316 = vmatprep.subr.mxu0 0.0
        %2317 = vmatpush1.msra.mxu0 %v436
        %2318 = vmatprep.subr.mxu0 0.0
        %2319 = vmatpush1.msra.mxu0 %v435
        %2320 = vmatprep.subr.mxu0 0.0
        %2321 = vmatpush2.msra.mxu0 %v466
        %2322 = vmatprep.subr.mxu0 0.0
        %2323 = vmatpush2.msra.mxu0 %v465
        %2324 = vmatprep.subr.mxu0 0.0
        %2325 = vmatpush2.msra.mxu0 %v464
        %2326 = vmatprep.subr.mxu0 0.0
        %2327 = vmatpush2.msra.mxu0 %v463
        %2328 = vmatprep.subr.mxu0 0.0
        %2329 = vmatpush2.msra.mxu0 %v462
        %2330 = vmatprep.subr.mxu0 0.0
        %2331 = vmatpush2.msra.mxu0 %v461
        %2332 = vmatprep.subr.mxu0 0.0
        %2333 = vmatpush2.msra.mxu0 %v460
        %2334 = vmatprep.subr.mxu0 0.0
        %2335 = vmatpush2.msra.mxu0 %v459
        %2336 = vmatprep.subr.mxu0 0.0
        %2337 = vmatpush2.msra.mxu0 %v458
        %2338 = vmatprep.subr.mxu0 0.0
        %2339 = vmatpush2.msra.mxu0 %v457
        %2340 = vmatprep.subr.mxu0 0.0
        %2341 = vmatpush2.msra.mxu0 %v456
        %2342 = vmatprep.subr.mxu0 0.0
        %2343 = vmatpush2.msra.mxu0 %v455
        %2344 = vmatprep.subr.mxu0 0.0
        %2345 = vmatpush2.msra.mxu0 %v454
        %2346 = vmatprep.subr.mxu0 0.0
        %2347 = vmatpush2.msra.mxu0 %v453
        %2348 = vmatprep.subr.mxu0 0.0
        %2349 = vmatpush2.msra.mxu0 %v452
        %2350 = vmatprep.subr.mxu0 0.0
        %2351 = vmatpush2.msra.mxu0 %v451
        %2352 = vmatprep.mubr.f32.mxu0 %v2273
        %2353 = vmatmul.mubr.f32.gmra.mxu0 %v2272
        %v2354 = vpop.f32.mrf.mxu0
        %v2355 = vadd.f32 0.0, %v2354
        %v2356 = vpop.f32.mrf.mxu0
        %2357 = vmatprep.mubr.f32.mxu0 %v2275
        %2358 = vmatmul.mubr.f32.gmra.mxu0 %v2274
        %v2359 = vpop.f32.mrf.mxu0
        %v2360 = vadd.f32 0.0, %v2359
        %v2361 = vpop.f32.mrf.mxu0
        %2362 = vmatprep.mubr.f32.mxu0 %v2277
        %2363 = vmatmul.mubr.f32.gmra.mxu0 %v2276
        %v2364 = vpop.f32.mrf.mxu0
        %v2365 = vadd.f32 0.0, %v2364
        %v2366 = vpop.f32.mrf.mxu0
        %2367 = vmatprep.mubr.f32.mxu0 %v2279
        %2368 = vmatmul.mubr.f32.gmra.mxu0 %v2278
        %v2369 = vpop.f32.mrf.mxu0
        %v2370 = vadd.f32 0.0, %v2369
        %v2371 = vpop.f32.mrf.mxu0
        %2372 = vmatprep.mubr.f32.mxu0 %v2281
        %2373 = vmatmul.mubr.f32.gmra.mxu0 %v2280
        %v2374 = vpop.f32.mrf.mxu0
        %v2375 = vadd.f32 0.0, %v2374
        %v2376 = vpop.f32.mrf.mxu0
        %2377 = vmatprep.mubr.f32.mxu0 %v2283
        %2378 = vmatmul.mubr.f32.gmra.mxu0 %v2282
        %v2379 = vpop.f32.mrf.mxu0
        %v2380 = vadd.f32 0.0, %v2379
        %v2381 = vpop.f32.mrf.mxu0
        %2382 = vmatprep.mubr.f32.mxu0 %v2285
        %2383 = vmatmul.mubr.f32.gmra.mxu0 %v2284
        %v2384 = vpop.f32.mrf.mxu0
        %v2385 = vadd.f32 0.0, %v2384
        %v2386 = vpop.f32.mrf.mxu0
        %2387 = vmatprep.mubr.f32.mxu0 %v2287
        %2388 = vmatmul.mubr.f32.gmra.mxu0 %v2286
        %v2389 = vpop.f32.mrf.mxu0
        %v2390 = vadd.f32 0.0, %v2389
        %v2391 = vpop.f32.mrf.mxu0
        %2392 = vdwg.mxu0
        %v2393 = vld [vmem:[%s2 + $0x38] sm:$0xff]
        %v2395 = vsel %vm712, %v2355, 0
        %v2398 = vsel %vm712, %v2360, 0
        %v2401 = vsel %vm712, %v2365, 0
        %v2404 = vsel %vm712, %v2370, 0
        %v2407 = vsel %vm712, %v2375, 0
        %v2410 = vsel %vm712, %v2380, 0
        %v2413 = vsel %vm712, %v2385, 0
        %v2416 = vsel %vm712, %v2390, 0
        %2418 = vmatprep.subr.mxu0 0.0
        %2419 = vmatpush1.msra.mxu0 0.0
        %2420 = vmatprep.subr.mxu0 0.0
        %2421 = vmatpush1.msra.mxu0 0.0
        %2422 = vmatprep.subr.mxu0 0.0
        %2423 = vmatpush1.msra.mxu0 0.0
        %2424 = vmatprep.subr.mxu0 0.0
        %2425 = vmatpush1.msra.mxu0 0.0
        %2426 = vmatprep.subr.mxu0 0.0
        %2427 = vmatpush1.msra.mxu0 0.0
        %2428 = vmatprep.subr.mxu0 0.0
        %2429 = vmatpush1.msra.mxu0 0.0
        %2430 = vmatprep.subr.mxu0 0.0
        %2431 = vmatpush1.msra.mxu0 0.0
        %2432 = vmatprep.subr.mxu0 0.0
        %2433 = vmatpush1.msra.mxu0 0.0
        %2434 = vmatprep.subr.mxu0 0.0
        %2435 = vmatpush1.msra.mxu0 0.0
        %2436 = vmatprep.subr.mxu0 0.0
        %2437 = vmatpush1.msra.mxu0 0.0
        %2438 = vmatprep.subr.mxu0 0.0
        %2439 = vmatpush1.msra.mxu0 0.0
        %2440 = vmatprep.subr.mxu0 0.0
        %2441 = vmatpush1.msra.mxu0 0.0
        %2442 = vmatprep.subr.mxu0 0.0
        %2443 = vmatpush1.msra.mxu0 0.0
        %2444 = vmatprep.subr.mxu0 0.0
        %2445 = vmatpush1.msra.mxu0 0.0
        %2446 = vmatprep.subr.mxu0 0.0
        %2447 = vmatpush1.msra.mxu0 0.0
        %2448 = vmatprep.subr.mxu0 0.0
        %2449 = vmatpush1.msra.mxu0 %v2393
        %2450 = vmatprep.subr.mxu0 0.0
        %2451 = vmatpush2.msra.mxu0 0.0
        %2452 = vmatprep.subr.mxu0 0.0
        %2453 = vmatpush2.msra.mxu0 0.0
        %2454 = vmatprep.subr.mxu0 0.0
        %2455 = vmatpush2.msra.mxu0 0.0
        %2456 = vmatprep.subr.mxu0 0.0
        %2457 = vmatpush2.msra.mxu0 0.0
        %2458 = vmatprep.subr.mxu0 0.0
        %2459 = vmatpush2.msra.mxu0 0.0
        %2460 = vmatprep.subr.mxu0 0.0
        %2461 = vmatpush2.msra.mxu0 0.0
        %2462 = vmatprep.subr.mxu0 0.0
        %2463 = vmatpush2.msra.mxu0 0.0
        %2464 = vmatprep.subr.mxu0 0.0
        %2465 = vmatpush2.msra.mxu0 0.0
        %2466 = vmatprep.subr.mxu0 0.0
        %2467 = vmatpush2.msra.mxu0 0.0
        %2468 = vmatprep.subr.mxu0 0.0
        %2469 = vmatpush2.msra.mxu0 0.0
        %2470 = vmatprep.subr.mxu0 0.0
        %2471 = vmatpush2.msra.mxu0 0.0
        %2472 = vmatprep.subr.mxu0 0.0
        %2473 = vmatpush2.msra.mxu0 0.0
        %2474 = vmatprep.subr.mxu0 0.0
        %2475 = vmatpush2.msra.mxu0 0.0
        %2476 = vmatprep.subr.mxu0 0.0
        %2477 = vmatpush2.msra.mxu0 0.0
        %2478 = vmatprep.subr.mxu0 0.0
        %2479 = vmatpush2.msra.mxu0 0.0
        %2480 = vmatprep.subr.mxu0 0.0
        %2481 = vmatpush2.msra.mxu0 0.0
        %2482 = vmatprep.mubr.f32.mxu0 0.0
        %2483 = vmatmul.mubr.f32.gmra.mxu0 %v2395
        %v2484 = vpop.f32.mrf.mxu0
        %v2485 = vadd.f32 0.0, %v2484
        %v2486 = vpop.f32.mrf.mxu0
        %2487 = vmatprep.mubr.f32.mxu0 0.0
        %2488 = vmatmul.mubr.f32.gmra.mxu0 %v2398
        %v2489 = vpop.f32.mrf.mxu0
        %v2490 = vadd.f32 0.0, %v2489
        %v2491 = vpop.f32.mrf.mxu0
        %2492 = vmatprep.mubr.f32.mxu0 0.0
        %2493 = vmatmul.mubr.f32.gmra.mxu0 %v2401
        %v2494 = vpop.f32.mrf.mxu0
        %v2495 = vadd.f32 0.0, %v2494
        %v2496 = vpop.f32.mrf.mxu0
        %2497 = vmatprep.mubr.f32.mxu0 0.0
        %2498 = vmatmul.mubr.f32.gmra.mxu0 %v2404
        %v2499 = vpop.f32.mrf.mxu0
        %v2500 = vadd.f32 0.0, %v2499
        %v2501 = vpop.f32.mrf.mxu0
        %2502 = vmatprep.mubr.f32.mxu0 0.0
        %2503 = vmatmul.mubr.f32.gmra.mxu0 %v2407
        %v2504 = vpop.f32.mrf.mxu0
        %v2505 = vadd.f32 0.0, %v2504
        %v2506 = vpop.f32.mrf.mxu0
        %2507 = vmatprep.mubr.f32.mxu0 0.0
        %2508 = vmatmul.mubr.f32.gmra.mxu0 %v2410
        %v2509 = vpop.f32.mrf.mxu0
        %v2510 = vadd.f32 0.0, %v2509
        %v2511 = vpop.f32.mrf.mxu0
        %2512 = vmatprep.mubr.f32.mxu0 0.0
        %2513 = vmatmul.mubr.f32.gmra.mxu0 %v2413
        %v2514 = vpop.f32.mrf.mxu0
        %v2515 = vadd.f32 0.0, %v2514
        %v2516 = vpop.f32.mrf.mxu0
        %2517 = vmatprep.mubr.f32.mxu0 0.0
        %2518 = vmatmul.mubr.f32.gmra.mxu0 %v2416
        %v2519 = vpop.f32.mrf.mxu0
        %v2520 = vadd.f32 0.0, %v2519
        %v2521 = vpop.f32.mrf.mxu0
        %2522 = vdwg.mxu0
        %v2523 = vadd.f32 %v2263, %v2485
        %v2524 = vadd.f32 %v2264, %v2490
        %v2525 = vadd.f32 %v2265, %v2495
        %v2526 = vadd.f32 %v2266, %v2500
        %v2527 = vadd.f32 %v2267, %v2505
        %v2528 = vadd.f32 %v2268, %v2510
        %v2529 = vadd.f32 %v2269, %v2515
        %v2530 = vadd.f32 %v2270, %v2520
        %s2531 = scalar_lea.vmem %s1, 1024
        %v2532 = vld [vmem:[%s2531] sm:$0xff]
        %v2533 = vld [vmem:[%s2531 + $0x8] sm:$0xff]
        %v2534 = vld [vmem:[%s2531 + $0x10] sm:$0xff]
        %v2535 = vld [vmem:[%s2531 + $0x18] sm:$0xff]
        %v2536 = vld [vmem:[%s2531 + $0x20] sm:$0xff]
        %v2537 = vld [vmem:[%s2531 + $0x28] sm:$0xff]
        %v2538 = vld [vmem:[%s2531 + $0x30] sm:$0xff]
        %v2539 = vld [vmem:[%s2531 + $0x38] sm:$0xff]
        %v2540 = vld [vmem:[%s2531 + $0x40] sm:$0xff]
        %v2541 = vld [vmem:[%s2531 + $0x48] sm:$0xff]
        %v2542 = vld [vmem:[%s2531 + $0x50] sm:$0xff]
        %v2543 = vld [vmem:[%s2531 + $0x58] sm:$0xff]
        %v2544 = vld [vmem:[%s2531 + $0x60] sm:$0xff]
        %v2545 = vld [vmem:[%s2531 + $0x68] sm:$0xff]
        %v2546 = vld [vmem:[%s2531 + $0x70] sm:$0xff]
        %v2547 = vld [vmem:[%s2531 + $0x78] sm:$0xff]
        %2548 = vmatprep.subr.mxu0 0.0
        %2549 = vmatpush1.msra.mxu0 %v450
        %2550 = vmatprep.subr.mxu0 0.0
        %2551 = vmatpush1.msra.mxu0 %v449
        %2552 = vmatprep.subr.mxu0 0.0
        %2553 = vmatpush1.msra.mxu0 %v448
        %2554 = vmatprep.subr.mxu0 0.0
        %2555 = vmatpush1.msra.mxu0 %v447
        %2556 = vmatprep.subr.mxu0 0.0
        %2557 = vmatpush1.msra.mxu0 %v446
        %2558 = vmatprep.subr.mxu0 0.0
        %2559 = vmatpush1.msra.mxu0 %v445
        %2560 = vmatprep.subr.mxu0 0.0
        %2561 = vmatpush1.msra.mxu0 %v444
        %2562 = vmatprep.subr.mxu0 0.0
        %2563 = vmatpush1.msra.mxu0 %v443
        %2564 = vmatprep.subr.mxu0 0.0
        %2565 = vmatpush1.msra.mxu0 %v442
        %2566 = vmatprep.subr.mxu0 0.0
        %2567 = vmatpush1.msra.mxu0 %v441
        %2568 = vmatprep.subr.mxu0 0.0
        %2569 = vmatpush1.msra.mxu0 %v440
        %2570 = vmatprep.subr.mxu0 0.0
        %2571 = vmatpush1.msra.mxu0 %v439
        %2572 = vmatprep.subr.mxu0 0.0
        %2573 = vmatpush1.msra.mxu0 %v438
        %2574 = vmatprep.subr.mxu0 0.0
        %2575 = vmatpush1.msra.mxu0 %v437
        %2576 = vmatprep.subr.mxu0 0.0
        %2577 = vmatpush1.msra.mxu0 %v436
        %2578 = vmatprep.subr.mxu0 0.0
        %2579 = vmatpush1.msra.mxu0 %v435
        %2580 = vmatprep.subr.mxu0 0.0
        %2581 = vmatpush2.msra.mxu0 %v466
        %2582 = vmatprep.subr.mxu0 0.0
        %2583 = vmatpush2.msra.mxu0 %v465
        %2584 = vmatprep.subr.mxu0 0.0
        %2585 = vmatpush2.msra.mxu0 %v464
        %2586 = vmatprep.subr.mxu0 0.0
        %2587 = vmatpush2.msra.mxu0 %v463
        %2588 = vmatprep.subr.mxu0 0.0
        %2589 = vmatpush2.msra.mxu0 %v462
        %2590 = vmatprep.subr.mxu0 0.0
        %2591 = vmatpush2.msra.mxu0 %v461
        %2592 = vmatprep.subr.mxu0 0.0
        %2593 = vmatpush2.msra.mxu0 %v460
        %2594 = vmatprep.subr.mxu0 0.0
        %2595 = vmatpush2.msra.mxu0 %v459
        %2596 = vmatprep.subr.mxu0 0.0
        %2597 = vmatpush2.msra.mxu0 %v458
        %2598 = vmatprep.subr.mxu0 0.0
        %2599 = vmatpush2.msra.mxu0 %v457
        %2600 = vmatprep.subr.mxu0 0.0
        %2601 = vmatpush2.msra.mxu0 %v456
        %2602 = vmatprep.subr.mxu0 0.0
        %2603 = vmatpush2.msra.mxu0 %v455
        %2604 = vmatprep.subr.mxu0 0.0
        %2605 = vmatpush2.msra.mxu0 %v454
        %2606 = vmatprep.subr.mxu0 0.0
        %2607 = vmatpush2.msra.mxu0 %v453
        %2608 = vmatprep.subr.mxu0 0.0
        %2609 = vmatpush2.msra.mxu0 %v452
        %2610 = vmatprep.subr.mxu0 0.0
        %2611 = vmatpush2.msra.mxu0 %v451
        %2612 = vmatprep.mubr.f32.mxu0 %v2533
        %2613 = vmatmul.mubr.f32.gmra.mxu0 %v2532
        %v2614 = vpop.f32.mrf.mxu0
        %v2615 = vadd.f32 0.0, %v2614
        %v2616 = vpop.f32.mrf.mxu0
        %2617 = vmatprep.mubr.f32.mxu0 %v2535
        %2618 = vmatmul.mubr.f32.gmra.mxu0 %v2534
        %v2619 = vpop.f32.mrf.mxu0
        %v2620 = vadd.f32 0.0, %v2619
        %v2621 = vpop.f32.mrf.mxu0
        %2622 = vmatprep.mubr.f32.mxu0 %v2537
        %2623 = vmatmul.mubr.f32.gmra.mxu0 %v2536
        %v2624 = vpop.f32.mrf.mxu0
        %v2625 = vadd.f32 0.0, %v2624
        %v2626 = vpop.f32.mrf.mxu0
        %2627 = vmatprep.mubr.f32.mxu0 %v2539
        %2628 = vmatmul.mubr.f32.gmra.mxu0 %v2538
        %v2629 = vpop.f32.mrf.mxu0
        %v2630 = vadd.f32 0.0, %v2629
        %v2631 = vpop.f32.mrf.mxu0
        %2632 = vmatprep.mubr.f32.mxu0 %v2541
        %2633 = vmatmul.mubr.f32.gmra.mxu0 %v2540
        %v2634 = vpop.f32.mrf.mxu0
        %v2635 = vadd.f32 0.0, %v2634
        %v2636 = vpop.f32.mrf.mxu0
        %2637 = vmatprep.mubr.f32.mxu0 %v2543
        %2638 = vmatmul.mubr.f32.gmra.mxu0 %v2542
        %v2639 = vpop.f32.mrf.mxu0
        %v2640 = vadd.f32 0.0, %v2639
        %v2641 = vpop.f32.mrf.mxu0
        %2642 = vmatprep.mubr.f32.mxu0 %v2545
        %2643 = vmatmul.mubr.f32.gmra.mxu0 %v2544
        %v2644 = vpop.f32.mrf.mxu0
        %v2645 = vadd.f32 0.0, %v2644
        %v2646 = vpop.f32.mrf.mxu0
        %2647 = vmatprep.mubr.f32.mxu0 %v2547
        %2648 = vmatmul.mubr.f32.gmra.mxu0 %v2546
        %v2649 = vpop.f32.mrf.mxu0
        %v2650 = vadd.f32 0.0, %v2649
        %v2651 = vpop.f32.mrf.mxu0
        %2652 = vdwg.mxu0
        %v2653 = vld [vmem:[%s2 + $0x40] sm:$0xff]
        %v2655 = vsel %vm712, %v2615, 0
        %v2658 = vsel %vm712, %v2620, 0
        %v2661 = vsel %vm712, %v2625, 0
        %v2664 = vsel %vm712, %v2630, 0
        %v2667 = vsel %vm712, %v2635, 0
        %v2670 = vsel %vm712, %v2640, 0
        %v2673 = vsel %vm712, %v2645, 0
        %v2676 = vsel %vm712, %v2650, 0
        %2678 = vmatprep.subr.mxu0 0.0
        %2679 = vmatpush1.msra.mxu0 0.0
        %2680 = vmatprep.subr.mxu0 0.0
        %2681 = vmatpush1.msra.mxu0 0.0
        %2682 = vmatprep.subr.mxu0 0.0
        %2683 = vmatpush1.msra.mxu0 0.0
        %2684 = vmatprep.subr.mxu0 0.0
        %2685 = vmatpush1.msra.mxu0 0.0
        %2686 = vmatprep.subr.mxu0 0.0
        %2687 = vmatpush1.msra.mxu0 0.0
        %2688 = vmatprep.subr.mxu0 0.0
        %2689 = vmatpush1.msra.mxu0 0.0
        %2690 = vmatprep.subr.mxu0 0.0
        %2691 = vmatpush1.msra.mxu0 0.0
        %2692 = vmatprep.subr.mxu0 0.0
        %2693 = vmatpush1.msra.mxu0 0.0
        %2694 = vmatprep.subr.mxu0 0.0
        %2695 = vmatpush1.msra.mxu0 0.0
        %2696 = vmatprep.subr.mxu0 0.0
        %2697 = vmatpush1.msra.mxu0 0.0
        %2698 = vmatprep.subr.mxu0 0.0
        %2699 = vmatpush1.msra.mxu0 0.0
        %2700 = vmatprep.subr.mxu0 0.0
        %2701 = vmatpush1.msra.mxu0 0.0
        %2702 = vmatprep.subr.mxu0 0.0
        %2703 = vmatpush1.msra.mxu0 0.0
        %2704 = vmatprep.subr.mxu0 0.0
        %2705 = vmatpush1.msra.mxu0 0.0
        %2706 = vmatprep.subr.mxu0 0.0
        %2707 = vmatpush1.msra.mxu0 0.0
        %2708 = vmatprep.subr.mxu0 0.0
        %2709 = vmatpush1.msra.mxu0 %v2653
        %2710 = vmatprep.subr.mxu0 0.0
        %2711 = vmatpush2.msra.mxu0 0.0
        %2712 = vmatprep.subr.mxu0 0.0
        %2713 = vmatpush2.msra.mxu0 0.0
        %2714 = vmatprep.subr.mxu0 0.0
        %2715 = vmatpush2.msra.mxu0 0.0
        %2716 = vmatprep.subr.mxu0 0.0
        %2717 = vmatpush2.msra.mxu0 0.0
        %2718 = vmatprep.subr.mxu0 0.0
        %2719 = vmatpush2.msra.mxu0 0.0
        %2720 = vmatprep.subr.mxu0 0.0
        %2721 = vmatpush2.msra.mxu0 0.0
        %2722 = vmatprep.subr.mxu0 0.0
        %2723 = vmatpush2.msra.mxu0 0.0
        %2724 = vmatprep.subr.mxu0 0.0
        %2725 = vmatpush2.msra.mxu0 0.0
        %2726 = vmatprep.subr.mxu0 0.0
        %2727 = vmatpush2.msra.mxu0 0.0
        %2728 = vmatprep.subr.mxu0 0.0
        %2729 = vmatpush2.msra.mxu0 0.0
        %2730 = vmatprep.subr.mxu0 0.0
        %2731 = vmatpush2.msra.mxu0 0.0
        %2732 = vmatprep.subr.mxu0 0.0
        %2733 = vmatpush2.msra.mxu0 0.0
        %2734 = vmatprep.subr.mxu0 0.0
        %2735 = vmatpush2.msra.mxu0 0.0
        %2736 = vmatprep.subr.mxu0 0.0
        %2737 = vmatpush2.msra.mxu0 0.0
        %2738 = vmatprep.subr.mxu0 0.0
        %2739 = vmatpush2.msra.mxu0 0.0
        %2740 = vmatprep.subr.mxu0 0.0
        %2741 = vmatpush2.msra.mxu0 0.0
        %2742 = vmatprep.mubr.f32.mxu0 0.0
        %2743 = vmatmul.mubr.f32.gmra.mxu0 %v2655
        %v2744 = vpop.f32.mrf.mxu0
        %v2745 = vadd.f32 0.0, %v2744
        %v2746 = vpop.f32.mrf.mxu0
        %2747 = vmatprep.mubr.f32.mxu0 0.0
        %2748 = vmatmul.mubr.f32.gmra.mxu0 %v2658
        %v2749 = vpop.f32.mrf.mxu0
        %v2750 = vadd.f32 0.0, %v2749
        %v2751 = vpop.f32.mrf.mxu0
        %2752 = vmatprep.mubr.f32.mxu0 0.0
        %2753 = vmatmul.mubr.f32.gmra.mxu0 %v2661
        %v2754 = vpop.f32.mrf.mxu0
        %v2755 = vadd.f32 0.0, %v2754
        %v2756 = vpop.f32.mrf.mxu0
        %2757 = vmatprep.mubr.f32.mxu0 0.0
        %2758 = vmatmul.mubr.f32.gmra.mxu0 %v2664
        %v2759 = vpop.f32.mrf.mxu0
        %v2760 = vadd.f32 0.0, %v2759
        %v2761 = vpop.f32.mrf.mxu0
        %2762 = vmatprep.mubr.f32.mxu0 0.0
        %2763 = vmatmul.mubr.f32.gmra.mxu0 %v2667
        %v2764 = vpop.f32.mrf.mxu0
        %v2765 = vadd.f32 0.0, %v2764
        %v2766 = vpop.f32.mrf.mxu0
        %2767 = vmatprep.mubr.f32.mxu0 0.0
        %2768 = vmatmul.mubr.f32.gmra.mxu0 %v2670
        %v2769 = vpop.f32.mrf.mxu0
        %v2770 = vadd.f32 0.0, %v2769
        %v2771 = vpop.f32.mrf.mxu0
        %2772 = vmatprep.mubr.f32.mxu0 0.0
        %2773 = vmatmul.mubr.f32.gmra.mxu0 %v2673
        %v2774 = vpop.f32.mrf.mxu0
        %v2775 = vadd.f32 0.0, %v2774
        %v2776 = vpop.f32.mrf.mxu0
        %2777 = vmatprep.mubr.f32.mxu0 0.0
        %2778 = vmatmul.mubr.f32.gmra.mxu0 %v2676
        %v2779 = vpop.f32.mrf.mxu0
        %v2780 = vadd.f32 0.0, %v2779
        %v2781 = vpop.f32.mrf.mxu0
        %2782 = vdwg.mxu0
        %v2783 = vadd.f32 %v2523, %v2745
        %v2784 = vadd.f32 %v2524, %v2750
        %v2785 = vadd.f32 %v2525, %v2755
        %v2786 = vadd.f32 %v2526, %v2760
        %v2787 = vadd.f32 %v2527, %v2765
        %v2788 = vadd.f32 %v2528, %v2770
        %v2789 = vadd.f32 %v2529, %v2775
        %v2790 = vadd.f32 %v2530, %v2780
        %s2791 = scalar_lea.vmem %s1, 1152
        %v2792 = vld [vmem:[%s2791] sm:$0xff]
        %v2793 = vld [vmem:[%s2791 + $0x8] sm:$0xff]
        %v2794 = vld [vmem:[%s2791 + $0x10] sm:$0xff]
        %v2795 = vld [vmem:[%s2791 + $0x18] sm:$0xff]
        %v2796 = vld [vmem:[%s2791 + $0x20] sm:$0xff]
        %v2797 = vld [vmem:[%s2791 + $0x28] sm:$0xff]
        %v2798 = vld [vmem:[%s2791 + $0x30] sm:$0xff]
        %v2799 = vld [vmem:[%s2791 + $0x38] sm:$0xff]
        %v2800 = vld [vmem:[%s2791 + $0x40] sm:$0xff]
        %v2801 = vld [vmem:[%s2791 + $0x48] sm:$0xff]
        %v2802 = vld [vmem:[%s2791 + $0x50] sm:$0xff]
        %v2803 = vld [vmem:[%s2791 + $0x58] sm:$0xff]
        %v2804 = vld [vmem:[%s2791 + $0x60] sm:$0xff]
        %v2805 = vld [vmem:[%s2791 + $0x68] sm:$0xff]
        %v2806 = vld [vmem:[%s2791 + $0x70] sm:$0xff]
        %v2807 = vld [vmem:[%s2791 + $0x78] sm:$0xff]
        %2808 = vmatprep.subr.mxu0 0.0
        %2809 = vmatpush1.msra.mxu0 %v450
        %2810 = vmatprep.subr.mxu0 0.0
        %2811 = vmatpush1.msra.mxu0 %v449
        %2812 = vmatprep.subr.mxu0 0.0
        %2813 = vmatpush1.msra.mxu0 %v448
        %2814 = vmatprep.subr.mxu0 0.0
        %2815 = vmatpush1.msra.mxu0 %v447
        %2816 = vmatprep.subr.mxu0 0.0
        %2817 = vmatpush1.msra.mxu0 %v446
        %2818 = vmatprep.subr.mxu0 0.0
        %2819 = vmatpush1.msra.mxu0 %v445
        %2820 = vmatprep.subr.mxu0 0.0
        %2821 = vmatpush1.msra.mxu0 %v444
        %2822 = vmatprep.subr.mxu0 0.0
        %2823 = vmatpush1.msra.mxu0 %v443
        %2824 = vmatprep.subr.mxu0 0.0
        %2825 = vmatpush1.msra.mxu0 %v442
        %2826 = vmatprep.subr.mxu0 0.0
        %2827 = vmatpush1.msra.mxu0 %v441
        %2828 = vmatprep.subr.mxu0 0.0
        %2829 = vmatpush1.msra.mxu0 %v440
        %2830 = vmatprep.subr.mxu0 0.0
        %2831 = vmatpush1.msra.mxu0 %v439
        %2832 = vmatprep.subr.mxu0 0.0
        %2833 = vmatpush1.msra.mxu0 %v438
        %2834 = vmatprep.subr.mxu0 0.0
        %2835 = vmatpush1.msra.mxu0 %v437
        %2836 = vmatprep.subr.mxu0 0.0
        %2837 = vmatpush1.msra.mxu0 %v436
        %2838 = vmatprep.subr.mxu0 0.0
        %2839 = vmatpush1.msra.mxu0 %v435
        %2840 = vmatprep.subr.mxu0 0.0
        %2841 = vmatpush2.msra.mxu0 %v466
        %2842 = vmatprep.subr.mxu0 0.0
        %2843 = vmatpush2.msra.mxu0 %v465
        %2844 = vmatprep.subr.mxu0 0.0
        %2845 = vmatpush2.msra.mxu0 %v464
        %2846 = vmatprep.subr.mxu0 0.0
        %2847 = vmatpush2.msra.mxu0 %v463
        %2848 = vmatprep.subr.mxu0 0.0
        %2849 = vmatpush2.msra.mxu0 %v462
        %2850 = vmatprep.subr.mxu0 0.0
        %2851 = vmatpush2.msra.mxu0 %v461
        %2852 = vmatprep.subr.mxu0 0.0
        %2853 = vmatpush2.msra.mxu0 %v460
        %2854 = vmatprep.subr.mxu0 0.0
        %2855 = vmatpush2.msra.mxu0 %v459
        %2856 = vmatprep.subr.mxu0 0.0
        %2857 = vmatpush2.msra.mxu0 %v458
        %2858 = vmatprep.subr.mxu0 0.0
        %2859 = vmatpush2.msra.mxu0 %v457
        %2860 = vmatprep.subr.mxu0 0.0
        %2861 = vmatpush2.msra.mxu0 %v456
        %2862 = vmatprep.subr.mxu0 0.0
        %2863 = vmatpush2.msra.mxu0 %v455
        %2864 = vmatprep.subr.mxu0 0.0
        %2865 = vmatpush2.msra.mxu0 %v454
        %2866 = vmatprep.subr.mxu0 0.0
        %2867 = vmatpush2.msra.mxu0 %v453
        %2868 = vmatprep.subr.mxu0 0.0
        %2869 = vmatpush2.msra.mxu0 %v452
        %2870 = vmatprep.subr.mxu0 0.0
        %2871 = vmatpush2.msra.mxu0 %v451
        %2872 = vmatprep.mubr.f32.mxu0 %v2793
        %2873 = vmatmul.mubr.f32.gmra.mxu0 %v2792
        %v2874 = vpop.f32.mrf.mxu0
        %v2875 = vadd.f32 0.0, %v2874
        %v2876 = vpop.f32.mrf.mxu0
        %2877 = vmatprep.mubr.f32.mxu0 %v2795
        %2878 = vmatmul.mubr.f32.gmra.mxu0 %v2794
        %v2879 = vpop.f32.mrf.mxu0
        %v2880 = vadd.f32 0.0, %v2879
        %v2881 = vpop.f32.mrf.mxu0
        %2882 = vmatprep.mubr.f32.mxu0 %v2797
        %2883 = vmatmul.mubr.f32.gmra.mxu0 %v2796
        %v2884 = vpop.f32.mrf.mxu0
        %v2885 = vadd.f32 0.0, %v2884
        %v2886 = vpop.f32.mrf.mxu0
        %2887 = vmatprep.mubr.f32.mxu0 %v2799
        %2888 = vmatmul.mubr.f32.gmra.mxu0 %v2798
        %v2889 = vpop.f32.mrf.mxu0
        %v2890 = vadd.f32 0.0, %v2889
        %v2891 = vpop.f32.mrf.mxu0
        %2892 = vmatprep.mubr.f32.mxu0 %v2801
        %2893 = vmatmul.mubr.f32.gmra.mxu0 %v2800
        %v2894 = vpop.f32.mrf.mxu0
        %v2895 = vadd.f32 0.0, %v2894
        %v2896 = vpop.f32.mrf.mxu0
        %2897 = vmatprep.mubr.f32.mxu0 %v2803
        %2898 = vmatmul.mubr.f32.gmra.mxu0 %v2802
        %v2899 = vpop.f32.mrf.mxu0
        %v2900 = vadd.f32 0.0, %v2899
        %v2901 = vpop.f32.mrf.mxu0
        %2902 = vmatprep.mubr.f32.mxu0 %v2805
        %2903 = vmatmul.mubr.f32.gmra.mxu0 %v2804
        %v2904 = vpop.f32.mrf.mxu0
        %v2905 = vadd.f32 0.0, %v2904
        %v2906 = vpop.f32.mrf.mxu0
        %2907 = vmatprep.mubr.f32.mxu0 %v2807
        %2908 = vmatmul.mubr.f32.gmra.mxu0 %v2806
        %v2909 = vpop.f32.mrf.mxu0
        %v2910 = vadd.f32 0.0, %v2909
        %v2911 = vpop.f32.mrf.mxu0
        %2912 = vdwg.mxu0
        %v2913 = vld [vmem:[%s2 + $0x48] sm:$0xff]
        %v2915 = vsel %vm712, %v2875, 0
        %v2918 = vsel %vm712, %v2880, 0
        %v2921 = vsel %vm712, %v2885, 0
        %v2924 = vsel %vm712, %v2890, 0
        %v2927 = vsel %vm712, %v2895, 0
        %v2930 = vsel %vm712, %v2900, 0
        %v2933 = vsel %vm712, %v2905, 0
        %v2936 = vsel %vm712, %v2910, 0
        %2938 = vmatprep.subr.mxu0 0.0
        %2939 = vmatpush1.msra.mxu0 0.0
        %2940 = vmatprep.subr.mxu0 0.0
        %2941 = vmatpush1.msra.mxu0 0.0
        %2942 = vmatprep.subr.mxu0 0.0
        %2943 = vmatpush1.msra.mxu0 0.0
        %2944 = vmatprep.subr.mxu0 0.0
        %2945 = vmatpush1.msra.mxu0 0.0
        %2946 = vmatprep.subr.mxu0 0.0
        %2947 = vmatpush1.msra.mxu0 0.0
        %2948 = vmatprep.subr.mxu0 0.0
        %2949 = vmatpush1.msra.mxu0 0.0
        %2950 = vmatprep.subr.mxu0 0.0
        %2951 = vmatpush1.msra.mxu0 0.0
        %2952 = vmatprep.subr.mxu0 0.0
        %2953 = vmatpush1.msra.mxu0 0.0
        %2954 = vmatprep.subr.mxu0 0.0
        %2955 = vmatpush1.msra.mxu0 0.0
        %2956 = vmatprep.subr.mxu0 0.0
        %2957 = vmatpush1.msra.mxu0 0.0
        %2958 = vmatprep.subr.mxu0 0.0
        %2959 = vmatpush1.msra.mxu0 0.0
        %2960 = vmatprep.subr.mxu0 0.0
        %2961 = vmatpush1.msra.mxu0 0.0
        %2962 = vmatprep.subr.mxu0 0.0
        %2963 = vmatpush1.msra.mxu0 0.0
        %2964 = vmatprep.subr.mxu0 0.0
        %2965 = vmatpush1.msra.mxu0 0.0
        %2966 = vmatprep.subr.mxu0 0.0
        %2967 = vmatpush1.msra.mxu0 0.0
        %2968 = vmatprep.subr.mxu0 0.0
        %2969 = vmatpush1.msra.mxu0 %v2913
        %2970 = vmatprep.subr.mxu0 0.0
        %2971 = vmatpush2.msra.mxu0 0.0
        %2972 = vmatprep.subr.mxu0 0.0
        %2973 = vmatpush2.msra.mxu0 0.0
        %2974 = vmatprep.subr.mxu0 0.0
        %2975 = vmatpush2.msra.mxu0 0.0
        %2976 = vmatprep.subr.mxu0 0.0
        %2977 = vmatpush2.msra.mxu0 0.0
        %2978 = vmatprep.subr.mxu0 0.0
        %2979 = vmatpush2.msra.mxu0 0.0
        %2980 = vmatprep.subr.mxu0 0.0
        %2981 = vmatpush2.msra.mxu0 0.0
        %2982 = vmatprep.subr.mxu0 0.0
        %2983 = vmatpush2.msra.mxu0 0.0
        %2984 = vmatprep.subr.mxu0 0.0
        %2985 = vmatpush2.msra.mxu0 0.0
        %2986 = vmatprep.subr.mxu0 0.0
        %2987 = vmatpush2.msra.mxu0 0.0
        %2988 = vmatprep.subr.mxu0 0.0
        %2989 = vmatpush2.msra.mxu0 0.0
        %2990 = vmatprep.subr.mxu0 0.0
        %2991 = vmatpush2.msra.mxu0 0.0
        %2992 = vmatprep.subr.mxu0 0.0
        %2993 = vmatpush2.msra.mxu0 0.0
        %2994 = vmatprep.subr.mxu0 0.0
        %2995 = vmatpush2.msra.mxu0 0.0
        %2996 = vmatprep.subr.mxu0 0.0
        %2997 = vmatpush2.msra.mxu0 0.0
        %2998 = vmatprep.subr.mxu0 0.0
        %2999 = vmatpush2.msra.mxu0 0.0
        %3000 = vmatprep.subr.mxu0 0.0
        %3001 = vmatpush2.msra.mxu0 0.0
        %3002 = vmatprep.mubr.f32.mxu0 0.0
        %3003 = vmatmul.mubr.f32.gmra.mxu0 %v2915
        %v3004 = vpop.f32.mrf.mxu0
        %v3005 = vadd.f32 0.0, %v3004
        %v3006 = vpop.f32.mrf.mxu0
        %3007 = vmatprep.mubr.f32.mxu0 0.0
        %3008 = vmatmul.mubr.f32.gmra.mxu0 %v2918
        %v3009 = vpop.f32.mrf.mxu0
        %v3010 = vadd.f32 0.0, %v3009
        %v3011 = vpop.f32.mrf.mxu0
        %3012 = vmatprep.mubr.f32.mxu0 0.0
        %3013 = vmatmul.mubr.f32.gmra.mxu0 %v2921
        %v3014 = vpop.f32.mrf.mxu0
        %v3015 = vadd.f32 0.0, %v3014
        %v3016 = vpop.f32.mrf.mxu0
        %3017 = vmatprep.mubr.f32.mxu0 0.0
        %3018 = vmatmul.mubr.f32.gmra.mxu0 %v2924
        %v3019 = vpop.f32.mrf.mxu0
        %v3020 = vadd.f32 0.0, %v3019
        %v3021 = vpop.f32.mrf.mxu0
        %3022 = vmatprep.mubr.f32.mxu0 0.0
        %3023 = vmatmul.mubr.f32.gmra.mxu0 %v2927
        %v3024 = vpop.f32.mrf.mxu0
        %v3025 = vadd.f32 0.0, %v3024
        %v3026 = vpop.f32.mrf.mxu0
        %3027 = vmatprep.mubr.f32.mxu0 0.0
        %3028 = vmatmul.mubr.f32.gmra.mxu0 %v2930
        %v3029 = vpop.f32.mrf.mxu0
        %v3030 = vadd.f32 0.0, %v3029
        %v3031 = vpop.f32.mrf.mxu0
        %3032 = vmatprep.mubr.f32.mxu0 0.0
        %3033 = vmatmul.mubr.f32.gmra.mxu0 %v2933
        %v3034 = vpop.f32.mrf.mxu0
        %v3035 = vadd.f32 0.0, %v3034
        %v3036 = vpop.f32.mrf.mxu0
        %3037 = vmatprep.mubr.f32.mxu0 0.0
        %3038 = vmatmul.mubr.f32.gmra.mxu0 %v2936
        %v3039 = vpop.f32.mrf.mxu0
        %v3040 = vadd.f32 0.0, %v3039
        %v3041 = vpop.f32.mrf.mxu0
        %3042 = vdwg.mxu0
        %v3043 = vadd.f32 %v2783, %v3005
        %v3044 = vadd.f32 %v2784, %v3010
        %v3045 = vadd.f32 %v2785, %v3015
        %v3046 = vadd.f32 %v2786, %v3020
        %v3047 = vadd.f32 %v2787, %v3025
        %v3048 = vadd.f32 %v2788, %v3030
        %v3049 = vadd.f32 %v2789, %v3035
        %v3050 = vadd.f32 %v2790, %v3040
        %s3051 = scalar_lea.vmem %s1, 1280
        %v3052 = vld [vmem:[%s3051] sm:$0xff]
        %v3053 = vld [vmem:[%s3051 + $0x8] sm:$0xff]
        %v3054 = vld [vmem:[%s3051 + $0x10] sm:$0xff]
        %v3055 = vld [vmem:[%s3051 + $0x18] sm:$0xff]
        %v3056 = vld [vmem:[%s3051 + $0x20] sm:$0xff]
        %v3057 = vld [vmem:[%s3051 + $0x28] sm:$0xff]
        %v3058 = vld [vmem:[%s3051 + $0x30] sm:$0xff]
        %v3059 = vld [vmem:[%s3051 + $0x38] sm:$0xff]
        %v3060 = vld [vmem:[%s3051 + $0x40] sm:$0xff]
        %v3061 = vld [vmem:[%s3051 + $0x48] sm:$0xff]
        %v3062 = vld [vmem:[%s3051 + $0x50] sm:$0xff]
        %v3063 = vld [vmem:[%s3051 + $0x58] sm:$0xff]
        %v3064 = vld [vmem:[%s3051 + $0x60] sm:$0xff]
        %v3065 = vld [vmem:[%s3051 + $0x68] sm:$0xff]
        %v3066 = vld [vmem:[%s3051 + $0x70] sm:$0xff]
        %v3067 = vld [vmem:[%s3051 + $0x78] sm:$0xff]
        %3068 = vmatprep.subr.mxu0 0.0
        %3069 = vmatpush1.msra.mxu0 %v450
        %3070 = vmatprep.subr.mxu0 0.0
        %3071 = vmatpush1.msra.mxu0 %v449
        %3072 = vmatprep.subr.mxu0 0.0
        %3073 = vmatpush1.msra.mxu0 %v448
        %3074 = vmatprep.subr.mxu0 0.0
        %3075 = vmatpush1.msra.mxu0 %v447
        %3076 = vmatprep.subr.mxu0 0.0
        %3077 = vmatpush1.msra.mxu0 %v446
        %3078 = vmatprep.subr.mxu0 0.0
        %3079 = vmatpush1.msra.mxu0 %v445
        %3080 = vmatprep.subr.mxu0 0.0
        %3081 = vmatpush1.msra.mxu0 %v444
        %3082 = vmatprep.subr.mxu0 0.0
        %3083 = vmatpush1.msra.mxu0 %v443
        %3084 = vmatprep.subr.mxu0 0.0
        %3085 = vmatpush1.msra.mxu0 %v442
        %3086 = vmatprep.subr.mxu0 0.0
        %3087 = vmatpush1.msra.mxu0 %v441
        %3088 = vmatprep.subr.mxu0 0.0
        %3089 = vmatpush1.msra.mxu0 %v440
        %3090 = vmatprep.subr.mxu0 0.0
        %3091 = vmatpush1.msra.mxu0 %v439
        %3092 = vmatprep.subr.mxu0 0.0
        %3093 = vmatpush1.msra.mxu0 %v438
        %3094 = vmatprep.subr.mxu0 0.0
        %3095 = vmatpush1.msra.mxu0 %v437
        %3096 = vmatprep.subr.mxu0 0.0
        %3097 = vmatpush1.msra.mxu0 %v436
        %3098 = vmatprep.subr.mxu0 0.0
        %3099 = vmatpush1.msra.mxu0 %v435
        %3100 = vmatprep.subr.mxu0 0.0
        %3101 = vmatpush2.msra.mxu0 %v466
        %3102 = vmatprep.subr.mxu0 0.0
        %3103 = vmatpush2.msra.mxu0 %v465
        %3104 = vmatprep.subr.mxu0 0.0
        %3105 = vmatpush2.msra.mxu0 %v464
        %3106 = vmatprep.subr.mxu0 0.0
        %3107 = vmatpush2.msra.mxu0 %v463
        %3108 = vmatprep.subr.mxu0 0.0
        %3109 = vmatpush2.msra.mxu0 %v462
        %3110 = vmatprep.subr.mxu0 0.0
        %3111 = vmatpush2.msra.mxu0 %v461
        %3112 = vmatprep.subr.mxu0 0.0
        %3113 = vmatpush2.msra.mxu0 %v460
        %3114 = vmatprep.subr.mxu0 0.0
        %3115 = vmatpush2.msra.mxu0 %v459
        %3116 = vmatprep.subr.mxu0 0.0
        %3117 = vmatpush2.msra.mxu0 %v458
        %3118 = vmatprep.subr.mxu0 0.0
        %3119 = vmatpush2.msra.mxu0 %v457
        %3120 = vmatprep.subr.mxu0 0.0
        %3121 = vmatpush2.msra.mxu0 %v456
        %3122 = vmatprep.subr.mxu0 0.0
        %3123 = vmatpush2.msra.mxu0 %v455
        %3124 = vmatprep.subr.mxu0 0.0
        %3125 = vmatpush2.msra.mxu0 %v454
        %3126 = vmatprep.subr.mxu0 0.0
        %3127 = vmatpush2.msra.mxu0 %v453
        %3128 = vmatprep.subr.mxu0 0.0
        %3129 = vmatpush2.msra.mxu0 %v452
        %3130 = vmatprep.subr.mxu0 0.0
        %3131 = vmatpush2.msra.mxu0 %v451
        %3132 = vmatprep.mubr.f32.mxu0 %v3053
        %3133 = vmatmul.mubr.f32.gmra.mxu0 %v3052
        %v3134 = vpop.f32.mrf.mxu0
        %v3135 = vadd.f32 0.0, %v3134
        %v3136 = vpop.f32.mrf.mxu0
        %3137 = vmatprep.mubr.f32.mxu0 %v3055
        %3138 = vmatmul.mubr.f32.gmra.mxu0 %v3054
        %v3139 = vpop.f32.mrf.mxu0
        %v3140 = vadd.f32 0.0, %v3139
        %v3141 = vpop.f32.mrf.mxu0
        %3142 = vmatprep.mubr.f32.mxu0 %v3057
        %3143 = vmatmul.mubr.f32.gmra.mxu0 %v3056
        %v3144 = vpop.f32.mrf.mxu0
        %v3145 = vadd.f32 0.0, %v3144
        %v3146 = vpop.f32.mrf.mxu0
        %3147 = vmatprep.mubr.f32.mxu0 %v3059
        %3148 = vmatmul.mubr.f32.gmra.mxu0 %v3058
        %v3149 = vpop.f32.mrf.mxu0
        %v3150 = vadd.f32 0.0, %v3149
        %v3151 = vpop.f32.mrf.mxu0
        %3152 = vmatprep.mubr.f32.mxu0 %v3061
        %3153 = vmatmul.mubr.f32.gmra.mxu0 %v3060
        %v3154 = vpop.f32.mrf.mxu0
        %v3155 = vadd.f32 0.0, %v3154
        %v3156 = vpop.f32.mrf.mxu0
        %3157 = vmatprep.mubr.f32.mxu0 %v3063
        %3158 = vmatmul.mubr.f32.gmra.mxu0 %v3062
        %v3159 = vpop.f32.mrf.mxu0
        %v3160 = vadd.f32 0.0, %v3159
        %v3161 = vpop.f32.mrf.mxu0
        %3162 = vmatprep.mubr.f32.mxu0 %v3065
        %3163 = vmatmul.mubr.f32.gmra.mxu0 %v3064
        %v3164 = vpop.f32.mrf.mxu0
        %v3165 = vadd.f32 0.0, %v3164
        %v3166 = vpop.f32.mrf.mxu0
        %3167 = vmatprep.mubr.f32.mxu0 %v3067
        %3168 = vmatmul.mubr.f32.gmra.mxu0 %v3066
        %v3169 = vpop.f32.mrf.mxu0
        %v3170 = vadd.f32 0.0, %v3169
        %v3171 = vpop.f32.mrf.mxu0
        %3172 = vdwg.mxu0
        %v3173 = vld [vmem:[%s2 + $0x50] sm:$0xff]
        %v3175 = vsel %vm712, %v3135, 0
        %v3178 = vsel %vm712, %v3140, 0
        %v3181 = vsel %vm712, %v3145, 0
        %v3184 = vsel %vm712, %v3150, 0
        %v3187 = vsel %vm712, %v3155, 0
        %v3190 = vsel %vm712, %v3160, 0
        %v3193 = vsel %vm712, %v3165, 0
        %v3196 = vsel %vm712, %v3170, 0
        %3198 = vmatprep.subr.mxu0 0.0
        %3199 = vmatpush1.msra.mxu0 0.0
        %3200 = vmatprep.subr.mxu0 0.0
        %3201 = vmatpush1.msra.mxu0 0.0
        %3202 = vmatprep.subr.mxu0 0.0
        %3203 = vmatpush1.msra.mxu0 0.0
        %3204 = vmatprep.subr.mxu0 0.0
        %3205 = vmatpush1.msra.mxu0 0.0
        %3206 = vmatprep.subr.mxu0 0.0
        %3207 = vmatpush1.msra.mxu0 0.0
        %3208 = vmatprep.subr.mxu0 0.0
        %3209 = vmatpush1.msra.mxu0 0.0
        %3210 = vmatprep.subr.mxu0 0.0
        %3211 = vmatpush1.msra.mxu0 0.0
        %3212 = vmatprep.subr.mxu0 0.0
        %3213 = vmatpush1.msra.mxu0 0.0
        %3214 = vmatprep.subr.mxu0 0.0
        %3215 = vmatpush1.msra.mxu0 0.0
        %3216 = vmatprep.subr.mxu0 0.0
        %3217 = vmatpush1.msra.mxu0 0.0
        %3218 = vmatprep.subr.mxu0 0.0
        %3219 = vmatpush1.msra.mxu0 0.0
        %3220 = vmatprep.subr.mxu0 0.0
        %3221 = vmatpush1.msra.mxu0 0.0
        %3222 = vmatprep.subr.mxu0 0.0
        %3223 = vmatpush1.msra.mxu0 0.0
        %3224 = vmatprep.subr.mxu0 0.0
        %3225 = vmatpush1.msra.mxu0 0.0
        %3226 = vmatprep.subr.mxu0 0.0
        %3227 = vmatpush1.msra.mxu0 0.0
        %3228 = vmatprep.subr.mxu0 0.0
        %3229 = vmatpush1.msra.mxu0 %v3173
        %3230 = vmatprep.subr.mxu0 0.0
        %3231 = vmatpush2.msra.mxu0 0.0
        %3232 = vmatprep.subr.mxu0 0.0
        %3233 = vmatpush2.msra.mxu0 0.0
        %3234 = vmatprep.subr.mxu0 0.0
        %3235 = vmatpush2.msra.mxu0 0.0
        %3236 = vmatprep.subr.mxu0 0.0
        %3237 = vmatpush2.msra.mxu0 0.0
        %3238 = vmatprep.subr.mxu0 0.0
        %3239 = vmatpush2.msra.mxu0 0.0
        %3240 = vmatprep.subr.mxu0 0.0
        %3241 = vmatpush2.msra.mxu0 0.0
        %3242 = vmatprep.subr.mxu0 0.0
        %3243 = vmatpush2.msra.mxu0 0.0
        %3244 = vmatprep.subr.mxu0 0.0
        %3245 = vmatpush2.msra.mxu0 0.0
        %3246 = vmatprep.subr.mxu0 0.0
        %3247 = vmatpush2.msra.mxu0 0.0
        %3248 = vmatprep.subr.mxu0 0.0
        %3249 = vmatpush2.msra.mxu0 0.0
        %3250 = vmatprep.subr.mxu0 0.0
        %3251 = vmatpush2.msra.mxu0 0.0
        %3252 = vmatprep.subr.mxu0 0.0
        %3253 = vmatpush2.msra.mxu0 0.0
        %3254 = vmatprep.subr.mxu0 0.0
        %3255 = vmatpush2.msra.mxu0 0.0
        %3256 = vmatprep.subr.mxu0 0.0
        %3257 = vmatpush2.msra.mxu0 0.0
        %3258 = vmatprep.subr.mxu0 0.0
        %3259 = vmatpush2.msra.mxu0 0.0
        %3260 = vmatprep.subr.mxu0 0.0
        %3261 = vmatpush2.msra.mxu0 0.0
        %3262 = vmatprep.mubr.f32.mxu0 0.0
        %3263 = vmatmul.mubr.f32.gmra.mxu0 %v3175
        %v3264 = vpop.f32.mrf.mxu0
        %v3265 = vadd.f32 0.0, %v3264
        %v3266 = vpop.f32.mrf.mxu0
        %3267 = vmatprep.mubr.f32.mxu0 0.0
        %3268 = vmatmul.mubr.f32.gmra.mxu0 %v3178
        %v3269 = vpop.f32.mrf.mxu0
        %v3270 = vadd.f32 0.0, %v3269
        %v3271 = vpop.f32.mrf.mxu0
        %3272 = vmatprep.mubr.f32.mxu0 0.0
        %3273 = vmatmul.mubr.f32.gmra.mxu0 %v3181
        %v3274 = vpop.f32.mrf.mxu0
        %v3275 = vadd.f32 0.0, %v3274
        %v3276 = vpop.f32.mrf.mxu0
        %3277 = vmatprep.mubr.f32.mxu0 0.0
        %3278 = vmatmul.mubr.f32.gmra.mxu0 %v3184
        %v3279 = vpop.f32.mrf.mxu0
        %v3280 = vadd.f32 0.0, %v3279
        %v3281 = vpop.f32.mrf.mxu0
        %3282 = vmatprep.mubr.f32.mxu0 0.0
        %3283 = vmatmul.mubr.f32.gmra.mxu0 %v3187
        %v3284 = vpop.f32.mrf.mxu0
        %v3285 = vadd.f32 0.0, %v3284
        %v3286 = vpop.f32.mrf.mxu0
        %3287 = vmatprep.mubr.f32.mxu0 0.0
        %3288 = vmatmul.mubr.f32.gmra.mxu0 %v3190
        %v3289 = vpop.f32.mrf.mxu0
        %v3290 = vadd.f32 0.0, %v3289
        %v3291 = vpop.f32.mrf.mxu0
        %3292 = vmatprep.mubr.f32.mxu0 0.0
        %3293 = vmatmul.mubr.f32.gmra.mxu0 %v3193
        %v3294 = vpop.f32.mrf.mxu0
        %v3295 = vadd.f32 0.0, %v3294
        %v3296 = vpop.f32.mrf.mxu0
        %3297 = vmatprep.mubr.f32.mxu0 0.0
        %3298 = vmatmul.mubr.f32.gmra.mxu0 %v3196
        %v3299 = vpop.f32.mrf.mxu0
        %v3300 = vadd.f32 0.0, %v3299
        %v3301 = vpop.f32.mrf.mxu0
        %3302 = vdwg.mxu0
        %v3303 = vadd.f32 %v3043, %v3265
        %v3304 = vadd.f32 %v3044, %v3270
        %v3305 = vadd.f32 %v3045, %v3275
        %v3306 = vadd.f32 %v3046, %v3280
        %v3307 = vadd.f32 %v3047, %v3285
        %v3308 = vadd.f32 %v3048, %v3290
        %v3309 = vadd.f32 %v3049, %v3295
        %v3310 = vadd.f32 %v3050, %v3300
        %s3311 = scalar_lea.vmem %s1, 1408
        %v3312 = vld [vmem:[%s3311] sm:$0xff]
        %v3313 = vld [vmem:[%s3311 + $0x8] sm:$0xff]
        %v3314 = vld [vmem:[%s3311 + $0x10] sm:$0xff]
        %v3315 = vld [vmem:[%s3311 + $0x18] sm:$0xff]
        %v3316 = vld [vmem:[%s3311 + $0x20] sm:$0xff]
        %v3317 = vld [vmem:[%s3311 + $0x28] sm:$0xff]
        %v3318 = vld [vmem:[%s3311 + $0x30] sm:$0xff]
        %v3319 = vld [vmem:[%s3311 + $0x38] sm:$0xff]
        %v3320 = vld [vmem:[%s3311 + $0x40] sm:$0xff]
        %v3321 = vld [vmem:[%s3311 + $0x48] sm:$0xff]
        %v3322 = vld [vmem:[%s3311 + $0x50] sm:$0xff]
        %v3323 = vld [vmem:[%s3311 + $0x58] sm:$0xff]
        %v3324 = vld [vmem:[%s3311 + $0x60] sm:$0xff]
        %v3325 = vld [vmem:[%s3311 + $0x68] sm:$0xff]
        %v3326 = vld [vmem:[%s3311 + $0x70] sm:$0xff]
        %v3327 = vld [vmem:[%s3311 + $0x78] sm:$0xff]
        %3328 = vmatprep.subr.mxu0 0.0
        %3329 = vmatpush1.msra.mxu0 %v450
        %3330 = vmatprep.subr.mxu0 0.0
        %3331 = vmatpush1.msra.mxu0 %v449
        %3332 = vmatprep.subr.mxu0 0.0
        %3333 = vmatpush1.msra.mxu0 %v448
        %3334 = vmatprep.subr.mxu0 0.0
        %3335 = vmatpush1.msra.mxu0 %v447
        %3336 = vmatprep.subr.mxu0 0.0
        %3337 = vmatpush1.msra.mxu0 %v446
        %3338 = vmatprep.subr.mxu0 0.0
        %3339 = vmatpush1.msra.mxu0 %v445
        %3340 = vmatprep.subr.mxu0 0.0
        %3341 = vmatpush1.msra.mxu0 %v444
        %3342 = vmatprep.subr.mxu0 0.0
        %3343 = vmatpush1.msra.mxu0 %v443
        %3344 = vmatprep.subr.mxu0 0.0
        %3345 = vmatpush1.msra.mxu0 %v442
        %3346 = vmatprep.subr.mxu0 0.0
        %3347 = vmatpush1.msra.mxu0 %v441
        %3348 = vmatprep.subr.mxu0 0.0
        %3349 = vmatpush1.msra.mxu0 %v440
        %3350 = vmatprep.subr.mxu0 0.0
        %3351 = vmatpush1.msra.mxu0 %v439
        %3352 = vmatprep.subr.mxu0 0.0
        %3353 = vmatpush1.msra.mxu0 %v438
        %3354 = vmatprep.subr.mxu0 0.0
        %3355 = vmatpush1.msra.mxu0 %v437
        %3356 = vmatprep.subr.mxu0 0.0
        %3357 = vmatpush1.msra.mxu0 %v436
        %3358 = vmatprep.subr.mxu0 0.0
        %3359 = vmatpush1.msra.mxu0 %v435
        %3360 = vmatprep.subr.mxu0 0.0
        %3361 = vmatpush2.msra.mxu0 %v466
        %3362 = vmatprep.subr.mxu0 0.0
        %3363 = vmatpush2.msra.mxu0 %v465
        %3364 = vmatprep.subr.mxu0 0.0
        %3365 = vmatpush2.msra.mxu0 %v464
        %3366 = vmatprep.subr.mxu0 0.0
        %3367 = vmatpush2.msra.mxu0 %v463
        %3368 = vmatprep.subr.mxu0 0.0
        %3369 = vmatpush2.msra.mxu0 %v462
        %3370 = vmatprep.subr.mxu0 0.0
        %3371 = vmatpush2.msra.mxu0 %v461
        %3372 = vmatprep.subr.mxu0 0.0
        %3373 = vmatpush2.msra.mxu0 %v460
        %3374 = vmatprep.subr.mxu0 0.0
        %3375 = vmatpush2.msra.mxu0 %v459
        %3376 = vmatprep.subr.mxu0 0.0
        %3377 = vmatpush2.msra.mxu0 %v458
        %3378 = vmatprep.subr.mxu0 0.0
        %3379 = vmatpush2.msra.mxu0 %v457
        %3380 = vmatprep.subr.mxu0 0.0
        %3381 = vmatpush2.msra.mxu0 %v456
        %3382 = vmatprep.subr.mxu0 0.0
        %3383 = vmatpush2.msra.mxu0 %v455
        %3384 = vmatprep.subr.mxu0 0.0
        %3385 = vmatpush2.msra.mxu0 %v454
        %3386 = vmatprep.subr.mxu0 0.0
        %3387 = vmatpush2.msra.mxu0 %v453
        %3388 = vmatprep.subr.mxu0 0.0
        %3389 = vmatpush2.msra.mxu0 %v452
        %3390 = vmatprep.subr.mxu0 0.0
        %3391 = vmatpush2.msra.mxu0 %v451
        %3392 = vmatprep.mubr.f32.mxu0 %v3313
        %3393 = vmatmul.mubr.f32.gmra.mxu0 %v3312
        %v3394 = vpop.f32.mrf.mxu0
        %v3395 = vadd.f32 0.0, %v3394
        %v3396 = vpop.f32.mrf.mxu0
        %3397 = vmatprep.mubr.f32.mxu0 %v3315
        %3398 = vmatmul.mubr.f32.gmra.mxu0 %v3314
        %v3399 = vpop.f32.mrf.mxu0
        %v3400 = vadd.f32 0.0, %v3399
        %v3401 = vpop.f32.mrf.mxu0
        %3402 = vmatprep.mubr.f32.mxu0 %v3317
        %3403 = vmatmul.mubr.f32.gmra.mxu0 %v3316
        %v3404 = vpop.f32.mrf.mxu0
        %v3405 = vadd.f32 0.0, %v3404
        %v3406 = vpop.f32.mrf.mxu0
        %3407 = vmatprep.mubr.f32.mxu0 %v3319
        %3408 = vmatmul.mubr.f32.gmra.mxu0 %v3318
        %v3409 = vpop.f32.mrf.mxu0
        %v3410 = vadd.f32 0.0, %v3409
        %v3411 = vpop.f32.mrf.mxu0
        %3412 = vmatprep.mubr.f32.mxu0 %v3321
        %3413 = vmatmul.mubr.f32.gmra.mxu0 %v3320
        %v3414 = vpop.f32.mrf.mxu0
        %v3415 = vadd.f32 0.0, %v3414
        %v3416 = vpop.f32.mrf.mxu0
        %3417 = vmatprep.mubr.f32.mxu0 %v3323
        %3418 = vmatmul.mubr.f32.gmra.mxu0 %v3322
        %v3419 = vpop.f32.mrf.mxu0
        %v3420 = vadd.f32 0.0, %v3419
        %v3421 = vpop.f32.mrf.mxu0
        %3422 = vmatprep.mubr.f32.mxu0 %v3325
        %3423 = vmatmul.mubr.f32.gmra.mxu0 %v3324
        %v3424 = vpop.f32.mrf.mxu0
        %v3425 = vadd.f32 0.0, %v3424
        %v3426 = vpop.f32.mrf.mxu0
        %3427 = vmatprep.mubr.f32.mxu0 %v3327
        %3428 = vmatmul.mubr.f32.gmra.mxu0 %v3326
        %v3429 = vpop.f32.mrf.mxu0
        %v3430 = vadd.f32 0.0, %v3429
        %v3431 = vpop.f32.mrf.mxu0
        %3432 = vdwg.mxu0
        %v3433 = vld [vmem:[%s2 + $0x58] sm:$0xff]
        %v3435 = vsel %vm712, %v3395, 0
        %v3438 = vsel %vm712, %v3400, 0
        %v3441 = vsel %vm712, %v3405, 0
        %v3444 = vsel %vm712, %v3410, 0
        %v3447 = vsel %vm712, %v3415, 0
        %v3450 = vsel %vm712, %v3420, 0
        %v3453 = vsel %vm712, %v3425, 0
        %v3456 = vsel %vm712, %v3430, 0
        %3458 = vmatprep.subr.mxu0 0.0
        %3459 = vmatpush1.msra.mxu0 0.0
        %3460 = vmatprep.subr.mxu0 0.0
        %3461 = vmatpush1.msra.mxu0 0.0
        %3462 = vmatprep.subr.mxu0 0.0
        %3463 = vmatpush1.msra.mxu0 0.0
        %3464 = vmatprep.subr.mxu0 0.0
        %3465 = vmatpush1.msra.mxu0 0.0
        %3466 = vmatprep.subr.mxu0 0.0
        %3467 = vmatpush1.msra.mxu0 0.0
        %3468 = vmatprep.subr.mxu0 0.0
        %3469 = vmatpush1.msra.mxu0 0.0
        %3470 = vmatprep.subr.mxu0 0.0
        %3471 = vmatpush1.msra.mxu0 0.0
        %3472 = vmatprep.subr.mxu0 0.0
        %3473 = vmatpush1.msra.mxu0 0.0
        %3474 = vmatprep.subr.mxu0 0.0
        %3475 = vmatpush1.msra.mxu0 0.0
        %3476 = vmatprep.subr.mxu0 0.0
        %3477 = vmatpush1.msra.mxu0 0.0
        %3478 = vmatprep.subr.mxu0 0.0
        %3479 = vmatpush1.msra.mxu0 0.0
        %3480 = vmatprep.subr.mxu0 0.0
        %3481 = vmatpush1.msra.mxu0 0.0
        %3482 = vmatprep.subr.mxu0 0.0
        %3483 = vmatpush1.msra.mxu0 0.0
        %3484 = vmatprep.subr.mxu0 0.0
        %3485 = vmatpush1.msra.mxu0 0.0
        %3486 = vmatprep.subr.mxu0 0.0
        %3487 = vmatpush1.msra.mxu0 0.0
        %3488 = vmatprep.subr.mxu0 0.0
        %3489 = vmatpush1.msra.mxu0 %v3433
        %3490 = vmatprep.subr.mxu0 0.0
        %3491 = vmatpush2.msra.mxu0 0.0
        %3492 = vmatprep.subr.mxu0 0.0
        %3493 = vmatpush2.msra.mxu0 0.0
        %3494 = vmatprep.subr.mxu0 0.0
        %3495 = vmatpush2.msra.mxu0 0.0
        %3496 = vmatprep.subr.mxu0 0.0
        %3497 = vmatpush2.msra.mxu0 0.0
        %3498 = vmatprep.subr.mxu0 0.0
        %3499 = vmatpush2.msra.mxu0 0.0
        %3500 = vmatprep.subr.mxu0 0.0
        %3501 = vmatpush2.msra.mxu0 0.0
        %3502 = vmatprep.subr.mxu0 0.0
        %3503 = vmatpush2.msra.mxu0 0.0
        %3504 = vmatprep.subr.mxu0 0.0
        %3505 = vmatpush2.msra.mxu0 0.0
        %3506 = vmatprep.subr.mxu0 0.0
        %3507 = vmatpush2.msra.mxu0 0.0
        %3508 = vmatprep.subr.mxu0 0.0
        %3509 = vmatpush2.msra.mxu0 0.0
        %3510 = vmatprep.subr.mxu0 0.0
        %3511 = vmatpush2.msra.mxu0 0.0
        %3512 = vmatprep.subr.mxu0 0.0
        %3513 = vmatpush2.msra.mxu0 0.0
        %3514 = vmatprep.subr.mxu0 0.0
        %3515 = vmatpush2.msra.mxu0 0.0
        %3516 = vmatprep.subr.mxu0 0.0
        %3517 = vmatpush2.msra.mxu0 0.0
        %3518 = vmatprep.subr.mxu0 0.0
        %3519 = vmatpush2.msra.mxu0 0.0
        %3520 = vmatprep.subr.mxu0 0.0
        %3521 = vmatpush2.msra.mxu0 0.0
        %3522 = vmatprep.mubr.f32.mxu0 0.0
        %3523 = vmatmul.mubr.f32.gmra.mxu0 %v3435
        %v3524 = vpop.f32.mrf.mxu0
        %v3525 = vadd.f32 0.0, %v3524
        %v3526 = vpop.f32.mrf.mxu0
        %3527 = vmatprep.mubr.f32.mxu0 0.0
        %3528 = vmatmul.mubr.f32.gmra.mxu0 %v3438
        %v3529 = vpop.f32.mrf.mxu0
        %v3530 = vadd.f32 0.0, %v3529
        %v3531 = vpop.f32.mrf.mxu0
        %3532 = vmatprep.mubr.f32.mxu0 0.0
        %3533 = vmatmul.mubr.f32.gmra.mxu0 %v3441
        %v3534 = vpop.f32.mrf.mxu0
        %v3535 = vadd.f32 0.0, %v3534
        %v3536 = vpop.f32.mrf.mxu0
        %3537 = vmatprep.mubr.f32.mxu0 0.0
        %3538 = vmatmul.mubr.f32.gmra.mxu0 %v3444
        %v3539 = vpop.f32.mrf.mxu0
        %v3540 = vadd.f32 0.0, %v3539
        %v3541 = vpop.f32.mrf.mxu0
        %3542 = vmatprep.mubr.f32.mxu0 0.0
        %3543 = vmatmul.mubr.f32.gmra.mxu0 %v3447
        %v3544 = vpop.f32.mrf.mxu0
        %v3545 = vadd.f32 0.0, %v3544
        %v3546 = vpop.f32.mrf.mxu0
        %3547 = vmatprep.mubr.f32.mxu0 0.0
        %3548 = vmatmul.mubr.f32.gmra.mxu0 %v3450
        %v3549 = vpop.f32.mrf.mxu0
        %v3550 = vadd.f32 0.0, %v3549
        %v3551 = vpop.f32.mrf.mxu0
        %3552 = vmatprep.mubr.f32.mxu0 0.0
        %3553 = vmatmul.mubr.f32.gmra.mxu0 %v3453
        %v3554 = vpop.f32.mrf.mxu0
        %v3555 = vadd.f32 0.0, %v3554
        %v3556 = vpop.f32.mrf.mxu0
        %3557 = vmatprep.mubr.f32.mxu0 0.0
        %3558 = vmatmul.mubr.f32.gmra.mxu0 %v3456
        %v3559 = vpop.f32.mrf.mxu0
        %v3560 = vadd.f32 0.0, %v3559
        %v3561 = vpop.f32.mrf.mxu0
        %3562 = vdwg.mxu0
        %v3563 = vadd.f32 %v3303, %v3525
        %v3564 = vadd.f32 %v3304, %v3530
        %v3565 = vadd.f32 %v3305, %v3535
        %v3566 = vadd.f32 %v3306, %v3540
        %v3567 = vadd.f32 %v3307, %v3545
        %v3568 = vadd.f32 %v3308, %v3550
        %v3569 = vadd.f32 %v3309, %v3555
        %v3570 = vadd.f32 %v3310, %v3560
        %s3571 = scalar_lea.vmem %s1, 1536
        %v3572 = vld [vmem:[%s3571] sm:$0xff]
        %v3573 = vld [vmem:[%s3571 + $0x8] sm:$0xff]
        %v3574 = vld [vmem:[%s3571 + $0x10] sm:$0xff]
        %v3575 = vld [vmem:[%s3571 + $0x18] sm:$0xff]
        %v3576 = vld [vmem:[%s3571 + $0x20] sm:$0xff]
        %v3577 = vld [vmem:[%s3571 + $0x28] sm:$0xff]
        %v3578 = vld [vmem:[%s3571 + $0x30] sm:$0xff]
        %v3579 = vld [vmem:[%s3571 + $0x38] sm:$0xff]
        %v3580 = vld [vmem:[%s3571 + $0x40] sm:$0xff]
        %v3581 = vld [vmem:[%s3571 + $0x48] sm:$0xff]
        %v3582 = vld [vmem:[%s3571 + $0x50] sm:$0xff]
        %v3583 = vld [vmem:[%s3571 + $0x58] sm:$0xff]
        %v3584 = vld [vmem:[%s3571 + $0x60] sm:$0xff]
        %v3585 = vld [vmem:[%s3571 + $0x68] sm:$0xff]
        %v3586 = vld [vmem:[%s3571 + $0x70] sm:$0xff]
        %v3587 = vld [vmem:[%s3571 + $0x78] sm:$0xff]
        %3588 = vmatprep.subr.mxu0 0.0
        %3589 = vmatpush1.msra.mxu0 %v450
        %3590 = vmatprep.subr.mxu0 0.0
        %3591 = vmatpush1.msra.mxu0 %v449
        %3592 = vmatprep.subr.mxu0 0.0
        %3593 = vmatpush1.msra.mxu0 %v448
        %3594 = vmatprep.subr.mxu0 0.0
        %3595 = vmatpush1.msra.mxu0 %v447
        %3596 = vmatprep.subr.mxu0 0.0
        %3597 = vmatpush1.msra.mxu0 %v446
        %3598 = vmatprep.subr.mxu0 0.0
        %3599 = vmatpush1.msra.mxu0 %v445
        %3600 = vmatprep.subr.mxu0 0.0
        %3601 = vmatpush1.msra.mxu0 %v444
        %3602 = vmatprep.subr.mxu0 0.0
        %3603 = vmatpush1.msra.mxu0 %v443
        %3604 = vmatprep.subr.mxu0 0.0
        %3605 = vmatpush1.msra.mxu0 %v442
        %3606 = vmatprep.subr.mxu0 0.0
        %3607 = vmatpush1.msra.mxu0 %v441
        %3608 = vmatprep.subr.mxu0 0.0
        %3609 = vmatpush1.msra.mxu0 %v440
        %3610 = vmatprep.subr.mxu0 0.0
        %3611 = vmatpush1.msra.mxu0 %v439
        %3612 = vmatprep.subr.mxu0 0.0
        %3613 = vmatpush1.msra.mxu0 %v438
        %3614 = vmatprep.subr.mxu0 0.0
        %3615 = vmatpush1.msra.mxu0 %v437
        %3616 = vmatprep.subr.mxu0 0.0
        %3617 = vmatpush1.msra.mxu0 %v436
        %3618 = vmatprep.subr.mxu0 0.0
        %3619 = vmatpush1.msra.mxu0 %v435
        %3620 = vmatprep.subr.mxu0 0.0
        %3621 = vmatpush2.msra.mxu0 %v466
        %3622 = vmatprep.subr.mxu0 0.0
        %3623 = vmatpush2.msra.mxu0 %v465
        %3624 = vmatprep.subr.mxu0 0.0
        %3625 = vmatpush2.msra.mxu0 %v464
        %3626 = vmatprep.subr.mxu0 0.0
        %3627 = vmatpush2.msra.mxu0 %v463
        %3628 = vmatprep.subr.mxu0 0.0
        %3629 = vmatpush2.msra.mxu0 %v462
        %3630 = vmatprep.subr.mxu0 0.0
        %3631 = vmatpush2.msra.mxu0 %v461
        %3632 = vmatprep.subr.mxu0 0.0
        %3633 = vmatpush2.msra.mxu0 %v460
        %3634 = vmatprep.subr.mxu0 0.0
        %3635 = vmatpush2.msra.mxu0 %v459
        %3636 = vmatprep.subr.mxu0 0.0
        %3637 = vmatpush2.msra.mxu0 %v458
        %3638 = vmatprep.subr.mxu0 0.0
        %3639 = vmatpush2.msra.mxu0 %v457
        %3640 = vmatprep.subr.mxu0 0.0
        %3641 = vmatpush2.msra.mxu0 %v456
        %3642 = vmatprep.subr.mxu0 0.0
        %3643 = vmatpush2.msra.mxu0 %v455
        %3644 = vmatprep.subr.mxu0 0.0
        %3645 = vmatpush2.msra.mxu0 %v454
        %3646 = vmatprep.subr.mxu0 0.0
        %3647 = vmatpush2.msra.mxu0 %v453
        %3648 = vmatprep.subr.mxu0 0.0
        %3649 = vmatpush2.msra.mxu0 %v452
        %3650 = vmatprep.subr.mxu0 0.0
        %3651 = vmatpush2.msra.mxu0 %v451
        %3652 = vmatprep.mubr.f32.mxu0 %v3573
        %3653 = vmatmul.mubr.f32.gmra.mxu0 %v3572
        %v3654 = vpop.f32.mrf.mxu0
        %v3655 = vadd.f32 0.0, %v3654
        %v3656 = vpop.f32.mrf.mxu0
        %3657 = vmatprep.mubr.f32.mxu0 %v3575
        %3658 = vmatmul.mubr.f32.gmra.mxu0 %v3574
        %v3659 = vpop.f32.mrf.mxu0
        %v3660 = vadd.f32 0.0, %v3659
        %v3661 = vpop.f32.mrf.mxu0
        %3662 = vmatprep.mubr.f32.mxu0 %v3577
        %3663 = vmatmul.mubr.f32.gmra.mxu0 %v3576
        %v3664 = vpop.f32.mrf.mxu0
        %v3665 = vadd.f32 0.0, %v3664
        %v3666 = vpop.f32.mrf.mxu0
        %3667 = vmatprep.mubr.f32.mxu0 %v3579
        %3668 = vmatmul.mubr.f32.gmra.mxu0 %v3578
        %v3669 = vpop.f32.mrf.mxu0
        %v3670 = vadd.f32 0.0, %v3669
        %v3671 = vpop.f32.mrf.mxu0
        %3672 = vmatprep.mubr.f32.mxu0 %v3581
        %3673 = vmatmul.mubr.f32.gmra.mxu0 %v3580
        %v3674 = vpop.f32.mrf.mxu0
        %v3675 = vadd.f32 0.0, %v3674
        %v3676 = vpop.f32.mrf.mxu0
        %3677 = vmatprep.mubr.f32.mxu0 %v3583
        %3678 = vmatmul.mubr.f32.gmra.mxu0 %v3582
        %v3679 = vpop.f32.mrf.mxu0
        %v3680 = vadd.f32 0.0, %v3679
        %v3681 = vpop.f32.mrf.mxu0
        %3682 = vmatprep.mubr.f32.mxu0 %v3585
        %3683 = vmatmul.mubr.f32.gmra.mxu0 %v3584
        %v3684 = vpop.f32.mrf.mxu0
        %v3685 = vadd.f32 0.0, %v3684
        %v3686 = vpop.f32.mrf.mxu0
        %3687 = vmatprep.mubr.f32.mxu0 %v3587
        %3688 = vmatmul.mubr.f32.gmra.mxu0 %v3586
        %v3689 = vpop.f32.mrf.mxu0
        %v3690 = vadd.f32 0.0, %v3689
        %v3691 = vpop.f32.mrf.mxu0
        %3692 = vdwg.mxu0
        %v3693 = vld [vmem:[%s2 + $0x60] sm:$0xff]
        %v3695 = vsel %vm712, %v3655, 0
        %v3698 = vsel %vm712, %v3660, 0
        %v3701 = vsel %vm712, %v3665, 0
        %v3704 = vsel %vm712, %v3670, 0
        %v3707 = vsel %vm712, %v3675, 0
        %v3710 = vsel %vm712, %v3680, 0
        %v3713 = vsel %vm712, %v3685, 0
        %v3716 = vsel %vm712, %v3690, 0
        %3718 = vmatprep.subr.mxu0 0.0
        %3719 = vmatpush1.msra.mxu0 0.0
        %3720 = vmatprep.subr.mxu0 0.0
        %3721 = vmatpush1.msra.mxu0 0.0
        %3722 = vmatprep.subr.mxu0 0.0
        %3723 = vmatpush1.msra.mxu0 0.0
        %3724 = vmatprep.subr.mxu0 0.0
        %3725 = vmatpush1.msra.mxu0 0.0
        %3726 = vmatprep.subr.mxu0 0.0
        %3727 = vmatpush1.msra.mxu0 0.0
        %3728 = vmatprep.subr.mxu0 0.0
        %3729 = vmatpush1.msra.mxu0 0.0
        %3730 = vmatprep.subr.mxu0 0.0
        %3731 = vmatpush1.msra.mxu0 0.0
        %3732 = vmatprep.subr.mxu0 0.0
        %3733 = vmatpush1.msra.mxu0 0.0
        %3734 = vmatprep.subr.mxu0 0.0
        %3735 = vmatpush1.msra.mxu0 0.0
        %3736 = vmatprep.subr.mxu0 0.0
        %3737 = vmatpush1.msra.mxu0 0.0
        %3738 = vmatprep.subr.mxu0 0.0
        %3739 = vmatpush1.msra.mxu0 0.0
        %3740 = vmatprep.subr.mxu0 0.0
        %3741 = vmatpush1.msra.mxu0 0.0
        %3742 = vmatprep.subr.mxu0 0.0
        %3743 = vmatpush1.msra.mxu0 0.0
        %3744 = vmatprep.subr.mxu0 0.0
        %3745 = vmatpush1.msra.mxu0 0.0
        %3746 = vmatprep.subr.mxu0 0.0
        %3747 = vmatpush1.msra.mxu0 0.0
        %3748 = vmatprep.subr.mxu0 0.0
        %3749 = vmatpush1.msra.mxu0 %v3693
        %3750 = vmatprep.subr.mxu0 0.0
        %3751 = vmatpush2.msra.mxu0 0.0
        %3752 = vmatprep.subr.mxu0 0.0
        %3753 = vmatpush2.msra.mxu0 0.0
        %3754 = vmatprep.subr.mxu0 0.0
        %3755 = vmatpush2.msra.mxu0 0.0
        %3756 = vmatprep.subr.mxu0 0.0
        %3757 = vmatpush2.msra.mxu0 0.0
        %3758 = vmatprep.subr.mxu0 0.0
        %3759 = vmatpush2.msra.mxu0 0.0
        %3760 = vmatprep.subr.mxu0 0.0
        %3761 = vmatpush2.msra.mxu0 0.0
        %3762 = vmatprep.subr.mxu0 0.0
        %3763 = vmatpush2.msra.mxu0 0.0
        %3764 = vmatprep.subr.mxu0 0.0
        %3765 = vmatpush2.msra.mxu0 0.0
        %3766 = vmatprep.subr.mxu0 0.0
        %3767 = vmatpush2.msra.mxu0 0.0
        %3768 = vmatprep.subr.mxu0 0.0
        %3769 = vmatpush2.msra.mxu0 0.0
        %3770 = vmatprep.subr.mxu0 0.0
        %3771 = vmatpush2.msra.mxu0 0.0
        %3772 = vmatprep.subr.mxu0 0.0
        %3773 = vmatpush2.msra.mxu0 0.0
        %3774 = vmatprep.subr.mxu0 0.0
        %3775 = vmatpush2.msra.mxu0 0.0
        %3776 = vmatprep.subr.mxu0 0.0
        %3777 = vmatpush2.msra.mxu0 0.0
        %3778 = vmatprep.subr.mxu0 0.0
        %3779 = vmatpush2.msra.mxu0 0.0
        %3780 = vmatprep.subr.mxu0 0.0
        %3781 = vmatpush2.msra.mxu0 0.0
        %3782 = vmatprep.mubr.f32.mxu0 0.0
        %3783 = vmatmul.mubr.f32.gmra.mxu0 %v3695
        %v3784 = vpop.f32.mrf.mxu0
        %v3785 = vadd.f32 0.0, %v3784
        %v3786 = vpop.f32.mrf.mxu0
        %3787 = vmatprep.mubr.f32.mxu0 0.0
        %3788 = vmatmul.mubr.f32.gmra.mxu0 %v3698
        %v3789 = vpop.f32.mrf.mxu0
        %v3790 = vadd.f32 0.0, %v3789
        %v3791 = vpop.f32.mrf.mxu0
        %3792 = vmatprep.mubr.f32.mxu0 0.0
        %3793 = vmatmul.mubr.f32.gmra.mxu0 %v3701
        %v3794 = vpop.f32.mrf.mxu0
        %v3795 = vadd.f32 0.0, %v3794
        %v3796 = vpop.f32.mrf.mxu0
        %3797 = vmatprep.mubr.f32.mxu0 0.0
        %3798 = vmatmul.mubr.f32.gmra.mxu0 %v3704
        %v3799 = vpop.f32.mrf.mxu0
        %v3800 = vadd.f32 0.0, %v3799
        %v3801 = vpop.f32.mrf.mxu0
        %3802 = vmatprep.mubr.f32.mxu0 0.0
        %3803 = vmatmul.mubr.f32.gmra.mxu0 %v3707
        %v3804 = vpop.f32.mrf.mxu0
        %v3805 = vadd.f32 0.0, %v3804
        %v3806 = vpop.f32.mrf.mxu0
        %3807 = vmatprep.mubr.f32.mxu0 0.0
        %3808 = vmatmul.mubr.f32.gmra.mxu0 %v3710
        %v3809 = vpop.f32.mrf.mxu0
        %v3810 = vadd.f32 0.0, %v3809
        %v3811 = vpop.f32.mrf.mxu0
        %3812 = vmatprep.mubr.f32.mxu0 0.0
        %3813 = vmatmul.mubr.f32.gmra.mxu0 %v3713
        %v3814 = vpop.f32.mrf.mxu0
        %v3815 = vadd.f32 0.0, %v3814
        %v3816 = vpop.f32.mrf.mxu0
        %3817 = vmatprep.mubr.f32.mxu0 0.0
        %3818 = vmatmul.mubr.f32.gmra.mxu0 %v3716
        %v3819 = vpop.f32.mrf.mxu0
        %v3820 = vadd.f32 0.0, %v3819
        %v3821 = vpop.f32.mrf.mxu0
        %3822 = vdwg.mxu0
        %v3823 = vadd.f32 %v3563, %v3785
        %v3824 = vadd.f32 %v3564, %v3790
        %v3825 = vadd.f32 %v3565, %v3795
        %v3826 = vadd.f32 %v3566, %v3800
        %v3827 = vadd.f32 %v3567, %v3805
        %v3828 = vadd.f32 %v3568, %v3810
        %v3829 = vadd.f32 %v3569, %v3815
        %v3830 = vadd.f32 %v3570, %v3820
        %s3831 = scalar_lea.vmem %s1, 1664
        %v3832 = vld [vmem:[%s3831] sm:$0xff]
        %v3833 = vld [vmem:[%s3831 + $0x8] sm:$0xff]
        %v3834 = vld [vmem:[%s3831 + $0x10] sm:$0xff]
        %v3835 = vld [vmem:[%s3831 + $0x18] sm:$0xff]
        %v3836 = vld [vmem:[%s3831 + $0x20] sm:$0xff]
        %v3837 = vld [vmem:[%s3831 + $0x28] sm:$0xff]
        %v3838 = vld [vmem:[%s3831 + $0x30] sm:$0xff]
        %v3839 = vld [vmem:[%s3831 + $0x38] sm:$0xff]
        %v3840 = vld [vmem:[%s3831 + $0x40] sm:$0xff]
        %v3841 = vld [vmem:[%s3831 + $0x48] sm:$0xff]
        %v3842 = vld [vmem:[%s3831 + $0x50] sm:$0xff]
        %v3843 = vld [vmem:[%s3831 + $0x58] sm:$0xff]
        %v3844 = vld [vmem:[%s3831 + $0x60] sm:$0xff]
        %v3845 = vld [vmem:[%s3831 + $0x68] sm:$0xff]
        %v3846 = vld [vmem:[%s3831 + $0x70] sm:$0xff]
        %v3847 = vld [vmem:[%s3831 + $0x78] sm:$0xff]
        %3848 = vmatprep.subr.mxu0 0.0
        %3849 = vmatpush1.msra.mxu0 %v450
        %3850 = vmatprep.subr.mxu0 0.0
        %3851 = vmatpush1.msra.mxu0 %v449
        %3852 = vmatprep.subr.mxu0 0.0
        %3853 = vmatpush1.msra.mxu0 %v448
        %3854 = vmatprep.subr.mxu0 0.0
        %3855 = vmatpush1.msra.mxu0 %v447
        %3856 = vmatprep.subr.mxu0 0.0
        %3857 = vmatpush1.msra.mxu0 %v446
        %3858 = vmatprep.subr.mxu0 0.0
        %3859 = vmatpush1.msra.mxu0 %v445
        %3860 = vmatprep.subr.mxu0 0.0
        %3861 = vmatpush1.msra.mxu0 %v444
        %3862 = vmatprep.subr.mxu0 0.0
        %3863 = vmatpush1.msra.mxu0 %v443
        %3864 = vmatprep.subr.mxu0 0.0
        %3865 = vmatpush1.msra.mxu0 %v442
        %3866 = vmatprep.subr.mxu0 0.0
        %3867 = vmatpush1.msra.mxu0 %v441
        %3868 = vmatprep.subr.mxu0 0.0
        %3869 = vmatpush1.msra.mxu0 %v440
        %3870 = vmatprep.subr.mxu0 0.0
        %3871 = vmatpush1.msra.mxu0 %v439
        %3872 = vmatprep.subr.mxu0 0.0
        %3873 = vmatpush1.msra.mxu0 %v438
        %3874 = vmatprep.subr.mxu0 0.0
        %3875 = vmatpush1.msra.mxu0 %v437
        %3876 = vmatprep.subr.mxu0 0.0
        %3877 = vmatpush1.msra.mxu0 %v436
        %3878 = vmatprep.subr.mxu0 0.0
        %3879 = vmatpush1.msra.mxu0 %v435
        %3880 = vmatprep.subr.mxu0 0.0
        %3881 = vmatpush2.msra.mxu0 %v466
        %3882 = vmatprep.subr.mxu0 0.0
        %3883 = vmatpush2.msra.mxu0 %v465
        %3884 = vmatprep.subr.mxu0 0.0
        %3885 = vmatpush2.msra.mxu0 %v464
        %3886 = vmatprep.subr.mxu0 0.0
        %3887 = vmatpush2.msra.mxu0 %v463
        %3888 = vmatprep.subr.mxu0 0.0
        %3889 = vmatpush2.msra.mxu0 %v462
        %3890 = vmatprep.subr.mxu0 0.0
        %3891 = vmatpush2.msra.mxu0 %v461
        %3892 = vmatprep.subr.mxu0 0.0
        %3893 = vmatpush2.msra.mxu0 %v460
        %3894 = vmatprep.subr.mxu0 0.0
        %3895 = vmatpush2.msra.mxu0 %v459
        %3896 = vmatprep.subr.mxu0 0.0
        %3897 = vmatpush2.msra.mxu0 %v458
        %3898 = vmatprep.subr.mxu0 0.0
        %3899 = vmatpush2.msra.mxu0 %v457
        %3900 = vmatprep.subr.mxu0 0.0
        %3901 = vmatpush2.msra.mxu0 %v456
        %3902 = vmatprep.subr.mxu0 0.0
        %3903 = vmatpush2.msra.mxu0 %v455
        %3904 = vmatprep.subr.mxu0 0.0
        %3905 = vmatpush2.msra.mxu0 %v454
        %3906 = vmatprep.subr.mxu0 0.0
        %3907 = vmatpush2.msra.mxu0 %v453
        %3908 = vmatprep.subr.mxu0 0.0
        %3909 = vmatpush2.msra.mxu0 %v452
        %3910 = vmatprep.subr.mxu0 0.0
        %3911 = vmatpush2.msra.mxu0 %v451
        %3912 = vmatprep.mubr.f32.mxu0 %v3833
        %3913 = vmatmul.mubr.f32.gmra.mxu0 %v3832
        %v3914 = vpop.f32.mrf.mxu0
        %v3915 = vadd.f32 0.0, %v3914
        %v3916 = vpop.f32.mrf.mxu0
        %3917 = vmatprep.mubr.f32.mxu0 %v3835
        %3918 = vmatmul.mubr.f32.gmra.mxu0 %v3834
        %v3919 = vpop.f32.mrf.mxu0
        %v3920 = vadd.f32 0.0, %v3919
        %v3921 = vpop.f32.mrf.mxu0
        %3922 = vmatprep.mubr.f32.mxu0 %v3837
        %3923 = vmatmul.mubr.f32.gmra.mxu0 %v3836
        %v3924 = vpop.f32.mrf.mxu0
        %v3925 = vadd.f32 0.0, %v3924
        %v3926 = vpop.f32.mrf.mxu0
        %3927 = vmatprep.mubr.f32.mxu0 %v3839
        %3928 = vmatmul.mubr.f32.gmra.mxu0 %v3838
        %v3929 = vpop.f32.mrf.mxu0
        %v3930 = vadd.f32 0.0, %v3929
        %v3931 = vpop.f32.mrf.mxu0
        %3932 = vmatprep.mubr.f32.mxu0 %v3841
        %3933 = vmatmul.mubr.f32.gmra.mxu0 %v3840
        %v3934 = vpop.f32.mrf.mxu0
        %v3935 = vadd.f32 0.0, %v3934
        %v3936 = vpop.f32.mrf.mxu0
        %3937 = vmatprep.mubr.f32.mxu0 %v3843
        %3938 = vmatmul.mubr.f32.gmra.mxu0 %v3842
        %v3939 = vpop.f32.mrf.mxu0
        %v3940 = vadd.f32 0.0, %v3939
        %v3941 = vpop.f32.mrf.mxu0
        %3942 = vmatprep.mubr.f32.mxu0 %v3845
        %3943 = vmatmul.mubr.f32.gmra.mxu0 %v3844
        %v3944 = vpop.f32.mrf.mxu0
        %v3945 = vadd.f32 0.0, %v3944
        %v3946 = vpop.f32.mrf.mxu0
        %3947 = vmatprep.mubr.f32.mxu0 %v3847
        %3948 = vmatmul.mubr.f32.gmra.mxu0 %v3846
        %v3949 = vpop.f32.mrf.mxu0
        %v3950 = vadd.f32 0.0, %v3949
        %v3951 = vpop.f32.mrf.mxu0
        %3952 = vdwg.mxu0
        %v3953 = vld [vmem:[%s2 + $0x68] sm:$0xff]
        %v3955 = vsel %vm712, %v3915, 0
        %v3958 = vsel %vm712, %v3920, 0
        %v3961 = vsel %vm712, %v3925, 0
        %v3964 = vsel %vm712, %v3930, 0
        %v3967 = vsel %vm712, %v3935, 0
        %v3970 = vsel %vm712, %v3940, 0
        %v3973 = vsel %vm712, %v3945, 0
        %v3976 = vsel %vm712, %v3950, 0
        %3978 = vmatprep.subr.mxu0 0.0
        %3979 = vmatpush1.msra.mxu0 0.0
        %3980 = vmatprep.subr.mxu0 0.0
        %3981 = vmatpush1.msra.mxu0 0.0
        %3982 = vmatprep.subr.mxu0 0.0
        %3983 = vmatpush1.msra.mxu0 0.0
        %3984 = vmatprep.subr.mxu0 0.0
        %3985 = vmatpush1.msra.mxu0 0.0
        %3986 = vmatprep.subr.mxu0 0.0
        %3987 = vmatpush1.msra.mxu0 0.0
        %3988 = vmatprep.subr.mxu0 0.0
        %3989 = vmatpush1.msra.mxu0 0.0
        %3990 = vmatprep.subr.mxu0 0.0
        %3991 = vmatpush1.msra.mxu0 0.0
        %3992 = vmatprep.subr.mxu0 0.0
        %3993 = vmatpush1.msra.mxu0 0.0
        %3994 = vmatprep.subr.mxu0 0.0
        %3995 = vmatpush1.msra.mxu0 0.0
        %3996 = vmatprep.subr.mxu0 0.0
        %3997 = vmatpush1.msra.mxu0 0.0
        %3998 = vmatprep.subr.mxu0 0.0
        %3999 = vmatpush1.msra.mxu0 0.0
        %4000 = vmatprep.subr.mxu0 0.0
        %4001 = vmatpush1.msra.mxu0 0.0
        %4002 = vmatprep.subr.mxu0 0.0
        %4003 = vmatpush1.msra.mxu0 0.0
        %4004 = vmatprep.subr.mxu0 0.0
        %4005 = vmatpush1.msra.mxu0 0.0
        %4006 = vmatprep.subr.mxu0 0.0
        %4007 = vmatpush1.msra.mxu0 0.0
        %4008 = vmatprep.subr.mxu0 0.0
        %4009 = vmatpush1.msra.mxu0 %v3953
        %4010 = vmatprep.subr.mxu0 0.0
        %4011 = vmatpush2.msra.mxu0 0.0
        %4012 = vmatprep.subr.mxu0 0.0
        %4013 = vmatpush2.msra.mxu0 0.0
        %4014 = vmatprep.subr.mxu0 0.0
        %4015 = vmatpush2.msra.mxu0 0.0
        %4016 = vmatprep.subr.mxu0 0.0
        %4017 = vmatpush2.msra.mxu0 0.0
        %4018 = vmatprep.subr.mxu0 0.0
        %4019 = vmatpush2.msra.mxu0 0.0
        %4020 = vmatprep.subr.mxu0 0.0
        %4021 = vmatpush2.msra.mxu0 0.0
        %4022 = vmatprep.subr.mxu0 0.0
        %4023 = vmatpush2.msra.mxu0 0.0
        %4024 = vmatprep.subr.mxu0 0.0
        %4025 = vmatpush2.msra.mxu0 0.0
        %4026 = vmatprep.subr.mxu0 0.0
        %4027 = vmatpush2.msra.mxu0 0.0
        %4028 = vmatprep.subr.mxu0 0.0
        %4029 = vmatpush2.msra.mxu0 0.0
        %4030 = vmatprep.subr.mxu0 0.0
        %4031 = vmatpush2.msra.mxu0 0.0
        %4032 = vmatprep.subr.mxu0 0.0
        %4033 = vmatpush2.msra.mxu0 0.0
        %4034 = vmatprep.subr.mxu0 0.0
        %4035 = vmatpush2.msra.mxu0 0.0
        %4036 = vmatprep.subr.mxu0 0.0
        %4037 = vmatpush2.msra.mxu0 0.0
        %4038 = vmatprep.subr.mxu0 0.0
        %4039 = vmatpush2.msra.mxu0 0.0
        %4040 = vmatprep.subr.mxu0 0.0
        %4041 = vmatpush2.msra.mxu0 0.0
        %4042 = vmatprep.mubr.f32.mxu0 0.0
        %4043 = vmatmul.mubr.f32.gmra.mxu0 %v3955
        %v4044 = vpop.f32.mrf.mxu0
        %v4045 = vadd.f32 0.0, %v4044
        %v4046 = vpop.f32.mrf.mxu0
        %4047 = vmatprep.mubr.f32.mxu0 0.0
        %4048 = vmatmul.mubr.f32.gmra.mxu0 %v3958
        %v4049 = vpop.f32.mrf.mxu0
        %v4050 = vadd.f32 0.0, %v4049
        %v4051 = vpop.f32.mrf.mxu0
        %4052 = vmatprep.mubr.f32.mxu0 0.0
        %4053 = vmatmul.mubr.f32.gmra.mxu0 %v3961
        %v4054 = vpop.f32.mrf.mxu0
        %v4055 = vadd.f32 0.0, %v4054
        %v4056 = vpop.f32.mrf.mxu0
        %4057 = vmatprep.mubr.f32.mxu0 0.0
        %4058 = vmatmul.mubr.f32.gmra.mxu0 %v3964
        %v4059 = vpop.f32.mrf.mxu0
        %v4060 = vadd.f32 0.0, %v4059
        %v4061 = vpop.f32.mrf.mxu0
        %4062 = vmatprep.mubr.f32.mxu0 0.0
        %4063 = vmatmul.mubr.f32.gmra.mxu0 %v3967
        %v4064 = vpop.f32.mrf.mxu0
        %v4065 = vadd.f32 0.0, %v4064
        %v4066 = vpop.f32.mrf.mxu0
        %4067 = vmatprep.mubr.f32.mxu0 0.0
        %4068 = vmatmul.mubr.f32.gmra.mxu0 %v3970
        %v4069 = vpop.f32.mrf.mxu0
        %v4070 = vadd.f32 0.0, %v4069
        %v4071 = vpop.f32.mrf.mxu0
        %4072 = vmatprep.mubr.f32.mxu0 0.0
        %4073 = vmatmul.mubr.f32.gmra.mxu0 %v3973
        %v4074 = vpop.f32.mrf.mxu0
        %v4075 = vadd.f32 0.0, %v4074
        %v4076 = vpop.f32.mrf.mxu0
        %4077 = vmatprep.mubr.f32.mxu0 0.0
        %4078 = vmatmul.mubr.f32.gmra.mxu0 %v3976
        %v4079 = vpop.f32.mrf.mxu0
        %v4080 = vadd.f32 0.0, %v4079
        %v4081 = vpop.f32.mrf.mxu0
        %4082 = vdwg.mxu0
        %v4083 = vadd.f32 %v3823, %v4045
        %v4084 = vadd.f32 %v3824, %v4050
        %v4085 = vadd.f32 %v3825, %v4055
        %v4086 = vadd.f32 %v3826, %v4060
        %v4087 = vadd.f32 %v3827, %v4065
        %v4088 = vadd.f32 %v3828, %v4070
        %v4089 = vadd.f32 %v3829, %v4075
        %v4090 = vadd.f32 %v3830, %v4080
        %s4091 = scalar_lea.vmem %s1, 1792
        %v4092 = vld [vmem:[%s4091] sm:$0xff]
        %v4093 = vld [vmem:[%s4091 + $0x8] sm:$0xff]
        %v4094 = vld [vmem:[%s4091 + $0x10] sm:$0xff]
        %v4095 = vld [vmem:[%s4091 + $0x18] sm:$0xff]
        %v4096 = vld [vmem:[%s4091 + $0x20] sm:$0xff]
        %v4097 = vld [vmem:[%s4091 + $0x28] sm:$0xff]
        %v4098 = vld [vmem:[%s4091 + $0x30] sm:$0xff]
        %v4099 = vld [vmem:[%s4091 + $0x38] sm:$0xff]
        %v4100 = vld [vmem:[%s4091 + $0x40] sm:$0xff]
        %v4101 = vld [vmem:[%s4091 + $0x48] sm:$0xff]
        %v4102 = vld [vmem:[%s4091 + $0x50] sm:$0xff]
        %v4103 = vld [vmem:[%s4091 + $0x58] sm:$0xff]
        %v4104 = vld [vmem:[%s4091 + $0x60] sm:$0xff]
        %v4105 = vld [vmem:[%s4091 + $0x68] sm:$0xff]
        %v4106 = vld [vmem:[%s4091 + $0x70] sm:$0xff]
        %v4107 = vld [vmem:[%s4091 + $0x78] sm:$0xff]
        %4108 = vmatprep.subr.mxu0 0.0
        %4109 = vmatpush1.msra.mxu0 %v450
        %4110 = vmatprep.subr.mxu0 0.0
        %4111 = vmatpush1.msra.mxu0 %v449
        %4112 = vmatprep.subr.mxu0 0.0
        %4113 = vmatpush1.msra.mxu0 %v448
        %4114 = vmatprep.subr.mxu0 0.0
        %4115 = vmatpush1.msra.mxu0 %v447
        %4116 = vmatprep.subr.mxu0 0.0
        %4117 = vmatpush1.msra.mxu0 %v446
        %4118 = vmatprep.subr.mxu0 0.0
        %4119 = vmatpush1.msra.mxu0 %v445
        %4120 = vmatprep.subr.mxu0 0.0
        %4121 = vmatpush1.msra.mxu0 %v444
        %4122 = vmatprep.subr.mxu0 0.0
        %4123 = vmatpush1.msra.mxu0 %v443
        %4124 = vmatprep.subr.mxu0 0.0
        %4125 = vmatpush1.msra.mxu0 %v442
        %4126 = vmatprep.subr.mxu0 0.0
        %4127 = vmatpush1.msra.mxu0 %v441
        %4128 = vmatprep.subr.mxu0 0.0
        %4129 = vmatpush1.msra.mxu0 %v440
        %4130 = vmatprep.subr.mxu0 0.0
        %4131 = vmatpush1.msra.mxu0 %v439
        %4132 = vmatprep.subr.mxu0 0.0
        %4133 = vmatpush1.msra.mxu0 %v438
        %4134 = vmatprep.subr.mxu0 0.0
        %4135 = vmatpush1.msra.mxu0 %v437
        %4136 = vmatprep.subr.mxu0 0.0
        %4137 = vmatpush1.msra.mxu0 %v436
        %4138 = vmatprep.subr.mxu0 0.0
        %4139 = vmatpush1.msra.mxu0 %v435
        %4140 = vmatprep.subr.mxu0 0.0
        %4141 = vmatpush2.msra.mxu0 %v466
        %4142 = vmatprep.subr.mxu0 0.0
        %4143 = vmatpush2.msra.mxu0 %v465
        %4144 = vmatprep.subr.mxu0 0.0
        %4145 = vmatpush2.msra.mxu0 %v464
        %4146 = vmatprep.subr.mxu0 0.0
        %4147 = vmatpush2.msra.mxu0 %v463
        %4148 = vmatprep.subr.mxu0 0.0
        %4149 = vmatpush2.msra.mxu0 %v462
        %4150 = vmatprep.subr.mxu0 0.0
        %4151 = vmatpush2.msra.mxu0 %v461
        %4152 = vmatprep.subr.mxu0 0.0
        %4153 = vmatpush2.msra.mxu0 %v460
        %4154 = vmatprep.subr.mxu0 0.0
        %4155 = vmatpush2.msra.mxu0 %v459
        %4156 = vmatprep.subr.mxu0 0.0
        %4157 = vmatpush2.msra.mxu0 %v458
        %4158 = vmatprep.subr.mxu0 0.0
        %4159 = vmatpush2.msra.mxu0 %v457
        %4160 = vmatprep.subr.mxu0 0.0
        %4161 = vmatpush2.msra.mxu0 %v456
        %4162 = vmatprep.subr.mxu0 0.0
        %4163 = vmatpush2.msra.mxu0 %v455
        %4164 = vmatprep.subr.mxu0 0.0
        %4165 = vmatpush2.msra.mxu0 %v454
        %4166 = vmatprep.subr.mxu0 0.0
        %4167 = vmatpush2.msra.mxu0 %v453
        %4168 = vmatprep.subr.mxu0 0.0
        %4169 = vmatpush2.msra.mxu0 %v452
        %4170 = vmatprep.subr.mxu0 0.0
        %4171 = vmatpush2.msra.mxu0 %v451
        %4172 = vmatprep.mubr.f32.mxu0 %v4093
        %4173 = vmatmul.mubr.f32.gmra.mxu0 %v4092
        %v4174 = vpop.f32.mrf.mxu0
        %v4175 = vadd.f32 0.0, %v4174
        %v4176 = vpop.f32.mrf.mxu0
        %4177 = vmatprep.mubr.f32.mxu0 %v4095
        %4178 = vmatmul.mubr.f32.gmra.mxu0 %v4094
        %v4179 = vpop.f32.mrf.mxu0
        %v4180 = vadd.f32 0.0, %v4179
        %v4181 = vpop.f32.mrf.mxu0
        %4182 = vmatprep.mubr.f32.mxu0 %v4097
        %4183 = vmatmul.mubr.f32.gmra.mxu0 %v4096
        %v4184 = vpop.f32.mrf.mxu0
        %v4185 = vadd.f32 0.0, %v4184
        %v4186 = vpop.f32.mrf.mxu0
        %4187 = vmatprep.mubr.f32.mxu0 %v4099
        %4188 = vmatmul.mubr.f32.gmra.mxu0 %v4098
        %v4189 = vpop.f32.mrf.mxu0
        %v4190 = vadd.f32 0.0, %v4189
        %v4191 = vpop.f32.mrf.mxu0
        %4192 = vmatprep.mubr.f32.mxu0 %v4101
        %4193 = vmatmul.mubr.f32.gmra.mxu0 %v4100
        %v4194 = vpop.f32.mrf.mxu0
        %v4195 = vadd.f32 0.0, %v4194
        %v4196 = vpop.f32.mrf.mxu0
        %4197 = vmatprep.mubr.f32.mxu0 %v4103
        %4198 = vmatmul.mubr.f32.gmra.mxu0 %v4102
        %v4199 = vpop.f32.mrf.mxu0
        %v4200 = vadd.f32 0.0, %v4199
        %v4201 = vpop.f32.mrf.mxu0
        %4202 = vmatprep.mubr.f32.mxu0 %v4105
        %4203 = vmatmul.mubr.f32.gmra.mxu0 %v4104
        %v4204 = vpop.f32.mrf.mxu0
        %v4205 = vadd.f32 0.0, %v4204
        %v4206 = vpop.f32.mrf.mxu0
        %4207 = vmatprep.mubr.f32.mxu0 %v4107
        %4208 = vmatmul.mubr.f32.gmra.mxu0 %v4106
        %v4209 = vpop.f32.mrf.mxu0
        %v4210 = vadd.f32 0.0, %v4209
        %v4211 = vpop.f32.mrf.mxu0
        %4212 = vdwg.mxu0
        %v4213 = vld [vmem:[%s2 + $0x70] sm:$0xff]
        %v4215 = vsel %vm712, %v4175, 0
        %v4218 = vsel %vm712, %v4180, 0
        %v4221 = vsel %vm712, %v4185, 0
        %v4224 = vsel %vm712, %v4190, 0
        %v4227 = vsel %vm712, %v4195, 0
        %v4230 = vsel %vm712, %v4200, 0
        %v4233 = vsel %vm712, %v4205, 0
        %v4236 = vsel %vm712, %v4210, 0
        %4238 = vmatprep.subr.mxu0 0.0
        %4239 = vmatpush1.msra.mxu0 0.0
        %4240 = vmatprep.subr.mxu0 0.0
        %4241 = vmatpush1.msra.mxu0 0.0
        %4242 = vmatprep.subr.mxu0 0.0
        %4243 = vmatpush1.msra.mxu0 0.0
        %4244 = vmatprep.subr.mxu0 0.0
        %4245 = vmatpush1.msra.mxu0 0.0
        %4246 = vmatprep.subr.mxu0 0.0
        %4247 = vmatpush1.msra.mxu0 0.0
        %4248 = vmatprep.subr.mxu0 0.0
        %4249 = vmatpush1.msra.mxu0 0.0
        %4250 = vmatprep.subr.mxu0 0.0
        %4251 = vmatpush1.msra.mxu0 0.0
        %4252 = vmatprep.subr.mxu0 0.0
        %4253 = vmatpush1.msra.mxu0 0.0
        %4254 = vmatprep.subr.mxu0 0.0
        %4255 = vmatpush1.msra.mxu0 0.0
        %4256 = vmatprep.subr.mxu0 0.0
        %4257 = vmatpush1.msra.mxu0 0.0
        %4258 = vmatprep.subr.mxu0 0.0
        %4259 = vmatpush1.msra.mxu0 0.0
        %4260 = vmatprep.subr.mxu0 0.0
        %4261 = vmatpush1.msra.mxu0 0.0
        %4262 = vmatprep.subr.mxu0 0.0
        %4263 = vmatpush1.msra.mxu0 0.0
        %4264 = vmatprep.subr.mxu0 0.0
        %4265 = vmatpush1.msra.mxu0 0.0
        %4266 = vmatprep.subr.mxu0 0.0
        %4267 = vmatpush1.msra.mxu0 0.0
        %4268 = vmatprep.subr.mxu0 0.0
        %4269 = vmatpush1.msra.mxu0 %v4213
        %4270 = vmatprep.subr.mxu0 0.0
        %4271 = vmatpush2.msra.mxu0 0.0
        %4272 = vmatprep.subr.mxu0 0.0
        %4273 = vmatpush2.msra.mxu0 0.0
        %4274 = vmatprep.subr.mxu0 0.0
        %4275 = vmatpush2.msra.mxu0 0.0
        %4276 = vmatprep.subr.mxu0 0.0
        %4277 = vmatpush2.msra.mxu0 0.0
        %4278 = vmatprep.subr.mxu0 0.0
        %4279 = vmatpush2.msra.mxu0 0.0
        %4280 = vmatprep.subr.mxu0 0.0
        %4281 = vmatpush2.msra.mxu0 0.0
        %4282 = vmatprep.subr.mxu0 0.0
        %4283 = vmatpush2.msra.mxu0 0.0
        %4284 = vmatprep.subr.mxu0 0.0
        %4285 = vmatpush2.msra.mxu0 0.0
        %4286 = vmatprep.subr.mxu0 0.0
        %4287 = vmatpush2.msra.mxu0 0.0
        %4288 = vmatprep.subr.mxu0 0.0
        %4289 = vmatpush2.msra.mxu0 0.0
        %4290 = vmatprep.subr.mxu0 0.0
        %4291 = vmatpush2.msra.mxu0 0.0
        %4292 = vmatprep.subr.mxu0 0.0
        %4293 = vmatpush2.msra.mxu0 0.0
        %4294 = vmatprep.subr.mxu0 0.0
        %4295 = vmatpush2.msra.mxu0 0.0
        %4296 = vmatprep.subr.mxu0 0.0
        %4297 = vmatpush2.msra.mxu0 0.0
        %4298 = vmatprep.subr.mxu0 0.0
        %4299 = vmatpush2.msra.mxu0 0.0
        %4300 = vmatprep.subr.mxu0 0.0
        %4301 = vmatpush2.msra.mxu0 0.0
        %4302 = vmatprep.mubr.f32.mxu0 0.0
        %4303 = vmatmul.mubr.f32.gmra.mxu0 %v4215
        %v4304 = vpop.f32.mrf.mxu0
        %v4305 = vadd.f32 0.0, %v4304
        %v4306 = vpop.f32.mrf.mxu0
        %4307 = vmatprep.mubr.f32.mxu0 0.0
        %4308 = vmatmul.mubr.f32.gmra.mxu0 %v4218
        %v4309 = vpop.f32.mrf.mxu0
        %v4310 = vadd.f32 0.0, %v4309
        %v4311 = vpop.f32.mrf.mxu0
        %4312 = vmatprep.mubr.f32.mxu0 0.0
        %4313 = vmatmul.mubr.f32.gmra.mxu0 %v4221
        %v4314 = vpop.f32.mrf.mxu0
        %v4315 = vadd.f32 0.0, %v4314
        %v4316 = vpop.f32.mrf.mxu0
        %4317 = vmatprep.mubr.f32.mxu0 0.0
        %4318 = vmatmul.mubr.f32.gmra.mxu0 %v4224
        %v4319 = vpop.f32.mrf.mxu0
        %v4320 = vadd.f32 0.0, %v4319
        %v4321 = vpop.f32.mrf.mxu0
        %4322 = vmatprep.mubr.f32.mxu0 0.0
        %4323 = vmatmul.mubr.f32.gmra.mxu0 %v4227
        %v4324 = vpop.f32.mrf.mxu0
        %v4325 = vadd.f32 0.0, %v4324
        %v4326 = vpop.f32.mrf.mxu0
        %4327 = vmatprep.mubr.f32.mxu0 0.0
        %4328 = vmatmul.mubr.f32.gmra.mxu0 %v4230
        %v4329 = vpop.f32.mrf.mxu0
        %v4330 = vadd.f32 0.0, %v4329
        %v4331 = vpop.f32.mrf.mxu0
        %4332 = vmatprep.mubr.f32.mxu0 0.0
        %4333 = vmatmul.mubr.f32.gmra.mxu0 %v4233
        %v4334 = vpop.f32.mrf.mxu0
        %v4335 = vadd.f32 0.0, %v4334
        %v4336 = vpop.f32.mrf.mxu0
        %4337 = vmatprep.mubr.f32.mxu0 0.0
        %4338 = vmatmul.mubr.f32.gmra.mxu0 %v4236
        %v4339 = vpop.f32.mrf.mxu0
        %v4340 = vadd.f32 0.0, %v4339
        %v4341 = vpop.f32.mrf.mxu0
        %4342 = vdwg.mxu0
        %v4343 = vadd.f32 %v4083, %v4305
        %v4344 = vadd.f32 %v4084, %v4310
        %v4345 = vadd.f32 %v4085, %v4315
        %v4346 = vadd.f32 %v4086, %v4320
        %v4347 = vadd.f32 %v4087, %v4325
        %v4348 = vadd.f32 %v4088, %v4330
        %v4349 = vadd.f32 %v4089, %v4335
        %v4350 = vadd.f32 %v4090, %v4340
        %s4351 = scalar_lea.vmem %s1, 1920
        %v4352 = vld [vmem:[%s4351] sm:$0xff]
        %v4353 = vld [vmem:[%s4351 + $0x8] sm:$0xff]
        %v4354 = vld [vmem:[%s4351 + $0x10] sm:$0xff]
        %v4355 = vld [vmem:[%s4351 + $0x18] sm:$0xff]
        %v4356 = vld [vmem:[%s4351 + $0x20] sm:$0xff]
        %v4357 = vld [vmem:[%s4351 + $0x28] sm:$0xff]
        %v4358 = vld [vmem:[%s4351 + $0x30] sm:$0xff]
        %v4359 = vld [vmem:[%s4351 + $0x38] sm:$0xff]
        %v4360 = vld [vmem:[%s4351 + $0x40] sm:$0xff]
        %v4361 = vld [vmem:[%s4351 + $0x48] sm:$0xff]
        %v4362 = vld [vmem:[%s4351 + $0x50] sm:$0xff]
        %v4363 = vld [vmem:[%s4351 + $0x58] sm:$0xff]
        %v4364 = vld [vmem:[%s4351 + $0x60] sm:$0xff]
        %v4365 = vld [vmem:[%s4351 + $0x68] sm:$0xff]
        %v4366 = vld [vmem:[%s4351 + $0x70] sm:$0xff]
        %v4367 = vld [vmem:[%s4351 + $0x78] sm:$0xff]
        %4368 = vmatprep.subr.mxu0 0.0
        %4369 = vmatpush1.msra.mxu0 %v450
        %4370 = vmatprep.subr.mxu0 0.0
        %4371 = vmatpush1.msra.mxu0 %v449
        %4372 = vmatprep.subr.mxu0 0.0
        %4373 = vmatpush1.msra.mxu0 %v448
        %4374 = vmatprep.subr.mxu0 0.0
        %4375 = vmatpush1.msra.mxu0 %v447
        %4376 = vmatprep.subr.mxu0 0.0
        %4377 = vmatpush1.msra.mxu0 %v446
        %4378 = vmatprep.subr.mxu0 0.0
        %4379 = vmatpush1.msra.mxu0 %v445
        %4380 = vmatprep.subr.mxu0 0.0
        %4381 = vmatpush1.msra.mxu0 %v444
        %4382 = vmatprep.subr.mxu0 0.0
        %4383 = vmatpush1.msra.mxu0 %v443
        %4384 = vmatprep.subr.mxu0 0.0
        %4385 = vmatpush1.msra.mxu0 %v442
        %4386 = vmatprep.subr.mxu0 0.0
        %4387 = vmatpush1.msra.mxu0 %v441
        %4388 = vmatprep.subr.mxu0 0.0
        %4389 = vmatpush1.msra.mxu0 %v440
        %4390 = vmatprep.subr.mxu0 0.0
        %4391 = vmatpush1.msra.mxu0 %v439
        %4392 = vmatprep.subr.mxu0 0.0
        %4393 = vmatpush1.msra.mxu0 %v438
        %4394 = vmatprep.subr.mxu0 0.0
        %4395 = vmatpush1.msra.mxu0 %v437
        %4396 = vmatprep.subr.mxu0 0.0
        %4397 = vmatpush1.msra.mxu0 %v436
        %4398 = vmatprep.subr.mxu0 0.0
        %4399 = vmatpush1.msra.mxu0 %v435
        %4400 = vmatprep.subr.mxu0 0.0
        %4401 = vmatpush2.msra.mxu0 %v466
        %4402 = vmatprep.subr.mxu0 0.0
        %4403 = vmatpush2.msra.mxu0 %v465
        %4404 = vmatprep.subr.mxu0 0.0
        %4405 = vmatpush2.msra.mxu0 %v464
        %4406 = vmatprep.subr.mxu0 0.0
        %4407 = vmatpush2.msra.mxu0 %v463
        %4408 = vmatprep.subr.mxu0 0.0
        %4409 = vmatpush2.msra.mxu0 %v462
        %4410 = vmatprep.subr.mxu0 0.0
        %4411 = vmatpush2.msra.mxu0 %v461
        %4412 = vmatprep.subr.mxu0 0.0
        %4413 = vmatpush2.msra.mxu0 %v460
        %4414 = vmatprep.subr.mxu0 0.0
        %4415 = vmatpush2.msra.mxu0 %v459
        %4416 = vmatprep.subr.mxu0 0.0
        %4417 = vmatpush2.msra.mxu0 %v458
        %4418 = vmatprep.subr.mxu0 0.0
        %4419 = vmatpush2.msra.mxu0 %v457
        %4420 = vmatprep.subr.mxu0 0.0
        %4421 = vmatpush2.msra.mxu0 %v456
        %4422 = vmatprep.subr.mxu0 0.0
        %4423 = vmatpush2.msra.mxu0 %v455
        %4424 = vmatprep.subr.mxu0 0.0
        %4425 = vmatpush2.msra.mxu0 %v454
        %4426 = vmatprep.subr.mxu0 0.0
        %4427 = vmatpush2.msra.mxu0 %v453
        %4428 = vmatprep.subr.mxu0 0.0
        %4429 = vmatpush2.msra.mxu0 %v452
        %4430 = vmatprep.subr.mxu0 0.0
        %4431 = vmatpush2.msra.mxu0 %v451
        %4432 = vmatprep.mubr.f32.mxu0 %v4353
        %4433 = vmatmul.mubr.f32.gmra.mxu0 %v4352
        %v4434 = vpop.f32.mrf.mxu0
        %v4435 = vadd.f32 0.0, %v4434
        %v4436 = vpop.f32.mrf.mxu0
        %4437 = vmatprep.mubr.f32.mxu0 %v4355
        %4438 = vmatmul.mubr.f32.gmra.mxu0 %v4354
        %v4439 = vpop.f32.mrf.mxu0
        %v4440 = vadd.f32 0.0, %v4439
        %v4441 = vpop.f32.mrf.mxu0
        %4442 = vmatprep.mubr.f32.mxu0 %v4357
        %4443 = vmatmul.mubr.f32.gmra.mxu0 %v4356
        %v4444 = vpop.f32.mrf.mxu0
        %v4445 = vadd.f32 0.0, %v4444
        %v4446 = vpop.f32.mrf.mxu0
        %4447 = vmatprep.mubr.f32.mxu0 %v4359
        %4448 = vmatmul.mubr.f32.gmra.mxu0 %v4358
        %v4449 = vpop.f32.mrf.mxu0
        %v4450 = vadd.f32 0.0, %v4449
        %v4451 = vpop.f32.mrf.mxu0
        %4452 = vmatprep.mubr.f32.mxu0 %v4361
        %4453 = vmatmul.mubr.f32.gmra.mxu0 %v4360
        %v4454 = vpop.f32.mrf.mxu0
        %v4455 = vadd.f32 0.0, %v4454
        %v4456 = vpop.f32.mrf.mxu0
        %4457 = vmatprep.mubr.f32.mxu0 %v4363
        %4458 = vmatmul.mubr.f32.gmra.mxu0 %v4362
        %v4459 = vpop.f32.mrf.mxu0
        %v4460 = vadd.f32 0.0, %v4459
        %v4461 = vpop.f32.mrf.mxu0
        %4462 = vmatprep.mubr.f32.mxu0 %v4365
        %4463 = vmatmul.mubr.f32.gmra.mxu0 %v4364
        %v4464 = vpop.f32.mrf.mxu0
        %v4465 = vadd.f32 0.0, %v4464
        %v4466 = vpop.f32.mrf.mxu0
        %4467 = vmatprep.mubr.f32.mxu0 %v4367
        %4468 = vmatmul.mubr.f32.gmra.mxu0 %v4366
        %v4469 = vpop.f32.mrf.mxu0
        %v4470 = vadd.f32 0.0, %v4469
        %v4471 = vpop.f32.mrf.mxu0
        %4472 = vdwg.mxu0
        %v4473 = vld [vmem:[%s2 + $0x78] sm:$0xff]
        %v4475 = vsel %vm712, %v4435, 0
        %v4478 = vsel %vm712, %v4440, 0
        %v4481 = vsel %vm712, %v4445, 0
        %v4484 = vsel %vm712, %v4450, 0
        %v4487 = vsel %vm712, %v4455, 0
        %v4490 = vsel %vm712, %v4460, 0
        %v4493 = vsel %vm712, %v4465, 0
        %v4496 = vsel %vm712, %v4470, 0
        %4498 = vmatprep.subr.mxu0 0.0
        %4499 = vmatpush1.msra.mxu0 0.0
        %4500 = vmatprep.subr.mxu0 0.0
        %4501 = vmatpush1.msra.mxu0 0.0
        %4502 = vmatprep.subr.mxu0 0.0
        %4503 = vmatpush1.msra.mxu0 0.0
        %4504 = vmatprep.subr.mxu0 0.0
        %4505 = vmatpush1.msra.mxu0 0.0
        %4506 = vmatprep.subr.mxu0 0.0
        %4507 = vmatpush1.msra.mxu0 0.0
        %4508 = vmatprep.subr.mxu0 0.0
        %4509 = vmatpush1.msra.mxu0 0.0
        %4510 = vmatprep.subr.mxu0 0.0
        %4511 = vmatpush1.msra.mxu0 0.0
        %4512 = vmatprep.subr.mxu0 0.0
        %4513 = vmatpush1.msra.mxu0 0.0
        %4514 = vmatprep.subr.mxu0 0.0
        %4515 = vmatpush1.msra.mxu0 0.0
        %4516 = vmatprep.subr.mxu0 0.0
        %4517 = vmatpush1.msra.mxu0 0.0
        %4518 = vmatprep.subr.mxu0 0.0
        %4519 = vmatpush1.msra.mxu0 0.0
        %4520 = vmatprep.subr.mxu0 0.0
        %4521 = vmatpush1.msra.mxu0 0.0
        %4522 = vmatprep.subr.mxu0 0.0
        %4523 = vmatpush1.msra.mxu0 0.0
        %4524 = vmatprep.subr.mxu0 0.0
        %4525 = vmatpush1.msra.mxu0 0.0
        %4526 = vmatprep.subr.mxu0 0.0
        %4527 = vmatpush1.msra.mxu0 0.0
        %4528 = vmatprep.subr.mxu0 0.0
        %4529 = vmatpush1.msra.mxu0 %v4473
        %4530 = vmatprep.subr.mxu0 0.0
        %4531 = vmatpush2.msra.mxu0 0.0
        %4532 = vmatprep.subr.mxu0 0.0
        %4533 = vmatpush2.msra.mxu0 0.0
        %4534 = vmatprep.subr.mxu0 0.0
        %4535 = vmatpush2.msra.mxu0 0.0
        %4536 = vmatprep.subr.mxu0 0.0
        %4537 = vmatpush2.msra.mxu0 0.0
        %4538 = vmatprep.subr.mxu0 0.0
        %4539 = vmatpush2.msra.mxu0 0.0
        %4540 = vmatprep.subr.mxu0 0.0
        %4541 = vmatpush2.msra.mxu0 0.0
        %4542 = vmatprep.subr.mxu0 0.0
        %4543 = vmatpush2.msra.mxu0 0.0
        %4544 = vmatprep.subr.mxu0 0.0
        %4545 = vmatpush2.msra.mxu0 0.0
        %4546 = vmatprep.subr.mxu0 0.0
        %4547 = vmatpush2.msra.mxu0 0.0
        %4548 = vmatprep.subr.mxu0 0.0
        %4549 = vmatpush2.msra.mxu0 0.0
        %4550 = vmatprep.subr.mxu0 0.0
        %4551 = vmatpush2.msra.mxu0 0.0
        %4552 = vmatprep.subr.mxu0 0.0
        %4553 = vmatpush2.msra.mxu0 0.0
        %4554 = vmatprep.subr.mxu0 0.0
        %4555 = vmatpush2.msra.mxu0 0.0
        %4556 = vmatprep.subr.mxu0 0.0
        %4557 = vmatpush2.msra.mxu0 0.0
        %4558 = vmatprep.subr.mxu0 0.0
        %4559 = vmatpush2.msra.mxu0 0.0
        %4560 = vmatprep.subr.mxu0 0.0
        %4561 = vmatpush2.msra.mxu0 0.0
        %4562 = vmatprep.mubr.f32.mxu0 0.0
        %4563 = vmatmul.mubr.f32.gmra.mxu0 %v4475
        %v4564 = vpop.f32.mrf.mxu0
        %v4565 = vadd.f32 0.0, %v4564
        %v4566 = vpop.f32.mrf.mxu0
        %4567 = vmatprep.mubr.f32.mxu0 0.0
        %4568 = vmatmul.mubr.f32.gmra.mxu0 %v4478
        %v4569 = vpop.f32.mrf.mxu0
        %v4570 = vadd.f32 0.0, %v4569
        %v4571 = vpop.f32.mrf.mxu0
        %4572 = vmatprep.mubr.f32.mxu0 0.0
        %4573 = vmatmul.mubr.f32.gmra.mxu0 %v4481
        %v4574 = vpop.f32.mrf.mxu0
        %v4575 = vadd.f32 0.0, %v4574
        %v4576 = vpop.f32.mrf.mxu0
        %4577 = vmatprep.mubr.f32.mxu0 0.0
        %4578 = vmatmul.mubr.f32.gmra.mxu0 %v4484
        %v4579 = vpop.f32.mrf.mxu0
        %v4580 = vadd.f32 0.0, %v4579
        %v4581 = vpop.f32.mrf.mxu0
        %4582 = vmatprep.mubr.f32.mxu0 0.0
        %4583 = vmatmul.mubr.f32.gmra.mxu0 %v4487
        %v4584 = vpop.f32.mrf.mxu0
        %v4585 = vadd.f32 0.0, %v4584
        %v4586 = vpop.f32.mrf.mxu0
        %4587 = vmatprep.mubr.f32.mxu0 0.0
        %4588 = vmatmul.mubr.f32.gmra.mxu0 %v4490
        %v4589 = vpop.f32.mrf.mxu0
        %v4590 = vadd.f32 0.0, %v4589
        %v4591 = vpop.f32.mrf.mxu0
        %4592 = vmatprep.mubr.f32.mxu0 0.0
        %4593 = vmatmul.mubr.f32.gmra.mxu0 %v4493
        %v4594 = vpop.f32.mrf.mxu0
        %v4595 = vadd.f32 0.0, %v4594
        %v4596 = vpop.f32.mrf.mxu0
        %4597 = vmatprep.mubr.f32.mxu0 0.0
        %4598 = vmatmul.mubr.f32.gmra.mxu0 %v4496
        %v4599 = vpop.f32.mrf.mxu0
        %v4600 = vadd.f32 0.0, %v4599
        %v4601 = vpop.f32.mrf.mxu0
        %4602 = vdwg.mxu0
        %v4603 = vadd.f32 %v4343, %v4565
        %v4604 = vadd.f32 %v4344, %v4570
        %v4605 = vadd.f32 %v4345, %v4575
        %v4606 = vadd.f32 %v4346, %v4580
        %v4607 = vadd.f32 %v4347, %v4585
        %v4608 = vadd.f32 %v4348, %v4590
        %v4609 = vadd.f32 %v4349, %v4595
        %v4610 = vadd.f32 %v4350, %v4600
        %v4611 = vld [vmem:[%s3] sm:$0x1]
        %v4613 = vlaneseq
        %v4614 = vshrl.u32 %v4613, 7
        %v4615 = vsub.s32 0, %v4614
        %v4616 = vrot.slane %v4611, %v4615
        %v4618 = vadd.f32 %v4603, %v4616
        %v4619 = vadd.f32 %v4604, %v4616
        %v4620 = vadd.f32 %v4605, %v4616
        %v4621 = vadd.f32 %v4606, %v4616
        %v4622 = vadd.f32 %v4607, %v4616
        %v4623 = vadd.f32 %v4608, %v4616
        %v4624 = vadd.f32 %v4609, %v4616
        %v4625 = vadd.f32 %v4610, %v4616
        %v4626 = vmax.f32 %v4618, 0.0
        %v4627 = vmax.f32 %v4619, 0.0
        %v4628 = vmax.f32 %v4620, 0.0
        %v4629 = vmax.f32 %v4621, 0.0
        %v4630 = vmax.f32 %v4622, 0.0
        %v4631 = vmax.f32 %v4623, 0.0
        %v4632 = vmax.f32 %v4624, 0.0
        %v4633 = vmax.f32 %v4625, 0.0
        %4634 = vst [vmem:[%s430] sm:$0xff] %v4626
        %4635 = vst [vmem:[%s430 + $0x8] sm:$0xff] %v4627
        %4636 = vst [vmem:[%s430 + $0x10] sm:$0xff] %v4628
        %4637 = vst [vmem:[%s430 + $0x18] sm:$0xff] %v4629
        %4638 = vst [vmem:[%s430 + $0x20] sm:$0xff] %v4630
        %4639 = vst [vmem:[%s430 + $0x28] sm:$0xff] %v4631
        %4640 = vst [vmem:[%s430 + $0x30] sm:$0xff] %v4632
        %4641 = vst [vmem:[%s430 + $0x38] sm:$0xff] %v4633
        %v4642 = vld [vmem:[%s4] sm:$0xff]
        %v4643 = vld [vmem:[%s4 + $0x8] sm:$0xff]
        %vm4644 = vcmask 523264
        %v4646 = vsel %vm4644, %v4642, 0
        %v4649 = vsel %vm4644, %v4643, 0
        %4651 = vmatprep.subr.mxu0 0.0
        %4652 = vmatpush1.msra.mxu0 0.0
        %4653 = vmatprep.subr.mxu0 0.0
        %4654 = vmatpush1.msra.mxu0 0.0
        %4655 = vmatprep.subr.mxu0 0.0
        %4656 = vmatpush1.msra.mxu0 0.0
        %4657 = vmatprep.subr.mxu0 0.0
        %4658 = vmatpush1.msra.mxu0 0.0
        %4659 = vmatprep.subr.mxu0 0.0
        %4660 = vmatpush1.msra.mxu0 0.0
        %4661 = vmatprep.subr.mxu0 0.0
        %4662 = vmatpush1.msra.mxu0 0.0
        %4663 = vmatprep.subr.mxu0 0.0
        %4664 = vmatpush1.msra.mxu0 0.0
        %4665 = vmatprep.subr.mxu0 0.0
        %4666 = vmatpush1.msra.mxu0 0.0
        %4667 = vmatprep.subr.mxu0 0.0
        %4668 = vmatpush1.msra.mxu0 %v4633
        %4669 = vmatprep.subr.mxu0 0.0
        %4670 = vmatpush1.msra.mxu0 %v4632
        %4671 = vmatprep.subr.mxu0 0.0
        %4672 = vmatpush1.msra.mxu0 %v4631
        %4673 = vmatprep.subr.mxu0 0.0
        %4674 = vmatpush1.msra.mxu0 %v4630
        %4675 = vmatprep.subr.mxu0 0.0
        %4676 = vmatpush1.msra.mxu0 %v4629
        %4677 = vmatprep.subr.mxu0 0.0
        %4678 = vmatpush1.msra.mxu0 %v4628
        %4679 = vmatprep.subr.mxu0 0.0
        %4680 = vmatpush1.msra.mxu0 %v4627
        %4681 = vmatprep.subr.mxu0 0.0
        %4682 = vmatpush1.msra.mxu0 %v4626
        %4683 = vmatprep.subr.mxu0 0.0
        %4684 = vmatpush2.msra.mxu0 0.0
        %4685 = vmatprep.subr.mxu0 0.0
        %4686 = vmatpush2.msra.mxu0 0.0
        %4687 = vmatprep.subr.mxu0 0.0
        %4688 = vmatpush2.msra.mxu0 0.0
        %4689 = vmatprep.subr.mxu0 0.0
        %4690 = vmatpush2.msra.mxu0 0.0
        %4691 = vmatprep.subr.mxu0 0.0
        %4692 = vmatpush2.msra.mxu0 0.0
        %4693 = vmatprep.subr.mxu0 0.0
        %4694 = vmatpush2.msra.mxu0 0.0
        %4695 = vmatprep.subr.mxu0 0.0
        %4696 = vmatpush2.msra.mxu0 0.0
        %4697 = vmatprep.subr.mxu0 0.0
        %4698 = vmatpush2.msra.mxu0 0.0
        %4699 = vmatprep.subr.mxu0 0.0
        %4700 = vmatpush2.msra.mxu0 0.0
        %4701 = vmatprep.subr.mxu0 0.0
        %4702 = vmatpush2.msra.mxu0 0.0
        %4703 = vmatprep.subr.mxu0 0.0
        %4704 = vmatpush2.msra.mxu0 0.0
        %4705 = vmatprep.subr.mxu0 0.0
        %4706 = vmatpush2.msra.mxu0 0.0
        %4707 = vmatprep.subr.mxu0 0.0
        %4708 = vmatpush2.msra.mxu0 0.0
        %4709 = vmatprep.subr.mxu0 0.0
        %4710 = vmatpush2.msra.mxu0 0.0
        %4711 = vmatprep.subr.mxu0 0.0
        %4712 = vmatpush2.msra.mxu0 0.0
        %4713 = vmatprep.subr.mxu0 0.0
        %4714 = vmatpush2.msra.mxu0 0.0
        %4715 = vmatprep.mubr.f32.mxu0 0.0
        %4716 = vmatmul.mubr.f32.gmra.mxu0 %v4646
        %v4717 = vpop.f32.mrf.mxu0
        %v4718 = vadd.f32 0.0, %v4717
        %v4719 = vpop.f32.mrf.mxu0
        %4720 = vmatprep.mubr.f32.mxu0 0.0
        %4721 = vmatmul.mubr.f32.gmra.mxu0 %v4649
        %v4722 = vpop.f32.mrf.mxu0
        %v4723 = vadd.f32 0.0, %v4722
        %v4724 = vpop.f32.mrf.mxu0
        %4725 = vdwg.mxu0
        %v4726 = vld [vmem:[%s5] sm:$0xff]
        %v4727 = vld [vmem:[%s5 + $0x8] sm:$0xff]
        %s4728 = scalar_lea.vmem %s4, 16
        %v4729 = vld [vmem:[%s4728] sm:$0xff]
        %v4730 = vld [vmem:[%s4728 + $0x8] sm:$0xff]
        %v4732 = vsel %vm4644, %v4729, 0
        %v4735 = vsel %vm4644, %v4730, 0
        %4737 = vmatprep.subr.mxu0 0.0
        %4738 = vmatpush1.msra.mxu0 0.0
        %4739 = vmatprep.subr.mxu0 0.0
        %4740 = vmatpush1.msra.mxu0 0.0
        %4741 = vmatprep.subr.mxu0 0.0
        %4742 = vmatpush1.msra.mxu0 0.0
        %4743 = vmatprep.subr.mxu0 0.0
        %4744 = vmatpush1.msra.mxu0 0.0
        %4745 = vmatprep.subr.mxu0 0.0
        %4746 = vmatpush1.msra.mxu0 0.0
        %4747 = vmatprep.subr.mxu0 0.0
        %4748 = vmatpush1.msra.mxu0 0.0
        %4749 = vmatprep.subr.mxu0 0.0
        %4750 = vmatpush1.msra.mxu0 0.0
        %4751 = vmatprep.subr.mxu0 0.0
        %4752 = vmatpush1.msra.mxu0 0.0
        %4753 = vmatprep.subr.mxu0 0.0
        %4754 = vmatpush1.msra.mxu0 %v4633
        %4755 = vmatprep.subr.mxu0 0.0
        %4756 = vmatpush1.msra.mxu0 %v4632
        %4757 = vmatprep.subr.mxu0 0.0
        %4758 = vmatpush1.msra.mxu0 %v4631
        %4759 = vmatprep.subr.mxu0 0.0
        %4760 = vmatpush1.msra.mxu0 %v4630
        %4761 = vmatprep.subr.mxu0 0.0
        %4762 = vmatpush1.msra.mxu0 %v4629
        %4763 = vmatprep.subr.mxu0 0.0
        %4764 = vmatpush1.msra.mxu0 %v4628
        %4765 = vmatprep.subr.mxu0 0.0
        %4766 = vmatpush1.msra.mxu0 %v4627
        %4767 = vmatprep.subr.mxu0 0.0
        %4768 = vmatpush1.msra.mxu0 %v4626
        %4769 = vmatprep.subr.mxu0 0.0
        %4770 = vmatpush2.msra.mxu0 0.0
        %4771 = vmatprep.subr.mxu0 0.0
        %4772 = vmatpush2.msra.mxu0 0.0
        %4773 = vmatprep.subr.mxu0 0.0
        %4774 = vmatpush2.msra.mxu0 0.0
        %4775 = vmatprep.subr.mxu0 0.0
        %4776 = vmatpush2.msra.mxu0 0.0
        %4777 = vmatprep.subr.mxu0 0.0
        %4778 = vmatpush2.msra.mxu0 0.0
        %4779 = vmatprep.subr.mxu0 0.0
        %4780 = vmatpush2.msra.mxu0 0.0
        %4781 = vmatprep.subr.mxu0 0.0
        %4782 = vmatpush2.msra.mxu0 0.0
        %4783 = vmatprep.subr.mxu0 0.0
        %4784 = vmatpush2.msra.mxu0 0.0
        %4785 = vmatprep.subr.mxu0 0.0
        %4786 = vmatpush2.msra.mxu0 0.0
        %4787 = vmatprep.subr.mxu0 0.0
        %4788 = vmatpush2.msra.mxu0 0.0
        %4789 = vmatprep.subr.mxu0 0.0
        %4790 = vmatpush2.msra.mxu0 0.0
        %4791 = vmatprep.subr.mxu0 0.0
        %4792 = vmatpush2.msra.mxu0 0.0
        %4793 = vmatprep.subr.mxu0 0.0
        %4794 = vmatpush2.msra.mxu0 0.0
        %4795 = vmatprep.subr.mxu0 0.0
        %4796 = vmatpush2.msra.mxu0 0.0
        %4797 = vmatprep.subr.mxu0 0.0
        %4798 = vmatpush2.msra.mxu0 0.0
        %4799 = vmatprep.subr.mxu0 0.0
        %4800 = vmatpush2.msra.mxu0 0.0
        %4801 = vmatprep.mubr.f32.mxu0 0.0
        %4802 = vmatmul.mubr.f32.gmra.mxu0 %v4732
        %v4803 = vpop.f32.mrf.mxu0
        %v4804 = vadd.f32 0.0, %v4803
        %v4805 = vpop.f32.mrf.mxu0
        %4806 = vmatprep.mubr.f32.mxu0 0.0
        %4807 = vmatmul.mubr.f32.gmra.mxu0 %v4735
        %v4808 = vpop.f32.mrf.mxu0
        %v4809 = vadd.f32 0.0, %v4808
        %v4810 = vpop.f32.mrf.mxu0
        %4811 = vdwg.mxu0
        %v4812 = vld [vmem:[%s5 + $0x10] sm:$0xff]
        %v4813 = vld [vmem:[%s5 + $0x18] sm:$0xff]
        %vm4814 = vcmask 130048
        %v4816 = vsel %vm4814, %v4804, 0
        %v4819 = vsel %vm4814, %v4809, 0
        %4821 = vmatprep.subr.mxu0 0.0
        %4822 = vmatpush1.msra.mxu0 0.0
        %4823 = vmatprep.subr.mxu0 0.0
        %4824 = vmatpush1.msra.mxu0 0.0
        %4825 = vmatprep.subr.mxu0 0.0
        %4826 = vmatpush1.msra.mxu0 0.0
        %4827 = vmatprep.subr.mxu0 0.0
        %4828 = vmatpush1.msra.mxu0 0.0
        %4829 = vmatprep.subr.mxu0 0.0
        %4830 = vmatpush1.msra.mxu0 0.0
        %4831 = vmatprep.subr.mxu0 0.0
        %4832 = vmatpush1.msra.mxu0 0.0
        %4833 = vmatprep.subr.mxu0 0.0
        %4834 = vmatpush1.msra.mxu0 0.0
        %4835 = vmatprep.subr.mxu0 0.0
        %4836 = vmatpush1.msra.mxu0 0.0
        %4837 = vmatprep.subr.mxu0 0.0
        %4838 = vmatpush1.msra.mxu0 0.0
        %4839 = vmatprep.subr.mxu0 0.0
        %4840 = vmatpush1.msra.mxu0 0.0
        %4841 = vmatprep.subr.mxu0 0.0
        %4842 = vmatpush1.msra.mxu0 0.0
        %4843 = vmatprep.subr.mxu0 0.0
        %4844 = vmatpush1.msra.mxu0 0.0
        %4845 = vmatprep.subr.mxu0 0.0
        %4846 = vmatpush1.msra.mxu0 0.0
        %4847 = vmatprep.subr.mxu0 0.0
        %4848 = vmatpush1.msra.mxu0 0.0
        %4849 = vmatprep.subr.mxu0 0.0
        %4850 = vmatpush1.msra.mxu0 %v4813
        %4851 = vmatprep.subr.mxu0 0.0
        %4852 = vmatpush1.msra.mxu0 %v4812
        %4853 = vmatprep.subr.mxu0 0.0
        %4854 = vmatpush2.msra.mxu0 0.0
        %4855 = vmatprep.subr.mxu0 0.0
        %4856 = vmatpush2.msra.mxu0 0.0
        %4857 = vmatprep.subr.mxu0 0.0
        %4858 = vmatpush2.msra.mxu0 0.0
        %4859 = vmatprep.subr.mxu0 0.0
        %4860 = vmatpush2.msra.mxu0 0.0
        %4861 = vmatprep.subr.mxu0 0.0
        %4862 = vmatpush2.msra.mxu0 0.0
        %4863 = vmatprep.subr.mxu0 0.0
        %4864 = vmatpush2.msra.mxu0 0.0
        %4865 = vmatprep.subr.mxu0 0.0
        %4866 = vmatpush2.msra.mxu0 0.0
        %4867 = vmatprep.subr.mxu0 0.0
        %4868 = vmatpush2.msra.mxu0 0.0
        %4869 = vmatprep.subr.mxu0 0.0
        %4870 = vmatpush2.msra.mxu0 0.0
        %4871 = vmatprep.subr.mxu0 0.0
        %4872 = vmatpush2.msra.mxu0 0.0
        %4873 = vmatprep.subr.mxu0 0.0
        %4874 = vmatpush2.msra.mxu0 0.0
        %4875 = vmatprep.subr.mxu0 0.0
        %4876 = vmatpush2.msra.mxu0 0.0
        %4877 = vmatprep.subr.mxu0 0.0
        %4878 = vmatpush2.msra.mxu0 0.0
        %4879 = vmatprep.subr.mxu0 0.0
        %4880 = vmatpush2.msra.mxu0 0.0
        %4881 = vmatprep.subr.mxu0 0.0
        %4882 = vmatpush2.msra.mxu0 0.0
        %4883 = vmatprep.subr.mxu0 0.0
        %4884 = vmatpush2.msra.mxu0 0.0
        %4885 = vmatprep.mubr.f32.mxu0 0.0
        %4886 = vmatmul.mubr.f32.gmra.mxu0 %v4816
        %v4887 = vpop.f32.mrf.mxu0
        %v4888 = vadd.f32 0.0, %v4887
        %v4889 = vpop.f32.mrf.mxu0
        %4890 = vmatprep.mubr.f32.mxu0 0.0
        %4891 = vmatmul.mubr.f32.gmra.mxu0 %v4819
        %v4892 = vpop.f32.mrf.mxu0
        %v4893 = vadd.f32 0.0, %v4892
        %v4894 = vpop.f32.mrf.mxu0
        %4895 = vdwg.mxu0
        %v4897 = vsel %vm4814, %v4718, 0
        %v4900 = vsel %vm4814, %v4723, 0
        %4902 = vmatprep.subr.mxu0 0.0
        %4903 = vmatpush1.msra.mxu0 0.0
        %4904 = vmatprep.subr.mxu0 0.0
        %4905 = vmatpush1.msra.mxu0 0.0
        %4906 = vmatprep.subr.mxu0 0.0
        %4907 = vmatpush1.msra.mxu0 0.0
        %4908 = vmatprep.subr.mxu0 0.0
        %4909 = vmatpush1.msra.mxu0 0.0
        %4910 = vmatprep.subr.mxu0 0.0
        %4911 = vmatpush1.msra.mxu0 0.0
        %4912 = vmatprep.subr.mxu0 0.0
        %4913 = vmatpush1.msra.mxu0 0.0
        %4914 = vmatprep.subr.mxu0 0.0
        %4915 = vmatpush1.msra.mxu0 0.0
        %4916 = vmatprep.subr.mxu0 0.0
        %4917 = vmatpush1.msra.mxu0 0.0
        %4918 = vmatprep.subr.mxu0 0.0
        %4919 = vmatpush1.msra.mxu0 0.0
        %4920 = vmatprep.subr.mxu0 0.0
        %4921 = vmatpush1.msra.mxu0 0.0
        %4922 = vmatprep.subr.mxu0 0.0
        %4923 = vmatpush1.msra.mxu0 0.0
        %4924 = vmatprep.subr.mxu0 0.0
        %4925 = vmatpush1.msra.mxu0 0.0
        %4926 = vmatprep.subr.mxu0 0.0
        %4927 = vmatpush1.msra.mxu0 0.0
        %4928 = vmatprep.subr.mxu0 0.0
        %4929 = vmatpush1.msra.mxu0 0.0
        %4930 = vmatprep.subr.mxu0 0.0
        %4931 = vmatpush1.msra.mxu0 %v4727
        %4932 = vmatprep.subr.mxu0 0.0
        %4933 = vmatpush1.msra.mxu0 %v4726
        %4934 = vmatprep.subr.mxu0 0.0
        %4935 = vmatpush2.msra.mxu0 0.0
        %4936 = vmatprep.subr.mxu0 0.0
        %4937 = vmatpush2.msra.mxu0 0.0
        %4938 = vmatprep.subr.mxu0 0.0
        %4939 = vmatpush2.msra.mxu0 0.0
        %4940 = vmatprep.subr.mxu0 0.0
        %4941 = vmatpush2.msra.mxu0 0.0
        %4942 = vmatprep.subr.mxu0 0.0
        %4943 = vmatpush2.msra.mxu0 0.0
        %4944 = vmatprep.subr.mxu0 0.0
        %4945 = vmatpush2.msra.mxu0 0.0
        %4946 = vmatprep.subr.mxu0 0.0
        %4947 = vmatpush2.msra.mxu0 0.0
        %4948 = vmatprep.subr.mxu0 0.0
        %4949 = vmatpush2.msra.mxu0 0.0
        %4950 = vmatprep.subr.mxu0 0.0
        %4951 = vmatpush2.msra.mxu0 0.0
        %4952 = vmatprep.subr.mxu0 0.0
        %4953 = vmatpush2.msra.mxu0 0.0
        %4954 = vmatprep.subr.mxu0 0.0
        %4955 = vmatpush2.msra.mxu0 0.0
        %4956 = vmatprep.subr.mxu0 0.0
        %4957 = vmatpush2.msra.mxu0 0.0
        %4958 = vmatprep.subr.mxu0 0.0
        %4959 = vmatpush2.msra.mxu0 0.0
        %4960 = vmatprep.subr.mxu0 0.0
        %4961 = vmatpush2.msra.mxu0 0.0
        %4962 = vmatprep.subr.mxu0 0.0
        %4963 = vmatpush2.msra.mxu0 0.0
        %4964 = vmatprep.subr.mxu0 0.0
        %4965 = vmatpush2.msra.mxu0 0.0
        %4966 = vmatprep.mubr.f32.mxu0 0.0
        %4967 = vmatmul.mubr.f32.gmra.mxu0 %v4897
        %v4968 = vpop.f32.mrf.mxu0
        %v4969 = vadd.f32 %v4888, %v4968
        %v4970 = vpop.f32.mrf.mxu0
        %4971 = vmatprep.mubr.f32.mxu0 0.0
        %4972 = vmatmul.mubr.f32.gmra.mxu0 %v4900
        %v4973 = vpop.f32.mrf.mxu0
        %v4974 = vadd.f32 %v4893, %v4973
        %v4975 = vpop.f32.mrf.mxu0
        %4976 = vdwg.mxu0
        %s4977 = scalar_lea.vmem %s4, 32
        %v4978 = vld [vmem:[%s4977] sm:$0xff]
        %v4979 = vld [vmem:[%s4977 + $0x8] sm:$0xff]
        %v4981 = vsel %vm4644, %v4978, 0
        %v4984 = vsel %vm4644, %v4979, 0
        %4986 = vmatprep.subr.mxu0 0.0
        %4987 = vmatpush1.msra.mxu0 0.0
        %4988 = vmatprep.subr.mxu0 0.0
        %4989 = vmatpush1.msra.mxu0 0.0
        %4990 = vmatprep.subr.mxu0 0.0
        %4991 = vmatpush1.msra.mxu0 0.0
        %4992 = vmatprep.subr.mxu0 0.0
        %4993 = vmatpush1.msra.mxu0 0.0
        %4994 = vmatprep.subr.mxu0 0.0
        %4995 = vmatpush1.msra.mxu0 0.0
        %4996 = vmatprep.subr.mxu0 0.0
        %4997 = vmatpush1.msra.mxu0 0.0
        %4998 = vmatprep.subr.mxu0 0.0
        %4999 = vmatpush1.msra.mxu0 0.0
        %5000 = vmatprep.subr.mxu0 0.0
        %5001 = vmatpush1.msra.mxu0 0.0
        %5002 = vmatprep.subr.mxu0 0.0
        %5003 = vmatpush1.msra.mxu0 %v4633
        %5004 = vmatprep.subr.mxu0 0.0
        %5005 = vmatpush1.msra.mxu0 %v4632
        %5006 = vmatprep.subr.mxu0 0.0
        %5007 = vmatpush1.msra.mxu0 %v4631
        %5008 = vmatprep.subr.mxu0 0.0
        %5009 = vmatpush1.msra.mxu0 %v4630
        %5010 = vmatprep.subr.mxu0 0.0
        %5011 = vmatpush1.msra.mxu0 %v4629
        %5012 = vmatprep.subr.mxu0 0.0
        %5013 = vmatpush1.msra.mxu0 %v4628
        %5014 = vmatprep.subr.mxu0 0.0
        %5015 = vmatpush1.msra.mxu0 %v4627
        %5016 = vmatprep.subr.mxu0 0.0
        %5017 = vmatpush1.msra.mxu0 %v4626
        %5018 = vmatprep.subr.mxu0 0.0
        %5019 = vmatpush2.msra.mxu0 0.0
        %5020 = vmatprep.subr.mxu0 0.0
        %5021 = vmatpush2.msra.mxu0 0.0
        %5022 = vmatprep.subr.mxu0 0.0
        %5023 = vmatpush2.msra.mxu0 0.0
        %5024 = vmatprep.subr.mxu0 0.0
        %5025 = vmatpush2.msra.mxu0 0.0
        %5026 = vmatprep.subr.mxu0 0.0
        %5027 = vmatpush2.msra.mxu0 0.0
        %5028 = vmatprep.subr.mxu0 0.0
        %5029 = vmatpush2.msra.mxu0 0.0
        %5030 = vmatprep.subr.mxu0 0.0
        %5031 = vmatpush2.msra.mxu0 0.0
        %5032 = vmatprep.subr.mxu0 0.0
        %5033 = vmatpush2.msra.mxu0 0.0
        %5034 = vmatprep.subr.mxu0 0.0
        %5035 = vmatpush2.msra.mxu0 0.0
        %5036 = vmatprep.subr.mxu0 0.0
        %5037 = vmatpush2.msra.mxu0 0.0
        %5038 = vmatprep.subr.mxu0 0.0
        %5039 = vmatpush2.msra.mxu0 0.0
        %5040 = vmatprep.subr.mxu0 0.0
        %5041 = vmatpush2.msra.mxu0 0.0
        %5042 = vmatprep.subr.mxu0 0.0
        %5043 = vmatpush2.msra.mxu0 0.0
        %5044 = vmatprep.subr.mxu0 0.0
        %5045 = vmatpush2.msra.mxu0 0.0
        %5046 = vmatprep.subr.mxu0 0.0
        %5047 = vmatpush2.msra.mxu0 0.0
        %5048 = vmatprep.subr.mxu0 0.0
        %5049 = vmatpush2.msra.mxu0 0.0
        %5050 = vmatprep.mubr.f32.mxu0 0.0
        %5051 = vmatmul.mubr.f32.gmra.mxu0 %v4981
        %v5052 = vpop.f32.mrf.mxu0
        %v5053 = vadd.f32 0.0, %v5052
        %v5054 = vpop.f32.mrf.mxu0
        %5055 = vmatprep.mubr.f32.mxu0 0.0
        %5056 = vmatmul.mubr.f32.gmra.mxu0 %v4984
        %v5057 = vpop.f32.mrf.mxu0
        %v5058 = vadd.f32 0.0, %v5057
        %v5059 = vpop.f32.mrf.mxu0
        %5060 = vdwg.mxu0
        %v5061 = vld [vmem:[%s5 + $0x20] sm:$0xff]
        %v5062 = vld [vmem:[%s5 + $0x28] sm:$0xff]
        %v5064 = vsel %vm4814, %v5053, 0
        %v5067 = vsel %vm4814, %v5058, 0
        %5069 = vmatprep.subr.mxu0 0.0
        %5070 = vmatpush1.msra.mxu0 0.0
        %5071 = vmatprep.subr.mxu0 0.0
        %5072 = vmatpush1.msra.mxu0 0.0
        %5073 = vmatprep.subr.mxu0 0.0
        %5074 = vmatpush1.msra.mxu0 0.0
        %5075 = vmatprep.subr.mxu0 0.0
        %5076 = vmatpush1.msra.mxu0 0.0
        %5077 = vmatprep.subr.mxu0 0.0
        %5078 = vmatpush1.msra.mxu0 0.0
        %5079 = vmatprep.subr.mxu0 0.0
        %5080 = vmatpush1.msra.mxu0 0.0
        %5081 = vmatprep.subr.mxu0 0.0
        %5082 = vmatpush1.msra.mxu0 0.0
        %5083 = vmatprep.subr.mxu0 0.0
        %5084 = vmatpush1.msra.mxu0 0.0
        %5085 = vmatprep.subr.mxu0 0.0
        %5086 = vmatpush1.msra.mxu0 0.0
        %5087 = vmatprep.subr.mxu0 0.0
        %5088 = vmatpush1.msra.mxu0 0.0
        %5089 = vmatprep.subr.mxu0 0.0
        %5090 = vmatpush1.msra.mxu0 0.0
        %5091 = vmatprep.subr.mxu0 0.0
        %5092 = vmatpush1.msra.mxu0 0.0
        %5093 = vmatprep.subr.mxu0 0.0
        %5094 = vmatpush1.msra.mxu0 0.0
        %5095 = vmatprep.subr.mxu0 0.0
        %5096 = vmatpush1.msra.mxu0 0.0
        %5097 = vmatprep.subr.mxu0 0.0
        %5098 = vmatpush1.msra.mxu0 %v5062
        %5099 = vmatprep.subr.mxu0 0.0
        %5100 = vmatpush1.msra.mxu0 %v5061
        %5101 = vmatprep.subr.mxu0 0.0
        %5102 = vmatpush2.msra.mxu0 0.0
        %5103 = vmatprep.subr.mxu0 0.0
        %5104 = vmatpush2.msra.mxu0 0.0
        %5105 = vmatprep.subr.mxu0 0.0
        %5106 = vmatpush2.msra.mxu0 0.0
        %5107 = vmatprep.subr.mxu0 0.0
        %5108 = vmatpush2.msra.mxu0 0.0
        %5109 = vmatprep.subr.mxu0 0.0
        %5110 = vmatpush2.msra.mxu0 0.0
        %5111 = vmatprep.subr.mxu0 0.0
        %5112 = vmatpush2.msra.mxu0 0.0
        %5113 = vmatprep.subr.mxu0 0.0
        %5114 = vmatpush2.msra.mxu0 0.0
        %5115 = vmatprep.subr.mxu0 0.0
        %5116 = vmatpush2.msra.mxu0 0.0
        %5117 = vmatprep.subr.mxu0 0.0
        %5118 = vmatpush2.msra.mxu0 0.0
        %5119 = vmatprep.subr.mxu0 0.0
        %5120 = vmatpush2.msra.mxu0 0.0
        %5121 = vmatprep.subr.mxu0 0.0
        %5122 = vmatpush2.msra.mxu0 0.0
        %5123 = vmatprep.subr.mxu0 0.0
        %5124 = vmatpush2.msra.mxu0 0.0
        %5125 = vmatprep.subr.mxu0 0.0
        %5126 = vmatpush2.msra.mxu0 0.0
        %5127 = vmatprep.subr.mxu0 0.0
        %5128 = vmatpush2.msra.mxu0 0.0
        %5129 = vmatprep.subr.mxu0 0.0
        %5130 = vmatpush2.msra.mxu0 0.0
        %5131 = vmatprep.subr.mxu0 0.0
        %5132 = vmatpush2.msra.mxu0 0.0
        %5133 = vmatprep.mubr.f32.mxu0 0.0
        %5134 = vmatmul.mubr.f32.gmra.mxu0 %v5064
        %v5135 = vpop.f32.mrf.mxu0
        %v5136 = vadd.f32 0.0, %v5135
        %v5137 = vpop.f32.mrf.mxu0
        %5138 = vmatprep.mubr.f32.mxu0 0.0
        %5139 = vmatmul.mubr.f32.gmra.mxu0 %v5067
        %v5140 = vpop.f32.mrf.mxu0
        %v5141 = vadd.f32 0.0, %v5140
        %v5142 = vpop.f32.mrf.mxu0
        %5143 = vdwg.mxu0
        %v5144 = vadd.f32 %v4969, %v5136
        %v5145 = vadd.f32 %v4974, %v5141
        %s5146 = scalar_lea.vmem %s4, 48
        %v5147 = vld [vmem:[%s5146] sm:$0xff]
        %v5148 = vld [vmem:[%s5146 + $0x8] sm:$0xff]
        %v5150 = vsel %vm4644, %v5147, 0
        %v5153 = vsel %vm4644, %v5148, 0
        %5155 = vmatprep.subr.mxu0 0.0
        %5156 = vmatpush1.msra.mxu0 0.0
        %5157 = vmatprep.subr.mxu0 0.0
        %5158 = vmatpush1.msra.mxu0 0.0
        %5159 = vmatprep.subr.mxu0 0.0
        %5160 = vmatpush1.msra.mxu0 0.0
        %5161 = vmatprep.subr.mxu0 0.0
        %5162 = vmatpush1.msra.mxu0 0.0
        %5163 = vmatprep.subr.mxu0 0.0
        %5164 = vmatpush1.msra.mxu0 0.0
        %5165 = vmatprep.subr.mxu0 0.0
        %5166 = vmatpush1.msra.mxu0 0.0
        %5167 = vmatprep.subr.mxu0 0.0
        %5168 = vmatpush1.msra.mxu0 0.0
        %5169 = vmatprep.subr.mxu0 0.0
        %5170 = vmatpush1.msra.mxu0 0.0
        %5171 = vmatprep.subr.mxu0 0.0
        %5172 = vmatpush1.msra.mxu0 %v4633
        %5173 = vmatprep.subr.mxu0 0.0
        %5174 = vmatpush1.msra.mxu0 %v4632
        %5175 = vmatprep.subr.mxu0 0.0
        %5176 = vmatpush1.msra.mxu0 %v4631
        %5177 = vmatprep.subr.mxu0 0.0
        %5178 = vmatpush1.msra.mxu0 %v4630
        %5179 = vmatprep.subr.mxu0 0.0
        %5180 = vmatpush1.msra.mxu0 %v4629
        %5181 = vmatprep.subr.mxu0 0.0
        %5182 = vmatpush1.msra.mxu0 %v4628
        %5183 = vmatprep.subr.mxu0 0.0
        %5184 = vmatpush1.msra.mxu0 %v4627
        %5185 = vmatprep.subr.mxu0 0.0
        %5186 = vmatpush1.msra.mxu0 %v4626
        %5187 = vmatprep.subr.mxu0 0.0
        %5188 = vmatpush2.msra.mxu0 0.0
        %5189 = vmatprep.subr.mxu0 0.0
        %5190 = vmatpush2.msra.mxu0 0.0
        %5191 = vmatprep.subr.mxu0 0.0
        %5192 = vmatpush2.msra.mxu0 0.0
        %5193 = vmatprep.subr.mxu0 0.0
        %5194 = vmatpush2.msra.mxu0 0.0
        %5195 = vmatprep.subr.mxu0 0.0
        %5196 = vmatpush2.msra.mxu0 0.0
        %5197 = vmatprep.subr.mxu0 0.0
        %5198 = vmatpush2.msra.mxu0 0.0
        %5199 = vmatprep.subr.mxu0 0.0
        %5200 = vmatpush2.msra.mxu0 0.0
        %5201 = vmatprep.subr.mxu0 0.0
        %5202 = vmatpush2.msra.mxu0 0.0
        %5203 = vmatprep.subr.mxu0 0.0
        %5204 = vmatpush2.msra.mxu0 0.0
        %5205 = vmatprep.subr.mxu0 0.0
        %5206 = vmatpush2.msra.mxu0 0.0
        %5207 = vmatprep.subr.mxu0 0.0
        %5208 = vmatpush2.msra.mxu0 0.0
        %5209 = vmatprep.subr.mxu0 0.0
        %5210 = vmatpush2.msra.mxu0 0.0
        %5211 = vmatprep.subr.mxu0 0.0
        %5212 = vmatpush2.msra.mxu0 0.0
        %5213 = vmatprep.subr.mxu0 0.0
        %5214 = vmatpush2.msra.mxu0 0.0
        %5215 = vmatprep.subr.mxu0 0.0
        %5216 = vmatpush2.msra.mxu0 0.0
        %5217 = vmatprep.subr.mxu0 0.0
        %5218 = vmatpush2.msra.mxu0 0.0
        %5219 = vmatprep.mubr.f32.mxu0 0.0
        %5220 = vmatmul.mubr.f32.gmra.mxu0 %v5150
        %v5221 = vpop.f32.mrf.mxu0
        %v5222 = vadd.f32 0.0, %v5221
        %v5223 = vpop.f32.mrf.mxu0
        %5224 = vmatprep.mubr.f32.mxu0 0.0
        %5225 = vmatmul.mubr.f32.gmra.mxu0 %v5153
        %v5226 = vpop.f32.mrf.mxu0
        %v5227 = vadd.f32 0.0, %v5226
        %v5228 = vpop.f32.mrf.mxu0
        %5229 = vdwg.mxu0
        %v5230 = vld [vmem:[%s5 + $0x30] sm:$0xff]
        %v5231 = vld [vmem:[%s5 + $0x38] sm:$0xff]
        %v5233 = vsel %vm4814, %v5222, 0
        %v5236 = vsel %vm4814, %v5227, 0
        %5238 = vmatprep.subr.mxu0 0.0
        %5239 = vmatpush1.msra.mxu0 0.0
        %5240 = vmatprep.subr.mxu0 0.0
        %5241 = vmatpush1.msra.mxu0 0.0
        %5242 = vmatprep.subr.mxu0 0.0
        %5243 = vmatpush1.msra.mxu0 0.0
        %5244 = vmatprep.subr.mxu0 0.0
        %5245 = vmatpush1.msra.mxu0 0.0
        %5246 = vmatprep.subr.mxu0 0.0
        %5247 = vmatpush1.msra.mxu0 0.0
        %5248 = vmatprep.subr.mxu0 0.0
        %5249 = vmatpush1.msra.mxu0 0.0
        %5250 = vmatprep.subr.mxu0 0.0
        %5251 = vmatpush1.msra.mxu0 0.0
        %5252 = vmatprep.subr.mxu0 0.0
        %5253 = vmatpush1.msra.mxu0 0.0
        %5254 = vmatprep.subr.mxu0 0.0
        %5255 = vmatpush1.msra.mxu0 0.0
        %5256 = vmatprep.subr.mxu0 0.0
        %5257 = vmatpush1.msra.mxu0 0.0
        %5258 = vmatprep.subr.mxu0 0.0
        %5259 = vmatpush1.msra.mxu0 0.0
        %5260 = vmatprep.subr.mxu0 0.0
        %5261 = vmatpush1.msra.mxu0 0.0
        %5262 = vmatprep.subr.mxu0 0.0
        %5263 = vmatpush1.msra.mxu0 0.0
        %5264 = vmatprep.subr.mxu0 0.0
        %5265 = vmatpush1.msra.mxu0 0.0
        %5266 = vmatprep.subr.mxu0 0.0
        %5267 = vmatpush1.msra.mxu0 %v5231
        %5268 = vmatprep.subr.mxu0 0.0
        %5269 = vmatpush1.msra.mxu0 %v5230
        %5270 = vmatprep.subr.mxu0 0.0
        %5271 = vmatpush2.msra.mxu0 0.0
        %5272 = vmatprep.subr.mxu0 0.0
        %5273 = vmatpush2.msra.mxu0 0.0
        %5274 = vmatprep.subr.mxu0 0.0
        %5275 = vmatpush2.msra.mxu0 0.0
        %5276 = vmatprep.subr.mxu0 0.0
        %5277 = vmatpush2.msra.mxu0 0.0
        %5278 = vmatprep.subr.mxu0 0.0
        %5279 = vmatpush2.msra.mxu0 0.0
        %5280 = vmatprep.subr.mxu0 0.0
        %5281 = vmatpush2.msra.mxu0 0.0
        %5282 = vmatprep.subr.mxu0 0.0
        %5283 = vmatpush2.msra.mxu0 0.0
        %5284 = vmatprep.subr.mxu0 0.0
        %5285 = vmatpush2.msra.mxu0 0.0
        %5286 = vmatprep.subr.mxu0 0.0
        %5287 = vmatpush2.msra.mxu0 0.0
        %5288 = vmatprep.subr.mxu0 0.0
        %5289 = vmatpush2.msra.mxu0 0.0
        %5290 = vmatprep.subr.mxu0 0.0
        %5291 = vmatpush2.msra.mxu0 0.0
        %5292 = vmatprep.subr.mxu0 0.0
        %5293 = vmatpush2.msra.mxu0 0.0
        %5294 = vmatprep.subr.mxu0 0.0
        %5295 = vmatpush2.msra.mxu0 0.0
        %5296 = vmatprep.subr.mxu0 0.0
        %5297 = vmatpush2.msra.mxu0 0.0
        %5298 = vmatprep.subr.mxu0 0.0
        %5299 = vmatpush2.msra.mxu0 0.0
        %5300 = vmatprep.subr.mxu0 0.0
        %5301 = vmatpush2.msra.mxu0 0.0
        %5302 = vmatprep.mubr.f32.mxu0 0.0
        %5303 = vmatmul.mubr.f32.gmra.mxu0 %v5233
        %v5304 = vpop.f32.mrf.mxu0
        %v5305 = vadd.f32 0.0, %v5304
        %v5306 = vpop.f32.mrf.mxu0
        %5307 = vmatprep.mubr.f32.mxu0 0.0
        %5308 = vmatmul.mubr.f32.gmra.mxu0 %v5236
        %v5309 = vpop.f32.mrf.mxu0
        %v5310 = vadd.f32 0.0, %v5309
        %v5311 = vpop.f32.mrf.mxu0
        %5312 = vdwg.mxu0
        %v5313 = vadd.f32 %v5144, %v5305
        %v5314 = vadd.f32 %v5145, %v5310
        %s5315 = scalar_lea.vmem %s4, 64
        %v5316 = vld [vmem:[%s5315] sm:$0xff]
        %v5317 = vld [vmem:[%s5315 + $0x8] sm:$0xff]
        %v5319 = vsel %vm4644, %v5316, 0
        %v5322 = vsel %vm4644, %v5317, 0
        %5324 = vmatprep.subr.mxu0 0.0
        %5325 = vmatpush1.msra.mxu0 0.0
        %5326 = vmatprep.subr.mxu0 0.0
        %5327 = vmatpush1.msra.mxu0 0.0
        %5328 = vmatprep.subr.mxu0 0.0
        %5329 = vmatpush1.msra.mxu0 0.0
        %5330 = vmatprep.subr.mxu0 0.0
        %5331 = vmatpush1.msra.mxu0 0.0
        %5332 = vmatprep.subr.mxu0 0.0
        %5333 = vmatpush1.msra.mxu0 0.0
        %5334 = vmatprep.subr.mxu0 0.0
        %5335 = vmatpush1.msra.mxu0 0.0
        %5336 = vmatprep.subr.mxu0 0.0
        %5337 = vmatpush1.msra.mxu0 0.0
        %5338 = vmatprep.subr.mxu0 0.0
        %5339 = vmatpush1.msra.mxu0 0.0
        %5340 = vmatprep.subr.mxu0 0.0
        %5341 = vmatpush1.msra.mxu0 %v4633
        %5342 = vmatprep.subr.mxu0 0.0
        %5343 = vmatpush1.msra.mxu0 %v4632
        %5344 = vmatprep.subr.mxu0 0.0
        %5345 = vmatpush1.msra.mxu0 %v4631
        %5346 = vmatprep.subr.mxu0 0.0
        %5347 = vmatpush1.msra.mxu0 %v4630
        %5348 = vmatprep.subr.mxu0 0.0
        %5349 = vmatpush1.msra.mxu0 %v4629
        %5350 = vmatprep.subr.mxu0 0.0
        %5351 = vmatpush1.msra.mxu0 %v4628
        %5352 = vmatprep.subr.mxu0 0.0
        %5353 = vmatpush1.msra.mxu0 %v4627
        %5354 = vmatprep.subr.mxu0 0.0
        %5355 = vmatpush1.msra.mxu0 %v4626
        %5356 = vmatprep.subr.mxu0 0.0
        %5357 = vmatpush2.msra.mxu0 0.0
        %5358 = vmatprep.subr.mxu0 0.0
        %5359 = vmatpush2.msra.mxu0 0.0
        %5360 = vmatprep.subr.mxu0 0.0
        %5361 = vmatpush2.msra.mxu0 0.0
        %5362 = vmatprep.subr.mxu0 0.0
        %5363 = vmatpush2.msra.mxu0 0.0
        %5364 = vmatprep.subr.mxu0 0.0
        %5365 = vmatpush2.msra.mxu0 0.0
        %5366 = vmatprep.subr.mxu0 0.0
        %5367 = vmatpush2.msra.mxu0 0.0
        %5368 = vmatprep.subr.mxu0 0.0
        %5369 = vmatpush2.msra.mxu0 0.0
        %5370 = vmatprep.subr.mxu0 0.0
        %5371 = vmatpush2.msra.mxu0 0.0
        %5372 = vmatprep.subr.mxu0 0.0
        %5373 = vmatpush2.msra.mxu0 0.0
        %5374 = vmatprep.subr.mxu0 0.0
        %5375 = vmatpush2.msra.mxu0 0.0
        %5376 = vmatprep.subr.mxu0 0.0
        %5377 = vmatpush2.msra.mxu0 0.0
        %5378 = vmatprep.subr.mxu0 0.0
        %5379 = vmatpush2.msra.mxu0 0.0
        %5380 = vmatprep.subr.mxu0 0.0
        %5381 = vmatpush2.msra.mxu0 0.0
        %5382 = vmatprep.subr.mxu0 0.0
        %5383 = vmatpush2.msra.mxu0 0.0
        %5384 = vmatprep.subr.mxu0 0.0
        %5385 = vmatpush2.msra.mxu0 0.0
        %5386 = vmatprep.subr.mxu0 0.0
        %5387 = vmatpush2.msra.mxu0 0.0
        %5388 = vmatprep.mubr.f32.mxu0 0.0
        %5389 = vmatmul.mubr.f32.gmra.mxu0 %v5319
        %v5390 = vpop.f32.mrf.mxu0
        %v5391 = vadd.f32 0.0, %v5390
        %v5392 = vpop.f32.mrf.mxu0
        %5393 = vmatprep.mubr.f32.mxu0 0.0
        %5394 = vmatmul.mubr.f32.gmra.mxu0 %v5322
        %v5395 = vpop.f32.mrf.mxu0
        %v5396 = vadd.f32 0.0, %v5395
        %v5397 = vpop.f32.mrf.mxu0
        %5398 = vdwg.mxu0
        %v5399 = vld [vmem:[%s5 + $0x40] sm:$0xff]
        %v5400 = vld [vmem:[%s5 + $0x48] sm:$0xff]
        %v5402 = vsel %vm4814, %v5391, 0
        %v5405 = vsel %vm4814, %v5396, 0
        %5407 = vmatprep.subr.mxu0 0.0
        %5408 = vmatpush1.msra.mxu0 0.0
        %5409 = vmatprep.subr.mxu0 0.0
        %5410 = vmatpush1.msra.mxu0 0.0
        %5411 = vmatprep.subr.mxu0 0.0
        %5412 = vmatpush1.msra.mxu0 0.0
        %5413 = vmatprep.subr.mxu0 0.0
        %5414 = vmatpush1.msra.mxu0 0.0
        %5415 = vmatprep.subr.mxu0 0.0
        %5416 = vmatpush1.msra.mxu0 0.0
        %5417 = vmatprep.subr.mxu0 0.0
        %5418 = vmatpush1.msra.mxu0 0.0
        %5419 = vmatprep.subr.mxu0 0.0
        %5420 = vmatpush1.msra.mxu0 0.0
        %5421 = vmatprep.subr.mxu0 0.0
        %5422 = vmatpush1.msra.mxu0 0.0
        %5423 = vmatprep.subr.mxu0 0.0
        %5424 = vmatpush1.msra.mxu0 0.0
        %5425 = vmatprep.subr.mxu0 0.0
        %5426 = vmatpush1.msra.mxu0 0.0
        %5427 = vmatprep.subr.mxu0 0.0
        %5428 = vmatpush1.msra.mxu0 0.0
        %5429 = vmatprep.subr.mxu0 0.0
        %5430 = vmatpush1.msra.mxu0 0.0
        %5431 = vmatprep.subr.mxu0 0.0
        %5432 = vmatpush1.msra.mxu0 0.0
        %5433 = vmatprep.subr.mxu0 0.0
        %5434 = vmatpush1.msra.mxu0 0.0
        %5435 = vmatprep.subr.mxu0 0.0
        %5436 = vmatpush1.msra.mxu0 %v5400
        %5437 = vmatprep.subr.mxu0 0.0
        %5438 = vmatpush1.msra.mxu0 %v5399
        %5439 = vmatprep.subr.mxu0 0.0
        %5440 = vmatpush2.msra.mxu0 0.0
        %5441 = vmatprep.subr.mxu0 0.0
        %5442 = vmatpush2.msra.mxu0 0.0
        %5443 = vmatprep.subr.mxu0 0.0
        %5444 = vmatpush2.msra.mxu0 0.0
        %5445 = vmatprep.subr.mxu0 0.0
        %5446 = vmatpush2.msra.mxu0 0.0
        %5447 = vmatprep.subr.mxu0 0.0
        %5448 = vmatpush2.msra.mxu0 0.0
        %5449 = vmatprep.subr.mxu0 0.0
        %5450 = vmatpush2.msra.mxu0 0.0
        %5451 = vmatprep.subr.mxu0 0.0
        %5452 = vmatpush2.msra.mxu0 0.0
        %5453 = vmatprep.subr.mxu0 0.0
        %5454 = vmatpush2.msra.mxu0 0.0
        %5455 = vmatprep.subr.mxu0 0.0
        %5456 = vmatpush2.msra.mxu0 0.0
        %5457 = vmatprep.subr.mxu0 0.0
        %5458 = vmatpush2.msra.mxu0 0.0
        %5459 = vmatprep.subr.mxu0 0.0
        %5460 = vmatpush2.msra.mxu0 0.0
        %5461 = vmatprep.subr.mxu0 0.0
        %5462 = vmatpush2.msra.mxu0 0.0
        %5463 = vmatprep.subr.mxu0 0.0
        %5464 = vmatpush2.msra.mxu0 0.0
        %5465 = vmatprep.subr.mxu0 0.0
        %5466 = vmatpush2.msra.mxu0 0.0
        %5467 = vmatprep.subr.mxu0 0.0
        %5468 = vmatpush2.msra.mxu0 0.0
        %5469 = vmatprep.subr.mxu0 0.0
        %5470 = vmatpush2.msra.mxu0 0.0
        %5471 = vmatprep.mubr.f32.mxu0 0.0
        %5472 = vmatmul.mubr.f32.gmra.mxu0 %v5402
        %v5473 = vpop.f32.mrf.mxu0
        %v5474 = vadd.f32 0.0, %v5473
        %v5475 = vpop.f32.mrf.mxu0
        %5476 = vmatprep.mubr.f32.mxu0 0.0
        %5477 = vmatmul.mubr.f32.gmra.mxu0 %v5405
        %v5478 = vpop.f32.mrf.mxu0
        %v5479 = vadd.f32 0.0, %v5478
        %v5480 = vpop.f32.mrf.mxu0
        %5481 = vdwg.mxu0
        %v5482 = vadd.f32 %v5313, %v5474
        %v5483 = vadd.f32 %v5314, %v5479
        %s5484 = scalar_lea.vmem %s4, 80
        %v5485 = vld [vmem:[%s5484] sm:$0xff]
        %v5486 = vld [vmem:[%s5484 + $0x8] sm:$0xff]
        %v5488 = vsel %vm4644, %v5485, 0
        %v5491 = vsel %vm4644, %v5486, 0
        %5493 = vmatprep.subr.mxu0 0.0
        %5494 = vmatpush1.msra.mxu0 0.0
        %5495 = vmatprep.subr.mxu0 0.0
        %5496 = vmatpush1.msra.mxu0 0.0
        %5497 = vmatprep.subr.mxu0 0.0
        %5498 = vmatpush1.msra.mxu0 0.0
        %5499 = vmatprep.subr.mxu0 0.0
        %5500 = vmatpush1.msra.mxu0 0.0
        %5501 = vmatprep.subr.mxu0 0.0
        %5502 = vmatpush1.msra.mxu0 0.0
        %5503 = vmatprep.subr.mxu0 0.0
        %5504 = vmatpush1.msra.mxu0 0.0
        %5505 = vmatprep.subr.mxu0 0.0
        %5506 = vmatpush1.msra.mxu0 0.0
        %5507 = vmatprep.subr.mxu0 0.0
        %5508 = vmatpush1.msra.mxu0 0.0
        %5509 = vmatprep.subr.mxu0 0.0
        %5510 = vmatpush1.msra.mxu0 %v4633
        %5511 = vmatprep.subr.mxu0 0.0
        %5512 = vmatpush1.msra.mxu0 %v4632
        %5513 = vmatprep.subr.mxu0 0.0
        %5514 = vmatpush1.msra.mxu0 %v4631
        %5515 = vmatprep.subr.mxu0 0.0
        %5516 = vmatpush1.msra.mxu0 %v4630
        %5517 = vmatprep.subr.mxu0 0.0
        %5518 = vmatpush1.msra.mxu0 %v4629
        %5519 = vmatprep.subr.mxu0 0.0
        %5520 = vmatpush1.msra.mxu0 %v4628
        %5521 = vmatprep.subr.mxu0 0.0
        %5522 = vmatpush1.msra.mxu0 %v4627
        %5523 = vmatprep.subr.mxu0 0.0
        %5524 = vmatpush1.msra.mxu0 %v4626
        %5525 = vmatprep.subr.mxu0 0.0
        %5526 = vmatpush2.msra.mxu0 0.0
        %5527 = vmatprep.subr.mxu0 0.0
        %5528 = vmatpush2.msra.mxu0 0.0
        %5529 = vmatprep.subr.mxu0 0.0
        %5530 = vmatpush2.msra.mxu0 0.0
        %5531 = vmatprep.subr.mxu0 0.0
        %5532 = vmatpush2.msra.mxu0 0.0
        %5533 = vmatprep.subr.mxu0 0.0
        %5534 = vmatpush2.msra.mxu0 0.0
        %5535 = vmatprep.subr.mxu0 0.0
        %5536 = vmatpush2.msra.mxu0 0.0
        %5537 = vmatprep.subr.mxu0 0.0
        %5538 = vmatpush2.msra.mxu0 0.0
        %5539 = vmatprep.subr.mxu0 0.0
        %5540 = vmatpush2.msra.mxu0 0.0
        %5541 = vmatprep.subr.mxu0 0.0
        %5542 = vmatpush2.msra.mxu0 0.0
        %5543 = vmatprep.subr.mxu0 0.0
        %5544 = vmatpush2.msra.mxu0 0.0
        %5545 = vmatprep.subr.mxu0 0.0
        %5546 = vmatpush2.msra.mxu0 0.0
        %5547 = vmatprep.subr.mxu0 0.0
        %5548 = vmatpush2.msra.mxu0 0.0
        %5549 = vmatprep.subr.mxu0 0.0
        %5550 = vmatpush2.msra.mxu0 0.0
        %5551 = vmatprep.subr.mxu0 0.0
        %5552 = vmatpush2.msra.mxu0 0.0
        %5553 = vmatprep.subr.mxu0 0.0
        %5554 = vmatpush2.msra.mxu0 0.0
        %5555 = vmatprep.subr.mxu0 0.0
        %5556 = vmatpush2.msra.mxu0 0.0
        %5557 = vmatprep.mubr.f32.mxu0 0.0
        %5558 = vmatmul.mubr.f32.gmra.mxu0 %v5488
        %v5559 = vpop.f32.mrf.mxu0
        %v5560 = vadd.f32 0.0, %v5559
        %v5561 = vpop.f32.mrf.mxu0
        %5562 = vmatprep.mubr.f32.mxu0 0.0
        %5563 = vmatmul.mubr.f32.gmra.mxu0 %v5491
        %v5564 = vpop.f32.mrf.mxu0
        %v5565 = vadd.f32 0.0, %v5564
        %v5566 = vpop.f32.mrf.mxu0
        %5567 = vdwg.mxu0
        %v5568 = vld [vmem:[%s5 + $0x50] sm:$0xff]
        %v5569 = vld [vmem:[%s5 + $0x58] sm:$0xff]
        %v5571 = vsel %vm4814, %v5560, 0
        %v5574 = vsel %vm4814, %v5565, 0
        %5576 = vmatprep.subr.mxu0 0.0
        %5577 = vmatpush1.msra.mxu0 0.0
        %5578 = vmatprep.subr.mxu0 0.0
        %5579 = vmatpush1.msra.mxu0 0.0
        %5580 = vmatprep.subr.mxu0 0.0
        %5581 = vmatpush1.msra.mxu0 0.0
        %5582 = vmatprep.subr.mxu0 0.0
        %5583 = vmatpush1.msra.mxu0 0.0
        %5584 = vmatprep.subr.mxu0 0.0
        %5585 = vmatpush1.msra.mxu0 0.0
        %5586 = vmatprep.subr.mxu0 0.0
        %5587 = vmatpush1.msra.mxu0 0.0
        %5588 = vmatprep.subr.mxu0 0.0
        %5589 = vmatpush1.msra.mxu0 0.0
        %5590 = vmatprep.subr.mxu0 0.0
        %5591 = vmatpush1.msra.mxu0 0.0
        %5592 = vmatprep.subr.mxu0 0.0
        %5593 = vmatpush1.msra.mxu0 0.0
        %5594 = vmatprep.subr.mxu0 0.0
        %5595 = vmatpush1.msra.mxu0 0.0
        %5596 = vmatprep.subr.mxu0 0.0
        %5597 = vmatpush1.msra.mxu0 0.0
        %5598 = vmatprep.subr.mxu0 0.0
        %5599 = vmatpush1.msra.mxu0 0.0
        %5600 = vmatprep.subr.mxu0 0.0
        %5601 = vmatpush1.msra.mxu0 0.0
        %5602 = vmatprep.subr.mxu0 0.0
        %5603 = vmatpush1.msra.mxu0 0.0
        %5604 = vmatprep.subr.mxu0 0.0
        %5605 = vmatpush1.msra.mxu0 %v5569
        %5606 = vmatprep.subr.mxu0 0.0
        %5607 = vmatpush1.msra.mxu0 %v5568
        %5608 = vmatprep.subr.mxu0 0.0
        %5609 = vmatpush2.msra.mxu0 0.0
        %5610 = vmatprep.subr.mxu0 0.0
        %5611 = vmatpush2.msra.mxu0 0.0
        %5612 = vmatprep.subr.mxu0 0.0
        %5613 = vmatpush2.msra.mxu0 0.0
        %5614 = vmatprep.subr.mxu0 0.0
        %5615 = vmatpush2.msra.mxu0 0.0
        %5616 = vmatprep.subr.mxu0 0.0
        %5617 = vmatpush2.msra.mxu0 0.0
        %5618 = vmatprep.subr.mxu0 0.0
        %5619 = vmatpush2.msra.mxu0 0.0
        %5620 = vmatprep.subr.mxu0 0.0
        %5621 = vmatpush2.msra.mxu0 0.0
        %5622 = vmatprep.subr.mxu0 0.0
        %5623 = vmatpush2.msra.mxu0 0.0
        %5624 = vmatprep.subr.mxu0 0.0
        %5625 = vmatpush2.msra.mxu0 0.0
        %5626 = vmatprep.subr.mxu0 0.0
        %5627 = vmatpush2.msra.mxu0 0.0
        %5628 = vmatprep.subr.mxu0 0.0
        %5629 = vmatpush2.msra.mxu0 0.0
        %5630 = vmatprep.subr.mxu0 0.0
        %5631 = vmatpush2.msra.mxu0 0.0
        %5632 = vmatprep.subr.mxu0 0.0
        %5633 = vmatpush2.msra.mxu0 0.0
        %5634 = vmatprep.subr.mxu0 0.0
        %5635 = vmatpush2.msra.mxu0 0.0
        %5636 = vmatprep.subr.mxu0 0.0
        %5637 = vmatpush2.msra.mxu0 0.0
        %5638 = vmatprep.subr.mxu0 0.0
        %5639 = vmatpush2.msra.mxu0 0.0
        %5640 = vmatprep.mubr.f32.mxu0 0.0
        %5641 = vmatmul.mubr.f32.gmra.mxu0 %v5571
        %v5642 = vpop.f32.mrf.mxu0
        %v5643 = vadd.f32 0.0, %v5642
        %v5644 = vpop.f32.mrf.mxu0
        %5645 = vmatprep.mubr.f32.mxu0 0.0
        %5646 = vmatmul.mubr.f32.gmra.mxu0 %v5574
        %v5647 = vpop.f32.mrf.mxu0
        %v5648 = vadd.f32 0.0, %v5647
        %v5649 = vpop.f32.mrf.mxu0
        %5650 = vdwg.mxu0
        %v5651 = vadd.f32 %v5482, %v5643
        %v5652 = vadd.f32 %v5483, %v5648
        %s5653 = scalar_lea.vmem %s4, 96
        %v5654 = vld [vmem:[%s5653] sm:$0xff]
        %v5655 = vld [vmem:[%s5653 + $0x8] sm:$0xff]
        %v5657 = vsel %vm4644, %v5654, 0
        %v5660 = vsel %vm4644, %v5655, 0
        %5662 = vmatprep.subr.mxu0 0.0
        %5663 = vmatpush1.msra.mxu0 0.0
        %5664 = vmatprep.subr.mxu0 0.0
        %5665 = vmatpush1.msra.mxu0 0.0
        %5666 = vmatprep.subr.mxu0 0.0
        %5667 = vmatpush1.msra.mxu0 0.0
        %5668 = vmatprep.subr.mxu0 0.0
        %5669 = vmatpush1.msra.mxu0 0.0
        %5670 = vmatprep.subr.mxu0 0.0
        %5671 = vmatpush1.msra.mxu0 0.0
        %5672 = vmatprep.subr.mxu0 0.0
        %5673 = vmatpush1.msra.mxu0 0.0
        %5674 = vmatprep.subr.mxu0 0.0
        %5675 = vmatpush1.msra.mxu0 0.0
        %5676 = vmatprep.subr.mxu0 0.0
        %5677 = vmatpush1.msra.mxu0 0.0
        %5678 = vmatprep.subr.mxu0 0.0
        %5679 = vmatpush1.msra.mxu0 %v4633
        %5680 = vmatprep.subr.mxu0 0.0
        %5681 = vmatpush1.msra.mxu0 %v4632
        %5682 = vmatprep.subr.mxu0 0.0
        %5683 = vmatpush1.msra.mxu0 %v4631
        %5684 = vmatprep.subr.mxu0 0.0
        %5685 = vmatpush1.msra.mxu0 %v4630
        %5686 = vmatprep.subr.mxu0 0.0
        %5687 = vmatpush1.msra.mxu0 %v4629
        %5688 = vmatprep.subr.mxu0 0.0
        %5689 = vmatpush1.msra.mxu0 %v4628
        %5690 = vmatprep.subr.mxu0 0.0
        %5691 = vmatpush1.msra.mxu0 %v4627
        %5692 = vmatprep.subr.mxu0 0.0
        %5693 = vmatpush1.msra.mxu0 %v4626
        %5694 = vmatprep.subr.mxu0 0.0
        %5695 = vmatpush2.msra.mxu0 0.0
        %5696 = vmatprep.subr.mxu0 0.0
        %5697 = vmatpush2.msra.mxu0 0.0
        %5698 = vmatprep.subr.mxu0 0.0
        %5699 = vmatpush2.msra.mxu0 0.0
        %5700 = vmatprep.subr.mxu0 0.0
        %5701 = vmatpush2.msra.mxu0 0.0
        %5702 = vmatprep.subr.mxu0 0.0
        %5703 = vmatpush2.msra.mxu0 0.0
        %5704 = vmatprep.subr.mxu0 0.0
        %5705 = vmatpush2.msra.mxu0 0.0
        %5706 = vmatprep.subr.mxu0 0.0
        %5707 = vmatpush2.msra.mxu0 0.0
        %5708 = vmatprep.subr.mxu0 0.0
        %5709 = vmatpush2.msra.mxu0 0.0
        %5710 = vmatprep.subr.mxu0 0.0
        %5711 = vmatpush2.msra.mxu0 0.0
        %5712 = vmatprep.subr.mxu0 0.0
        %5713 = vmatpush2.msra.mxu0 0.0
        %5714 = vmatprep.subr.mxu0 0.0
        %5715 = vmatpush2.msra.mxu0 0.0
        %5716 = vmatprep.subr.mxu0 0.0
        %5717 = vmatpush2.msra.mxu0 0.0
        %5718 = vmatprep.subr.mxu0 0.0
        %5719 = vmatpush2.msra.mxu0 0.0
        %5720 = vmatprep.subr.mxu0 0.0
        %5721 = vmatpush2.msra.mxu0 0.0
        %5722 = vmatprep.subr.mxu0 0.0
        %5723 = vmatpush2.msra.mxu0 0.0
        %5724 = vmatprep.subr.mxu0 0.0
        %5725 = vmatpush2.msra.mxu0 0.0
        %5726 = vmatprep.mubr.f32.mxu0 0.0
        %5727 = vmatmul.mubr.f32.gmra.mxu0 %v5657
        %v5728 = vpop.f32.mrf.mxu0
        %v5729 = vadd.f32 0.0, %v5728
        %v5730 = vpop.f32.mrf.mxu0
        %5731 = vmatprep.mubr.f32.mxu0 0.0
        %5732 = vmatmul.mubr.f32.gmra.mxu0 %v5660
        %v5733 = vpop.f32.mrf.mxu0
        %v5734 = vadd.f32 0.0, %v5733
        %v5735 = vpop.f32.mrf.mxu0
        %5736 = vdwg.mxu0
        %v5737 = vld [vmem:[%s5 + $0x60] sm:$0xff]
        %v5738 = vld [vmem:[%s5 + $0x68] sm:$0xff]
        %v5740 = vsel %vm4814, %v5729, 0
        %v5743 = vsel %vm4814, %v5734, 0
        %5745 = vmatprep.subr.mxu0 0.0
        %5746 = vmatpush1.msra.mxu0 0.0
        %5747 = vmatprep.subr.mxu0 0.0
        %5748 = vmatpush1.msra.mxu0 0.0
        %5749 = vmatprep.subr.mxu0 0.0
        %5750 = vmatpush1.msra.mxu0 0.0
        %5751 = vmatprep.subr.mxu0 0.0
        %5752 = vmatpush1.msra.mxu0 0.0
        %5753 = vmatprep.subr.mxu0 0.0
        %5754 = vmatpush1.msra.mxu0 0.0
        %5755 = vmatprep.subr.mxu0 0.0
        %5756 = vmatpush1.msra.mxu0 0.0
        %5757 = vmatprep.subr.mxu0 0.0
        %5758 = vmatpush1.msra.mxu0 0.0
        %5759 = vmatprep.subr.mxu0 0.0
        %5760 = vmatpush1.msra.mxu0 0.0
        %5761 = vmatprep.subr.mxu0 0.0
        %5762 = vmatpush1.msra.mxu0 0.0
        %5763 = vmatprep.subr.mxu0 0.0
        %5764 = vmatpush1.msra.mxu0 0.0
        %5765 = vmatprep.subr.mxu0 0.0
        %5766 = vmatpush1.msra.mxu0 0.0
        %5767 = vmatprep.subr.mxu0 0.0
        %5768 = vmatpush1.msra.mxu0 0.0
        %5769 = vmatprep.subr.mxu0 0.0
        %5770 = vmatpush1.msra.mxu0 0.0
        %5771 = vmatprep.subr.mxu0 0.0
        %5772 = vmatpush1.msra.mxu0 0.0
        %5773 = vmatprep.subr.mxu0 0.0
        %5774 = vmatpush1.msra.mxu0 %v5738
        %5775 = vmatprep.subr.mxu0 0.0
        %5776 = vmatpush1.msra.mxu0 %v5737
        %5777 = vmatprep.subr.mxu0 0.0
        %5778 = vmatpush2.msra.mxu0 0.0
        %5779 = vmatprep.subr.mxu0 0.0
        %5780 = vmatpush2.msra.mxu0 0.0
        %5781 = vmatprep.subr.mxu0 0.0
        %5782 = vmatpush2.msra.mxu0 0.0
        %5783 = vmatprep.subr.mxu0 0.0
        %5784 = vmatpush2.msra.mxu0 0.0
        %5785 = vmatprep.subr.mxu0 0.0
        %5786 = vmatpush2.msra.mxu0 0.0
        %5787 = vmatprep.subr.mxu0 0.0
        %5788 = vmatpush2.msra.mxu0 0.0
        %5789 = vmatprep.subr.mxu0 0.0
        %5790 = vmatpush2.msra.mxu0 0.0
        %5791 = vmatprep.subr.mxu0 0.0
        %5792 = vmatpush2.msra.mxu0 0.0
        %5793 = vmatprep.subr.mxu0 0.0
        %5794 = vmatpush2.msra.mxu0 0.0
        %5795 = vmatprep.subr.mxu0 0.0
        %5796 = vmatpush2.msra.mxu0 0.0
        %5797 = vmatprep.subr.mxu0 0.0
        %5798 = vmatpush2.msra.mxu0 0.0
        %5799 = vmatprep.subr.mxu0 0.0
        %5800 = vmatpush2.msra.mxu0 0.0
        %5801 = vmatprep.subr.mxu0 0.0
        %5802 = vmatpush2.msra.mxu0 0.0
        %5803 = vmatprep.subr.mxu0 0.0
        %5804 = vmatpush2.msra.mxu0 0.0
        %5805 = vmatprep.subr.mxu0 0.0
        %5806 = vmatpush2.msra.mxu0 0.0
        %5807 = vmatprep.subr.mxu0 0.0
        %5808 = vmatpush2.msra.mxu0 0.0
        %5809 = vmatprep.mubr.f32.mxu0 0.0
        %5810 = vmatmul.mubr.f32.gmra.mxu0 %v5740
        %v5811 = vpop.f32.mrf.mxu0
        %v5812 = vadd.f32 0.0, %v5811
        %v5813 = vpop.f32.mrf.mxu0
        %5814 = vmatprep.mubr.f32.mxu0 0.0
        %5815 = vmatmul.mubr.f32.gmra.mxu0 %v5743
        %v5816 = vpop.f32.mrf.mxu0
        %v5817 = vadd.f32 0.0, %v5816
        %v5818 = vpop.f32.mrf.mxu0
        %5819 = vdwg.mxu0
        %v5820 = vadd.f32 %v5651, %v5812
        %v5821 = vadd.f32 %v5652, %v5817
        %s5822 = scalar_lea.vmem %s4, 112
        %v5823 = vld [vmem:[%s5822] sm:$0xff]
        %v5824 = vld [vmem:[%s5822 + $0x8] sm:$0xff]
        %v5826 = vsel %vm4644, %v5823, 0
        %v5829 = vsel %vm4644, %v5824, 0
        %5831 = vmatprep.subr.mxu0 0.0
        %5832 = vmatpush1.msra.mxu0 0.0
        %5833 = vmatprep.subr.mxu0 0.0
        %5834 = vmatpush1.msra.mxu0 0.0
        %5835 = vmatprep.subr.mxu0 0.0
        %5836 = vmatpush1.msra.mxu0 0.0
        %5837 = vmatprep.subr.mxu0 0.0
        %5838 = vmatpush1.msra.mxu0 0.0
        %5839 = vmatprep.subr.mxu0 0.0
        %5840 = vmatpush1.msra.mxu0 0.0
        %5841 = vmatprep.subr.mxu0 0.0
        %5842 = vmatpush1.msra.mxu0 0.0
        %5843 = vmatprep.subr.mxu0 0.0
        %5844 = vmatpush1.msra.mxu0 0.0
        %5845 = vmatprep.subr.mxu0 0.0
        %5846 = vmatpush1.msra.mxu0 0.0
        %5847 = vmatprep.subr.mxu0 0.0
        %5848 = vmatpush1.msra.mxu0 %v4633
        %5849 = vmatprep.subr.mxu0 0.0
        %5850 = vmatpush1.msra.mxu0 %v4632
        %5851 = vmatprep.subr.mxu0 0.0
        %5852 = vmatpush1.msra.mxu0 %v4631
        %5853 = vmatprep.subr.mxu0 0.0
        %5854 = vmatpush1.msra.mxu0 %v4630
        %5855 = vmatprep.subr.mxu0 0.0
        %5856 = vmatpush1.msra.mxu0 %v4629
        %5857 = vmatprep.subr.mxu0 0.0
        %5858 = vmatpush1.msra.mxu0 %v4628
        %5859 = vmatprep.subr.mxu0 0.0
        %5860 = vmatpush1.msra.mxu0 %v4627
        %5861 = vmatprep.subr.mxu0 0.0
        %5862 = vmatpush1.msra.mxu0 %v4626
        %5863 = vmatprep.subr.mxu0 0.0
        %5864 = vmatpush2.msra.mxu0 0.0
        %5865 = vmatprep.subr.mxu0 0.0
        %5866 = vmatpush2.msra.mxu0 0.0
        %5867 = vmatprep.subr.mxu0 0.0
        %5868 = vmatpush2.msra.mxu0 0.0
        %5869 = vmatprep.subr.mxu0 0.0
        %5870 = vmatpush2.msra.mxu0 0.0
        %5871 = vmatprep.subr.mxu0 0.0
        %5872 = vmatpush2.msra.mxu0 0.0
        %5873 = vmatprep.subr.mxu0 0.0
        %5874 = vmatpush2.msra.mxu0 0.0
        %5875 = vmatprep.subr.mxu0 0.0
        %5876 = vmatpush2.msra.mxu0 0.0
        %5877 = vmatprep.subr.mxu0 0.0
        %5878 = vmatpush2.msra.mxu0 0.0
        %5879 = vmatprep.subr.mxu0 0.0
        %5880 = vmatpush2.msra.mxu0 0.0
        %5881 = vmatprep.subr.mxu0 0.0
        %5882 = vmatpush2.msra.mxu0 0.0
        %5883 = vmatprep.subr.mxu0 0.0
        %5884 = vmatpush2.msra.mxu0 0.0
        %5885 = vmatprep.subr.mxu0 0.0
        %5886 = vmatpush2.msra.mxu0 0.0
        %5887 = vmatprep.subr.mxu0 0.0
        %5888 = vmatpush2.msra.mxu0 0.0
        %5889 = vmatprep.subr.mxu0 0.0
        %5890 = vmatpush2.msra.mxu0 0.0
        %5891 = vmatprep.subr.mxu0 0.0
        %5892 = vmatpush2.msra.mxu0 0.0
        %5893 = vmatprep.subr.mxu0 0.0
        %5894 = vmatpush2.msra.mxu0 0.0
        %5895 = vmatprep.mubr.f32.mxu0 0.0
        %5896 = vmatmul.mubr.f32.gmra.mxu0 %v5826
        %v5897 = vpop.f32.mrf.mxu0
        %v5898 = vadd.f32 0.0, %v5897
        %v5899 = vpop.f32.mrf.mxu0
        %5900 = vmatprep.mubr.f32.mxu0 0.0
        %5901 = vmatmul.mubr.f32.gmra.mxu0 %v5829
        %v5902 = vpop.f32.mrf.mxu0
        %v5903 = vadd.f32 0.0, %v5902
        %v5904 = vpop.f32.mrf.mxu0
        %5905 = vdwg.mxu0
        %v5906 = vld [vmem:[%s5 + $0x70] sm:$0xff]
        %v5907 = vld [vmem:[%s5 + $0x78] sm:$0xff]
        %v5909 = vsel %vm4814, %v5898, 0
        %v5912 = vsel %vm4814, %v5903, 0
        %5914 = vmatprep.subr.mxu0 0.0
        %5915 = vmatpush1.msra.mxu0 0.0
        %5916 = vmatprep.subr.mxu0 0.0
        %5917 = vmatpush1.msra.mxu0 0.0
        %5918 = vmatprep.subr.mxu0 0.0
        %5919 = vmatpush1.msra.mxu0 0.0
        %5920 = vmatprep.subr.mxu0 0.0
        %5921 = vmatpush1.msra.mxu0 0.0
        %5922 = vmatprep.subr.mxu0 0.0
        %5923 = vmatpush1.msra.mxu0 0.0
        %5924 = vmatprep.subr.mxu0 0.0
        %5925 = vmatpush1.msra.mxu0 0.0
        %5926 = vmatprep.subr.mxu0 0.0
        %5927 = vmatpush1.msra.mxu0 0.0
        %5928 = vmatprep.subr.mxu0 0.0
        %5929 = vmatpush1.msra.mxu0 0.0
        %5930 = vmatprep.subr.mxu0 0.0
        %5931 = vmatpush1.msra.mxu0 0.0
        %5932 = vmatprep.subr.mxu0 0.0
        %5933 = vmatpush1.msra.mxu0 0.0
        %5934 = vmatprep.subr.mxu0 0.0
        %5935 = vmatpush1.msra.mxu0 0.0
        %5936 = vmatprep.subr.mxu0 0.0
        %5937 = vmatpush1.msra.mxu0 0.0
        %5938 = vmatprep.subr.mxu0 0.0
        %5939 = vmatpush1.msra.mxu0 0.0
        %5940 = vmatprep.subr.mxu0 0.0
        %5941 = vmatpush1.msra.mxu0 0.0
        %5942 = vmatprep.subr.mxu0 0.0
        %5943 = vmatpush1.msra.mxu0 %v5907
        %5944 = vmatprep.subr.mxu0 0.0
        %5945 = vmatpush1.msra.mxu0 %v5906
        %5946 = vmatprep.subr.mxu0 0.0
        %5947 = vmatpush2.msra.mxu0 0.0
        %5948 = vmatprep.subr.mxu0 0.0
        %5949 = vmatpush2.msra.mxu0 0.0
        %5950 = vmatprep.subr.mxu0 0.0
        %5951 = vmatpush2.msra.mxu0 0.0
        %5952 = vmatprep.subr.mxu0 0.0
        %5953 = vmatpush2.msra.mxu0 0.0
        %5954 = vmatprep.subr.mxu0 0.0
        %5955 = vmatpush2.msra.mxu0 0.0
        %5956 = vmatprep.subr.mxu0 0.0
        %5957 = vmatpush2.msra.mxu0 0.0
        %5958 = vmatprep.subr.mxu0 0.0
        %5959 = vmatpush2.msra.mxu0 0.0
        %5960 = vmatprep.subr.mxu0 0.0
        %5961 = vmatpush2.msra.mxu0 0.0
        %5962 = vmatprep.subr.mxu0 0.0
        %5963 = vmatpush2.msra.mxu0 0.0
        %5964 = vmatprep.subr.mxu0 0.0
        %5965 = vmatpush2.msra.mxu0 0.0
        %5966 = vmatprep.subr.mxu0 0.0
        %5967 = vmatpush2.msra.mxu0 0.0
        %5968 = vmatprep.subr.mxu0 0.0
        %5969 = vmatpush2.msra.mxu0 0.0
        %5970 = vmatprep.subr.mxu0 0.0
        %5971 = vmatpush2.msra.mxu0 0.0
        %5972 = vmatprep.subr.mxu0 0.0
        %5973 = vmatpush2.msra.mxu0 0.0
        %5974 = vmatprep.subr.mxu0 0.0
        %5975 = vmatpush2.msra.mxu0 0.0
        %5976 = vmatprep.subr.mxu0 0.0
        %5977 = vmatpush2.msra.mxu0 0.0
        %5978 = vmatprep.mubr.f32.mxu0 0.0
        %5979 = vmatmul.mubr.f32.gmra.mxu0 %v5909
        %v5980 = vpop.f32.mrf.mxu0
        %v5981 = vadd.f32 0.0, %v5980
        %v5982 = vpop.f32.mrf.mxu0
        %5983 = vmatprep.mubr.f32.mxu0 0.0
        %5984 = vmatmul.mubr.f32.gmra.mxu0 %v5912
        %v5985 = vpop.f32.mrf.mxu0
        %v5986 = vadd.f32 0.0, %v5985
        %v5987 = vpop.f32.mrf.mxu0
        %5988 = vdwg.mxu0
        %v5989 = vadd.f32 %v5820, %v5981
        %v5990 = vadd.f32 %v5821, %v5986
        %s5991 = scalar_lea.vmem %s4, 128
        %v5992 = vld [vmem:[%s5991] sm:$0xff]
        %v5993 = vld [vmem:[%s5991 + $0x8] sm:$0xff]
        %v5995 = vsel %vm4644, %v5992, 0
        %v5998 = vsel %vm4644, %v5993, 0
        %6000 = vmatprep.subr.mxu0 0.0
        %6001 = vmatpush1.msra.mxu0 0.0
        %6002 = vmatprep.subr.mxu0 0.0
        %6003 = vmatpush1.msra.mxu0 0.0
        %6004 = vmatprep.subr.mxu0 0.0
        %6005 = vmatpush1.msra.mxu0 0.0
        %6006 = vmatprep.subr.mxu0 0.0
        %6007 = vmatpush1.msra.mxu0 0.0
        %6008 = vmatprep.subr.mxu0 0.0
        %6009 = vmatpush1.msra.mxu0 0.0
        %6010 = vmatprep.subr.mxu0 0.0
        %6011 = vmatpush1.msra.mxu0 0.0
        %6012 = vmatprep.subr.mxu0 0.0
        %6013 = vmatpush1.msra.mxu0 0.0
        %6014 = vmatprep.subr.mxu0 0.0
        %6015 = vmatpush1.msra.mxu0 0.0
        %6016 = vmatprep.subr.mxu0 0.0
        %6017 = vmatpush1.msra.mxu0 %v4633
        %6018 = vmatprep.subr.mxu0 0.0
        %6019 = vmatpush1.msra.mxu0 %v4632
        %6020 = vmatprep.subr.mxu0 0.0
        %6021 = vmatpush1.msra.mxu0 %v4631
        %6022 = vmatprep.subr.mxu0 0.0
        %6023 = vmatpush1.msra.mxu0 %v4630
        %6024 = vmatprep.subr.mxu0 0.0
        %6025 = vmatpush1.msra.mxu0 %v4629
        %6026 = vmatprep.subr.mxu0 0.0
        %6027 = vmatpush1.msra.mxu0 %v4628
        %6028 = vmatprep.subr.mxu0 0.0
        %6029 = vmatpush1.msra.mxu0 %v4627
        %6030 = vmatprep.subr.mxu0 0.0
        %6031 = vmatpush1.msra.mxu0 %v4626
        %6032 = vmatprep.subr.mxu0 0.0
        %6033 = vmatpush2.msra.mxu0 0.0
        %6034 = vmatprep.subr.mxu0 0.0
        %6035 = vmatpush2.msra.mxu0 0.0
        %6036 = vmatprep.subr.mxu0 0.0
        %6037 = vmatpush2.msra.mxu0 0.0
        %6038 = vmatprep.subr.mxu0 0.0
        %6039 = vmatpush2.msra.mxu0 0.0
        %6040 = vmatprep.subr.mxu0 0.0
        %6041 = vmatpush2.msra.mxu0 0.0
        %6042 = vmatprep.subr.mxu0 0.0
        %6043 = vmatpush2.msra.mxu0 0.0
        %6044 = vmatprep.subr.mxu0 0.0
        %6045 = vmatpush2.msra.mxu0 0.0
        %6046 = vmatprep.subr.mxu0 0.0
        %6047 = vmatpush2.msra.mxu0 0.0
        %6048 = vmatprep.subr.mxu0 0.0
        %6049 = vmatpush2.msra.mxu0 0.0
        %6050 = vmatprep.subr.mxu0 0.0
        %6051 = vmatpush2.msra.mxu0 0.0
        %6052 = vmatprep.subr.mxu0 0.0
        %6053 = vmatpush2.msra.mxu0 0.0
        %6054 = vmatprep.subr.mxu0 0.0
        %6055 = vmatpush2.msra.mxu0 0.0
        %6056 = vmatprep.subr.mxu0 0.0
        %6057 = vmatpush2.msra.mxu0 0.0
        %6058 = vmatprep.subr.mxu0 0.0
        %6059 = vmatpush2.msra.mxu0 0.0
        %6060 = vmatprep.subr.mxu0 0.0
        %6061 = vmatpush2.msra.mxu0 0.0
        %6062 = vmatprep.subr.mxu0 0.0
        %6063 = vmatpush2.msra.mxu0 0.0
        %6064 = vmatprep.mubr.f32.mxu0 0.0
        %6065 = vmatmul.mubr.f32.gmra.mxu0 %v5995
        %v6066 = vpop.f32.mrf.mxu0
        %v6067 = vadd.f32 0.0, %v6066
        %v6068 = vpop.f32.mrf.mxu0
        %6069 = vmatprep.mubr.f32.mxu0 0.0
        %6070 = vmatmul.mubr.f32.gmra.mxu0 %v5998
        %v6071 = vpop.f32.mrf.mxu0
        %v6072 = vadd.f32 0.0, %v6071
        %v6073 = vpop.f32.mrf.mxu0
        %6074 = vdwg.mxu0
        %v6075 = vld [vmem:[%s5 + $0x80] sm:$0xff]
        %v6076 = vld [vmem:[%s5 + $0x88] sm:$0xff]
        %v6078 = vsel %vm4814, %v6067, 0
        %v6081 = vsel %vm4814, %v6072, 0
        %6083 = vmatprep.subr.mxu0 0.0
        %6084 = vmatpush1.msra.mxu0 0.0
        %6085 = vmatprep.subr.mxu0 0.0
        %6086 = vmatpush1.msra.mxu0 0.0
        %6087 = vmatprep.subr.mxu0 0.0
        %6088 = vmatpush1.msra.mxu0 0.0
        %6089 = vmatprep.subr.mxu0 0.0
        %6090 = vmatpush1.msra.mxu0 0.0
        %6091 = vmatprep.subr.mxu0 0.0
        %6092 = vmatpush1.msra.mxu0 0.0
        %6093 = vmatprep.subr.mxu0 0.0
        %6094 = vmatpush1.msra.mxu0 0.0
        %6095 = vmatprep.subr.mxu0 0.0
        %6096 = vmatpush1.msra.mxu0 0.0
        %6097 = vmatprep.subr.mxu0 0.0
        %6098 = vmatpush1.msra.mxu0 0.0
        %6099 = vmatprep.subr.mxu0 0.0
        %6100 = vmatpush1.msra.mxu0 0.0
        %6101 = vmatprep.subr.mxu0 0.0
        %6102 = vmatpush1.msra.mxu0 0.0
        %6103 = vmatprep.subr.mxu0 0.0
        %6104 = vmatpush1.msra.mxu0 0.0
        %6105 = vmatprep.subr.mxu0 0.0
        %6106 = vmatpush1.msra.mxu0 0.0
        %6107 = vmatprep.subr.mxu0 0.0
        %6108 = vmatpush1.msra.mxu0 0.0
        %6109 = vmatprep.subr.mxu0 0.0
        %6110 = vmatpush1.msra.mxu0 0.0
        %6111 = vmatprep.subr.mxu0 0.0
        %6112 = vmatpush1.msra.mxu0 %v6076
        %6113 = vmatprep.subr.mxu0 0.0
        %6114 = vmatpush1.msra.mxu0 %v6075
        %6115 = vmatprep.subr.mxu0 0.0
        %6116 = vmatpush2.msra.mxu0 0.0
        %6117 = vmatprep.subr.mxu0 0.0
        %6118 = vmatpush2.msra.mxu0 0.0
        %6119 = vmatprep.subr.mxu0 0.0
        %6120 = vmatpush2.msra.mxu0 0.0
        %6121 = vmatprep.subr.mxu0 0.0
        %6122 = vmatpush2.msra.mxu0 0.0
        %6123 = vmatprep.subr.mxu0 0.0
        %6124 = vmatpush2.msra.mxu0 0.0
        %6125 = vmatprep.subr.mxu0 0.0
        %6126 = vmatpush2.msra.mxu0 0.0
        %6127 = vmatprep.subr.mxu0 0.0
        %6128 = vmatpush2.msra.mxu0 0.0
        %6129 = vmatprep.subr.mxu0 0.0
        %6130 = vmatpush2.msra.mxu0 0.0
        %6131 = vmatprep.subr.mxu0 0.0
        %6132 = vmatpush2.msra.mxu0 0.0
        %6133 = vmatprep.subr.mxu0 0.0
        %6134 = vmatpush2.msra.mxu0 0.0
        %6135 = vmatprep.subr.mxu0 0.0
        %6136 = vmatpush2.msra.mxu0 0.0
        %6137 = vmatprep.subr.mxu0 0.0
        %6138 = vmatpush2.msra.mxu0 0.0
        %6139 = vmatprep.subr.mxu0 0.0
        %6140 = vmatpush2.msra.mxu0 0.0
        %6141 = vmatprep.subr.mxu0 0.0
        %6142 = vmatpush2.msra.mxu0 0.0
        %6143 = vmatprep.subr.mxu0 0.0
        %6144 = vmatpush2.msra.mxu0 0.0
        %6145 = vmatprep.subr.mxu0 0.0
        %6146 = vmatpush2.msra.mxu0 0.0
        %6147 = vmatprep.mubr.f32.mxu0 0.0
        %6148 = vmatmul.mubr.f32.gmra.mxu0 %v6078
        %v6149 = vpop.f32.mrf.mxu0
        %v6150 = vadd.f32 0.0, %v6149
        %v6151 = vpop.f32.mrf.mxu0
        %6152 = vmatprep.mubr.f32.mxu0 0.0
        %6153 = vmatmul.mubr.f32.gmra.mxu0 %v6081
        %v6154 = vpop.f32.mrf.mxu0
        %v6155 = vadd.f32 0.0, %v6154
        %v6156 = vpop.f32.mrf.mxu0
        %6157 = vdwg.mxu0
        %v6158 = vadd.f32 %v5989, %v6150
        %v6159 = vadd.f32 %v5990, %v6155
        %s6160 = scalar_lea.vmem %s4, 144
        %v6161 = vld [vmem:[%s6160] sm:$0xff]
        %v6162 = vld [vmem:[%s6160 + $0x8] sm:$0xff]
        %v6164 = vsel %vm4644, %v6161, 0
        %v6167 = vsel %vm4644, %v6162, 0
        %6169 = vmatprep.subr.mxu0 0.0
        %6170 = vmatpush1.msra.mxu0 0.0
        %6171 = vmatprep.subr.mxu0 0.0
        %6172 = vmatpush1.msra.mxu0 0.0
        %6173 = vmatprep.subr.mxu0 0.0
        %6174 = vmatpush1.msra.mxu0 0.0
        %6175 = vmatprep.subr.mxu0 0.0
        %6176 = vmatpush1.msra.mxu0 0.0
        %6177 = vmatprep.subr.mxu0 0.0
        %6178 = vmatpush1.msra.mxu0 0.0
        %6179 = vmatprep.subr.mxu0 0.0
        %6180 = vmatpush1.msra.mxu0 0.0
        %6181 = vmatprep.subr.mxu0 0.0
        %6182 = vmatpush1.msra.mxu0 0.0
        %6183 = vmatprep.subr.mxu0 0.0
        %6184 = vmatpush1.msra.mxu0 0.0
        %6185 = vmatprep.subr.mxu0 0.0
        %6186 = vmatpush1.msra.mxu0 %v4633
        %6187 = vmatprep.subr.mxu0 0.0
        %6188 = vmatpush1.msra.mxu0 %v4632
        %6189 = vmatprep.subr.mxu0 0.0
        %6190 = vmatpush1.msra.mxu0 %v4631
        %6191 = vmatprep.subr.mxu0 0.0
        %6192 = vmatpush1.msra.mxu0 %v4630
        %6193 = vmatprep.subr.mxu0 0.0
        %6194 = vmatpush1.msra.mxu0 %v4629
        %6195 = vmatprep.subr.mxu0 0.0
        %6196 = vmatpush1.msra.mxu0 %v4628
        %6197 = vmatprep.subr.mxu0 0.0
        %6198 = vmatpush1.msra.mxu0 %v4627
        %6199 = vmatprep.subr.mxu0 0.0
        %6200 = vmatpush1.msra.mxu0 %v4626
        %6201 = vmatprep.subr.mxu0 0.0
        %6202 = vmatpush2.msra.mxu0 0.0
        %6203 = vmatprep.subr.mxu0 0.0
        %6204 = vmatpush2.msra.mxu0 0.0
        %6205 = vmatprep.subr.mxu0 0.0
        %6206 = vmatpush2.msra.mxu0 0.0
        %6207 = vmatprep.subr.mxu0 0.0
        %6208 = vmatpush2.msra.mxu0 0.0
        %6209 = vmatprep.subr.mxu0 0.0
        %6210 = vmatpush2.msra.mxu0 0.0
        %6211 = vmatprep.subr.mxu0 0.0
        %6212 = vmatpush2.msra.mxu0 0.0
        %6213 = vmatprep.subr.mxu0 0.0
        %6214 = vmatpush2.msra.mxu0 0.0
        %6215 = vmatprep.subr.mxu0 0.0
        %6216 = vmatpush2.msra.mxu0 0.0
        %6217 = vmatprep.subr.mxu0 0.0
        %6218 = vmatpush2.msra.mxu0 0.0
        %6219 = vmatprep.subr.mxu0 0.0
        %6220 = vmatpush2.msra.mxu0 0.0
        %6221 = vmatprep.subr.mxu0 0.0
        %6222 = vmatpush2.msra.mxu0 0.0
        %6223 = vmatprep.subr.mxu0 0.0
        %6224 = vmatpush2.msra.mxu0 0.0
        %6225 = vmatprep.subr.mxu0 0.0
        %6226 = vmatpush2.msra.mxu0 0.0
        %6227 = vmatprep.subr.mxu0 0.0
        %6228 = vmatpush2.msra.mxu0 0.0
        %6229 = vmatprep.subr.mxu0 0.0
        %6230 = vmatpush2.msra.mxu0 0.0
        %6231 = vmatprep.subr.mxu0 0.0
        %6232 = vmatpush2.msra.mxu0 0.0
        %6233 = vmatprep.mubr.f32.mxu0 0.0
        %6234 = vmatmul.mubr.f32.gmra.mxu0 %v6164
        %v6235 = vpop.f32.mrf.mxu0
        %v6236 = vadd.f32 0.0, %v6235
        %v6237 = vpop.f32.mrf.mxu0
        %6238 = vmatprep.mubr.f32.mxu0 0.0
        %6239 = vmatmul.mubr.f32.gmra.mxu0 %v6167
        %v6240 = vpop.f32.mrf.mxu0
        %v6241 = vadd.f32 0.0, %v6240
        %v6242 = vpop.f32.mrf.mxu0
        %6243 = vdwg.mxu0
        %v6244 = vld [vmem:[%s5 + $0x90] sm:$0xff]
        %v6245 = vld [vmem:[%s5 + $0x98] sm:$0xff]
        %v6247 = vsel %vm4814, %v6236, 0
        %v6250 = vsel %vm4814, %v6241, 0
        %6252 = vmatprep.subr.mxu0 0.0
        %6253 = vmatpush1.msra.mxu0 0.0
        %6254 = vmatprep.subr.mxu0 0.0
        %6255 = vmatpush1.msra.mxu0 0.0
        %6256 = vmatprep.subr.mxu0 0.0
        %6257 = vmatpush1.msra.mxu0 0.0
        %6258 = vmatprep.subr.mxu0 0.0
        %6259 = vmatpush1.msra.mxu0 0.0
        %6260 = vmatprep.subr.mxu0 0.0
        %6261 = vmatpush1.msra.mxu0 0.0
        %6262 = vmatprep.subr.mxu0 0.0
        %6263 = vmatpush1.msra.mxu0 0.0
        %6264 = vmatprep.subr.mxu0 0.0
        %6265 = vmatpush1.msra.mxu0 0.0
        %6266 = vmatprep.subr.mxu0 0.0
        %6267 = vmatpush1.msra.mxu0 0.0
        %6268 = vmatprep.subr.mxu0 0.0
        %6269 = vmatpush1.msra.mxu0 0.0
        %6270 = vmatprep.subr.mxu0 0.0
        %6271 = vmatpush1.msra.mxu0 0.0
        %6272 = vmatprep.subr.mxu0 0.0
        %6273 = vmatpush1.msra.mxu0 0.0
        %6274 = vmatprep.subr.mxu0 0.0
        %6275 = vmatpush1.msra.mxu0 0.0
        %6276 = vmatprep.subr.mxu0 0.0
        %6277 = vmatpush1.msra.mxu0 0.0
        %6278 = vmatprep.subr.mxu0 0.0
        %6279 = vmatpush1.msra.mxu0 0.0
        %6280 = vmatprep.subr.mxu0 0.0
        %6281 = vmatpush1.msra.mxu0 %v6245
        %6282 = vmatprep.subr.mxu0 0.0
        %6283 = vmatpush1.msra.mxu0 %v6244
        %6284 = vmatprep.subr.mxu0 0.0
        %6285 = vmatpush2.msra.mxu0 0.0
        %6286 = vmatprep.subr.mxu0 0.0
        %6287 = vmatpush2.msra.mxu0 0.0
        %6288 = vmatprep.subr.mxu0 0.0
        %6289 = vmatpush2.msra.mxu0 0.0
        %6290 = vmatprep.subr.mxu0 0.0
        %6291 = vmatpush2.msra.mxu0 0.0
        %6292 = vmatprep.subr.mxu0 0.0
        %6293 = vmatpush2.msra.mxu0 0.0
        %6294 = vmatprep.subr.mxu0 0.0
        %6295 = vmatpush2.msra.mxu0 0.0
        %6296 = vmatprep.subr.mxu0 0.0
        %6297 = vmatpush2.msra.mxu0 0.0
        %6298 = vmatprep.subr.mxu0 0.0
        %6299 = vmatpush2.msra.mxu0 0.0
        %6300 = vmatprep.subr.mxu0 0.0
        %6301 = vmatpush2.msra.mxu0 0.0
        %6302 = vmatprep.subr.mxu0 0.0
        %6303 = vmatpush2.msra.mxu0 0.0
        %6304 = vmatprep.subr.mxu0 0.0
        %6305 = vmatpush2.msra.mxu0 0.0
        %6306 = vmatprep.subr.mxu0 0.0
        %6307 = vmatpush2.msra.mxu0 0.0
        %6308 = vmatprep.subr.mxu0 0.0
        %6309 = vmatpush2.msra.mxu0 0.0
        %6310 = vmatprep.subr.mxu0 0.0
        %6311 = vmatpush2.msra.mxu0 0.0
        %6312 = vmatprep.subr.mxu0 0.0
        %6313 = vmatpush2.msra.mxu0 0.0
        %6314 = vmatprep.subr.mxu0 0.0
        %6315 = vmatpush2.msra.mxu0 0.0
        %6316 = vmatprep.mubr.f32.mxu0 0.0
        %6317 = vmatmul.mubr.f32.gmra.mxu0 %v6247
        %v6318 = vpop.f32.mrf.mxu0
        %v6319 = vadd.f32 0.0, %v6318
        %v6320 = vpop.f32.mrf.mxu0
        %6321 = vmatprep.mubr.f32.mxu0 0.0
        %6322 = vmatmul.mubr.f32.gmra.mxu0 %v6250
        %v6323 = vpop.f32.mrf.mxu0
        %v6324 = vadd.f32 0.0, %v6323
        %v6325 = vpop.f32.mrf.mxu0
        %6326 = vdwg.mxu0
        %v6327 = vadd.f32 %v6158, %v6319
        %v6328 = vadd.f32 %v6159, %v6324
        %s6329 = scalar_lea.vmem %s4, 160
        %v6330 = vld [vmem:[%s6329] sm:$0xff]
        %v6331 = vld [vmem:[%s6329 + $0x8] sm:$0xff]
        %v6333 = vsel %vm4644, %v6330, 0
        %v6336 = vsel %vm4644, %v6331, 0
        %6338 = vmatprep.subr.mxu0 0.0
        %6339 = vmatpush1.msra.mxu0 0.0
        %6340 = vmatprep.subr.mxu0 0.0
        %6341 = vmatpush1.msra.mxu0 0.0
        %6342 = vmatprep.subr.mxu0 0.0
        %6343 = vmatpush1.msra.mxu0 0.0
        %6344 = vmatprep.subr.mxu0 0.0
        %6345 = vmatpush1.msra.mxu0 0.0
        %6346 = vmatprep.subr.mxu0 0.0
        %6347 = vmatpush1.msra.mxu0 0.0
        %6348 = vmatprep.subr.mxu0 0.0
        %6349 = vmatpush1.msra.mxu0 0.0
        %6350 = vmatprep.subr.mxu0 0.0
        %6351 = vmatpush1.msra.mxu0 0.0
        %6352 = vmatprep.subr.mxu0 0.0
        %6353 = vmatpush1.msra.mxu0 0.0
        %6354 = vmatprep.subr.mxu0 0.0
        %6355 = vmatpush1.msra.mxu0 %v4633
        %6356 = vmatprep.subr.mxu0 0.0
        %6357 = vmatpush1.msra.mxu0 %v4632
        %6358 = vmatprep.subr.mxu0 0.0
        %6359 = vmatpush1.msra.mxu0 %v4631
        %6360 = vmatprep.subr.mxu0 0.0
        %6361 = vmatpush1.msra.mxu0 %v4630
        %6362 = vmatprep.subr.mxu0 0.0
        %6363 = vmatpush1.msra.mxu0 %v4629
        %6364 = vmatprep.subr.mxu0 0.0
        %6365 = vmatpush1.msra.mxu0 %v4628
        %6366 = vmatprep.subr.mxu0 0.0
        %6367 = vmatpush1.msra.mxu0 %v4627
        %6368 = vmatprep.subr.mxu0 0.0
        %6369 = vmatpush1.msra.mxu0 %v4626
        %6370 = vmatprep.subr.mxu0 0.0
        %6371 = vmatpush2.msra.mxu0 0.0
        %6372 = vmatprep.subr.mxu0 0.0
        %6373 = vmatpush2.msra.mxu0 0.0
        %6374 = vmatprep.subr.mxu0 0.0
        %6375 = vmatpush2.msra.mxu0 0.0
        %6376 = vmatprep.subr.mxu0 0.0
        %6377 = vmatpush2.msra.mxu0 0.0
        %6378 = vmatprep.subr.mxu0 0.0
        %6379 = vmatpush2.msra.mxu0 0.0
        %6380 = vmatprep.subr.mxu0 0.0
        %6381 = vmatpush2.msra.mxu0 0.0
        %6382 = vmatprep.subr.mxu0 0.0
        %6383 = vmatpush2.msra.mxu0 0.0
        %6384 = vmatprep.subr.mxu0 0.0
        %6385 = vmatpush2.msra.mxu0 0.0
        %6386 = vmatprep.subr.mxu0 0.0
        %6387 = vmatpush2.msra.mxu0 0.0
        %6388 = vmatprep.subr.mxu0 0.0
        %6389 = vmatpush2.msra.mxu0 0.0
        %6390 = vmatprep.subr.mxu0 0.0
        %6391 = vmatpush2.msra.mxu0 0.0
        %6392 = vmatprep.subr.mxu0 0.0
        %6393 = vmatpush2.msra.mxu0 0.0
        %6394 = vmatprep.subr.mxu0 0.0
        %6395 = vmatpush2.msra.mxu0 0.0
        %6396 = vmatprep.subr.mxu0 0.0
        %6397 = vmatpush2.msra.mxu0 0.0
        %6398 = vmatprep.subr.mxu0 0.0
        %6399 = vmatpush2.msra.mxu0 0.0
        %6400 = vmatprep.subr.mxu0 0.0
        %6401 = vmatpush2.msra.mxu0 0.0
        %6402 = vmatprep.mubr.f32.mxu0 0.0
        %6403 = vmatmul.mubr.f32.gmra.mxu0 %v6333
        %v6404 = vpop.f32.mrf.mxu0
        %v6405 = vadd.f32 0.0, %v6404
        %v6406 = vpop.f32.mrf.mxu0
        %6407 = vmatprep.mubr.f32.mxu0 0.0
        %6408 = vmatmul.mubr.f32.gmra.mxu0 %v6336
        %v6409 = vpop.f32.mrf.mxu0
        %v6410 = vadd.f32 0.0, %v6409
        %v6411 = vpop.f32.mrf.mxu0
        %6412 = vdwg.mxu0
        %v6413 = vld [vmem:[%s5 + $0xa0] sm:$0xff]
        %v6414 = vld [vmem:[%s5 + $0xa8] sm:$0xff]
        %v6416 = vsel %vm4814, %v6405, 0
        %v6419 = vsel %vm4814, %v6410, 0
        %6421 = vmatprep.subr.mxu0 0.0
        %6422 = vmatpush1.msra.mxu0 0.0
        %6423 = vmatprep.subr.mxu0 0.0
        %6424 = vmatpush1.msra.mxu0 0.0
        %6425 = vmatprep.subr.mxu0 0.0
        %6426 = vmatpush1.msra.mxu0 0.0
        %6427 = vmatprep.subr.mxu0 0.0
        %6428 = vmatpush1.msra.mxu0 0.0
        %6429 = vmatprep.subr.mxu0 0.0
        %6430 = vmatpush1.msra.mxu0 0.0
        %6431 = vmatprep.subr.mxu0 0.0
        %6432 = vmatpush1.msra.mxu0 0.0
        %6433 = vmatprep.subr.mxu0 0.0
        %6434 = vmatpush1.msra.mxu0 0.0
        %6435 = vmatprep.subr.mxu0 0.0
        %6436 = vmatpush1.msra.mxu0 0.0
        %6437 = vmatprep.subr.mxu0 0.0
        %6438 = vmatpush1.msra.mxu0 0.0
        %6439 = vmatprep.subr.mxu0 0.0
        %6440 = vmatpush1.msra.mxu0 0.0
        %6441 = vmatprep.subr.mxu0 0.0
        %6442 = vmatpush1.msra.mxu0 0.0
        %6443 = vmatprep.subr.mxu0 0.0
        %6444 = vmatpush1.msra.mxu0 0.0
        %6445 = vmatprep.subr.mxu0 0.0
        %6446 = vmatpush1.msra.mxu0 0.0
        %6447 = vmatprep.subr.mxu0 0.0
        %6448 = vmatpush1.msra.mxu0 0.0
        %6449 = vmatprep.subr.mxu0 0.0
        %6450 = vmatpush1.msra.mxu0 %v6414
        %6451 = vmatprep.subr.mxu0 0.0
        %6452 = vmatpush1.msra.mxu0 %v6413
        %6453 = vmatprep.subr.mxu0 0.0
        %6454 = vmatpush2.msra.mxu0 0.0
        %6455 = vmatprep.subr.mxu0 0.0
        %6456 = vmatpush2.msra.mxu0 0.0
        %6457 = vmatprep.subr.mxu0 0.0
        %6458 = vmatpush2.msra.mxu0 0.0
        %6459 = vmatprep.subr.mxu0 0.0
        %6460 = vmatpush2.msra.mxu0 0.0
        %6461 = vmatprep.subr.mxu0 0.0
        %6462 = vmatpush2.msra.mxu0 0.0
        %6463 = vmatprep.subr.mxu0 0.0
        %6464 = vmatpush2.msra.mxu0 0.0
        %6465 = vmatprep.subr.mxu0 0.0
        %6466 = vmatpush2.msra.mxu0 0.0
        %6467 = vmatprep.subr.mxu0 0.0
        %6468 = vmatpush2.msra.mxu0 0.0
        %6469 = vmatprep.subr.mxu0 0.0
        %6470 = vmatpush2.msra.mxu0 0.0
        %6471 = vmatprep.subr.mxu0 0.0
        %6472 = vmatpush2.msra.mxu0 0.0
        %6473 = vmatprep.subr.mxu0 0.0
        %6474 = vmatpush2.msra.mxu0 0.0
        %6475 = vmatprep.subr.mxu0 0.0
        %6476 = vmatpush2.msra.mxu0 0.0
        %6477 = vmatprep.subr.mxu0 0.0
        %6478 = vmatpush2.msra.mxu0 0.0
        %6479 = vmatprep.subr.mxu0 0.0
        %6480 = vmatpush2.msra.mxu0 0.0
        %6481 = vmatprep.subr.mxu0 0.0
        %6482 = vmatpush2.msra.mxu0 0.0
        %6483 = vmatprep.subr.mxu0 0.0
        %6484 = vmatpush2.msra.mxu0 0.0
        %6485 = vmatprep.mubr.f32.mxu0 0.0
        %6486 = vmatmul.mubr.f32.gmra.mxu0 %v6416
        %v6487 = vpop.f32.mrf.mxu0
        %v6488 = vadd.f32 0.0, %v6487
        %v6489 = vpop.f32.mrf.mxu0
        %6490 = vmatprep.mubr.f32.mxu0 0.0
        %6491 = vmatmul.mubr.f32.gmra.mxu0 %v6419
        %v6492 = vpop.f32.mrf.mxu0
        %v6493 = vadd.f32 0.0, %v6492
        %v6494 = vpop.f32.mrf.mxu0
        %6495 = vdwg.mxu0
        %v6496 = vadd.f32 %v6327, %v6488
        %v6497 = vadd.f32 %v6328, %v6493
        %s6498 = scalar_lea.vmem %s4, 176
        %v6499 = vld [vmem:[%s6498] sm:$0xff]
        %v6500 = vld [vmem:[%s6498 + $0x8] sm:$0xff]
        %v6502 = vsel %vm4644, %v6499, 0
        %v6505 = vsel %vm4644, %v6500, 0
        %6507 = vmatprep.subr.mxu0 0.0
        %6508 = vmatpush1.msra.mxu0 0.0
        %6509 = vmatprep.subr.mxu0 0.0
        %6510 = vmatpush1.msra.mxu0 0.0
        %6511 = vmatprep.subr.mxu0 0.0
        %6512 = vmatpush1.msra.mxu0 0.0
        %6513 = vmatprep.subr.mxu0 0.0
        %6514 = vmatpush1.msra.mxu0 0.0
        %6515 = vmatprep.subr.mxu0 0.0
        %6516 = vmatpush1.msra.mxu0 0.0
        %6517 = vmatprep.subr.mxu0 0.0
        %6518 = vmatpush1.msra.mxu0 0.0
        %6519 = vmatprep.subr.mxu0 0.0
        %6520 = vmatpush1.msra.mxu0 0.0
        %6521 = vmatprep.subr.mxu0 0.0
        %6522 = vmatpush1.msra.mxu0 0.0
        %6523 = vmatprep.subr.mxu0 0.0
        %6524 = vmatpush1.msra.mxu0 %v4633
        %6525 = vmatprep.subr.mxu0 0.0
        %6526 = vmatpush1.msra.mxu0 %v4632
        %6527 = vmatprep.subr.mxu0 0.0
        %6528 = vmatpush1.msra.mxu0 %v4631
        %6529 = vmatprep.subr.mxu0 0.0
        %6530 = vmatpush1.msra.mxu0 %v4630
        %6531 = vmatprep.subr.mxu0 0.0
        %6532 = vmatpush1.msra.mxu0 %v4629
        %6533 = vmatprep.subr.mxu0 0.0
        %6534 = vmatpush1.msra.mxu0 %v4628
        %6535 = vmatprep.subr.mxu0 0.0
        %6536 = vmatpush1.msra.mxu0 %v4627
        %6537 = vmatprep.subr.mxu0 0.0
        %6538 = vmatpush1.msra.mxu0 %v4626
        %6539 = vmatprep.subr.mxu0 0.0
        %6540 = vmatpush2.msra.mxu0 0.0
        %6541 = vmatprep.subr.mxu0 0.0
        %6542 = vmatpush2.msra.mxu0 0.0
        %6543 = vmatprep.subr.mxu0 0.0
        %6544 = vmatpush2.msra.mxu0 0.0
        %6545 = vmatprep.subr.mxu0 0.0
        %6546 = vmatpush2.msra.mxu0 0.0
        %6547 = vmatprep.subr.mxu0 0.0
        %6548 = vmatpush2.msra.mxu0 0.0
        %6549 = vmatprep.subr.mxu0 0.0
        %6550 = vmatpush2.msra.mxu0 0.0
        %6551 = vmatprep.subr.mxu0 0.0
        %6552 = vmatpush2.msra.mxu0 0.0
        %6553 = vmatprep.subr.mxu0 0.0
        %6554 = vmatpush2.msra.mxu0 0.0
        %6555 = vmatprep.subr.mxu0 0.0
        %6556 = vmatpush2.msra.mxu0 0.0
        %6557 = vmatprep.subr.mxu0 0.0
        %6558 = vmatpush2.msra.mxu0 0.0
        %6559 = vmatprep.subr.mxu0 0.0
        %6560 = vmatpush2.msra.mxu0 0.0
        %6561 = vmatprep.subr.mxu0 0.0
        %6562 = vmatpush2.msra.mxu0 0.0
        %6563 = vmatprep.subr.mxu0 0.0
        %6564 = vmatpush2.msra.mxu0 0.0
        %6565 = vmatprep.subr.mxu0 0.0
        %6566 = vmatpush2.msra.mxu0 0.0
        %6567 = vmatprep.subr.mxu0 0.0
        %6568 = vmatpush2.msra.mxu0 0.0
        %6569 = vmatprep.subr.mxu0 0.0
        %6570 = vmatpush2.msra.mxu0 0.0
        %6571 = vmatprep.mubr.f32.mxu0 0.0
        %6572 = vmatmul.mubr.f32.gmra.mxu0 %v6502
        %v6573 = vpop.f32.mrf.mxu0
        %v6574 = vadd.f32 0.0, %v6573
        %v6575 = vpop.f32.mrf.mxu0
        %6576 = vmatprep.mubr.f32.mxu0 0.0
        %6577 = vmatmul.mubr.f32.gmra.mxu0 %v6505
        %v6578 = vpop.f32.mrf.mxu0
        %v6579 = vadd.f32 0.0, %v6578
        %v6580 = vpop.f32.mrf.mxu0
        %6581 = vdwg.mxu0
        %v6582 = vld [vmem:[%s5 + $0xb0] sm:$0xff]
        %v6583 = vld [vmem:[%s5 + $0xb8] sm:$0xff]
        %v6585 = vsel %vm4814, %v6574, 0
        %v6588 = vsel %vm4814, %v6579, 0
        %6590 = vmatprep.subr.mxu0 0.0
        %6591 = vmatpush1.msra.mxu0 0.0
        %6592 = vmatprep.subr.mxu0 0.0
        %6593 = vmatpush1.msra.mxu0 0.0
        %6594 = vmatprep.subr.mxu0 0.0
        %6595 = vmatpush1.msra.mxu0 0.0
        %6596 = vmatprep.subr.mxu0 0.0
        %6597 = vmatpush1.msra.mxu0 0.0
        %6598 = vmatprep.subr.mxu0 0.0
        %6599 = vmatpush1.msra.mxu0 0.0
        %6600 = vmatprep.subr.mxu0 0.0
        %6601 = vmatpush1.msra.mxu0 0.0
        %6602 = vmatprep.subr.mxu0 0.0
        %6603 = vmatpush1.msra.mxu0 0.0
        %6604 = vmatprep.subr.mxu0 0.0
        %6605 = vmatpush1.msra.mxu0 0.0
        %6606 = vmatprep.subr.mxu0 0.0
        %6607 = vmatpush1.msra.mxu0 0.0
        %6608 = vmatprep.subr.mxu0 0.0
        %6609 = vmatpush1.msra.mxu0 0.0
        %6610 = vmatprep.subr.mxu0 0.0
        %6611 = vmatpush1.msra.mxu0 0.0
        %6612 = vmatprep.subr.mxu0 0.0
        %6613 = vmatpush1.msra.mxu0 0.0
        %6614 = vmatprep.subr.mxu0 0.0
        %6615 = vmatpush1.msra.mxu0 0.0
        %6616 = vmatprep.subr.mxu0 0.0
        %6617 = vmatpush1.msra.mxu0 0.0
        %6618 = vmatprep.subr.mxu0 0.0
        %6619 = vmatpush1.msra.mxu0 %v6583
        %6620 = vmatprep.subr.mxu0 0.0
        %6621 = vmatpush1.msra.mxu0 %v6582
        %6622 = vmatprep.subr.mxu0 0.0
        %6623 = vmatpush2.msra.mxu0 0.0
        %6624 = vmatprep.subr.mxu0 0.0
        %6625 = vmatpush2.msra.mxu0 0.0
        %6626 = vmatprep.subr.mxu0 0.0
        %6627 = vmatpush2.msra.mxu0 0.0
        %6628 = vmatprep.subr.mxu0 0.0
        %6629 = vmatpush2.msra.mxu0 0.0
        %6630 = vmatprep.subr.mxu0 0.0
        %6631 = vmatpush2.msra.mxu0 0.0
        %6632 = vmatprep.subr.mxu0 0.0
        %6633 = vmatpush2.msra.mxu0 0.0
        %6634 = vmatprep.subr.mxu0 0.0
        %6635 = vmatpush2.msra.mxu0 0.0
        %6636 = vmatprep.subr.mxu0 0.0
        %6637 = vmatpush2.msra.mxu0 0.0
        %6638 = vmatprep.subr.mxu0 0.0
        %6639 = vmatpush2.msra.mxu0 0.0
        %6640 = vmatprep.subr.mxu0 0.0
        %6641 = vmatpush2.msra.mxu0 0.0
        %6642 = vmatprep.subr.mxu0 0.0
        %6643 = vmatpush2.msra.mxu0 0.0
        %6644 = vmatprep.subr.mxu0 0.0
        %6645 = vmatpush2.msra.mxu0 0.0
        %6646 = vmatprep.subr.mxu0 0.0
        %6647 = vmatpush2.msra.mxu0 0.0
        %6648 = vmatprep.subr.mxu0 0.0
        %6649 = vmatpush2.msra.mxu0 0.0
        %6650 = vmatprep.subr.mxu0 0.0
        %6651 = vmatpush2.msra.mxu0 0.0
        %6652 = vmatprep.subr.mxu0 0.0
        %6653 = vmatpush2.msra.mxu0 0.0
        %6654 = vmatprep.mubr.f32.mxu0 0.0
        %6655 = vmatmul.mubr.f32.gmra.mxu0 %v6585
        %v6656 = vpop.f32.mrf.mxu0
        %v6657 = vadd.f32 0.0, %v6656
        %v6658 = vpop.f32.mrf.mxu0
        %6659 = vmatprep.mubr.f32.mxu0 0.0
        %6660 = vmatmul.mubr.f32.gmra.mxu0 %v6588
        %v6661 = vpop.f32.mrf.mxu0
        %v6662 = vadd.f32 0.0, %v6661
        %v6663 = vpop.f32.mrf.mxu0
        %6664 = vdwg.mxu0
        %v6665 = vadd.f32 %v6496, %v6657
        %v6666 = vadd.f32 %v6497, %v6662
        %s6667 = scalar_lea.vmem %s4, 192
        %v6668 = vld [vmem:[%s6667] sm:$0xff]
        %v6669 = vld [vmem:[%s6667 + $0x8] sm:$0xff]
        %v6671 = vsel %vm4644, %v6668, 0
        %v6674 = vsel %vm4644, %v6669, 0
        %6676 = vmatprep.subr.mxu0 0.0
        %6677 = vmatpush1.msra.mxu0 0.0
        %6678 = vmatprep.subr.mxu0 0.0
        %6679 = vmatpush1.msra.mxu0 0.0
        %6680 = vmatprep.subr.mxu0 0.0
        %6681 = vmatpush1.msra.mxu0 0.0
        %6682 = vmatprep.subr.mxu0 0.0
        %6683 = vmatpush1.msra.mxu0 0.0
        %6684 = vmatprep.subr.mxu0 0.0
        %6685 = vmatpush1.msra.mxu0 0.0
        %6686 = vmatprep.subr.mxu0 0.0
        %6687 = vmatpush1.msra.mxu0 0.0
        %6688 = vmatprep.subr.mxu0 0.0
        %6689 = vmatpush1.msra.mxu0 0.0
        %6690 = vmatprep.subr.mxu0 0.0
        %6691 = vmatpush1.msra.mxu0 0.0
        %6692 = vmatprep.subr.mxu0 0.0
        %6693 = vmatpush1.msra.mxu0 %v4633
        %6694 = vmatprep.subr.mxu0 0.0
        %6695 = vmatpush1.msra.mxu0 %v4632
        %6696 = vmatprep.subr.mxu0 0.0
        %6697 = vmatpush1.msra.mxu0 %v4631
        %6698 = vmatprep.subr.mxu0 0.0
        %6699 = vmatpush1.msra.mxu0 %v4630
        %6700 = vmatprep.subr.mxu0 0.0
        %6701 = vmatpush1.msra.mxu0 %v4629
        %6702 = vmatprep.subr.mxu0 0.0
        %6703 = vmatpush1.msra.mxu0 %v4628
        %6704 = vmatprep.subr.mxu0 0.0
        %6705 = vmatpush1.msra.mxu0 %v4627
        %6706 = vmatprep.subr.mxu0 0.0
        %6707 = vmatpush1.msra.mxu0 %v4626
        %6708 = vmatprep.subr.mxu0 0.0
        %6709 = vmatpush2.msra.mxu0 0.0
        %6710 = vmatprep.subr.mxu0 0.0
        %6711 = vmatpush2.msra.mxu0 0.0
        %6712 = vmatprep.subr.mxu0 0.0
        %6713 = vmatpush2.msra.mxu0 0.0
        %6714 = vmatprep.subr.mxu0 0.0
        %6715 = vmatpush2.msra.mxu0 0.0
        %6716 = vmatprep.subr.mxu0 0.0
        %6717 = vmatpush2.msra.mxu0 0.0
        %6718 = vmatprep.subr.mxu0 0.0
        %6719 = vmatpush2.msra.mxu0 0.0
        %6720 = vmatprep.subr.mxu0 0.0
        %6721 = vmatpush2.msra.mxu0 0.0
        %6722 = vmatprep.subr.mxu0 0.0
        %6723 = vmatpush2.msra.mxu0 0.0
        %6724 = vmatprep.subr.mxu0 0.0
        %6725 = vmatpush2.msra.mxu0 0.0
        %6726 = vmatprep.subr.mxu0 0.0
        %6727 = vmatpush2.msra.mxu0 0.0
        %6728 = vmatprep.subr.mxu0 0.0
        %6729 = vmatpush2.msra.mxu0 0.0
        %6730 = vmatprep.subr.mxu0 0.0
        %6731 = vmatpush2.msra.mxu0 0.0
        %6732 = vmatprep.subr.mxu0 0.0
        %6733 = vmatpush2.msra.mxu0 0.0
        %6734 = vmatprep.subr.mxu0 0.0
        %6735 = vmatpush2.msra.mxu0 0.0
        %6736 = vmatprep.subr.mxu0 0.0
        %6737 = vmatpush2.msra.mxu0 0.0
        %6738 = vmatprep.subr.mxu0 0.0
        %6739 = vmatpush2.msra.mxu0 0.0
        %6740 = vmatprep.mubr.f32.mxu0 0.0
        %6741 = vmatmul.mubr.f32.gmra.mxu0 %v6671
        %v6742 = vpop.f32.mrf.mxu0
        %v6743 = vadd.f32 0.0, %v6742
        %v6744 = vpop.f32.mrf.mxu0
        %6745 = vmatprep.mubr.f32.mxu0 0.0
        %6746 = vmatmul.mubr.f32.gmra.mxu0 %v6674
        %v6747 = vpop.f32.mrf.mxu0
        %v6748 = vadd.f32 0.0, %v6747
        %v6749 = vpop.f32.mrf.mxu0
        %6750 = vdwg.mxu0
        %v6751 = vld [vmem:[%s5 + $0xc0] sm:$0xff]
        %v6752 = vld [vmem:[%s5 + $0xc8] sm:$0xff]
        %v6754 = vsel %vm4814, %v6743, 0
        %v6757 = vsel %vm4814, %v6748, 0
        %6759 = vmatprep.subr.mxu0 0.0
        %6760 = vmatpush1.msra.mxu0 0.0
        %6761 = vmatprep.subr.mxu0 0.0
        %6762 = vmatpush1.msra.mxu0 0.0
        %6763 = vmatprep.subr.mxu0 0.0
        %6764 = vmatpush1.msra.mxu0 0.0
        %6765 = vmatprep.subr.mxu0 0.0
        %6766 = vmatpush1.msra.mxu0 0.0
        %6767 = vmatprep.subr.mxu0 0.0
        %6768 = vmatpush1.msra.mxu0 0.0
        %6769 = vmatprep.subr.mxu0 0.0
        %6770 = vmatpush1.msra.mxu0 0.0
        %6771 = vmatprep.subr.mxu0 0.0
        %6772 = vmatpush1.msra.mxu0 0.0
        %6773 = vmatprep.subr.mxu0 0.0
        %6774 = vmatpush1.msra.mxu0 0.0
        %6775 = vmatprep.subr.mxu0 0.0
        %6776 = vmatpush1.msra.mxu0 0.0
        %6777 = vmatprep.subr.mxu0 0.0
        %6778 = vmatpush1.msra.mxu0 0.0
        %6779 = vmatprep.subr.mxu0 0.0
        %6780 = vmatpush1.msra.mxu0 0.0
        %6781 = vmatprep.subr.mxu0 0.0
        %6782 = vmatpush1.msra.mxu0 0.0
        %6783 = vmatprep.subr.mxu0 0.0
        %6784 = vmatpush1.msra.mxu0 0.0
        %6785 = vmatprep.subr.mxu0 0.0
        %6786 = vmatpush1.msra.mxu0 0.0
        %6787 = vmatprep.subr.mxu0 0.0
        %6788 = vmatpush1.msra.mxu0 %v6752
        %6789 = vmatprep.subr.mxu0 0.0
        %6790 = vmatpush1.msra.mxu0 %v6751
        %6791 = vmatprep.subr.mxu0 0.0
        %6792 = vmatpush2.msra.mxu0 0.0
        %6793 = vmatprep.subr.mxu0 0.0
        %6794 = vmatpush2.msra.mxu0 0.0
        %6795 = vmatprep.subr.mxu0 0.0
        %6796 = vmatpush2.msra.mxu0 0.0
        %6797 = vmatprep.subr.mxu0 0.0
        %6798 = vmatpush2.msra.mxu0 0.0
        %6799 = vmatprep.subr.mxu0 0.0
        %6800 = vmatpush2.msra.mxu0 0.0
        %6801 = vmatprep.subr.mxu0 0.0
        %6802 = vmatpush2.msra.mxu0 0.0
        %6803 = vmatprep.subr.mxu0 0.0
        %6804 = vmatpush2.msra.mxu0 0.0
        %6805 = vmatprep.subr.mxu0 0.0
        %6806 = vmatpush2.msra.mxu0 0.0
        %6807 = vmatprep.subr.mxu0 0.0
        %6808 = vmatpush2.msra.mxu0 0.0
        %6809 = vmatprep.subr.mxu0 0.0
        %6810 = vmatpush2.msra.mxu0 0.0
        %6811 = vmatprep.subr.mxu0 0.0
        %6812 = vmatpush2.msra.mxu0 0.0
        %6813 = vmatprep.subr.mxu0 0.0
        %6814 = vmatpush2.msra.mxu0 0.0
        %6815 = vmatprep.subr.mxu0 0.0
        %6816 = vmatpush2.msra.mxu0 0.0
        %6817 = vmatprep.subr.mxu0 0.0
        %6818 = vmatpush2.msra.mxu0 0.0
        %6819 = vmatprep.subr.mxu0 0.0
        %6820 = vmatpush2.msra.mxu0 0.0
        %6821 = vmatprep.subr.mxu0 0.0
        %6822 = vmatpush2.msra.mxu0 0.0
        %6823 = vmatprep.mubr.f32.mxu0 0.0
        %6824 = vmatmul.mubr.f32.gmra.mxu0 %v6754
        %v6825 = vpop.f32.mrf.mxu0
        %v6826 = vadd.f32 0.0, %v6825
        %v6827 = vpop.f32.mrf.mxu0
        %6828 = vmatprep.mubr.f32.mxu0 0.0
        %6829 = vmatmul.mubr.f32.gmra.mxu0 %v6757
        %v6830 = vpop.f32.mrf.mxu0
        %v6831 = vadd.f32 0.0, %v6830
        %v6832 = vpop.f32.mrf.mxu0
        %6833 = vdwg.mxu0
        %v6834 = vadd.f32 %v6665, %v6826
        %v6835 = vadd.f32 %v6666, %v6831
        %s6836 = scalar_lea.vmem %s4, 208
        %v6837 = vld [vmem:[%s6836] sm:$0xff]
        %v6838 = vld [vmem:[%s6836 + $0x8] sm:$0xff]
        %v6840 = vsel %vm4644, %v6837, 0
        %v6843 = vsel %vm4644, %v6838, 0
        %6845 = vmatprep.subr.mxu0 0.0
        %6846 = vmatpush1.msra.mxu0 0.0
        %6847 = vmatprep.subr.mxu0 0.0
        %6848 = vmatpush1.msra.mxu0 0.0
        %6849 = vmatprep.subr.mxu0 0.0
        %6850 = vmatpush1.msra.mxu0 0.0
        %6851 = vmatprep.subr.mxu0 0.0
        %6852 = vmatpush1.msra.mxu0 0.0
        %6853 = vmatprep.subr.mxu0 0.0
        %6854 = vmatpush1.msra.mxu0 0.0
        %6855 = vmatprep.subr.mxu0 0.0
        %6856 = vmatpush1.msra.mxu0 0.0
        %6857 = vmatprep.subr.mxu0 0.0
        %6858 = vmatpush1.msra.mxu0 0.0
        %6859 = vmatprep.subr.mxu0 0.0
        %6860 = vmatpush1.msra.mxu0 0.0
        %6861 = vmatprep.subr.mxu0 0.0
        %6862 = vmatpush1.msra.mxu0 %v4633
        %6863 = vmatprep.subr.mxu0 0.0
        %6864 = vmatpush1.msra.mxu0 %v4632
        %6865 = vmatprep.subr.mxu0 0.0
        %6866 = vmatpush1.msra.mxu0 %v4631
        %6867 = vmatprep.subr.mxu0 0.0
        %6868 = vmatpush1.msra.mxu0 %v4630
        %6869 = vmatprep.subr.mxu0 0.0
        %6870 = vmatpush1.msra.mxu0 %v4629
        %6871 = vmatprep.subr.mxu0 0.0
        %6872 = vmatpush1.msra.mxu0 %v4628
        %6873 = vmatprep.subr.mxu0 0.0
        %6874 = vmatpush1.msra.mxu0 %v4627
        %6875 = vmatprep.subr.mxu0 0.0
        %6876 = vmatpush1.msra.mxu0 %v4626
        %6877 = vmatprep.subr.mxu0 0.0
        %6878 = vmatpush2.msra.mxu0 0.0
        %6879 = vmatprep.subr.mxu0 0.0
        %6880 = vmatpush2.msra.mxu0 0.0
        %6881 = vmatprep.subr.mxu0 0.0
        %6882 = vmatpush2.msra.mxu0 0.0
        %6883 = vmatprep.subr.mxu0 0.0
        %6884 = vmatpush2.msra.mxu0 0.0
        %6885 = vmatprep.subr.mxu0 0.0
        %6886 = vmatpush2.msra.mxu0 0.0
        %6887 = vmatprep.subr.mxu0 0.0
        %6888 = vmatpush2.msra.mxu0 0.0
        %6889 = vmatprep.subr.mxu0 0.0
        %6890 = vmatpush2.msra.mxu0 0.0
        %6891 = vmatprep.subr.mxu0 0.0
        %6892 = vmatpush2.msra.mxu0 0.0
        %6893 = vmatprep.subr.mxu0 0.0
        %6894 = vmatpush2.msra.mxu0 0.0
        %6895 = vmatprep.subr.mxu0 0.0
        %6896 = vmatpush2.msra.mxu0 0.0
        %6897 = vmatprep.subr.mxu0 0.0
        %6898 = vmatpush2.msra.mxu0 0.0
        %6899 = vmatprep.subr.mxu0 0.0
        %6900 = vmatpush2.msra.mxu0 0.0
        %6901 = vmatprep.subr.mxu0 0.0
        %6902 = vmatpush2.msra.mxu0 0.0
        %6903 = vmatprep.subr.mxu0 0.0
        %6904 = vmatpush2.msra.mxu0 0.0
        %6905 = vmatprep.subr.mxu0 0.0
        %6906 = vmatpush2.msra.mxu0 0.0
        %6907 = vmatprep.subr.mxu0 0.0
        %6908 = vmatpush2.msra.mxu0 0.0
        %6909 = vmatprep.mubr.f32.mxu0 0.0
        %6910 = vmatmul.mubr.f32.gmra.mxu0 %v6840
        %v6911 = vpop.f32.mrf.mxu0
        %v6912 = vadd.f32 0.0, %v6911
        %v6913 = vpop.f32.mrf.mxu0
        %6914 = vmatprep.mubr.f32.mxu0 0.0
        %6915 = vmatmul.mubr.f32.gmra.mxu0 %v6843
        %v6916 = vpop.f32.mrf.mxu0
        %v6917 = vadd.f32 0.0, %v6916
        %v6918 = vpop.f32.mrf.mxu0
        %6919 = vdwg.mxu0
        %v6920 = vld [vmem:[%s5 + $0xd0] sm:$0xff]
        %v6921 = vld [vmem:[%s5 + $0xd8] sm:$0xff]
        %v6923 = vsel %vm4814, %v6912, 0
        %v6926 = vsel %vm4814, %v6917, 0
        %6928 = vmatprep.subr.mxu0 0.0
        %6929 = vmatpush1.msra.mxu0 0.0
        %6930 = vmatprep.subr.mxu0 0.0
        %6931 = vmatpush1.msra.mxu0 0.0
        %6932 = vmatprep.subr.mxu0 0.0
        %6933 = vmatpush1.msra.mxu0 0.0
        %6934 = vmatprep.subr.mxu0 0.0
        %6935 = vmatpush1.msra.mxu0 0.0
        %6936 = vmatprep.subr.mxu0 0.0
        %6937 = vmatpush1.msra.mxu0 0.0
        %6938 = vmatprep.subr.mxu0 0.0
        %6939 = vmatpush1.msra.mxu0 0.0
        %6940 = vmatprep.subr.mxu0 0.0
        %6941 = vmatpush1.msra.mxu0 0.0
        %6942 = vmatprep.subr.mxu0 0.0
        %6943 = vmatpush1.msra.mxu0 0.0
        %6944 = vmatprep.subr.mxu0 0.0
        %6945 = vmatpush1.msra.mxu0 0.0
        %6946 = vmatprep.subr.mxu0 0.0
        %6947 = vmatpush1.msra.mxu0 0.0
        %6948 = vmatprep.subr.mxu0 0.0
        %6949 = vmatpush1.msra.mxu0 0.0
        %6950 = vmatprep.subr.mxu0 0.0
        %6951 = vmatpush1.msra.mxu0 0.0
        %6952 = vmatprep.subr.mxu0 0.0
        %6953 = vmatpush1.msra.mxu0 0.0
        %6954 = vmatprep.subr.mxu0 0.0
        %6955 = vmatpush1.msra.mxu0 0.0
        %6956 = vmatprep.subr.mxu0 0.0
        %6957 = vmatpush1.msra.mxu0 %v6921
        %6958 = vmatprep.subr.mxu0 0.0
        %6959 = vmatpush1.msra.mxu0 %v6920
        %6960 = vmatprep.subr.mxu0 0.0
        %6961 = vmatpush2.msra.mxu0 0.0
        %6962 = vmatprep.subr.mxu0 0.0
        %6963 = vmatpush2.msra.mxu0 0.0
        %6964 = vmatprep.subr.mxu0 0.0
        %6965 = vmatpush2.msra.mxu0 0.0
        %6966 = vmatprep.subr.mxu0 0.0
        %6967 = vmatpush2.msra.mxu0 0.0
        %6968 = vmatprep.subr.mxu0 0.0
        %6969 = vmatpush2.msra.mxu0 0.0
        %6970 = vmatprep.subr.mxu0 0.0
        %6971 = vmatpush2.msra.mxu0 0.0
        %6972 = vmatprep.subr.mxu0 0.0
        %6973 = vmatpush2.msra.mxu0 0.0
        %6974 = vmatprep.subr.mxu0 0.0
        %6975 = vmatpush2.msra.mxu0 0.0
        %6976 = vmatprep.subr.mxu0 0.0
        %6977 = vmatpush2.msra.mxu0 0.0
        %6978 = vmatprep.subr.mxu0 0.0
        %6979 = vmatpush2.msra.mxu0 0.0
        %6980 = vmatprep.subr.mxu0 0.0
        %6981 = vmatpush2.msra.mxu0 0.0
        %6982 = vmatprep.subr.mxu0 0.0
        %6983 = vmatpush2.msra.mxu0 0.0
        %6984 = vmatprep.subr.mxu0 0.0
        %6985 = vmatpush2.msra.mxu0 0.0
        %6986 = vmatprep.subr.mxu0 0.0
        %6987 = vmatpush2.msra.mxu0 0.0
        %6988 = vmatprep.subr.mxu0 0.0
        %6989 = vmatpush2.msra.mxu0 0.0
        %6990 = vmatprep.subr.mxu0 0.0
        %6991 = vmatpush2.msra.mxu0 0.0
        %6992 = vmatprep.mubr.f32.mxu0 0.0
        %6993 = vmatmul.mubr.f32.gmra.mxu0 %v6923
        %v6994 = vpop.f32.mrf.mxu0
        %v6995 = vadd.f32 0.0, %v6994
        %v6996 = vpop.f32.mrf.mxu0
        %6997 = vmatprep.mubr.f32.mxu0 0.0
        %6998 = vmatmul.mubr.f32.gmra.mxu0 %v6926
        %v6999 = vpop.f32.mrf.mxu0
        %v7000 = vadd.f32 0.0, %v6999
        %v7001 = vpop.f32.mrf.mxu0
        %7002 = vdwg.mxu0
        %v7003 = vadd.f32 %v6834, %v6995
        %v7004 = vadd.f32 %v6835, %v7000
        %s7005 = scalar_lea.vmem %s4, 224
        %v7006 = vld [vmem:[%s7005] sm:$0xff]
        %v7007 = vld [vmem:[%s7005 + $0x8] sm:$0xff]
        %v7009 = vsel %vm4644, %v7006, 0
        %v7012 = vsel %vm4644, %v7007, 0
        %7014 = vmatprep.subr.mxu0 0.0
        %7015 = vmatpush1.msra.mxu0 0.0
        %7016 = vmatprep.subr.mxu0 0.0
        %7017 = vmatpush1.msra.mxu0 0.0
        %7018 = vmatprep.subr.mxu0 0.0
        %7019 = vmatpush1.msra.mxu0 0.0
        %7020 = vmatprep.subr.mxu0 0.0
        %7021 = vmatpush1.msra.mxu0 0.0
        %7022 = vmatprep.subr.mxu0 0.0
        %7023 = vmatpush1.msra.mxu0 0.0
        %7024 = vmatprep.subr.mxu0 0.0
        %7025 = vmatpush1.msra.mxu0 0.0
        %7026 = vmatprep.subr.mxu0 0.0
        %7027 = vmatpush1.msra.mxu0 0.0
        %7028 = vmatprep.subr.mxu0 0.0
        %7029 = vmatpush1.msra.mxu0 0.0
        %7030 = vmatprep.subr.mxu0 0.0
        %7031 = vmatpush1.msra.mxu0 %v4633
        %7032 = vmatprep.subr.mxu0 0.0
        %7033 = vmatpush1.msra.mxu0 %v4632
        %7034 = vmatprep.subr.mxu0 0.0
        %7035 = vmatpush1.msra.mxu0 %v4631
        %7036 = vmatprep.subr.mxu0 0.0
        %7037 = vmatpush1.msra.mxu0 %v4630
        %7038 = vmatprep.subr.mxu0 0.0
        %7039 = vmatpush1.msra.mxu0 %v4629
        %7040 = vmatprep.subr.mxu0 0.0
        %7041 = vmatpush1.msra.mxu0 %v4628
        %7042 = vmatprep.subr.mxu0 0.0
        %7043 = vmatpush1.msra.mxu0 %v4627
        %7044 = vmatprep.subr.mxu0 0.0
        %7045 = vmatpush1.msra.mxu0 %v4626
        %7046 = vmatprep.subr.mxu0 0.0
        %7047 = vmatpush2.msra.mxu0 0.0
        %7048 = vmatprep.subr.mxu0 0.0
        %7049 = vmatpush2.msra.mxu0 0.0
        %7050 = vmatprep.subr.mxu0 0.0
        %7051 = vmatpush2.msra.mxu0 0.0
        %7052 = vmatprep.subr.mxu0 0.0
        %7053 = vmatpush2.msra.mxu0 0.0
        %7054 = vmatprep.subr.mxu0 0.0
        %7055 = vmatpush2.msra.mxu0 0.0
        %7056 = vmatprep.subr.mxu0 0.0
        %7057 = vmatpush2.msra.mxu0 0.0
        %7058 = vmatprep.subr.mxu0 0.0
        %7059 = vmatpush2.msra.mxu0 0.0
        %7060 = vmatprep.subr.mxu0 0.0
        %7061 = vmatpush2.msra.mxu0 0.0
        %7062 = vmatprep.subr.mxu0 0.0
        %7063 = vmatpush2.msra.mxu0 0.0
        %7064 = vmatprep.subr.mxu0 0.0
        %7065 = vmatpush2.msra.mxu0 0.0
        %7066 = vmatprep.subr.mxu0 0.0
        %7067 = vmatpush2.msra.mxu0 0.0
        %7068 = vmatprep.subr.mxu0 0.0
        %7069 = vmatpush2.msra.mxu0 0.0
        %7070 = vmatprep.subr.mxu0 0.0
        %7071 = vmatpush2.msra.mxu0 0.0
        %7072 = vmatprep.subr.mxu0 0.0
        %7073 = vmatpush2.msra.mxu0 0.0
        %7074 = vmatprep.subr.mxu0 0.0
        %7075 = vmatpush2.msra.mxu0 0.0
        %7076 = vmatprep.subr.mxu0 0.0
        %7077 = vmatpush2.msra.mxu0 0.0
        %7078 = vmatprep.mubr.f32.mxu0 0.0
        %7079 = vmatmul.mubr.f32.gmra.mxu0 %v7009
        %v7080 = vpop.f32.mrf.mxu0
        %v7081 = vadd.f32 0.0, %v7080
        %v7082 = vpop.f32.mrf.mxu0
        %7083 = vmatprep.mubr.f32.mxu0 0.0
        %7084 = vmatmul.mubr.f32.gmra.mxu0 %v7012
        %v7085 = vpop.f32.mrf.mxu0
        %v7086 = vadd.f32 0.0, %v7085
        %v7087 = vpop.f32.mrf.mxu0
        %7088 = vdwg.mxu0
        %v7089 = vld [vmem:[%s5 + $0xe0] sm:$0xff]
        %v7090 = vld [vmem:[%s5 + $0xe8] sm:$0xff]
        %v7092 = vsel %vm4814, %v7081, 0
        %v7095 = vsel %vm4814, %v7086, 0
        %7097 = vmatprep.subr.mxu0 0.0
        %7098 = vmatpush1.msra.mxu0 0.0
        %7099 = vmatprep.subr.mxu0 0.0
        %7100 = vmatpush1.msra.mxu0 0.0
        %7101 = vmatprep.subr.mxu0 0.0
        %7102 = vmatpush1.msra.mxu0 0.0
        %7103 = vmatprep.subr.mxu0 0.0
        %7104 = vmatpush1.msra.mxu0 0.0
        %7105 = vmatprep.subr.mxu0 0.0
        %7106 = vmatpush1.msra.mxu0 0.0
        %7107 = vmatprep.subr.mxu0 0.0
        %7108 = vmatpush1.msra.mxu0 0.0
        %7109 = vmatprep.subr.mxu0 0.0
        %7110 = vmatpush1.msra.mxu0 0.0
        %7111 = vmatprep.subr.mxu0 0.0
        %7112 = vmatpush1.msra.mxu0 0.0
        %7113 = vmatprep.subr.mxu0 0.0
        %7114 = vmatpush1.msra.mxu0 0.0
        %7115 = vmatprep.subr.mxu0 0.0
        %7116 = vmatpush1.msra.mxu0 0.0
        %7117 = vmatprep.subr.mxu0 0.0
        %7118 = vmatpush1.msra.mxu0 0.0
        %7119 = vmatprep.subr.mxu0 0.0
        %7120 = vmatpush1.msra.mxu0 0.0
        %7121 = vmatprep.subr.mxu0 0.0
        %7122 = vmatpush1.msra.mxu0 0.0
        %7123 = vmatprep.subr.mxu0 0.0
        %7124 = vmatpush1.msra.mxu0 0.0
        %7125 = vmatprep.subr.mxu0 0.0
        %7126 = vmatpush1.msra.mxu0 %v7090
        %7127 = vmatprep.subr.mxu0 0.0
        %7128 = vmatpush1.msra.mxu0 %v7089
        %7129 = vmatprep.subr.mxu0 0.0
        %7130 = vmatpush2.msra.mxu0 0.0
        %7131 = vmatprep.subr.mxu0 0.0
        %7132 = vmatpush2.msra.mxu0 0.0
        %7133 = vmatprep.subr.mxu0 0.0
        %7134 = vmatpush2.msra.mxu0 0.0
        %7135 = vmatprep.subr.mxu0 0.0
        %7136 = vmatpush2.msra.mxu0 0.0
        %7137 = vmatprep.subr.mxu0 0.0
        %7138 = vmatpush2.msra.mxu0 0.0
        %7139 = vmatprep.subr.mxu0 0.0
        %7140 = vmatpush2.msra.mxu0 0.0
        %7141 = vmatprep.subr.mxu0 0.0
        %7142 = vmatpush2.msra.mxu0 0.0
        %7143 = vmatprep.subr.mxu0 0.0
        %7144 = vmatpush2.msra.mxu0 0.0
        %7145 = vmatprep.subr.mxu0 0.0
        %7146 = vmatpush2.msra.mxu0 0.0
        %7147 = vmatprep.subr.mxu0 0.0
        %7148 = vmatpush2.msra.mxu0 0.0
        %7149 = vmatprep.subr.mxu0 0.0
        %7150 = vmatpush2.msra.mxu0 0.0
        %7151 = vmatprep.subr.mxu0 0.0
        %7152 = vmatpush2.msra.mxu0 0.0
        %7153 = vmatprep.subr.mxu0 0.0
        %7154 = vmatpush2.msra.mxu0 0.0
        %7155 = vmatprep.subr.mxu0 0.0
        %7156 = vmatpush2.msra.mxu0 0.0
        %7157 = vmatprep.subr.mxu0 0.0
        %7158 = vmatpush2.msra.mxu0 0.0
        %7159 = vmatprep.subr.mxu0 0.0
        %7160 = vmatpush2.msra.mxu0 0.0
        %7161 = vmatprep.mubr.f32.mxu0 0.0
        %7162 = vmatmul.mubr.f32.gmra.mxu0 %v7092
        %v7163 = vpop.f32.mrf.mxu0
        %v7164 = vadd.f32 0.0, %v7163
        %v7165 = vpop.f32.mrf.mxu0
        %7166 = vmatprep.mubr.f32.mxu0 0.0
        %7167 = vmatmul.mubr.f32.gmra.mxu0 %v7095
        %v7168 = vpop.f32.mrf.mxu0
        %v7169 = vadd.f32 0.0, %v7168
        %v7170 = vpop.f32.mrf.mxu0
        %7171 = vdwg.mxu0
        %v7172 = vadd.f32 %v7003, %v7164
        %v7173 = vadd.f32 %v7004, %v7169
        %s7174 = scalar_lea.vmem %s4, 240
        %v7175 = vld [vmem:[%s7174] sm:$0xff]
        %v7176 = vld [vmem:[%s7174 + $0x8] sm:$0xff]
        %v7178 = vsel %vm4644, %v7175, 0
        %v7181 = vsel %vm4644, %v7176, 0
        %7183 = vmatprep.subr.mxu0 0.0
        %7184 = vmatpush1.msra.mxu0 0.0
        %7185 = vmatprep.subr.mxu0 0.0
        %7186 = vmatpush1.msra.mxu0 0.0
        %7187 = vmatprep.subr.mxu0 0.0
        %7188 = vmatpush1.msra.mxu0 0.0
        %7189 = vmatprep.subr.mxu0 0.0
        %7190 = vmatpush1.msra.mxu0 0.0
        %7191 = vmatprep.subr.mxu0 0.0
        %7192 = vmatpush1.msra.mxu0 0.0
        %7193 = vmatprep.subr.mxu0 0.0
        %7194 = vmatpush1.msra.mxu0 0.0
        %7195 = vmatprep.subr.mxu0 0.0
        %7196 = vmatpush1.msra.mxu0 0.0
        %7197 = vmatprep.subr.mxu0 0.0
        %7198 = vmatpush1.msra.mxu0 0.0
        %7199 = vmatprep.subr.mxu0 0.0
        %7200 = vmatpush1.msra.mxu0 %v4633
        %7201 = vmatprep.subr.mxu0 0.0
        %7202 = vmatpush1.msra.mxu0 %v4632
        %7203 = vmatprep.subr.mxu0 0.0
        %7204 = vmatpush1.msra.mxu0 %v4631
        %7205 = vmatprep.subr.mxu0 0.0
        %7206 = vmatpush1.msra.mxu0 %v4630
        %7207 = vmatprep.subr.mxu0 0.0
        %7208 = vmatpush1.msra.mxu0 %v4629
        %7209 = vmatprep.subr.mxu0 0.0
        %7210 = vmatpush1.msra.mxu0 %v4628
        %7211 = vmatprep.subr.mxu0 0.0
        %7212 = vmatpush1.msra.mxu0 %v4627
        %7213 = vmatprep.subr.mxu0 0.0
        %7214 = vmatpush1.msra.mxu0 %v4626
        %7215 = vmatprep.subr.mxu0 0.0
        %7216 = vmatpush2.msra.mxu0 0.0
        %7217 = vmatprep.subr.mxu0 0.0
        %7218 = vmatpush2.msra.mxu0 0.0
        %7219 = vmatprep.subr.mxu0 0.0
        %7220 = vmatpush2.msra.mxu0 0.0
        %7221 = vmatprep.subr.mxu0 0.0
        %7222 = vmatpush2.msra.mxu0 0.0
        %7223 = vmatprep.subr.mxu0 0.0
        %7224 = vmatpush2.msra.mxu0 0.0
        %7225 = vmatprep.subr.mxu0 0.0
        %7226 = vmatpush2.msra.mxu0 0.0
        %7227 = vmatprep.subr.mxu0 0.0
        %7228 = vmatpush2.msra.mxu0 0.0
        %7229 = vmatprep.subr.mxu0 0.0
        %7230 = vmatpush2.msra.mxu0 0.0
        %7231 = vmatprep.subr.mxu0 0.0
        %7232 = vmatpush2.msra.mxu0 0.0
        %7233 = vmatprep.subr.mxu0 0.0
        %7234 = vmatpush2.msra.mxu0 0.0
        %7235 = vmatprep.subr.mxu0 0.0
        %7236 = vmatpush2.msra.mxu0 0.0
        %7237 = vmatprep.subr.mxu0 0.0
        %7238 = vmatpush2.msra.mxu0 0.0
        %7239 = vmatprep.subr.mxu0 0.0
        %7240 = vmatpush2.msra.mxu0 0.0
        %7241 = vmatprep.subr.mxu0 0.0
        %7242 = vmatpush2.msra.mxu0 0.0
        %7243 = vmatprep.subr.mxu0 0.0
        %7244 = vmatpush2.msra.mxu0 0.0
        %7245 = vmatprep.subr.mxu0 0.0
        %7246 = vmatpush2.msra.mxu0 0.0
        %7247 = vmatprep.mubr.f32.mxu0 0.0
        %7248 = vmatmul.mubr.f32.gmra.mxu0 %v7178
        %v7249 = vpop.f32.mrf.mxu0
        %v7250 = vadd.f32 0.0, %v7249
        %v7251 = vpop.f32.mrf.mxu0
        %7252 = vmatprep.mubr.f32.mxu0 0.0
        %7253 = vmatmul.mubr.f32.gmra.mxu0 %v7181
        %v7254 = vpop.f32.mrf.mxu0
        %v7255 = vadd.f32 0.0, %v7254
        %v7256 = vpop.f32.mrf.mxu0
        %7257 = vdwg.mxu0
        %v7258 = vld [vmem:[%s5 + $0xf0] sm:$0xff]
        %v7259 = vld [vmem:[%s5 + $0xf8] sm:$0xff]
        %v7261 = vsel %vm4814, %v7250, 0
        %v7264 = vsel %vm4814, %v7255, 0
        %7266 = vmatprep.subr.mxu0 0.0
        %7267 = vmatpush1.msra.mxu0 0.0
        %7268 = vmatprep.subr.mxu0 0.0
        %7269 = vmatpush1.msra.mxu0 0.0
        %7270 = vmatprep.subr.mxu0 0.0
        %7271 = vmatpush1.msra.mxu0 0.0
        %7272 = vmatprep.subr.mxu0 0.0
        %7273 = vmatpush1.msra.mxu0 0.0
        %7274 = vmatprep.subr.mxu0 0.0
        %7275 = vmatpush1.msra.mxu0 0.0
        %7276 = vmatprep.subr.mxu0 0.0
        %7277 = vmatpush1.msra.mxu0 0.0
        %7278 = vmatprep.subr.mxu0 0.0
        %7279 = vmatpush1.msra.mxu0 0.0
        %7280 = vmatprep.subr.mxu0 0.0
        %7281 = vmatpush1.msra.mxu0 0.0
        %7282 = vmatprep.subr.mxu0 0.0
        %7283 = vmatpush1.msra.mxu0 0.0
        %7284 = vmatprep.subr.mxu0 0.0
        %7285 = vmatpush1.msra.mxu0 0.0
        %7286 = vmatprep.subr.mxu0 0.0
        %7287 = vmatpush1.msra.mxu0 0.0
        %7288 = vmatprep.subr.mxu0 0.0
        %7289 = vmatpush1.msra.mxu0 0.0
        %7290 = vmatprep.subr.mxu0 0.0
        %7291 = vmatpush1.msra.mxu0 0.0
        %7292 = vmatprep.subr.mxu0 0.0
        %7293 = vmatpush1.msra.mxu0 0.0
        %7294 = vmatprep.subr.mxu0 0.0
        %7295 = vmatpush1.msra.mxu0 %v7259
        %7296 = vmatprep.subr.mxu0 0.0
        %7297 = vmatpush1.msra.mxu0 %v7258
        %7298 = vmatprep.subr.mxu0 0.0
        %7299 = vmatpush2.msra.mxu0 0.0
        %7300 = vmatprep.subr.mxu0 0.0
        %7301 = vmatpush2.msra.mxu0 0.0
        %7302 = vmatprep.subr.mxu0 0.0
        %7303 = vmatpush2.msra.mxu0 0.0
        %7304 = vmatprep.subr.mxu0 0.0
        %7305 = vmatpush2.msra.mxu0 0.0
        %7306 = vmatprep.subr.mxu0 0.0
        %7307 = vmatpush2.msra.mxu0 0.0
        %7308 = vmatprep.subr.mxu0 0.0
        %7309 = vmatpush2.msra.mxu0 0.0
        %7310 = vmatprep.subr.mxu0 0.0
        %7311 = vmatpush2.msra.mxu0 0.0
        %7312 = vmatprep.subr.mxu0 0.0
        %7313 = vmatpush2.msra.mxu0 0.0
        %7314 = vmatprep.subr.mxu0 0.0
        %7315 = vmatpush2.msra.mxu0 0.0
        %7316 = vmatprep.subr.mxu0 0.0
        %7317 = vmatpush2.msra.mxu0 0.0
        %7318 = vmatprep.subr.mxu0 0.0
        %7319 = vmatpush2.msra.mxu0 0.0
        %7320 = vmatprep.subr.mxu0 0.0
        %7321 = vmatpush2.msra.mxu0 0.0
        %7322 = vmatprep.subr.mxu0 0.0
        %7323 = vmatpush2.msra.mxu0 0.0
        %7324 = vmatprep.subr.mxu0 0.0
        %7325 = vmatpush2.msra.mxu0 0.0
        %7326 = vmatprep.subr.mxu0 0.0
        %7327 = vmatpush2.msra.mxu0 0.0
        %7328 = vmatprep.subr.mxu0 0.0
        %7329 = vmatpush2.msra.mxu0 0.0
        %7330 = vmatprep.mubr.f32.mxu0 0.0
        %7331 = vmatmul.mubr.f32.gmra.mxu0 %v7261
        %v7332 = vpop.f32.mrf.mxu0
        %v7333 = vadd.f32 0.0, %v7332
        %v7334 = vpop.f32.mrf.mxu0
        %7335 = vmatprep.mubr.f32.mxu0 0.0
        %7336 = vmatmul.mubr.f32.gmra.mxu0 %v7264
        %v7337 = vpop.f32.mrf.mxu0
        %v7338 = vadd.f32 0.0, %v7337
        %v7339 = vpop.f32.mrf.mxu0
        %7340 = vdwg.mxu0
        %v7341 = vadd.f32 %v7172, %v7333
        %v7342 = vadd.f32 %v7173, %v7338
        %v7343 = vld [vmem:[%s6] sm:$0x1]
        %v7345 = vlaneseq
        %v7346 = vshrl.u32 %v7345, 7
        %v7347 = vsub.s32 0, %v7346
        %v7348 = vrot.slane %v7343, %v7347
        %v7350 = vadd.f32 %v7341, %v7348
        %v7351 = vadd.f32 %v7342, %v7348
        %v7352 = vmax.f32 %v7350, 0.0
        %v7353 = vmax.f32 %v7351, 0.0
        %7354 = vst [vmem:[%s414] sm:$0xff] %v7352
        %7355 = vst [vmem:[%s414 + $0x8] sm:$0xff] %v7353
        %v7356 = vld [vmem:[%s7] sm:$0xf]
        %v7358 = vsel %vm4814, %v7356, 0
        %7360 = vmatprep.subr.mxu0 0.0
        %7361 = vmatpush1.msra.mxu0 0.0
        %7362 = vmatprep.subr.mxu0 0.0
        %7363 = vmatpush1.msra.mxu0 0.0
        %7364 = vmatprep.subr.mxu0 0.0
        %7365 = vmatpush1.msra.mxu0 0.0
        %7366 = vmatprep.subr.mxu0 0.0
        %7367 = vmatpush1.msra.mxu0 0.0
        %7368 = vmatprep.subr.mxu0 0.0
        %7369 = vmatpush1.msra.mxu0 0.0
        %7370 = vmatprep.subr.mxu0 0.0
        %7371 = vmatpush1.msra.mxu0 0.0
        %7372 = vmatprep.subr.mxu0 0.0
        %7373 = vmatpush1.msra.mxu0 0.0
        %7374 = vmatprep.subr.mxu0 0.0
        %7375 = vmatpush1.msra.mxu0 0.0
        %7376 = vmatprep.subr.mxu0 0.0
        %7377 = vmatpush1.msra.mxu0 0.0
        %7378 = vmatprep.subr.mxu0 0.0
        %7379 = vmatpush1.msra.mxu0 0.0
        %7380 = vmatprep.subr.mxu0 0.0
        %7381 = vmatpush1.msra.mxu0 0.0
        %7382 = vmatprep.subr.mxu0 0.0
        %7383 = vmatpush1.msra.mxu0 0.0
        %7384 = vmatprep.subr.mxu0 0.0
        %7385 = vmatpush1.msra.mxu0 0.0
        %7386 = vmatprep.subr.mxu0 0.0
        %7387 = vmatpush1.msra.mxu0 0.0
        %7388 = vmatprep.subr.mxu0 0.0
        %7389 = vmatpush1.msra.mxu0 %v7353
        %7390 = vmatprep.subr.mxu0 0.0
        %7391 = vmatpush1.msra.mxu0 %v7352
        %7392 = vmatprep.subr.mxu0 0.0
        %7393 = vmatpush2.msra.mxu0 0.0
        %7394 = vmatprep.subr.mxu0 0.0
        %7395 = vmatpush2.msra.mxu0 0.0
        %7396 = vmatprep.subr.mxu0 0.0
        %7397 = vmatpush2.msra.mxu0 0.0
        %7398 = vmatprep.subr.mxu0 0.0
        %7399 = vmatpush2.msra.mxu0 0.0
        %7400 = vmatprep.subr.mxu0 0.0
        %7401 = vmatpush2.msra.mxu0 0.0
        %7402 = vmatprep.subr.mxu0 0.0
        %7403 = vmatpush2.msra.mxu0 0.0
        %7404 = vmatprep.subr.mxu0 0.0
        %7405 = vmatpush2.msra.mxu0 0.0
        %7406 = vmatprep.subr.mxu0 0.0
        %7407 = vmatpush2.msra.mxu0 0.0
        %7408 = vmatprep.subr.mxu0 0.0
        %7409 = vmatpush2.msra.mxu0 0.0
        %7410 = vmatprep.subr.mxu0 0.0
        %7411 = vmatpush2.msra.mxu0 0.0
        %7412 = vmatprep.subr.mxu0 0.0
        %7413 = vmatpush2.msra.mxu0 0.0
        %7414 = vmatprep.subr.mxu0 0.0
        %7415 = vmatpush2.msra.mxu0 0.0
        %7416 = vmatprep.subr.mxu0 0.0
        %7417 = vmatpush2.msra.mxu0 0.0
        %7418 = vmatprep.subr.mxu0 0.0
        %7419 = vmatpush2.msra.mxu0 0.0
        %7420 = vmatprep.subr.mxu0 0.0
        %7421 = vmatpush2.msra.mxu0 0.0
        %7422 = vmatprep.subr.mxu0 0.0
        %7423 = vmatpush2.msra.mxu0 0.0
        %7424 = vmatprep.mubr.f32.mxu0 0.0
        %7425 = vmatmul.mubr.f32.gmra.mxu0 %v7358
        %v7426 = vpop.f32.mrf.mxu0
        %v7427 = vadd.f32 0.0, %v7426
        %v7428 = vpop.f32.mrf.mxu0
        %7429 = vdwg.mxu0
        %v7430 = vld [vmem:[%s8] sm:$0xff]
        %v7431 = vld [vmem:[%s8 + $0x8] sm:$0xff]
        %v7432 = vld [vmem:[%s8 + $0x10] sm:$0xff]
        %v7433 = vld [vmem:[%s8 + $0x18] sm:$0xff]
        %s7434 = scalar_lea.vmem %s7, 4
        %v7435 = vld [vmem:[%s7434] sm:$0xf]
        %v7437 = vsel %vm4814, %v7435, 0
        %7439 = vmatprep.subr.mxu0 0.0
        %7440 = vmatpush1.msra.mxu0 0.0
        %7441 = vmatprep.subr.mxu0 0.0
        %7442 = vmatpush1.msra.mxu0 0.0
        %7443 = vmatprep.subr.mxu0 0.0
        %7444 = vmatpush1.msra.mxu0 0.0
        %7445 = vmatprep.subr.mxu0 0.0
        %7446 = vmatpush1.msra.mxu0 0.0
        %7447 = vmatprep.subr.mxu0 0.0
        %7448 = vmatpush1.msra.mxu0 0.0
        %7449 = vmatprep.subr.mxu0 0.0
        %7450 = vmatpush1.msra.mxu0 0.0
        %7451 = vmatprep.subr.mxu0 0.0
        %7452 = vmatpush1.msra.mxu0 0.0
        %7453 = vmatprep.subr.mxu0 0.0
        %7454 = vmatpush1.msra.mxu0 0.0
        %7455 = vmatprep.subr.mxu0 0.0
        %7456 = vmatpush1.msra.mxu0 0.0
        %7457 = vmatprep.subr.mxu0 0.0
        %7458 = vmatpush1.msra.mxu0 0.0
        %7459 = vmatprep.subr.mxu0 0.0
        %7460 = vmatpush1.msra.mxu0 0.0
        %7461 = vmatprep.subr.mxu0 0.0
        %7462 = vmatpush1.msra.mxu0 0.0
        %7463 = vmatprep.subr.mxu0 0.0
        %7464 = vmatpush1.msra.mxu0 0.0
        %7465 = vmatprep.subr.mxu0 0.0
        %7466 = vmatpush1.msra.mxu0 0.0
        %7467 = vmatprep.subr.mxu0 0.0
        %7468 = vmatpush1.msra.mxu0 %v7353
        %7469 = vmatprep.subr.mxu0 0.0
        %7470 = vmatpush1.msra.mxu0 %v7352
        %7471 = vmatprep.subr.mxu0 0.0
        %7472 = vmatpush2.msra.mxu0 0.0
        %7473 = vmatprep.subr.mxu0 0.0
        %7474 = vmatpush2.msra.mxu0 0.0
        %7475 = vmatprep.subr.mxu0 0.0
        %7476 = vmatpush2.msra.mxu0 0.0
        %7477 = vmatprep.subr.mxu0 0.0
        %7478 = vmatpush2.msra.mxu0 0.0
        %7479 = vmatprep.subr.mxu0 0.0
        %7480 = vmatpush2.msra.mxu0 0.0
        %7481 = vmatprep.subr.mxu0 0.0
        %7482 = vmatpush2.msra.mxu0 0.0
        %7483 = vmatprep.subr.mxu0 0.0
        %7484 = vmatpush2.msra.mxu0 0.0
        %7485 = vmatprep.subr.mxu0 0.0
        %7486 = vmatpush2.msra.mxu0 0.0
        %7487 = vmatprep.subr.mxu0 0.0
        %7488 = vmatpush2.msra.mxu0 0.0
        %7489 = vmatprep.subr.mxu0 0.0
        %7490 = vmatpush2.msra.mxu0 0.0
        %7491 = vmatprep.subr.mxu0 0.0
        %7492 = vmatpush2.msra.mxu0 0.0
        %7493 = vmatprep.subr.mxu0 0.0
        %7494 = vmatpush2.msra.mxu0 0.0
        %7495 = vmatprep.subr.mxu0 0.0
        %7496 = vmatpush2.msra.mxu0 0.0
        %7497 = vmatprep.subr.mxu0 0.0
        %7498 = vmatpush2.msra.mxu0 0.0
        %7499 = vmatprep.subr.mxu0 0.0
        %7500 = vmatpush2.msra.mxu0 0.0
        %7501 = vmatprep.subr.mxu0 0.0
        %7502 = vmatpush2.msra.mxu0 0.0
        %7503 = vmatprep.mubr.f32.mxu0 0.0
        %7504 = vmatmul.mubr.f32.gmra.mxu0 %v7437
        %v7505 = vpop.f32.mrf.mxu0
        %v7506 = vadd.f32 0.0, %v7505
        %v7507 = vpop.f32.mrf.mxu0
        %7508 = vdwg.mxu0
        %v7509 = vld [vmem:[%s8 + $0x20] sm:$0xff]
        %v7510 = vld [vmem:[%s8 + $0x28] sm:$0xff]
        %v7511 = vld [vmem:[%s8 + $0x30] sm:$0xff]
        %v7512 = vld [vmem:[%s8 + $0x38] sm:$0xff]
        %vm7513 = vcmask 261120
        %v7515 = vsel %vm7513, %v7506, 0
        %7517 = vmatprep.subr.mxu0 0.0
        %7518 = vmatpush1.msra.mxu0 0.0
        %7519 = vmatprep.subr.mxu0 0.0
        %7520 = vmatpush1.msra.mxu0 0.0
        %7521 = vmatprep.subr.mxu0 0.0
        %7522 = vmatpush1.msra.mxu0 0.0
        %7523 = vmatprep.subr.mxu0 0.0
        %7524 = vmatpush1.msra.mxu0 0.0
        %7525 = vmatprep.subr.mxu0 0.0
        %7526 = vmatpush1.msra.mxu0 0.0
        %7527 = vmatprep.subr.mxu0 0.0
        %7528 = vmatpush1.msra.mxu0 0.0
        %7529 = vmatprep.subr.mxu0 0.0
        %7530 = vmatpush1.msra.mxu0 0.0
        %7531 = vmatprep.subr.mxu0 0.0
        %7532 = vmatpush1.msra.mxu0 0.0
        %7533 = vmatprep.subr.mxu0 0.0
        %7534 = vmatpush1.msra.mxu0 0.0
        %7535 = vmatprep.subr.mxu0 0.0
        %7536 = vmatpush1.msra.mxu0 0.0
        %7537 = vmatprep.subr.mxu0 0.0
        %7538 = vmatpush1.msra.mxu0 0.0
        %7539 = vmatprep.subr.mxu0 0.0
        %7540 = vmatpush1.msra.mxu0 0.0
        %7541 = vmatprep.subr.mxu0 0.0
        %7542 = vmatpush1.msra.mxu0 %v7512
        %7543 = vmatprep.subr.mxu0 0.0
        %7544 = vmatpush1.msra.mxu0 %v7511
        %7545 = vmatprep.subr.mxu0 0.0
        %7546 = vmatpush1.msra.mxu0 %v7510
        %7547 = vmatprep.subr.mxu0 0.0
        %7548 = vmatpush1.msra.mxu0 %v7509
        %7549 = vmatprep.subr.mxu0 0.0
        %7550 = vmatpush2.msra.mxu0 0.0
        %7551 = vmatprep.subr.mxu0 0.0
        %7552 = vmatpush2.msra.mxu0 0.0
        %7553 = vmatprep.subr.mxu0 0.0
        %7554 = vmatpush2.msra.mxu0 0.0
        %7555 = vmatprep.subr.mxu0 0.0
        %7556 = vmatpush2.msra.mxu0 0.0
        %7557 = vmatprep.subr.mxu0 0.0
        %7558 = vmatpush2.msra.mxu0 0.0
        %7559 = vmatprep.subr.mxu0 0.0
        %7560 = vmatpush2.msra.mxu0 0.0
        %7561 = vmatprep.subr.mxu0 0.0
        %7562 = vmatpush2.msra.mxu0 0.0
        %7563 = vmatprep.subr.mxu0 0.0
        %7564 = vmatpush2.msra.mxu0 0.0
        %7565 = vmatprep.subr.mxu0 0.0
        %7566 = vmatpush2.msra.mxu0 0.0
        %7567 = vmatprep.subr.mxu0 0.0
        %7568 = vmatpush2.msra.mxu0 0.0
        %7569 = vmatprep.subr.mxu0 0.0
        %7570 = vmatpush2.msra.mxu0 0.0
        %7571 = vmatprep.subr.mxu0 0.0
        %7572 = vmatpush2.msra.mxu0 0.0
        %7573 = vmatprep.subr.mxu0 0.0
        %7574 = vmatpush2.msra.mxu0 0.0
        %7575 = vmatprep.subr.mxu0 0.0
        %7576 = vmatpush2.msra.mxu0 0.0
        %7577 = vmatprep.subr.mxu0 0.0
        %7578 = vmatpush2.msra.mxu0 0.0
        %7579 = vmatprep.subr.mxu0 0.0
        %7580 = vmatpush2.msra.mxu0 0.0
        %7581 = vmatprep.mubr.f32.mxu0 0.0
        %7582 = vmatmul.mubr.f32.gmra.mxu0 %v7515
        %v7583 = vpop.f32.mrf.mxu0
        %v7584 = vadd.f32 0.0, %v7583
        %v7585 = vpop.f32.mrf.mxu0
        %7586 = vdwg.mxu0
        %v7588 = vsel %vm7513, %v7427, 0
        %7590 = vmatprep.subr.mxu0 0.0
        %7591 = vmatpush1.msra.mxu0 0.0
        %7592 = vmatprep.subr.mxu0 0.0
        %7593 = vmatpush1.msra.mxu0 0.0
        %7594 = vmatprep.subr.mxu0 0.0
        %7595 = vmatpush1.msra.mxu0 0.0
        %7596 = vmatprep.subr.mxu0 0.0
        %7597 = vmatpush1.msra.mxu0 0.0
        %7598 = vmatprep.subr.mxu0 0.0
        %7599 = vmatpush1.msra.mxu0 0.0
        %7600 = vmatprep.subr.mxu0 0.0
        %7601 = vmatpush1.msra.mxu0 0.0
        %7602 = vmatprep.subr.mxu0 0.0
        %7603 = vmatpush1.msra.mxu0 0.0
        %7604 = vmatprep.subr.mxu0 0.0
        %7605 = vmatpush1.msra.mxu0 0.0
        %7606 = vmatprep.subr.mxu0 0.0
        %7607 = vmatpush1.msra.mxu0 0.0
        %7608 = vmatprep.subr.mxu0 0.0
        %7609 = vmatpush1.msra.mxu0 0.0
        %7610 = vmatprep.subr.mxu0 0.0
        %7611 = vmatpush1.msra.mxu0 0.0
        %7612 = vmatprep.subr.mxu0 0.0
        %7613 = vmatpush1.msra.mxu0 0.0
        %7614 = vmatprep.subr.mxu0 0.0
        %7615 = vmatpush1.msra.mxu0 %v7433
        %7616 = vmatprep.subr.mxu0 0.0
        %7617 = vmatpush1.msra.mxu0 %v7432
        %7618 = vmatprep.subr.mxu0 0.0
        %7619 = vmatpush1.msra.mxu0 %v7431
        %7620 = vmatprep.subr.mxu0 0.0
        %7621 = vmatpush1.msra.mxu0 %v7430
        %7622 = vmatprep.subr.mxu0 0.0
        %7623 = vmatpush2.msra.mxu0 0.0
        %7624 = vmatprep.subr.mxu0 0.0
        %7625 = vmatpush2.msra.mxu0 0.0
        %7626 = vmatprep.subr.mxu0 0.0
        %7627 = vmatpush2.msra.mxu0 0.0
        %7628 = vmatprep.subr.mxu0 0.0
        %7629 = vmatpush2.msra.mxu0 0.0
        %7630 = vmatprep.subr.mxu0 0.0
        %7631 = vmatpush2.msra.mxu0 0.0
        %7632 = vmatprep.subr.mxu0 0.0
        %7633 = vmatpush2.msra.mxu0 0.0
        %7634 = vmatprep.subr.mxu0 0.0
        %7635 = vmatpush2.msra.mxu0 0.0
        %7636 = vmatprep.subr.mxu0 0.0
        %7637 = vmatpush2.msra.mxu0 0.0
        %7638 = vmatprep.subr.mxu0 0.0
        %7639 = vmatpush2.msra.mxu0 0.0
        %7640 = vmatprep.subr.mxu0 0.0
        %7641 = vmatpush2.msra.mxu0 0.0
        %7642 = vmatprep.subr.mxu0 0.0
        %7643 = vmatpush2.msra.mxu0 0.0
        %7644 = vmatprep.subr.mxu0 0.0
        %7645 = vmatpush2.msra.mxu0 0.0
        %7646 = vmatprep.subr.mxu0 0.0
        %7647 = vmatpush2.msra.mxu0 0.0
        %7648 = vmatprep.subr.mxu0 0.0
        %7649 = vmatpush2.msra.mxu0 0.0
        %7650 = vmatprep.subr.mxu0 0.0
        %7651 = vmatpush2.msra.mxu0 0.0
        %7652 = vmatprep.subr.mxu0 0.0
        %7653 = vmatpush2.msra.mxu0 0.0
        %7654 = vmatprep.mubr.f32.mxu0 0.0
        %7655 = vmatmul.mubr.f32.gmra.mxu0 %v7588
        %v7656 = vpop.f32.mrf.mxu0
        %v7657 = vadd.f32 %v7584, %v7656
        %v7658 = vpop.f32.mrf.mxu0
        %7659 = vdwg.mxu0
        %s7660 = scalar_lea.vmem %s7, 8
        %v7661 = vld [vmem:[%s7660] sm:$0xf]
        %v7663 = vsel %vm4814, %v7661, 0
        %7665 = vmatprep.subr.mxu0 0.0
        %7666 = vmatpush1.msra.mxu0 0.0
        %7667 = vmatprep.subr.mxu0 0.0
        %7668 = vmatpush1.msra.mxu0 0.0
        %7669 = vmatprep.subr.mxu0 0.0
        %7670 = vmatpush1.msra.mxu0 0.0
        %7671 = vmatprep.subr.mxu0 0.0
        %7672 = vmatpush1.msra.mxu0 0.0
        %7673 = vmatprep.subr.mxu0 0.0
        %7674 = vmatpush1.msra.mxu0 0.0
        %7675 = vmatprep.subr.mxu0 0.0
        %7676 = vmatpush1.msra.mxu0 0.0
        %7677 = vmatprep.subr.mxu0 0.0
        %7678 = vmatpush1.msra.mxu0 0.0
        %7679 = vmatprep.subr.mxu0 0.0
        %7680 = vmatpush1.msra.mxu0 0.0
        %7681 = vmatprep.subr.mxu0 0.0
        %7682 = vmatpush1.msra.mxu0 0.0
        %7683 = vmatprep.subr.mxu0 0.0
        %7684 = vmatpush1.msra.mxu0 0.0
        %7685 = vmatprep.subr.mxu0 0.0
        %7686 = vmatpush1.msra.mxu0 0.0
        %7687 = vmatprep.subr.mxu0 0.0
        %7688 = vmatpush1.msra.mxu0 0.0
        %7689 = vmatprep.subr.mxu0 0.0
        %7690 = vmatpush1.msra.mxu0 0.0
        %7691 = vmatprep.subr.mxu0 0.0
        %7692 = vmatpush1.msra.mxu0 0.0
        %7693 = vmatprep.subr.mxu0 0.0
        %7694 = vmatpush1.msra.mxu0 %v7353
        %7695 = vmatprep.subr.mxu0 0.0
        %7696 = vmatpush1.msra.mxu0 %v7352
        %7697 = vmatprep.subr.mxu0 0.0
        %7698 = vmatpush2.msra.mxu0 0.0
        %7699 = vmatprep.subr.mxu0 0.0
        %7700 = vmatpush2.msra.mxu0 0.0
        %7701 = vmatprep.subr.mxu0 0.0
        %7702 = vmatpush2.msra.mxu0 0.0
        %7703 = vmatprep.subr.mxu0 0.0
        %7704 = vmatpush2.msra.mxu0 0.0
        %7705 = vmatprep.subr.mxu0 0.0
        %7706 = vmatpush2.msra.mxu0 0.0
        %7707 = vmatprep.subr.mxu0 0.0
        %7708 = vmatpush2.msra.mxu0 0.0
        %7709 = vmatprep.subr.mxu0 0.0
        %7710 = vmatpush2.msra.mxu0 0.0
        %7711 = vmatprep.subr.mxu0 0.0
        %7712 = vmatpush2.msra.mxu0 0.0
        %7713 = vmatprep.subr.mxu0 0.0
        %7714 = vmatpush2.msra.mxu0 0.0
        %7715 = vmatprep.subr.mxu0 0.0
        %7716 = vmatpush2.msra.mxu0 0.0
        %7717 = vmatprep.subr.mxu0 0.0
        %7718 = vmatpush2.msra.mxu0 0.0
        %7719 = vmatprep.subr.mxu0 0.0
        %7720 = vmatpush2.msra.mxu0 0.0
        %7721 = vmatprep.subr.mxu0 0.0
        %7722 = vmatpush2.msra.mxu0 0.0
        %7723 = vmatprep.subr.mxu0 0.0
        %7724 = vmatpush2.msra.mxu0 0.0
        %7725 = vmatprep.subr.mxu0 0.0
        %7726 = vmatpush2.msra.mxu0 0.0
        %7727 = vmatprep.subr.mxu0 0.0
        %7728 = vmatpush2.msra.mxu0 0.0
        %7729 = vmatprep.mubr.f32.mxu0 0.0
        %7730 = vmatmul.mubr.f32.gmra.mxu0 %v7663
        %v7731 = vpop.f32.mrf.mxu0
        %v7732 = vadd.f32 0.0, %v7731
        %v7733 = vpop.f32.mrf.mxu0
        %7734 = vdwg.mxu0
        %v7735 = vld [vmem:[%s8 + $0x40] sm:$0xff]
        %v7736 = vld [vmem:[%s8 + $0x48] sm:$0xff]
        %v7737 = vld [vmem:[%s8 + $0x50] sm:$0xff]
        %v7738 = vld [vmem:[%s8 + $0x58] sm:$0xff]
        %v7740 = vsel %vm7513, %v7732, 0
        %7742 = vmatprep.subr.mxu0 0.0
        %7743 = vmatpush1.msra.mxu0 0.0
        %7744 = vmatprep.subr.mxu0 0.0
        %7745 = vmatpush1.msra.mxu0 0.0
        %7746 = vmatprep.subr.mxu0 0.0
        %7747 = vmatpush1.msra.mxu0 0.0
        %7748 = vmatprep.subr.mxu0 0.0
        %7749 = vmatpush1.msra.mxu0 0.0
        %7750 = vmatprep.subr.mxu0 0.0
        %7751 = vmatpush1.msra.mxu0 0.0
        %7752 = vmatprep.subr.mxu0 0.0
        %7753 = vmatpush1.msra.mxu0 0.0
        %7754 = vmatprep.subr.mxu0 0.0
        %7755 = vmatpush1.msra.mxu0 0.0
        %7756 = vmatprep.subr.mxu0 0.0
        %7757 = vmatpush1.msra.mxu0 0.0
        %7758 = vmatprep.subr.mxu0 0.0
        %7759 = vmatpush1.msra.mxu0 0.0
        %7760 = vmatprep.subr.mxu0 0.0
        %7761 = vmatpush1.msra.mxu0 0.0
        %7762 = vmatprep.subr.mxu0 0.0
        %7763 = vmatpush1.msra.mxu0 0.0
        %7764 = vmatprep.subr.mxu0 0.0
        %7765 = vmatpush1.msra.mxu0 0.0
        %7766 = vmatprep.subr.mxu0 0.0
        %7767 = vmatpush1.msra.mxu0 %v7738
        %7768 = vmatprep.subr.mxu0 0.0
        %7769 = vmatpush1.msra.mxu0 %v7737
        %7770 = vmatprep.subr.mxu0 0.0
        %7771 = vmatpush1.msra.mxu0 %v7736
        %7772 = vmatprep.subr.mxu0 0.0
        %7773 = vmatpush1.msra.mxu0 %v7735
        %7774 = vmatprep.subr.mxu0 0.0
        %7775 = vmatpush2.msra.mxu0 0.0
        %7776 = vmatprep.subr.mxu0 0.0
        %7777 = vmatpush2.msra.mxu0 0.0
        %7778 = vmatprep.subr.mxu0 0.0
        %7779 = vmatpush2.msra.mxu0 0.0
        %7780 = vmatprep.subr.mxu0 0.0
        %7781 = vmatpush2.msra.mxu0 0.0
        %7782 = vmatprep.subr.mxu0 0.0
        %7783 = vmatpush2.msra.mxu0 0.0
        %7784 = vmatprep.subr.mxu0 0.0
        %7785 = vmatpush2.msra.mxu0 0.0
        %7786 = vmatprep.subr.mxu0 0.0
        %7787 = vmatpush2.msra.mxu0 0.0
        %7788 = vmatprep.subr.mxu0 0.0
        %7789 = vmatpush2.msra.mxu0 0.0
        %7790 = vmatprep.subr.mxu0 0.0
        %7791 = vmatpush2.msra.mxu0 0.0
        %7792 = vmatprep.subr.mxu0 0.0
        %7793 = vmatpush2.msra.mxu0 0.0
        %7794 = vmatprep.subr.mxu0 0.0
        %7795 = vmatpush2.msra.mxu0 0.0
        %7796 = vmatprep.subr.mxu0 0.0
        %7797 = vmatpush2.msra.mxu0 0.0
        %7798 = vmatprep.subr.mxu0 0.0
        %7799 = vmatpush2.msra.mxu0 0.0
        %7800 = vmatprep.subr.mxu0 0.0
        %7801 = vmatpush2.msra.mxu0 0.0
        %7802 = vmatprep.subr.mxu0 0.0
        %7803 = vmatpush2.msra.mxu0 0.0
        %7804 = vmatprep.subr.mxu0 0.0
        %7805 = vmatpush2.msra.mxu0 0.0
        %7806 = vmatprep.mubr.f32.mxu0 0.0
        %7807 = vmatmul.mubr.f32.gmra.mxu0 %v7740
        %v7808 = vpop.f32.mrf.mxu0
        %v7809 = vadd.f32 0.0, %v7808
        %v7810 = vpop.f32.mrf.mxu0
        %7811 = vdwg.mxu0
        %v7812 = vadd.f32 %v7657, %v7809
        %s7813 = scalar_lea.vmem %s7, 12
        %v7814 = vld [vmem:[%s7813] sm:$0xf]
        %v7816 = vsel %vm4814, %v7814, 0
        %7818 = vmatprep.subr.mxu0 0.0
        %7819 = vmatpush1.msra.mxu0 0.0
        %7820 = vmatprep.subr.mxu0 0.0
        %7821 = vmatpush1.msra.mxu0 0.0
        %7822 = vmatprep.subr.mxu0 0.0
        %7823 = vmatpush1.msra.mxu0 0.0
        %7824 = vmatprep.subr.mxu0 0.0
        %7825 = vmatpush1.msra.mxu0 0.0
        %7826 = vmatprep.subr.mxu0 0.0
        %7827 = vmatpush1.msra.mxu0 0.0
        %7828 = vmatprep.subr.mxu0 0.0
        %7829 = vmatpush1.msra.mxu0 0.0
        %7830 = vmatprep.subr.mxu0 0.0
        %7831 = vmatpush1.msra.mxu0 0.0
        %7832 = vmatprep.subr.mxu0 0.0
        %7833 = vmatpush1.msra.mxu0 0.0
        %7834 = vmatprep.subr.mxu0 0.0
        %7835 = vmatpush1.msra.mxu0 0.0
        %7836 = vmatprep.subr.mxu0 0.0
        %7837 = vmatpush1.msra.mxu0 0.0
        %7838 = vmatprep.subr.mxu0 0.0
        %7839 = vmatpush1.msra.mxu0 0.0
        %7840 = vmatprep.subr.mxu0 0.0
        %7841 = vmatpush1.msra.mxu0 0.0
        %7842 = vmatprep.subr.mxu0 0.0
        %7843 = vmatpush1.msra.mxu0 0.0
        %7844 = vmatprep.subr.mxu0 0.0
        %7845 = vmatpush1.msra.mxu0 0.0
        %7846 = vmatprep.subr.mxu0 0.0
        %7847 = vmatpush1.msra.mxu0 %v7353
        %7848 = vmatprep.subr.mxu0 0.0
        %7849 = vmatpush1.msra.mxu0 %v7352
        %7850 = vmatprep.subr.mxu0 0.0
        %7851 = vmatpush2.msra.mxu0 0.0
        %7852 = vmatprep.subr.mxu0 0.0
        %7853 = vmatpush2.msra.mxu0 0.0
        %7854 = vmatprep.subr.mxu0 0.0
        %7855 = vmatpush2.msra.mxu0 0.0
        %7856 = vmatprep.subr.mxu0 0.0
        %7857 = vmatpush2.msra.mxu0 0.0
        %7858 = vmatprep.subr.mxu0 0.0
        %7859 = vmatpush2.msra.mxu0 0.0
        %7860 = vmatprep.subr.mxu0 0.0
        %7861 = vmatpush2.msra.mxu0 0.0
        %7862 = vmatprep.subr.mxu0 0.0
        %7863 = vmatpush2.msra.mxu0 0.0
        %7864 = vmatprep.subr.mxu0 0.0
        %7865 = vmatpush2.msra.mxu0 0.0
        %7866 = vmatprep.subr.mxu0 0.0
        %7867 = vmatpush2.msra.mxu0 0.0
        %7868 = vmatprep.subr.mxu0 0.0
        %7869 = vmatpush2.msra.mxu0 0.0
        %7870 = vmatprep.subr.mxu0 0.0
        %7871 = vmatpush2.msra.mxu0 0.0
        %7872 = vmatprep.subr.mxu0 0.0
        %7873 = vmatpush2.msra.mxu0 0.0
        %7874 = vmatprep.subr.mxu0 0.0
        %7875 = vmatpush2.msra.mxu0 0.0
        %7876 = vmatprep.subr.mxu0 0.0
        %7877 = vmatpush2.msra.mxu0 0.0
        %7878 = vmatprep.subr.mxu0 0.0
        %7879 = vmatpush2.msra.mxu0 0.0
        %7880 = vmatprep.subr.mxu0 0.0
        %7881 = vmatpush2.msra.mxu0 0.0
        %7882 = vmatprep.mubr.f32.mxu0 0.0
        %7883 = vmatmul.mubr.f32.gmra.mxu0 %v7816
        %v7884 = vpop.f32.mrf.mxu0
        %v7885 = vadd.f32 0.0, %v7884
        %v7886 = vpop.f32.mrf.mxu0
        %7887 = vdwg.mxu0
        %v7888 = vld [vmem:[%s8 + $0x60] sm:$0xff]
        %v7889 = vld [vmem:[%s8 + $0x68] sm:$0xff]
        %v7890 = vld [vmem:[%s8 + $0x70] sm:$0xff]
        %v7891 = vld [vmem:[%s8 + $0x78] sm:$0xff]
        %v7893 = vsel %vm7513, %v7885, 0
        %7895 = vmatprep.subr.mxu0 0.0
        %7896 = vmatpush1.msra.mxu0 0.0
        %7897 = vmatprep.subr.mxu0 0.0
        %7898 = vmatpush1.msra.mxu0 0.0
        %7899 = vmatprep.subr.mxu0 0.0
        %7900 = vmatpush1.msra.mxu0 0.0
        %7901 = vmatprep.subr.mxu0 0.0
        %7902 = vmatpush1.msra.mxu0 0.0
        %7903 = vmatprep.subr.mxu0 0.0
        %7904 = vmatpush1.msra.mxu0 0.0
        %7905 = vmatprep.subr.mxu0 0.0
        %7906 = vmatpush1.msra.mxu0 0.0
        %7907 = vmatprep.subr.mxu0 0.0
        %7908 = vmatpush1.msra.mxu0 0.0
        %7909 = vmatprep.subr.mxu0 0.0
        %7910 = vmatpush1.msra.mxu0 0.0
        %7911 = vmatprep.subr.mxu0 0.0
        %7912 = vmatpush1.msra.mxu0 0.0
        %7913 = vmatprep.subr.mxu0 0.0
        %7914 = vmatpush1.msra.mxu0 0.0
        %7915 = vmatprep.subr.mxu0 0.0
        %7916 = vmatpush1.msra.mxu0 0.0
        %7917 = vmatprep.subr.mxu0 0.0
        %7918 = vmatpush1.msra.mxu0 0.0
        %7919 = vmatprep.subr.mxu0 0.0
        %7920 = vmatpush1.msra.mxu0 %v7891
        %7921 = vmatprep.subr.mxu0 0.0
        %7922 = vmatpush1.msra.mxu0 %v7890
        %7923 = vmatprep.subr.mxu0 0.0
        %7924 = vmatpush1.msra.mxu0 %v7889
        %7925 = vmatprep.subr.mxu0 0.0
        %7926 = vmatpush1.msra.mxu0 %v7888
        %7927 = vmatprep.subr.mxu0 0.0
        %7928 = vmatpush2.msra.mxu0 0.0
        %7929 = vmatprep.subr.mxu0 0.0
        %7930 = vmatpush2.msra.mxu0 0.0
        %7931 = vmatprep.subr.mxu0 0.0
        %7932 = vmatpush2.msra.mxu0 0.0
        %7933 = vmatprep.subr.mxu0 0.0
        %7934 = vmatpush2.msra.mxu0 0.0
        %7935 = vmatprep.subr.mxu0 0.0
        %7936 = vmatpush2.msra.mxu0 0.0
        %7937 = vmatprep.subr.mxu0 0.0
        %7938 = vmatpush2.msra.mxu0 0.0
        %7939 = vmatprep.subr.mxu0 0.0
        %7940 = vmatpush2.msra.mxu0 0.0
        %7941 = vmatprep.subr.mxu0 0.0
        %7942 = vmatpush2.msra.mxu0 0.0
        %7943 = vmatprep.subr.mxu0 0.0
        %7944 = vmatpush2.msra.mxu0 0.0
        %7945 = vmatprep.subr.mxu0 0.0
        %7946 = vmatpush2.msra.mxu0 0.0
        %7947 = vmatprep.subr.mxu0 0.0
        %7948 = vmatpush2.msra.mxu0 0.0
        %7949 = vmatprep.subr.mxu0 0.0
        %7950 = vmatpush2.msra.mxu0 0.0
        %7951 = vmatprep.subr.mxu0 0.0
        %7952 = vmatpush2.msra.mxu0 0.0
        %7953 = vmatprep.subr.mxu0 0.0
        %7954 = vmatpush2.msra.mxu0 0.0
        %7955 = vmatprep.subr.mxu0 0.0
        %7956 = vmatpush2.msra.mxu0 0.0
        %7957 = vmatprep.subr.mxu0 0.0
        %7958 = vmatpush2.msra.mxu0 0.0
        %7959 = vmatprep.mubr.f32.mxu0 0.0
        %7960 = vmatmul.mubr.f32.gmra.mxu0 %v7893
        %v7961 = vpop.f32.mrf.mxu0
        %v7962 = vadd.f32 0.0, %v7961
        %v7963 = vpop.f32.mrf.mxu0
        %7964 = vdwg.mxu0
        %v7965 = vadd.f32 %v7812, %v7962
        %s7966 = scalar_lea.vmem %s7, 16
        %v7967 = vld [vmem:[%s7966] sm:$0xf]
        %v7969 = vsel %vm4814, %v7967, 0
        %7971 = vmatprep.subr.mxu0 0.0
        %7972 = vmatpush1.msra.mxu0 0.0
        %7973 = vmatprep.subr.mxu0 0.0
        %7974 = vmatpush1.msra.mxu0 0.0
        %7975 = vmatprep.subr.mxu0 0.0
        %7976 = vmatpush1.msra.mxu0 0.0
        %7977 = vmatprep.subr.mxu0 0.0
        %7978 = vmatpush1.msra.mxu0 0.0
        %7979 = vmatprep.subr.mxu0 0.0
        %7980 = vmatpush1.msra.mxu0 0.0
        %7981 = vmatprep.subr.mxu0 0.0
        %7982 = vmatpush1.msra.mxu0 0.0
        %7983 = vmatprep.subr.mxu0 0.0
        %7984 = vmatpush1.msra.mxu0 0.0
        %7985 = vmatprep.subr.mxu0 0.0
        %7986 = vmatpush1.msra.mxu0 0.0
        %7987 = vmatprep.subr.mxu0 0.0
        %7988 = vmatpush1.msra.mxu0 0.0
        %7989 = vmatprep.subr.mxu0 0.0
        %7990 = vmatpush1.msra.mxu0 0.0
        %7991 = vmatprep.subr.mxu0 0.0
        %7992 = vmatpush1.msra.mxu0 0.0
        %7993 = vmatprep.subr.mxu0 0.0
        %7994 = vmatpush1.msra.mxu0 0.0
        %7995 = vmatprep.subr.mxu0 0.0
        %7996 = vmatpush1.msra.mxu0 0.0
        %7997 = vmatprep.subr.mxu0 0.0
        %7998 = vmatpush1.msra.mxu0 0.0
        %7999 = vmatprep.subr.mxu0 0.0
        %8000 = vmatpush1.msra.mxu0 %v7353
        %8001 = vmatprep.subr.mxu0 0.0
        %8002 = vmatpush1.msra.mxu0 %v7352
        %8003 = vmatprep.subr.mxu0 0.0
        %8004 = vmatpush2.msra.mxu0 0.0
        %8005 = vmatprep.subr.mxu0 0.0
        %8006 = vmatpush2.msra.mxu0 0.0
        %8007 = vmatprep.subr.mxu0 0.0
        %8008 = vmatpush2.msra.mxu0 0.0
        %8009 = vmatprep.subr.mxu0 0.0
        %8010 = vmatpush2.msra.mxu0 0.0
        %8011 = vmatprep.subr.mxu0 0.0
        %8012 = vmatpush2.msra.mxu0 0.0
        %8013 = vmatprep.subr.mxu0 0.0
        %8014 = vmatpush2.msra.mxu0 0.0
        %8015 = vmatprep.subr.mxu0 0.0
        %8016 = vmatpush2.msra.mxu0 0.0
        %8017 = vmatprep.subr.mxu0 0.0
        %8018 = vmatpush2.msra.mxu0 0.0
        %8019 = vmatprep.subr.mxu0 0.0
        %8020 = vmatpush2.msra.mxu0 0.0
        %8021 = vmatprep.subr.mxu0 0.0
        %8022 = vmatpush2.msra.mxu0 0.0
        %8023 = vmatprep.subr.mxu0 0.0
        %8024 = vmatpush2.msra.mxu0 0.0
        %8025 = vmatprep.subr.mxu0 0.0
        %8026 = vmatpush2.msra.mxu0 0.0
        %8027 = vmatprep.subr.mxu0 0.0
        %8028 = vmatpush2.msra.mxu0 0.0
        %8029 = vmatprep.subr.mxu0 0.0
        %8030 = vmatpush2.msra.mxu0 0.0
        %8031 = vmatprep.subr.mxu0 0.0
        %8032 = vmatpush2.msra.mxu0 0.0
        %8033 = vmatprep.subr.mxu0 0.0
        %8034 = vmatpush2.msra.mxu0 0.0
        %8035 = vmatprep.mubr.f32.mxu0 0.0
        %8036 = vmatmul.mubr.f32.gmra.mxu0 %v7969
        %v8037 = vpop.f32.mrf.mxu0
        %v8038 = vadd.f32 0.0, %v8037
        %v8039 = vpop.f32.mrf.mxu0
        %8040 = vdwg.mxu0
        %v8041 = vld [vmem:[%s8 + $0x80] sm:$0xff]
        %v8042 = vld [vmem:[%s8 + $0x88] sm:$0xff]
        %v8043 = vld [vmem:[%s8 + $0x90] sm:$0xff]
        %v8044 = vld [vmem:[%s8 + $0x98] sm:$0xff]
        %v8046 = vsel %vm7513, %v8038, 0
        %8048 = vmatprep.subr.mxu0 0.0
        %8049 = vmatpush1.msra.mxu0 0.0
        %8050 = vmatprep.subr.mxu0 0.0
        %8051 = vmatpush1.msra.mxu0 0.0
        %8052 = vmatprep.subr.mxu0 0.0
        %8053 = vmatpush1.msra.mxu0 0.0
        %8054 = vmatprep.subr.mxu0 0.0
        %8055 = vmatpush1.msra.mxu0 0.0
        %8056 = vmatprep.subr.mxu0 0.0
        %8057 = vmatpush1.msra.mxu0 0.0
        %8058 = vmatprep.subr.mxu0 0.0
        %8059 = vmatpush1.msra.mxu0 0.0
        %8060 = vmatprep.subr.mxu0 0.0
        %8061 = vmatpush1.msra.mxu0 0.0
        %8062 = vmatprep.subr.mxu0 0.0
        %8063 = vmatpush1.msra.mxu0 0.0
        %8064 = vmatprep.subr.mxu0 0.0
        %8065 = vmatpush1.msra.mxu0 0.0
        %8066 = vmatprep.subr.mxu0 0.0
        %8067 = vmatpush1.msra.mxu0 0.0
        %8068 = vmatprep.subr.mxu0 0.0
        %8069 = vmatpush1.msra.mxu0 0.0
        %8070 = vmatprep.subr.mxu0 0.0
        %8071 = vmatpush1.msra.mxu0 0.0
        %8072 = vmatprep.subr.mxu0 0.0
        %8073 = vmatpush1.msra.mxu0 %v8044
        %8074 = vmatprep.subr.mxu0 0.0
        %8075 = vmatpush1.msra.mxu0 %v8043
        %8076 = vmatprep.subr.mxu0 0.0
        %8077 = vmatpush1.msra.mxu0 %v8042
        %8078 = vmatprep.subr.mxu0 0.0
        %8079 = vmatpush1.msra.mxu0 %v8041
        %8080 = vmatprep.subr.mxu0 0.0
        %8081 = vmatpush2.msra.mxu0 0.0
        %8082 = vmatprep.subr.mxu0 0.0
        %8083 = vmatpush2.msra.mxu0 0.0
        %8084 = vmatprep.subr.mxu0 0.0
        %8085 = vmatpush2.msra.mxu0 0.0
        %8086 = vmatprep.subr.mxu0 0.0
        %8087 = vmatpush2.msra.mxu0 0.0
        %8088 = vmatprep.subr.mxu0 0.0
        %8089 = vmatpush2.msra.mxu0 0.0
        %8090 = vmatprep.subr.mxu0 0.0
        %8091 = vmatpush2.msra.mxu0 0.0
        %8092 = vmatprep.subr.mxu0 0.0
        %8093 = vmatpush2.msra.mxu0 0.0
        %8094 = vmatprep.subr.mxu0 0.0
        %8095 = vmatpush2.msra.mxu0 0.0
        %8096 = vmatprep.subr.mxu0 0.0
        %8097 = vmatpush2.msra.mxu0 0.0
        %8098 = vmatprep.subr.mxu0 0.0
        %8099 = vmatpush2.msra.mxu0 0.0
        %8100 = vmatprep.subr.mxu0 0.0
        %8101 = vmatpush2.msra.mxu0 0.0
        %8102 = vmatprep.subr.mxu0 0.0
        %8103 = vmatpush2.msra.mxu0 0.0
        %8104 = vmatprep.subr.mxu0 0.0
        %8105 = vmatpush2.msra.mxu0 0.0
        %8106 = vmatprep.subr.mxu0 0.0
        %8107 = vmatpush2.msra.mxu0 0.0
        %8108 = vmatprep.subr.mxu0 0.0
        %8109 = vmatpush2.msra.mxu0 0.0
        %8110 = vmatprep.subr.mxu0 0.0
        %8111 = vmatpush2.msra.mxu0 0.0
        %8112 = vmatprep.mubr.f32.mxu0 0.0
        %8113 = vmatmul.mubr.f32.gmra.mxu0 %v8046
        %v8114 = vpop.f32.mrf.mxu0
        %v8115 = vadd.f32 0.0, %v8114
        %v8116 = vpop.f32.mrf.mxu0
        %8117 = vdwg.mxu0
        %v8118 = vadd.f32 %v7965, %v8115
        %s8119 = scalar_lea.vmem %s7, 20
        %v8120 = vld [vmem:[%s8119] sm:$0xf]
        %v8122 = vsel %vm4814, %v8120, 0
        %8124 = vmatprep.subr.mxu0 0.0
        %8125 = vmatpush1.msra.mxu0 0.0
        %8126 = vmatprep.subr.mxu0 0.0
        %8127 = vmatpush1.msra.mxu0 0.0
        %8128 = vmatprep.subr.mxu0 0.0
        %8129 = vmatpush1.msra.mxu0 0.0
        %8130 = vmatprep.subr.mxu0 0.0
        %8131 = vmatpush1.msra.mxu0 0.0
        %8132 = vmatprep.subr.mxu0 0.0
        %8133 = vmatpush1.msra.mxu0 0.0
        %8134 = vmatprep.subr.mxu0 0.0
        %8135 = vmatpush1.msra.mxu0 0.0
        %8136 = vmatprep.subr.mxu0 0.0
        %8137 = vmatpush1.msra.mxu0 0.0
        %8138 = vmatprep.subr.mxu0 0.0
        %8139 = vmatpush1.msra.mxu0 0.0
        %8140 = vmatprep.subr.mxu0 0.0
        %8141 = vmatpush1.msra.mxu0 0.0
        %8142 = vmatprep.subr.mxu0 0.0
        %8143 = vmatpush1.msra.mxu0 0.0
        %8144 = vmatprep.subr.mxu0 0.0
        %8145 = vmatpush1.msra.mxu0 0.0
        %8146 = vmatprep.subr.mxu0 0.0
        %8147 = vmatpush1.msra.mxu0 0.0
        %8148 = vmatprep.subr.mxu0 0.0
        %8149 = vmatpush1.msra.mxu0 0.0
        %8150 = vmatprep.subr.mxu0 0.0
        %8151 = vmatpush1.msra.mxu0 0.0
        %8152 = vmatprep.subr.mxu0 0.0
        %8153 = vmatpush1.msra.mxu0 %v7353
        %8154 = vmatprep.subr.mxu0 0.0
        %8155 = vmatpush1.msra.mxu0 %v7352
        %8156 = vmatprep.subr.mxu0 0.0
        %8157 = vmatpush2.msra.mxu0 0.0
        %8158 = vmatprep.subr.mxu0 0.0
        %8159 = vmatpush2.msra.mxu0 0.0
        %8160 = vmatprep.subr.mxu0 0.0
        %8161 = vmatpush2.msra.mxu0 0.0
        %8162 = vmatprep.subr.mxu0 0.0
        %8163 = vmatpush2.msra.mxu0 0.0
        %8164 = vmatprep.subr.mxu0 0.0
        %8165 = vmatpush2.msra.mxu0 0.0
        %8166 = vmatprep.subr.mxu0 0.0
        %8167 = vmatpush2.msra.mxu0 0.0
        %8168 = vmatprep.subr.mxu0 0.0
        %8169 = vmatpush2.msra.mxu0 0.0
        %8170 = vmatprep.subr.mxu0 0.0
        %8171 = vmatpush2.msra.mxu0 0.0
        %8172 = vmatprep.subr.mxu0 0.0
        %8173 = vmatpush2.msra.mxu0 0.0
        %8174 = vmatprep.subr.mxu0 0.0
        %8175 = vmatpush2.msra.mxu0 0.0
        %8176 = vmatprep.subr.mxu0 0.0
        %8177 = vmatpush2.msra.mxu0 0.0
        %8178 = vmatprep.subr.mxu0 0.0
        %8179 = vmatpush2.msra.mxu0 0.0
        %8180 = vmatprep.subr.mxu0 0.0
        %8181 = vmatpush2.msra.mxu0 0.0
        %8182 = vmatprep.subr.mxu0 0.0
        %8183 = vmatpush2.msra.mxu0 0.0
        %8184 = vmatprep.subr.mxu0 0.0
        %8185 = vmatpush2.msra.mxu0 0.0
        %8186 = vmatprep.subr.mxu0 0.0
        %8187 = vmatpush2.msra.mxu0 0.0
        %8188 = vmatprep.mubr.f32.mxu0 0.0
        %8189 = vmatmul.mubr.f32.gmra.mxu0 %v8122
        %v8190 = vpop.f32.mrf.mxu0
        %v8191 = vadd.f32 0.0, %v8190
        %v8192 = vpop.f32.mrf.mxu0
        %8193 = vdwg.mxu0
        %v8194 = vld [vmem:[%s8 + $0xa0] sm:$0xff]
        %v8195 = vld [vmem:[%s8 + $0xa8] sm:$0xff]
        %v8196 = vld [vmem:[%s8 + $0xb0] sm:$0xff]
        %v8197 = vld [vmem:[%s8 + $0xb8] sm:$0xff]
        %v8199 = vsel %vm7513, %v8191, 0
        %8201 = vmatprep.subr.mxu0 0.0
        %8202 = vmatpush1.msra.mxu0 0.0
        %8203 = vmatprep.subr.mxu0 0.0
        %8204 = vmatpush1.msra.mxu0 0.0
        %8205 = vmatprep.subr.mxu0 0.0
        %8206 = vmatpush1.msra.mxu0 0.0
        %8207 = vmatprep.subr.mxu0 0.0
        %8208 = vmatpush1.msra.mxu0 0.0
        %8209 = vmatprep.subr.mxu0 0.0
        %8210 = vmatpush1.msra.mxu0 0.0
        %8211 = vmatprep.subr.mxu0 0.0
        %8212 = vmatpush1.msra.mxu0 0.0
        %8213 = vmatprep.subr.mxu0 0.0
        %8214 = vmatpush1.msra.mxu0 0.0
        %8215 = vmatprep.subr.mxu0 0.0
        %8216 = vmatpush1.msra.mxu0 0.0
        %8217 = vmatprep.subr.mxu0 0.0
        %8218 = vmatpush1.msra.mxu0 0.0
        %8219 = vmatprep.subr.mxu0 0.0
        %8220 = vmatpush1.msra.mxu0 0.0
        %8221 = vmatprep.subr.mxu0 0.0
        %8222 = vmatpush1.msra.mxu0 0.0
        %8223 = vmatprep.subr.mxu0 0.0
        %8224 = vmatpush1.msra.mxu0 0.0
        %8225 = vmatprep.subr.mxu0 0.0
        %8226 = vmatpush1.msra.mxu0 %v8197
        %8227 = vmatprep.subr.mxu0 0.0
        %8228 = vmatpush1.msra.mxu0 %v8196
        %8229 = vmatprep.subr.mxu0 0.0
        %8230 = vmatpush1.msra.mxu0 %v8195
        %8231 = vmatprep.subr.mxu0 0.0
        %8232 = vmatpush1.msra.mxu0 %v8194
        %8233 = vmatprep.subr.mxu0 0.0
        %8234 = vmatpush2.msra.mxu0 0.0
        %8235 = vmatprep.subr.mxu0 0.0
        %8236 = vmatpush2.msra.mxu0 0.0
        %8237 = vmatprep.subr.mxu0 0.0
        %8238 = vmatpush2.msra.mxu0 0.0
        %8239 = vmatprep.subr.mxu0 0.0
        %8240 = vmatpush2.msra.mxu0 0.0
        %8241 = vmatprep.subr.mxu0 0.0
        %8242 = vmatpush2.msra.mxu0 0.0
        %8243 = vmatprep.subr.mxu0 0.0
        %8244 = vmatpush2.msra.mxu0 0.0
        %8245 = vmatprep.subr.mxu0 0.0
        %8246 = vmatpush2.msra.mxu0 0.0
        %8247 = vmatprep.subr.mxu0 0.0
        %8248 = vmatpush2.msra.mxu0 0.0
        %8249 = vmatprep.subr.mxu0 0.0
        %8250 = vmatpush2.msra.mxu0 0.0
        %8251 = vmatprep.subr.mxu0 0.0
        %8252 = vmatpush2.msra.mxu0 0.0
        %8253 = vmatprep.subr.mxu0 0.0
        %8254 = vmatpush2.msra.mxu0 0.0
        %8255 = vmatprep.subr.mxu0 0.0
        %8256 = vmatpush2.msra.mxu0 0.0
        %8257 = vmatprep.subr.mxu0 0.0
        %8258 = vmatpush2.msra.mxu0 0.0
        %8259 = vmatprep.subr.mxu0 0.0
        %8260 = vmatpush2.msra.mxu0 0.0
        %8261 = vmatprep.subr.mxu0 0.0
        %8262 = vmatpush2.msra.mxu0 0.0
        %8263 = vmatprep.subr.mxu0 0.0
        %8264 = vmatpush2.msra.mxu0 0.0
        %8265 = vmatprep.mubr.f32.mxu0 0.0
        %8266 = vmatmul.mubr.f32.gmra.mxu0 %v8199
        %v8267 = vpop.f32.mrf.mxu0
        %v8268 = vadd.f32 0.0, %v8267
        %v8269 = vpop.f32.mrf.mxu0
        %8270 = vdwg.mxu0
        %v8271 = vadd.f32 %v8118, %v8268
        %s8272 = scalar_lea.vmem %s7, 24
        %v8273 = vld [vmem:[%s8272] sm:$0xf]
        %v8275 = vsel %vm4814, %v8273, 0
        %8277 = vmatprep.subr.mxu0 0.0
        %8278 = vmatpush1.msra.mxu0 0.0
        %8279 = vmatprep.subr.mxu0 0.0
        %8280 = vmatpush1.msra.mxu0 0.0
        %8281 = vmatprep.subr.mxu0 0.0
        %8282 = vmatpush1.msra.mxu0 0.0
        %8283 = vmatprep.subr.mxu0 0.0
        %8284 = vmatpush1.msra.mxu0 0.0
        %8285 = vmatprep.subr.mxu0 0.0
        %8286 = vmatpush1.msra.mxu0 0.0
        %8287 = vmatprep.subr.mxu0 0.0
        %8288 = vmatpush1.msra.mxu0 0.0
        %8289 = vmatprep.subr.mxu0 0.0
        %8290 = vmatpush1.msra.mxu0 0.0
        %8291 = vmatprep.subr.mxu0 0.0
        %8292 = vmatpush1.msra.mxu0 0.0
        %8293 = vmatprep.subr.mxu0 0.0
        %8294 = vmatpush1.msra.mxu0 0.0
        %8295 = vmatprep.subr.mxu0 0.0
        %8296 = vmatpush1.msra.mxu0 0.0
        %8297 = vmatprep.subr.mxu0 0.0
        %8298 = vmatpush1.msra.mxu0 0.0
        %8299 = vmatprep.subr.mxu0 0.0
        %8300 = vmatpush1.msra.mxu0 0.0
        %8301 = vmatprep.subr.mxu0 0.0
        %8302 = vmatpush1.msra.mxu0 0.0
        %8303 = vmatprep.subr.mxu0 0.0
        %8304 = vmatpush1.msra.mxu0 0.0
        %8305 = vmatprep.subr.mxu0 0.0
        %8306 = vmatpush1.msra.mxu0 %v7353
        %8307 = vmatprep.subr.mxu0 0.0
        %8308 = vmatpush1.msra.mxu0 %v7352
        %8309 = vmatprep.subr.mxu0 0.0
        %8310 = vmatpush2.msra.mxu0 0.0
        %8311 = vmatprep.subr.mxu0 0.0
        %8312 = vmatpush2.msra.mxu0 0.0
        %8313 = vmatprep.subr.mxu0 0.0
        %8314 = vmatpush2.msra.mxu0 0.0
        %8315 = vmatprep.subr.mxu0 0.0
        %8316 = vmatpush2.msra.mxu0 0.0
        %8317 = vmatprep.subr.mxu0 0.0
        %8318 = vmatpush2.msra.mxu0 0.0
        %8319 = vmatprep.subr.mxu0 0.0
        %8320 = vmatpush2.msra.mxu0 0.0
        %8321 = vmatprep.subr.mxu0 0.0
        %8322 = vmatpush2.msra.mxu0 0.0
        %8323 = vmatprep.subr.mxu0 0.0
        %8324 = vmatpush2.msra.mxu0 0.0
        %8325 = vmatprep.subr.mxu0 0.0
        %8326 = vmatpush2.msra.mxu0 0.0
        %8327 = vmatprep.subr.mxu0 0.0
        %8328 = vmatpush2.msra.mxu0 0.0
        %8329 = vmatprep.subr.mxu0 0.0
        %8330 = vmatpush2.msra.mxu0 0.0
        %8331 = vmatprep.subr.mxu0 0.0
        %8332 = vmatpush2.msra.mxu0 0.0
        %8333 = vmatprep.subr.mxu0 0.0
        %8334 = vmatpush2.msra.mxu0 0.0
        %8335 = vmatprep.subr.mxu0 0.0
        %8336 = vmatpush2.msra.mxu0 0.0
        %8337 = vmatprep.subr.mxu0 0.0
        %8338 = vmatpush2.msra.mxu0 0.0
        %8339 = vmatprep.subr.mxu0 0.0
        %8340 = vmatpush2.msra.mxu0 0.0
        %8341 = vmatprep.mubr.f32.mxu0 0.0
        %8342 = vmatmul.mubr.f32.gmra.mxu0 %v8275
        %v8343 = vpop.f32.mrf.mxu0
        %v8344 = vadd.f32 0.0, %v8343
        %v8345 = vpop.f32.mrf.mxu0
        %8346 = vdwg.mxu0
        %v8347 = vld [vmem:[%s8 + $0xc0] sm:$0xff]
        %v8348 = vld [vmem:[%s8 + $0xc8] sm:$0xff]
        %v8349 = vld [vmem:[%s8 + $0xd0] sm:$0xff]
        %v8350 = vld [vmem:[%s8 + $0xd8] sm:$0xff]
        %v8352 = vsel %vm7513, %v8344, 0
        %8354 = vmatprep.subr.mxu0 0.0
        %8355 = vmatpush1.msra.mxu0 0.0
        %8356 = vmatprep.subr.mxu0 0.0
        %8357 = vmatpush1.msra.mxu0 0.0
        %8358 = vmatprep.subr.mxu0 0.0
        %8359 = vmatpush1.msra.mxu0 0.0
        %8360 = vmatprep.subr.mxu0 0.0
        %8361 = vmatpush1.msra.mxu0 0.0
        %8362 = vmatprep.subr.mxu0 0.0
        %8363 = vmatpush1.msra.mxu0 0.0
        %8364 = vmatprep.subr.mxu0 0.0
        %8365 = vmatpush1.msra.mxu0 0.0
        %8366 = vmatprep.subr.mxu0 0.0
        %8367 = vmatpush1.msra.mxu0 0.0
        %8368 = vmatprep.subr.mxu0 0.0
        %8369 = vmatpush1.msra.mxu0 0.0
        %8370 = vmatprep.subr.mxu0 0.0
        %8371 = vmatpush1.msra.mxu0 0.0
        %8372 = vmatprep.subr.mxu0 0.0
        %8373 = vmatpush1.msra.mxu0 0.0
        %8374 = vmatprep.subr.mxu0 0.0
        %8375 = vmatpush1.msra.mxu0 0.0
        %8376 = vmatprep.subr.mxu0 0.0
        %8377 = vmatpush1.msra.mxu0 0.0
        %8378 = vmatprep.subr.mxu0 0.0
        %8379 = vmatpush1.msra.mxu0 %v8350
        %8380 = vmatprep.subr.mxu0 0.0
        %8381 = vmatpush1.msra.mxu0 %v8349
        %8382 = vmatprep.subr.mxu0 0.0
        %8383 = vmatpush1.msra.mxu0 %v8348
        %8384 = vmatprep.subr.mxu0 0.0
        %8385 = vmatpush1.msra.mxu0 %v8347
        %8386 = vmatprep.subr.mxu0 0.0
        %8387 = vmatpush2.msra.mxu0 0.0
        %8388 = vmatprep.subr.mxu0 0.0
        %8389 = vmatpush2.msra.mxu0 0.0
        %8390 = vmatprep.subr.mxu0 0.0
        %8391 = vmatpush2.msra.mxu0 0.0
        %8392 = vmatprep.subr.mxu0 0.0
        %8393 = vmatpush2.msra.mxu0 0.0
        %8394 = vmatprep.subr.mxu0 0.0
        %8395 = vmatpush2.msra.mxu0 0.0
        %8396 = vmatprep.subr.mxu0 0.0
        %8397 = vmatpush2.msra.mxu0 0.0
        %8398 = vmatprep.subr.mxu0 0.0
        %8399 = vmatpush2.msra.mxu0 0.0
        %8400 = vmatprep.subr.mxu0 0.0
        %8401 = vmatpush2.msra.mxu0 0.0
        %8402 = vmatprep.subr.mxu0 0.0
        %8403 = vmatpush2.msra.mxu0 0.0
        %8404 = vmatprep.subr.mxu0 0.0
        %8405 = vmatpush2.msra.mxu0 0.0
        %8406 = vmatprep.subr.mxu0 0.0
        %8407 = vmatpush2.msra.mxu0 0.0
        %8408 = vmatprep.subr.mxu0 0.0
        %8409 = vmatpush2.msra.mxu0 0.0
        %8410 = vmatprep.subr.mxu0 0.0
        %8411 = vmatpush2.msra.mxu0 0.0
        %8412 = vmatprep.subr.mxu0 0.0
        %8413 = vmatpush2.msra.mxu0 0.0
        %8414 = vmatprep.subr.mxu0 0.0
        %8415 = vmatpush2.msra.mxu0 0.0
        %8416 = vmatprep.subr.mxu0 0.0
        %8417 = vmatpush2.msra.mxu0 0.0
        %8418 = vmatprep.mubr.f32.mxu0 0.0
        %8419 = vmatmul.mubr.f32.gmra.mxu0 %v8352
        %v8420 = vpop.f32.mrf.mxu0
        %v8421 = vadd.f32 0.0, %v8420
        %v8422 = vpop.f32.mrf.mxu0
        %8423 = vdwg.mxu0
        %v8424 = vadd.f32 %v8271, %v8421
        %s8425 = scalar_lea.vmem %s7, 28
        %v8426 = vld [vmem:[%s8425] sm:$0xf]
        %v8428 = vsel %vm4814, %v8426, 0
        %8430 = vmatprep.subr.mxu0 0.0
        %8431 = vmatpush1.msra.mxu0 0.0
        %8432 = vmatprep.subr.mxu0 0.0
        %8433 = vmatpush1.msra.mxu0 0.0
        %8434 = vmatprep.subr.mxu0 0.0
        %8435 = vmatpush1.msra.mxu0 0.0
        %8436 = vmatprep.subr.mxu0 0.0
        %8437 = vmatpush1.msra.mxu0 0.0
        %8438 = vmatprep.subr.mxu0 0.0
        %8439 = vmatpush1.msra.mxu0 0.0
        %8440 = vmatprep.subr.mxu0 0.0
        %8441 = vmatpush1.msra.mxu0 0.0
        %8442 = vmatprep.subr.mxu0 0.0
        %8443 = vmatpush1.msra.mxu0 0.0
        %8444 = vmatprep.subr.mxu0 0.0
        %8445 = vmatpush1.msra.mxu0 0.0
        %8446 = vmatprep.subr.mxu0 0.0
        %8447 = vmatpush1.msra.mxu0 0.0
        %8448 = vmatprep.subr.mxu0 0.0
        %8449 = vmatpush1.msra.mxu0 0.0
        %8450 = vmatprep.subr.mxu0 0.0
        %8451 = vmatpush1.msra.mxu0 0.0
        %8452 = vmatprep.subr.mxu0 0.0
        %8453 = vmatpush1.msra.mxu0 0.0
        %8454 = vmatprep.subr.mxu0 0.0
        %8455 = vmatpush1.msra.mxu0 0.0
        %8456 = vmatprep.subr.mxu0 0.0
        %8457 = vmatpush1.msra.mxu0 0.0
        %8458 = vmatprep.subr.mxu0 0.0
        %8459 = vmatpush1.msra.mxu0 %v7353
        %8460 = vmatprep.subr.mxu0 0.0
        %8461 = vmatpush1.msra.mxu0 %v7352
        %8462 = vmatprep.subr.mxu0 0.0
        %8463 = vmatpush2.msra.mxu0 0.0
        %8464 = vmatprep.subr.mxu0 0.0
        %8465 = vmatpush2.msra.mxu0 0.0
        %8466 = vmatprep.subr.mxu0 0.0
        %8467 = vmatpush2.msra.mxu0 0.0
        %8468 = vmatprep.subr.mxu0 0.0
        %8469 = vmatpush2.msra.mxu0 0.0
        %8470 = vmatprep.subr.mxu0 0.0
        %8471 = vmatpush2.msra.mxu0 0.0
        %8472 = vmatprep.subr.mxu0 0.0
        %8473 = vmatpush2.msra.mxu0 0.0
        %8474 = vmatprep.subr.mxu0 0.0
        %8475 = vmatpush2.msra.mxu0 0.0
        %8476 = vmatprep.subr.mxu0 0.0
        %8477 = vmatpush2.msra.mxu0 0.0
        %8478 = vmatprep.subr.mxu0 0.0
        %8479 = vmatpush2.msra.mxu0 0.0
        %8480 = vmatprep.subr.mxu0 0.0
        %8481 = vmatpush2.msra.mxu0 0.0
        %8482 = vmatprep.subr.mxu0 0.0
        %8483 = vmatpush2.msra.mxu0 0.0
        %8484 = vmatprep.subr.mxu0 0.0
        %8485 = vmatpush2.msra.mxu0 0.0
        %8486 = vmatprep.subr.mxu0 0.0
        %8487 = vmatpush2.msra.mxu0 0.0
        %8488 = vmatprep.subr.mxu0 0.0
        %8489 = vmatpush2.msra.mxu0 0.0
        %8490 = vmatprep.subr.mxu0 0.0
        %8491 = vmatpush2.msra.mxu0 0.0
        %8492 = vmatprep.subr.mxu0 0.0
        %8493 = vmatpush2.msra.mxu0 0.0
        %8494 = vmatprep.mubr.f32.mxu0 0.0
        %8495 = vmatmul.mubr.f32.gmra.mxu0 %v8428
        %v8496 = vpop.f32.mrf.mxu0
        %v8497 = vadd.f32 0.0, %v8496
        %v8498 = vpop.f32.mrf.mxu0
        %8499 = vdwg.mxu0
        %v8500 = vld [vmem:[%s8 + $0xe0] sm:$0xff]
        %v8501 = vld [vmem:[%s8 + $0xe8] sm:$0xff]
        %v8502 = vld [vmem:[%s8 + $0xf0] sm:$0xff]
        %v8503 = vld [vmem:[%s8 + $0xf8] sm:$0xff]
        %v8505 = vsel %vm7513, %v8497, 0
        %8507 = vmatprep.subr.mxu0 0.0
        %8508 = vmatpush1.msra.mxu0 0.0
        %8509 = vmatprep.subr.mxu0 0.0
        %8510 = vmatpush1.msra.mxu0 0.0
        %8511 = vmatprep.subr.mxu0 0.0
        %8512 = vmatpush1.msra.mxu0 0.0
        %8513 = vmatprep.subr.mxu0 0.0
        %8514 = vmatpush1.msra.mxu0 0.0
        %8515 = vmatprep.subr.mxu0 0.0
        %8516 = vmatpush1.msra.mxu0 0.0
        %8517 = vmatprep.subr.mxu0 0.0
        %8518 = vmatpush1.msra.mxu0 0.0
        %8519 = vmatprep.subr.mxu0 0.0
        %8520 = vmatpush1.msra.mxu0 0.0
        %8521 = vmatprep.subr.mxu0 0.0
        %8522 = vmatpush1.msra.mxu0 0.0
        %8523 = vmatprep.subr.mxu0 0.0
        %8524 = vmatpush1.msra.mxu0 0.0
        %8525 = vmatprep.subr.mxu0 0.0
        %8526 = vmatpush1.msra.mxu0 0.0
        %8527 = vmatprep.subr.mxu0 0.0
        %8528 = vmatpush1.msra.mxu0 0.0
        %8529 = vmatprep.subr.mxu0 0.0
        %8530 = vmatpush1.msra.mxu0 0.0
        %8531 = vmatprep.subr.mxu0 0.0
        %8532 = vmatpush1.msra.mxu0 %v8503
        %8533 = vmatprep.subr.mxu0 0.0
        %8534 = vmatpush1.msra.mxu0 %v8502
        %8535 = vmatprep.subr.mxu0 0.0
        %8536 = vmatpush1.msra.mxu0 %v8501
        %8537 = vmatprep.subr.mxu0 0.0
        %8538 = vmatpush1.msra.mxu0 %v8500
        %8539 = vmatprep.subr.mxu0 0.0
        %8540 = vmatpush2.msra.mxu0 0.0
        %8541 = vmatprep.subr.mxu0 0.0
        %8542 = vmatpush2.msra.mxu0 0.0
        %8543 = vmatprep.subr.mxu0 0.0
        %8544 = vmatpush2.msra.mxu0 0.0
        %8545 = vmatprep.subr.mxu0 0.0
        %8546 = vmatpush2.msra.mxu0 0.0
        %8547 = vmatprep.subr.mxu0 0.0
        %8548 = vmatpush2.msra.mxu0 0.0
        %8549 = vmatprep.subr.mxu0 0.0
        %8550 = vmatpush2.msra.mxu0 0.0
        %8551 = vmatprep.subr.mxu0 0.0
        %8552 = vmatpush2.msra.mxu0 0.0
        %8553 = vmatprep.subr.mxu0 0.0
        %8554 = vmatpush2.msra.mxu0 0.0
        %8555 = vmatprep.subr.mxu0 0.0
        %8556 = vmatpush2.msra.mxu0 0.0
        %8557 = vmatprep.subr.mxu0 0.0
        %8558 = vmatpush2.msra.mxu0 0.0
        %8559 = vmatprep.subr.mxu0 0.0
        %8560 = vmatpush2.msra.mxu0 0.0
        %8561 = vmatprep.subr.mxu0 0.0
        %8562 = vmatpush2.msra.mxu0 0.0
        %8563 = vmatprep.subr.mxu0 0.0
        %8564 = vmatpush2.msra.mxu0 0.0
        %8565 = vmatprep.subr.mxu0 0.0
        %8566 = vmatpush2.msra.mxu0 0.0
        %8567 = vmatprep.subr.mxu0 0.0
        %8568 = vmatpush2.msra.mxu0 0.0
        %8569 = vmatprep.subr.mxu0 0.0
        %8570 = vmatpush2.msra.mxu0 0.0
        %8571 = vmatprep.mubr.f32.mxu0 0.0
        %8572 = vmatmul.mubr.f32.gmra.mxu0 %v8505
        %v8573 = vpop.f32.mrf.mxu0
        %v8574 = vadd.f32 0.0, %v8573
        %v8575 = vpop.f32.mrf.mxu0
        %8576 = vdwg.mxu0
        %v8577 = vadd.f32 %v8424, %v8574
        %s8578 = scalar_lea.vmem %s7, 32
        %v8579 = vld [vmem:[%s8578] sm:$0xf]
        %v8581 = vsel %vm4814, %v8579, 0
        %8583 = vmatprep.subr.mxu0 0.0
        %8584 = vmatpush1.msra.mxu0 0.0
        %8585 = vmatprep.subr.mxu0 0.0
        %8586 = vmatpush1.msra.mxu0 0.0
        %8587 = vmatprep.subr.mxu0 0.0
        %8588 = vmatpush1.msra.mxu0 0.0
        %8589 = vmatprep.subr.mxu0 0.0
        %8590 = vmatpush1.msra.mxu0 0.0
        %8591 = vmatprep.subr.mxu0 0.0
        %8592 = vmatpush1.msra.mxu0 0.0
        %8593 = vmatprep.subr.mxu0 0.0
        %8594 = vmatpush1.msra.mxu0 0.0
        %8595 = vmatprep.subr.mxu0 0.0
        %8596 = vmatpush1.msra.mxu0 0.0
        %8597 = vmatprep.subr.mxu0 0.0
        %8598 = vmatpush1.msra.mxu0 0.0
        %8599 = vmatprep.subr.mxu0 0.0
        %8600 = vmatpush1.msra.mxu0 0.0
        %8601 = vmatprep.subr.mxu0 0.0
        %8602 = vmatpush1.msra.mxu0 0.0
        %8603 = vmatprep.subr.mxu0 0.0
        %8604 = vmatpush1.msra.mxu0 0.0
        %8605 = vmatprep.subr.mxu0 0.0
        %8606 = vmatpush1.msra.mxu0 0.0
        %8607 = vmatprep.subr.mxu0 0.0
        %8608 = vmatpush1.msra.mxu0 0.0
        %8609 = vmatprep.subr.mxu0 0.0
        %8610 = vmatpush1.msra.mxu0 0.0
        %8611 = vmatprep.subr.mxu0 0.0
        %8612 = vmatpush1.msra.mxu0 %v7353
        %8613 = vmatprep.subr.mxu0 0.0
        %8614 = vmatpush1.msra.mxu0 %v7352
        %8615 = vmatprep.subr.mxu0 0.0
        %8616 = vmatpush2.msra.mxu0 0.0
        %8617 = vmatprep.subr.mxu0 0.0
        %8618 = vmatpush2.msra.mxu0 0.0
        %8619 = vmatprep.subr.mxu0 0.0
        %8620 = vmatpush2.msra.mxu0 0.0
        %8621 = vmatprep.subr.mxu0 0.0
        %8622 = vmatpush2.msra.mxu0 0.0
        %8623 = vmatprep.subr.mxu0 0.0
        %8624 = vmatpush2.msra.mxu0 0.0
        %8625 = vmatprep.subr.mxu0 0.0
        %8626 = vmatpush2.msra.mxu0 0.0
        %8627 = vmatprep.subr.mxu0 0.0
        %8628 = vmatpush2.msra.mxu0 0.0
        %8629 = vmatprep.subr.mxu0 0.0
        %8630 = vmatpush2.msra.mxu0 0.0
        %8631 = vmatprep.subr.mxu0 0.0
        %8632 = vmatpush2.msra.mxu0 0.0
        %8633 = vmatprep.subr.mxu0 0.0
        %8634 = vmatpush2.msra.mxu0 0.0
        %8635 = vmatprep.subr.mxu0 0.0
        %8636 = vmatpush2.msra.mxu0 0.0
        %8637 = vmatprep.subr.mxu0 0.0
        %8638 = vmatpush2.msra.mxu0 0.0
        %8639 = vmatprep.subr.mxu0 0.0
        %8640 = vmatpush2.msra.mxu0 0.0
        %8641 = vmatprep.subr.mxu0 0.0
        %8642 = vmatpush2.msra.mxu0 0.0
        %8643 = vmatprep.subr.mxu0 0.0
        %8644 = vmatpush2.msra.mxu0 0.0
        %8645 = vmatprep.subr.mxu0 0.0
        %8646 = vmatpush2.msra.mxu0 0.0
        %8647 = vmatprep.mubr.f32.mxu0 0.0
        %8648 = vmatmul.mubr.f32.gmra.mxu0 %v8581
        %v8649 = vpop.f32.mrf.mxu0
        %v8650 = vadd.f32 0.0, %v8649
        %v8651 = vpop.f32.mrf.mxu0
        %8652 = vdwg.mxu0
        %v8653 = vld [vmem:[%s8 + $0x100] sm:$0xff]
        %v8654 = vld [vmem:[%s8 + $0x108] sm:$0xff]
        %v8655 = vld [vmem:[%s8 + $0x110] sm:$0xff]
        %v8656 = vld [vmem:[%s8 + $0x118] sm:$0xff]
        %v8658 = vsel %vm7513, %v8650, 0
        %8660 = vmatprep.subr.mxu0 0.0
        %8661 = vmatpush1.msra.mxu0 0.0
        %8662 = vmatprep.subr.mxu0 0.0
        %8663 = vmatpush1.msra.mxu0 0.0
        %8664 = vmatprep.subr.mxu0 0.0
        %8665 = vmatpush1.msra.mxu0 0.0
        %8666 = vmatprep.subr.mxu0 0.0
        %8667 = vmatpush1.msra.mxu0 0.0
        %8668 = vmatprep.subr.mxu0 0.0
        %8669 = vmatpush1.msra.mxu0 0.0
        %8670 = vmatprep.subr.mxu0 0.0
        %8671 = vmatpush1.msra.mxu0 0.0
        %8672 = vmatprep.subr.mxu0 0.0
        %8673 = vmatpush1.msra.mxu0 0.0
        %8674 = vmatprep.subr.mxu0 0.0
        %8675 = vmatpush1.msra.mxu0 0.0
        %8676 = vmatprep.subr.mxu0 0.0
        %8677 = vmatpush1.msra.mxu0 0.0
        %8678 = vmatprep.subr.mxu0 0.0
        %8679 = vmatpush1.msra.mxu0 0.0
        %8680 = vmatprep.subr.mxu0 0.0
        %8681 = vmatpush1.msra.mxu0 0.0
        %8682 = vmatprep.subr.mxu0 0.0
        %8683 = vmatpush1.msra.mxu0 0.0
        %8684 = vmatprep.subr.mxu0 0.0
        %8685 = vmatpush1.msra.mxu0 %v8656
        %8686 = vmatprep.subr.mxu0 0.0
        %8687 = vmatpush1.msra.mxu0 %v8655
        %8688 = vmatprep.subr.mxu0 0.0
        %8689 = vmatpush1.msra.mxu0 %v8654
        %8690 = vmatprep.subr.mxu0 0.0
        %8691 = vmatpush1.msra.mxu0 %v8653
        %8692 = vmatprep.subr.mxu0 0.0
        %8693 = vmatpush2.msra.mxu0 0.0
        %8694 = vmatprep.subr.mxu0 0.0
        %8695 = vmatpush2.msra.mxu0 0.0
        %8696 = vmatprep.subr.mxu0 0.0
        %8697 = vmatpush2.msra.mxu0 0.0
        %8698 = vmatprep.subr.mxu0 0.0
        %8699 = vmatpush2.msra.mxu0 0.0
        %8700 = vmatprep.subr.mxu0 0.0
        %8701 = vmatpush2.msra.mxu0 0.0
        %8702 = vmatprep.subr.mxu0 0.0
        %8703 = vmatpush2.msra.mxu0 0.0
        %8704 = vmatprep.subr.mxu0 0.0
        %8705 = vmatpush2.msra.mxu0 0.0
        %8706 = vmatprep.subr.mxu0 0.0
        %8707 = vmatpush2.msra.mxu0 0.0
        %8708 = vmatprep.subr.mxu0 0.0
        %8709 = vmatpush2.msra.mxu0 0.0
        %8710 = vmatprep.subr.mxu0 0.0
        %8711 = vmatpush2.msra.mxu0 0.0
        %8712 = vmatprep.subr.mxu0 0.0
        %8713 = vmatpush2.msra.mxu0 0.0
        %8714 = vmatprep.subr.mxu0 0.0
        %8715 = vmatpush2.msra.mxu0 0.0
        %8716 = vmatprep.subr.mxu0 0.0
        %8717 = vmatpush2.msra.mxu0 0.0
        %8718 = vmatprep.subr.mxu0 0.0
        %8719 = vmatpush2.msra.mxu0 0.0
        %8720 = vmatprep.subr.mxu0 0.0
        %8721 = vmatpush2.msra.mxu0 0.0
        %8722 = vmatprep.subr.mxu0 0.0
        %8723 = vmatpush2.msra.mxu0 0.0
        %8724 = vmatprep.mubr.f32.mxu0 0.0
        %8725 = vmatmul.mubr.f32.gmra.mxu0 %v8658
        %v8726 = vpop.f32.mrf.mxu0
        %v8727 = vadd.f32 0.0, %v8726
        %v8728 = vpop.f32.mrf.mxu0
        %8729 = vdwg.mxu0
        %v8730 = vadd.f32 %v8577, %v8727
        %s8731 = scalar_lea.vmem %s7, 36
        %v8732 = vld [vmem:[%s8731] sm:$0xf]
        %v8734 = vsel %vm4814, %v8732, 0
        %8736 = vmatprep.subr.mxu0 0.0
        %8737 = vmatpush1.msra.mxu0 0.0
        %8738 = vmatprep.subr.mxu0 0.0
        %8739 = vmatpush1.msra.mxu0 0.0
        %8740 = vmatprep.subr.mxu0 0.0
        %8741 = vmatpush1.msra.mxu0 0.0
        %8742 = vmatprep.subr.mxu0 0.0
        %8743 = vmatpush1.msra.mxu0 0.0
        %8744 = vmatprep.subr.mxu0 0.0
        %8745 = vmatpush1.msra.mxu0 0.0
        %8746 = vmatprep.subr.mxu0 0.0
        %8747 = vmatpush1.msra.mxu0 0.0
        %8748 = vmatprep.subr.mxu0 0.0
        %8749 = vmatpush1.msra.mxu0 0.0
        %8750 = vmatprep.subr.mxu0 0.0
        %8751 = vmatpush1.msra.mxu0 0.0
        %8752 = vmatprep.subr.mxu0 0.0
        %8753 = vmatpush1.msra.mxu0 0.0
        %8754 = vmatprep.subr.mxu0 0.0
        %8755 = vmatpush1.msra.mxu0 0.0
        %8756 = vmatprep.subr.mxu0 0.0
        %8757 = vmatpush1.msra.mxu0 0.0
        %8758 = vmatprep.subr.mxu0 0.0
        %8759 = vmatpush1.msra.mxu0 0.0
        %8760 = vmatprep.subr.mxu0 0.0
        %8761 = vmatpush1.msra.mxu0 0.0
        %8762 = vmatprep.subr.mxu0 0.0
        %8763 = vmatpush1.msra.mxu0 0.0
        %8764 = vmatprep.subr.mxu0 0.0
        %8765 = vmatpush1.msra.mxu0 %v7353
        %8766 = vmatprep.subr.mxu0 0.0
        %8767 = vmatpush1.msra.mxu0 %v7352
        %8768 = vmatprep.subr.mxu0 0.0
        %8769 = vmatpush2.msra.mxu0 0.0
        %8770 = vmatprep.subr.mxu0 0.0
        %8771 = vmatpush2.msra.mxu0 0.0
        %8772 = vmatprep.subr.mxu0 0.0
        %8773 = vmatpush2.msra.mxu0 0.0
        %8774 = vmatprep.subr.mxu0 0.0
        %8775 = vmatpush2.msra.mxu0 0.0
        %8776 = vmatprep.subr.mxu0 0.0
        %8777 = vmatpush2.msra.mxu0 0.0
        %8778 = vmatprep.subr.mxu0 0.0
        %8779 = vmatpush2.msra.mxu0 0.0
        %8780 = vmatprep.subr.mxu0 0.0
        %8781 = vmatpush2.msra.mxu0 0.0
        %8782 = vmatprep.subr.mxu0 0.0
        %8783 = vmatpush2.msra.mxu0 0.0
        %8784 = vmatprep.subr.mxu0 0.0
        %8785 = vmatpush2.msra.mxu0 0.0
        %8786 = vmatprep.subr.mxu0 0.0
        %8787 = vmatpush2.msra.mxu0 0.0
        %8788 = vmatprep.subr.mxu0 0.0
        %8789 = vmatpush2.msra.mxu0 0.0
        %8790 = vmatprep.subr.mxu0 0.0
        %8791 = vmatpush2.msra.mxu0 0.0
        %8792 = vmatprep.subr.mxu0 0.0
        %8793 = vmatpush2.msra.mxu0 0.0
        %8794 = vmatprep.subr.mxu0 0.0
        %8795 = vmatpush2.msra.mxu0 0.0
        %8796 = vmatprep.subr.mxu0 0.0
        %8797 = vmatpush2.msra.mxu0 0.0
        %8798 = vmatprep.subr.mxu0 0.0
        %8799 = vmatpush2.msra.mxu0 0.0
        %8800 = vmatprep.mubr.f32.mxu0 0.0
        %8801 = vmatmul.mubr.f32.gmra.mxu0 %v8734
        %v8802 = vpop.f32.mrf.mxu0
        %v8803 = vadd.f32 0.0, %v8802
        %v8804 = vpop.f32.mrf.mxu0
        %8805 = vdwg.mxu0
        %v8806 = vld [vmem:[%s8 + $0x120] sm:$0xff]
        %v8807 = vld [vmem:[%s8 + $0x128] sm:$0xff]
        %v8808 = vld [vmem:[%s8 + $0x130] sm:$0xff]
        %v8809 = vld [vmem:[%s8 + $0x138] sm:$0xff]
        %v8811 = vsel %vm7513, %v8803, 0
        %8813 = vmatprep.subr.mxu0 0.0
        %8814 = vmatpush1.msra.mxu0 0.0
        %8815 = vmatprep.subr.mxu0 0.0
        %8816 = vmatpush1.msra.mxu0 0.0
        %8817 = vmatprep.subr.mxu0 0.0
        %8818 = vmatpush1.msra.mxu0 0.0
        %8819 = vmatprep.subr.mxu0 0.0
        %8820 = vmatpush1.msra.mxu0 0.0
        %8821 = vmatprep.subr.mxu0 0.0
        %8822 = vmatpush1.msra.mxu0 0.0
        %8823 = vmatprep.subr.mxu0 0.0
        %8824 = vmatpush1.msra.mxu0 0.0
        %8825 = vmatprep.subr.mxu0 0.0
        %8826 = vmatpush1.msra.mxu0 0.0
        %8827 = vmatprep.subr.mxu0 0.0
        %8828 = vmatpush1.msra.mxu0 0.0
        %8829 = vmatprep.subr.mxu0 0.0
        %8830 = vmatpush1.msra.mxu0 0.0
        %8831 = vmatprep.subr.mxu0 0.0
        %8832 = vmatpush1.msra.mxu0 0.0
        %8833 = vmatprep.subr.mxu0 0.0
        %8834 = vmatpush1.msra.mxu0 0.0
        %8835 = vmatprep.subr.mxu0 0.0
        %8836 = vmatpush1.msra.mxu0 0.0
        %8837 = vmatprep.subr.mxu0 0.0
        %8838 = vmatpush1.msra.mxu0 %v8809
        %8839 = vmatprep.subr.mxu0 0.0
        %8840 = vmatpush1.msra.mxu0 %v8808
        %8841 = vmatprep.subr.mxu0 0.0
        %8842 = vmatpush1.msra.mxu0 %v8807
        %8843 = vmatprep.subr.mxu0 0.0
        %8844 = vmatpush1.msra.mxu0 %v8806
        %8845 = vmatprep.subr.mxu0 0.0
        %8846 = vmatpush2.msra.mxu0 0.0
        %8847 = vmatprep.subr.mxu0 0.0
        %8848 = vmatpush2.msra.mxu0 0.0
        %8849 = vmatprep.subr.mxu0 0.0
        %8850 = vmatpush2.msra.mxu0 0.0
        %8851 = vmatprep.subr.mxu0 0.0
        %8852 = vmatpush2.msra.mxu0 0.0
        %8853 = vmatprep.subr.mxu0 0.0
        %8854 = vmatpush2.msra.mxu0 0.0
        %8855 = vmatprep.subr.mxu0 0.0
        %8856 = vmatpush2.msra.mxu0 0.0
        %8857 = vmatprep.subr.mxu0 0.0
        %8858 = vmatpush2.msra.mxu0 0.0
        %8859 = vmatprep.subr.mxu0 0.0
        %8860 = vmatpush2.msra.mxu0 0.0
        %8861 = vmatprep.subr.mxu0 0.0
        %8862 = vmatpush2.msra.mxu0 0.0
        %8863 = vmatprep.subr.mxu0 0.0
        %8864 = vmatpush2.msra.mxu0 0.0
        %8865 = vmatprep.subr.mxu0 0.0
        %8866 = vmatpush2.msra.mxu0 0.0
        %8867 = vmatprep.subr.mxu0 0.0
        %8868 = vmatpush2.msra.mxu0 0.0
        %8869 = vmatprep.subr.mxu0 0.0
        %8870 = vmatpush2.msra.mxu0 0.0
        %8871 = vmatprep.subr.mxu0 0.0
        %8872 = vmatpush2.msra.mxu0 0.0
        %8873 = vmatprep.subr.mxu0 0.0
        %8874 = vmatpush2.msra.mxu0 0.0
        %8875 = vmatprep.subr.mxu0 0.0
        %8876 = vmatpush2.msra.mxu0 0.0
        %8877 = vmatprep.mubr.f32.mxu0 0.0
        %8878 = vmatmul.mubr.f32.gmra.mxu0 %v8811
        %v8879 = vpop.f32.mrf.mxu0
        %v8880 = vadd.f32 0.0, %v8879
        %v8881 = vpop.f32.mrf.mxu0
        %8882 = vdwg.mxu0
        %v8883 = vadd.f32 %v8730, %v8880
        %s8884 = scalar_lea.vmem %s7, 40
        %v8885 = vld [vmem:[%s8884] sm:$0xf]
        %v8887 = vsel %vm4814, %v8885, 0
        %8889 = vmatprep.subr.mxu0 0.0
        %8890 = vmatpush1.msra.mxu0 0.0
        %8891 = vmatprep.subr.mxu0 0.0
        %8892 = vmatpush1.msra.mxu0 0.0
        %8893 = vmatprep.subr.mxu0 0.0
        %8894 = vmatpush1.msra.mxu0 0.0
        %8895 = vmatprep.subr.mxu0 0.0
        %8896 = vmatpush1.msra.mxu0 0.0
        %8897 = vmatprep.subr.mxu0 0.0
        %8898 = vmatpush1.msra.mxu0 0.0
        %8899 = vmatprep.subr.mxu0 0.0
        %8900 = vmatpush1.msra.mxu0 0.0
        %8901 = vmatprep.subr.mxu0 0.0
        %8902 = vmatpush1.msra.mxu0 0.0
        %8903 = vmatprep.subr.mxu0 0.0
        %8904 = vmatpush1.msra.mxu0 0.0
        %8905 = vmatprep.subr.mxu0 0.0
        %8906 = vmatpush1.msra.mxu0 0.0
        %8907 = vmatprep.subr.mxu0 0.0
        %8908 = vmatpush1.msra.mxu0 0.0
        %8909 = vmatprep.subr.mxu0 0.0
        %8910 = vmatpush1.msra.mxu0 0.0
        %8911 = vmatprep.subr.mxu0 0.0
        %8912 = vmatpush1.msra.mxu0 0.0
        %8913 = vmatprep.subr.mxu0 0.0
        %8914 = vmatpush1.msra.mxu0 0.0
        %8915 = vmatprep.subr.mxu0 0.0
        %8916 = vmatpush1.msra.mxu0 0.0
        %8917 = vmatprep.subr.mxu0 0.0
        %8918 = vmatpush1.msra.mxu0 %v7353
        %8919 = vmatprep.subr.mxu0 0.0
        %8920 = vmatpush1.msra.mxu0 %v7352
        %8921 = vmatprep.subr.mxu0 0.0
        %8922 = vmatpush2.msra.mxu0 0.0
        %8923 = vmatprep.subr.mxu0 0.0
        %8924 = vmatpush2.msra.mxu0 0.0
        %8925 = vmatprep.subr.mxu0 0.0
        %8926 = vmatpush2.msra.mxu0 0.0
        %8927 = vmatprep.subr.mxu0 0.0
        %8928 = vmatpush2.msra.mxu0 0.0
        %8929 = vmatprep.subr.mxu0 0.0
        %8930 = vmatpush2.msra.mxu0 0.0
        %8931 = vmatprep.subr.mxu0 0.0
        %8932 = vmatpush2.msra.mxu0 0.0
        %8933 = vmatprep.subr.mxu0 0.0
        %8934 = vmatpush2.msra.mxu0 0.0
        %8935 = vmatprep.subr.mxu0 0.0
        %8936 = vmatpush2.msra.mxu0 0.0
        %8937 = vmatprep.subr.mxu0 0.0
        %8938 = vmatpush2.msra.mxu0 0.0
        %8939 = vmatprep.subr.mxu0 0.0
        %8940 = vmatpush2.msra.mxu0 0.0
        %8941 = vmatprep.subr.mxu0 0.0
        %8942 = vmatpush2.msra.mxu0 0.0
        %8943 = vmatprep.subr.mxu0 0.0
        %8944 = vmatpush2.msra.mxu0 0.0
        %8945 = vmatprep.subr.mxu0 0.0
        %8946 = vmatpush2.msra.mxu0 0.0
        %8947 = vmatprep.subr.mxu0 0.0
        %8948 = vmatpush2.msra.mxu0 0.0
        %8949 = vmatprep.subr.mxu0 0.0
        %8950 = vmatpush2.msra.mxu0 0.0
        %8951 = vmatprep.subr.mxu0 0.0
        %8952 = vmatpush2.msra.mxu0 0.0
        %8953 = vmatprep.mubr.f32.mxu0 0.0
        %8954 = vmatmul.mubr.f32.gmra.mxu0 %v8887
        %v8955 = vpop.f32.mrf.mxu0
        %v8956 = vadd.f32 0.0, %v8955
        %v8957 = vpop.f32.mrf.mxu0
        %8958 = vdwg.mxu0
        %v8959 = vld [vmem:[%s8 + $0x140] sm:$0xff]
        %v8960 = vld [vmem:[%s8 + $0x148] sm:$0xff]
        %v8961 = vld [vmem:[%s8 + $0x150] sm:$0xff]
        %v8962 = vld [vmem:[%s8 + $0x158] sm:$0xff]
        %v8964 = vsel %vm7513, %v8956, 0
        %8966 = vmatprep.subr.mxu0 0.0
        %8967 = vmatpush1.msra.mxu0 0.0
        %8968 = vmatprep.subr.mxu0 0.0
        %8969 = vmatpush1.msra.mxu0 0.0
        %8970 = vmatprep.subr.mxu0 0.0
        %8971 = vmatpush1.msra.mxu0 0.0
        %8972 = vmatprep.subr.mxu0 0.0
        %8973 = vmatpush1.msra.mxu0 0.0
        %8974 = vmatprep.subr.mxu0 0.0
        %8975 = vmatpush1.msra.mxu0 0.0
        %8976 = vmatprep.subr.mxu0 0.0
        %8977 = vmatpush1.msra.mxu0 0.0
        %8978 = vmatprep.subr.mxu0 0.0
        %8979 = vmatpush1.msra.mxu0 0.0
        %8980 = vmatprep.subr.mxu0 0.0
        %8981 = vmatpush1.msra.mxu0 0.0
        %8982 = vmatprep.subr.mxu0 0.0
        %8983 = vmatpush1.msra.mxu0 0.0
        %8984 = vmatprep.subr.mxu0 0.0
        %8985 = vmatpush1.msra.mxu0 0.0
        %8986 = vmatprep.subr.mxu0 0.0
        %8987 = vmatpush1.msra.mxu0 0.0
        %8988 = vmatprep.subr.mxu0 0.0
        %8989 = vmatpush1.msra.mxu0 0.0
        %8990 = vmatprep.subr.mxu0 0.0
        %8991 = vmatpush1.msra.mxu0 %v8962
        %8992 = vmatprep.subr.mxu0 0.0
        %8993 = vmatpush1.msra.mxu0 %v8961
        %8994 = vmatprep.subr.mxu0 0.0
        %8995 = vmatpush1.msra.mxu0 %v8960
        %8996 = vmatprep.subr.mxu0 0.0
        %8997 = vmatpush1.msra.mxu0 %v8959
        %8998 = vmatprep.subr.mxu0 0.0
        %8999 = vmatpush2.msra.mxu0 0.0
        %9000 = vmatprep.subr.mxu0 0.0
        %9001 = vmatpush2.msra.mxu0 0.0
        %9002 = vmatprep.subr.mxu0 0.0
        %9003 = vmatpush2.msra.mxu0 0.0
        %9004 = vmatprep.subr.mxu0 0.0
        %9005 = vmatpush2.msra.mxu0 0.0
        %9006 = vmatprep.subr.mxu0 0.0
        %9007 = vmatpush2.msra.mxu0 0.0
        %9008 = vmatprep.subr.mxu0 0.0
        %9009 = vmatpush2.msra.mxu0 0.0
        %9010 = vmatprep.subr.mxu0 0.0
        %9011 = vmatpush2.msra.mxu0 0.0
        %9012 = vmatprep.subr.mxu0 0.0
        %9013 = vmatpush2.msra.mxu0 0.0
        %9014 = vmatprep.subr.mxu0 0.0
        %9015 = vmatpush2.msra.mxu0 0.0
        %9016 = vmatprep.subr.mxu0 0.0
        %9017 = vmatpush2.msra.mxu0 0.0
        %9018 = vmatprep.subr.mxu0 0.0
        %9019 = vmatpush2.msra.mxu0 0.0
        %9020 = vmatprep.subr.mxu0 0.0
        %9021 = vmatpush2.msra.mxu0 0.0
        %9022 = vmatprep.subr.mxu0 0.0
        %9023 = vmatpush2.msra.mxu0 0.0
        %9024 = vmatprep.subr.mxu0 0.0
        %9025 = vmatpush2.msra.mxu0 0.0
        %9026 = vmatprep.subr.mxu0 0.0
        %9027 = vmatpush2.msra.mxu0 0.0
        %9028 = vmatprep.subr.mxu0 0.0
        %9029 = vmatpush2.msra.mxu0 0.0
        %9030 = vmatprep.mubr.f32.mxu0 0.0
        %9031 = vmatmul.mubr.f32.gmra.mxu0 %v8964
        %v9032 = vpop.f32.mrf.mxu0
        %v9033 = vadd.f32 0.0, %v9032
        %v9034 = vpop.f32.mrf.mxu0
        %9035 = vdwg.mxu0
        %v9036 = vadd.f32 %v8883, %v9033
        %s9037 = scalar_lea.vmem %s7, 44
        %v9038 = vld [vmem:[%s9037] sm:$0xf]
        %v9040 = vsel %vm4814, %v9038, 0
        %9042 = vmatprep.subr.mxu0 0.0
        %9043 = vmatpush1.msra.mxu0 0.0
        %9044 = vmatprep.subr.mxu0 0.0
        %9045 = vmatpush1.msra.mxu0 0.0
        %9046 = vmatprep.subr.mxu0 0.0
        %9047 = vmatpush1.msra.mxu0 0.0
        %9048 = vmatprep.subr.mxu0 0.0
        %9049 = vmatpush1.msra.mxu0 0.0
        %9050 = vmatprep.subr.mxu0 0.0
        %9051 = vmatpush1.msra.mxu0 0.0
        %9052 = vmatprep.subr.mxu0 0.0
        %9053 = vmatpush1.msra.mxu0 0.0
        %9054 = vmatprep.subr.mxu0 0.0
        %9055 = vmatpush1.msra.mxu0 0.0
        %9056 = vmatprep.subr.mxu0 0.0
        %9057 = vmatpush1.msra.mxu0 0.0
        %9058 = vmatprep.subr.mxu0 0.0
        %9059 = vmatpush1.msra.mxu0 0.0
        %9060 = vmatprep.subr.mxu0 0.0
        %9061 = vmatpush1.msra.mxu0 0.0
        %9062 = vmatprep.subr.mxu0 0.0
        %9063 = vmatpush1.msra.mxu0 0.0
        %9064 = vmatprep.subr.mxu0 0.0
        %9065 = vmatpush1.msra.mxu0 0.0
        %9066 = vmatprep.subr.mxu0 0.0
        %9067 = vmatpush1.msra.mxu0 0.0
        %9068 = vmatprep.subr.mxu0 0.0
        %9069 = vmatpush1.msra.mxu0 0.0
        %9070 = vmatprep.subr.mxu0 0.0
        %9071 = vmatpush1.msra.mxu0 %v7353
        %9072 = vmatprep.subr.mxu0 0.0
        %9073 = vmatpush1.msra.mxu0 %v7352
        %9074 = vmatprep.subr.mxu0 0.0
        %9075 = vmatpush2.msra.mxu0 0.0
        %9076 = vmatprep.subr.mxu0 0.0
        %9077 = vmatpush2.msra.mxu0 0.0
        %9078 = vmatprep.subr.mxu0 0.0
        %9079 = vmatpush2.msra.mxu0 0.0
        %9080 = vmatprep.subr.mxu0 0.0
        %9081 = vmatpush2.msra.mxu0 0.0
        %9082 = vmatprep.subr.mxu0 0.0
        %9083 = vmatpush2.msra.mxu0 0.0
        %9084 = vmatprep.subr.mxu0 0.0
        %9085 = vmatpush2.msra.mxu0 0.0
        %9086 = vmatprep.subr.mxu0 0.0
        %9087 = vmatpush2.msra.mxu0 0.0
        %9088 = vmatprep.subr.mxu0 0.0
        %9089 = vmatpush2.msra.mxu0 0.0
        %9090 = vmatprep.subr.mxu0 0.0
        %9091 = vmatpush2.msra.mxu0 0.0
        %9092 = vmatprep.subr.mxu0 0.0
        %9093 = vmatpush2.msra.mxu0 0.0
        %9094 = vmatprep.subr.mxu0 0.0
        %9095 = vmatpush2.msra.mxu0 0.0
        %9096 = vmatprep.subr.mxu0 0.0
        %9097 = vmatpush2.msra.mxu0 0.0
        %9098 = vmatprep.subr.mxu0 0.0
        %9099 = vmatpush2.msra.mxu0 0.0
        %9100 = vmatprep.subr.mxu0 0.0
        %9101 = vmatpush2.msra.mxu0 0.0
        %9102 = vmatprep.subr.mxu0 0.0
        %9103 = vmatpush2.msra.mxu0 0.0
        %9104 = vmatprep.subr.mxu0 0.0
        %9105 = vmatpush2.msra.mxu0 0.0
        %9106 = vmatprep.mubr.f32.mxu0 0.0
        %9107 = vmatmul.mubr.f32.gmra.mxu0 %v9040
        %v9108 = vpop.f32.mrf.mxu0
        %v9109 = vadd.f32 0.0, %v9108
        %v9110 = vpop.f32.mrf.mxu0
        %9111 = vdwg.mxu0
        %v9112 = vld [vmem:[%s8 + $0x160] sm:$0xff]
        %v9113 = vld [vmem:[%s8 + $0x168] sm:$0xff]
        %v9114 = vld [vmem:[%s8 + $0x170] sm:$0xff]
        %v9115 = vld [vmem:[%s8 + $0x178] sm:$0xff]
        %v9117 = vsel %vm7513, %v9109, 0
        %9119 = vmatprep.subr.mxu0 0.0
        %9120 = vmatpush1.msra.mxu0 0.0
        %9121 = vmatprep.subr.mxu0 0.0
        %9122 = vmatpush1.msra.mxu0 0.0
        %9123 = vmatprep.subr.mxu0 0.0
        %9124 = vmatpush1.msra.mxu0 0.0
        %9125 = vmatprep.subr.mxu0 0.0
        %9126 = vmatpush1.msra.mxu0 0.0
        %9127 = vmatprep.subr.mxu0 0.0
        %9128 = vmatpush1.msra.mxu0 0.0
        %9129 = vmatprep.subr.mxu0 0.0
        %9130 = vmatpush1.msra.mxu0 0.0
        %9131 = vmatprep.subr.mxu0 0.0
        %9132 = vmatpush1.msra.mxu0 0.0
        %9133 = vmatprep.subr.mxu0 0.0
        %9134 = vmatpush1.msra.mxu0 0.0
        %9135 = vmatprep.subr.mxu0 0.0
        %9136 = vmatpush1.msra.mxu0 0.0
        %9137 = vmatprep.subr.mxu0 0.0
        %9138 = vmatpush1.msra.mxu0 0.0
        %9139 = vmatprep.subr.mxu0 0.0
        %9140 = vmatpush1.msra.mxu0 0.0
        %9141 = vmatprep.subr.mxu0 0.0
        %9142 = vmatpush1.msra.mxu0 0.0
        %9143 = vmatprep.subr.mxu0 0.0
        %9144 = vmatpush1.msra.mxu0 %v9115
        %9145 = vmatprep.subr.mxu0 0.0
        %9146 = vmatpush1.msra.mxu0 %v9114
        %9147 = vmatprep.subr.mxu0 0.0
        %9148 = vmatpush1.msra.mxu0 %v9113
        %9149 = vmatprep.subr.mxu0 0.0
        %9150 = vmatpush1.msra.mxu0 %v9112
        %9151 = vmatprep.subr.mxu0 0.0
        %9152 = vmatpush2.msra.mxu0 0.0
        %9153 = vmatprep.subr.mxu0 0.0
        %9154 = vmatpush2.msra.mxu0 0.0
        %9155 = vmatprep.subr.mxu0 0.0
        %9156 = vmatpush2.msra.mxu0 0.0
        %9157 = vmatprep.subr.mxu0 0.0
        %9158 = vmatpush2.msra.mxu0 0.0
        %9159 = vmatprep.subr.mxu0 0.0
        %9160 = vmatpush2.msra.mxu0 0.0
        %9161 = vmatprep.subr.mxu0 0.0
        %9162 = vmatpush2.msra.mxu0 0.0
        %9163 = vmatprep.subr.mxu0 0.0
        %9164 = vmatpush2.msra.mxu0 0.0
        %9165 = vmatprep.subr.mxu0 0.0
        %9166 = vmatpush2.msra.mxu0 0.0
        %9167 = vmatprep.subr.mxu0 0.0
        %9168 = vmatpush2.msra.mxu0 0.0
        %9169 = vmatprep.subr.mxu0 0.0
        %9170 = vmatpush2.msra.mxu0 0.0
        %9171 = vmatprep.subr.mxu0 0.0
        %9172 = vmatpush2.msra.mxu0 0.0
        %9173 = vmatprep.subr.mxu0 0.0
        %9174 = vmatpush2.msra.mxu0 0.0
        %9175 = vmatprep.subr.mxu0 0.0
        %9176 = vmatpush2.msra.mxu0 0.0
        %9177 = vmatprep.subr.mxu0 0.0
        %9178 = vmatpush2.msra.mxu0 0.0
        %9179 = vmatprep.subr.mxu0 0.0
        %9180 = vmatpush2.msra.mxu0 0.0
        %9181 = vmatprep.subr.mxu0 0.0
        %9182 = vmatpush2.msra.mxu0 0.0
        %9183 = vmatprep.mubr.f32.mxu0 0.0
        %9184 = vmatmul.mubr.f32.gmra.mxu0 %v9117
        %v9185 = vpop.f32.mrf.mxu0
        %v9186 = vadd.f32 0.0, %v9185
        %v9187 = vpop.f32.mrf.mxu0
        %9188 = vdwg.mxu0
        %v9189 = vadd.f32 %v9036, %v9186
        %s9190 = scalar_lea.vmem %s7, 48
        %v9191 = vld [vmem:[%s9190] sm:$0xf]
        %v9193 = vsel %vm4814, %v9191, 0
        %9195 = vmatprep.subr.mxu0 0.0
        %9196 = vmatpush1.msra.mxu0 0.0
        %9197 = vmatprep.subr.mxu0 0.0
        %9198 = vmatpush1.msra.mxu0 0.0
        %9199 = vmatprep.subr.mxu0 0.0
        %9200 = vmatpush1.msra.mxu0 0.0
        %9201 = vmatprep.subr.mxu0 0.0
        %9202 = vmatpush1.msra.mxu0 0.0
        %9203 = vmatprep.subr.mxu0 0.0
        %9204 = vmatpush1.msra.mxu0 0.0
        %9205 = vmatprep.subr.mxu0 0.0
        %9206 = vmatpush1.msra.mxu0 0.0
        %9207 = vmatprep.subr.mxu0 0.0
        %9208 = vmatpush1.msra.mxu0 0.0
        %9209 = vmatprep.subr.mxu0 0.0
        %9210 = vmatpush1.msra.mxu0 0.0
        %9211 = vmatprep.subr.mxu0 0.0
        %9212 = vmatpush1.msra.mxu0 0.0
        %9213 = vmatprep.subr.mxu0 0.0
        %9214 = vmatpush1.msra.mxu0 0.0
        %9215 = vmatprep.subr.mxu0 0.0
        %9216 = vmatpush1.msra.mxu0 0.0
        %9217 = vmatprep.subr.mxu0 0.0
        %9218 = vmatpush1.msra.mxu0 0.0
        %9219 = vmatprep.subr.mxu0 0.0
        %9220 = vmatpush1.msra.mxu0 0.0
        %9221 = vmatprep.subr.mxu0 0.0
        %9222 = vmatpush1.msra.mxu0 0.0
        %9223 = vmatprep.subr.mxu0 0.0
        %9224 = vmatpush1.msra.mxu0 %v7353
        %9225 = vmatprep.subr.mxu0 0.0
        %9226 = vmatpush1.msra.mxu0 %v7352
        %9227 = vmatprep.subr.mxu0 0.0
        %9228 = vmatpush2.msra.mxu0 0.0
        %9229 = vmatprep.subr.mxu0 0.0
        %9230 = vmatpush2.msra.mxu0 0.0
        %9231 = vmatprep.subr.mxu0 0.0
        %9232 = vmatpush2.msra.mxu0 0.0
        %9233 = vmatprep.subr.mxu0 0.0
        %9234 = vmatpush2.msra.mxu0 0.0
        %9235 = vmatprep.subr.mxu0 0.0
        %9236 = vmatpush2.msra.mxu0 0.0
        %9237 = vmatprep.subr.mxu0 0.0
        %9238 = vmatpush2.msra.mxu0 0.0
        %9239 = vmatprep.subr.mxu0 0.0
        %9240 = vmatpush2.msra.mxu0 0.0
        %9241 = vmatprep.subr.mxu0 0.0
        %9242 = vmatpush2.msra.mxu0 0.0
        %9243 = vmatprep.subr.mxu0 0.0
        %9244 = vmatpush2.msra.mxu0 0.0
        %9245 = vmatprep.subr.mxu0 0.0
        %9246 = vmatpush2.msra.mxu0 0.0
        %9247 = vmatprep.subr.mxu0 0.0
        %9248 = vmatpush2.msra.mxu0 0.0
        %9249 = vmatprep.subr.mxu0 0.0
        %9250 = vmatpush2.msra.mxu0 0.0
        %9251 = vmatprep.subr.mxu0 0.0
        %9252 = vmatpush2.msra.mxu0 0.0
        %9253 = vmatprep.subr.mxu0 0.0
        %9254 = vmatpush2.msra.mxu0 0.0
        %9255 = vmatprep.subr.mxu0 0.0
        %9256 = vmatpush2.msra.mxu0 0.0
        %9257 = vmatprep.subr.mxu0 0.0
        %9258 = vmatpush2.msra.mxu0 0.0
        %9259 = vmatprep.mubr.f32.mxu0 0.0
        %9260 = vmatmul.mubr.f32.gmra.mxu0 %v9193
        %v9261 = vpop.f32.mrf.mxu0
        %v9262 = vadd.f32 0.0, %v9261
        %v9263 = vpop.f32.mrf.mxu0
        %9264 = vdwg.mxu0
        %v9265 = vld [vmem:[%s8 + $0x180] sm:$0xff]
        %v9266 = vld [vmem:[%s8 + $0x188] sm:$0xff]
        %v9267 = vld [vmem:[%s8 + $0x190] sm:$0xff]
        %v9268 = vld [vmem:[%s8 + $0x198] sm:$0xff]
        %v9270 = vsel %vm7513, %v9262, 0
        %9272 = vmatprep.subr.mxu0 0.0
        %9273 = vmatpush1.msra.mxu0 0.0
        %9274 = vmatprep.subr.mxu0 0.0
        %9275 = vmatpush1.msra.mxu0 0.0
        %9276 = vmatprep.subr.mxu0 0.0
        %9277 = vmatpush1.msra.mxu0 0.0
        %9278 = vmatprep.subr.mxu0 0.0
        %9279 = vmatpush1.msra.mxu0 0.0
        %9280 = vmatprep.subr.mxu0 0.0
        %9281 = vmatpush1.msra.mxu0 0.0
        %9282 = vmatprep.subr.mxu0 0.0
        %9283 = vmatpush1.msra.mxu0 0.0
        %9284 = vmatprep.subr.mxu0 0.0
        %9285 = vmatpush1.msra.mxu0 0.0
        %9286 = vmatprep.subr.mxu0 0.0
        %9287 = vmatpush1.msra.mxu0 0.0
        %9288 = vmatprep.subr.mxu0 0.0
        %9289 = vmatpush1.msra.mxu0 0.0
        %9290 = vmatprep.subr.mxu0 0.0
        %9291 = vmatpush1.msra.mxu0 0.0
        %9292 = vmatprep.subr.mxu0 0.0
        %9293 = vmatpush1.msra.mxu0 0.0
        %9294 = vmatprep.subr.mxu0 0.0
        %9295 = vmatpush1.msra.mxu0 0.0
        %9296 = vmatprep.subr.mxu0 0.0
        %9297 = vmatpush1.msra.mxu0 %v9268
        %9298 = vmatprep.subr.mxu0 0.0
        %9299 = vmatpush1.msra.mxu0 %v9267
        %9300 = vmatprep.subr.mxu0 0.0
        %9301 = vmatpush1.msra.mxu0 %v9266
        %9302 = vmatprep.subr.mxu0 0.0
        %9303 = vmatpush1.msra.mxu0 %v9265
        %9304 = vmatprep.subr.mxu0 0.0
        %9305 = vmatpush2.msra.mxu0 0.0
        %9306 = vmatprep.subr.mxu0 0.0
        %9307 = vmatpush2.msra.mxu0 0.0
        %9308 = vmatprep.subr.mxu0 0.0
        %9309 = vmatpush2.msra.mxu0 0.0
        %9310 = vmatprep.subr.mxu0 0.0
        %9311 = vmatpush2.msra.mxu0 0.0
        %9312 = vmatprep.subr.mxu0 0.0
        %9313 = vmatpush2.msra.mxu0 0.0
        %9314 = vmatprep.subr.mxu0 0.0
        %9315 = vmatpush2.msra.mxu0 0.0
        %9316 = vmatprep.subr.mxu0 0.0
        %9317 = vmatpush2.msra.mxu0 0.0
        %9318 = vmatprep.subr.mxu0 0.0
        %9319 = vmatpush2.msra.mxu0 0.0
        %9320 = vmatprep.subr.mxu0 0.0
        %9321 = vmatpush2.msra.mxu0 0.0
        %9322 = vmatprep.subr.mxu0 0.0
        %9323 = vmatpush2.msra.mxu0 0.0
        %9324 = vmatprep.subr.mxu0 0.0
        %9325 = vmatpush2.msra.mxu0 0.0
        %9326 = vmatprep.subr.mxu0 0.0
        %9327 = vmatpush2.msra.mxu0 0.0
        %9328 = vmatprep.subr.mxu0 0.0
        %9329 = vmatpush2.msra.mxu0 0.0
        %9330 = vmatprep.subr.mxu0 0.0
        %9331 = vmatpush2.msra.mxu0 0.0
        %9332 = vmatprep.subr.mxu0 0.0
        %9333 = vmatpush2.msra.mxu0 0.0
        %9334 = vmatprep.subr.mxu0 0.0
        %9335 = vmatpush2.msra.mxu0 0.0
        %9336 = vmatprep.mubr.f32.mxu0 0.0
        %9337 = vmatmul.mubr.f32.gmra.mxu0 %v9270
        %v9338 = vpop.f32.mrf.mxu0
        %v9339 = vadd.f32 0.0, %v9338
        %v9340 = vpop.f32.mrf.mxu0
        %9341 = vdwg.mxu0
        %v9342 = vadd.f32 %v9189, %v9339
        %s9343 = scalar_lea.vmem %s7, 52
        %v9344 = vld [vmem:[%s9343] sm:$0xf]
        %v9346 = vsel %vm4814, %v9344, 0
        %9348 = vmatprep.subr.mxu0 0.0
        %9349 = vmatpush1.msra.mxu0 0.0
        %9350 = vmatprep.subr.mxu0 0.0
        %9351 = vmatpush1.msra.mxu0 0.0
        %9352 = vmatprep.subr.mxu0 0.0
        %9353 = vmatpush1.msra.mxu0 0.0
        %9354 = vmatprep.subr.mxu0 0.0
        %9355 = vmatpush1.msra.mxu0 0.0
        %9356 = vmatprep.subr.mxu0 0.0
        %9357 = vmatpush1.msra.mxu0 0.0
        %9358 = vmatprep.subr.mxu0 0.0
        %9359 = vmatpush1.msra.mxu0 0.0
        %9360 = vmatprep.subr.mxu0 0.0
        %9361 = vmatpush1.msra.mxu0 0.0
        %9362 = vmatprep.subr.mxu0 0.0
        %9363 = vmatpush1.msra.mxu0 0.0
        %9364 = vmatprep.subr.mxu0 0.0
        %9365 = vmatpush1.msra.mxu0 0.0
        %9366 = vmatprep.subr.mxu0 0.0
        %9367 = vmatpush1.msra.mxu0 0.0
        %9368 = vmatprep.subr.mxu0 0.0
        %9369 = vmatpush1.msra.mxu0 0.0
        %9370 = vmatprep.subr.mxu0 0.0
        %9371 = vmatpush1.msra.mxu0 0.0
        %9372 = vmatprep.subr.mxu0 0.0
        %9373 = vmatpush1.msra.mxu0 0.0
        %9374 = vmatprep.subr.mxu0 0.0
        %9375 = vmatpush1.msra.mxu0 0.0
        %9376 = vmatprep.subr.mxu0 0.0
        %9377 = vmatpush1.msra.mxu0 %v7353
        %9378 = vmatprep.subr.mxu0 0.0
        %9379 = vmatpush1.msra.mxu0 %v7352
        %9380 = vmatprep.subr.mxu0 0.0
        %9381 = vmatpush2.msra.mxu0 0.0
        %9382 = vmatprep.subr.mxu0 0.0
        %9383 = vmatpush2.msra.mxu0 0.0
        %9384 = vmatprep.subr.mxu0 0.0
        %9385 = vmatpush2.msra.mxu0 0.0
        %9386 = vmatprep.subr.mxu0 0.0
        %9387 = vmatpush2.msra.mxu0 0.0
        %9388 = vmatprep.subr.mxu0 0.0
        %9389 = vmatpush2.msra.mxu0 0.0
        %9390 = vmatprep.subr.mxu0 0.0
        %9391 = vmatpush2.msra.mxu0 0.0
        %9392 = vmatprep.subr.mxu0 0.0
        %9393 = vmatpush2.msra.mxu0 0.0
        %9394 = vmatprep.subr.mxu0 0.0
        %9395 = vmatpush2.msra.mxu0 0.0
        %9396 = vmatprep.subr.mxu0 0.0
        %9397 = vmatpush2.msra.mxu0 0.0
        %9398 = vmatprep.subr.mxu0 0.0
        %9399 = vmatpush2.msra.mxu0 0.0
        %9400 = vmatprep.subr.mxu0 0.0
        %9401 = vmatpush2.msra.mxu0 0.0
        %9402 = vmatprep.subr.mxu0 0.0
        %9403 = vmatpush2.msra.mxu0 0.0
        %9404 = vmatprep.subr.mxu0 0.0
        %9405 = vmatpush2.msra.mxu0 0.0
        %9406 = vmatprep.subr.mxu0 0.0
        %9407 = vmatpush2.msra.mxu0 0.0
        %9408 = vmatprep.subr.mxu0 0.0
        %9409 = vmatpush2.msra.mxu0 0.0
        %9410 = vmatprep.subr.mxu0 0.0
        %9411 = vmatpush2.msra.mxu0 0.0
        %9412 = vmatprep.mubr.f32.mxu0 0.0
        %9413 = vmatmul.mubr.f32.gmra.mxu0 %v9346
        %v9414 = vpop.f32.mrf.mxu0
        %v9415 = vadd.f32 0.0, %v9414
        %v9416 = vpop.f32.mrf.mxu0
        %9417 = vdwg.mxu0
        %v9418 = vld [vmem:[%s8 + $0x1a0] sm:$0xff]
        %v9419 = vld [vmem:[%s8 + $0x1a8] sm:$0xff]
        %v9420 = vld [vmem:[%s8 + $0x1b0] sm:$0xff]
        %v9421 = vld [vmem:[%s8 + $0x1b8] sm:$0xff]
        %v9423 = vsel %vm7513, %v9415, 0
        %9425 = vmatprep.subr.mxu0 0.0
        %9426 = vmatpush1.msra.mxu0 0.0
        %9427 = vmatprep.subr.mxu0 0.0
        %9428 = vmatpush1.msra.mxu0 0.0
        %9429 = vmatprep.subr.mxu0 0.0
        %9430 = vmatpush1.msra.mxu0 0.0
        %9431 = vmatprep.subr.mxu0 0.0
        %9432 = vmatpush1.msra.mxu0 0.0
        %9433 = vmatprep.subr.mxu0 0.0
        %9434 = vmatpush1.msra.mxu0 0.0
        %9435 = vmatprep.subr.mxu0 0.0
        %9436 = vmatpush1.msra.mxu0 0.0
        %9437 = vmatprep.subr.mxu0 0.0
        %9438 = vmatpush1.msra.mxu0 0.0
        %9439 = vmatprep.subr.mxu0 0.0
        %9440 = vmatpush1.msra.mxu0 0.0
        %9441 = vmatprep.subr.mxu0 0.0
        %9442 = vmatpush1.msra.mxu0 0.0
        %9443 = vmatprep.subr.mxu0 0.0
        %9444 = vmatpush1.msra.mxu0 0.0
        %9445 = vmatprep.subr.mxu0 0.0
        %9446 = vmatpush1.msra.mxu0 0.0
        %9447 = vmatprep.subr.mxu0 0.0
        %9448 = vmatpush1.msra.mxu0 0.0
        %9449 = vmatprep.subr.mxu0 0.0
        %9450 = vmatpush1.msra.mxu0 %v9421
        %9451 = vmatprep.subr.mxu0 0.0
        %9452 = vmatpush1.msra.mxu0 %v9420
        %9453 = vmatprep.subr.mxu0 0.0
        %9454 = vmatpush1.msra.mxu0 %v9419
        %9455 = vmatprep.subr.mxu0 0.0
        %9456 = vmatpush1.msra.mxu0 %v9418
        %9457 = vmatprep.subr.mxu0 0.0
        %9458 = vmatpush2.msra.mxu0 0.0
        %9459 = vmatprep.subr.mxu0 0.0
        %9460 = vmatpush2.msra.mxu0 0.0
        %9461 = vmatprep.subr.mxu0 0.0
        %9462 = vmatpush2.msra.mxu0 0.0
        %9463 = vmatprep.subr.mxu0 0.0
        %9464 = vmatpush2.msra.mxu0 0.0
        %9465 = vmatprep.subr.mxu0 0.0
        %9466 = vmatpush2.msra.mxu0 0.0
        %9467 = vmatprep.subr.mxu0 0.0
        %9468 = vmatpush2.msra.mxu0 0.0
        %9469 = vmatprep.subr.mxu0 0.0
        %9470 = vmatpush2.msra.mxu0 0.0
        %9471 = vmatprep.subr.mxu0 0.0
        %9472 = vmatpush2.msra.mxu0 0.0
        %9473 = vmatprep.subr.mxu0 0.0
        %9474 = vmatpush2.msra.mxu0 0.0
        %9475 = vmatprep.subr.mxu0 0.0
        %9476 = vmatpush2.msra.mxu0 0.0
        %9477 = vmatprep.subr.mxu0 0.0
        %9478 = vmatpush2.msra.mxu0 0.0
        %9479 = vmatprep.subr.mxu0 0.0
        %9480 = vmatpush2.msra.mxu0 0.0
        %9481 = vmatprep.subr.mxu0 0.0
        %9482 = vmatpush2.msra.mxu0 0.0
        %9483 = vmatprep.subr.mxu0 0.0
        %9484 = vmatpush2.msra.mxu0 0.0
        %9485 = vmatprep.subr.mxu0 0.0
        %9486 = vmatpush2.msra.mxu0 0.0
        %9487 = vmatprep.subr.mxu0 0.0
        %9488 = vmatpush2.msra.mxu0 0.0
        %9489 = vmatprep.mubr.f32.mxu0 0.0
        %9490 = vmatmul.mubr.f32.gmra.mxu0 %v9423
        %v9491 = vpop.f32.mrf.mxu0
        %v9492 = vadd.f32 0.0, %v9491
        %v9493 = vpop.f32.mrf.mxu0
        %9494 = vdwg.mxu0
        %v9495 = vadd.f32 %v9342, %v9492
        %s9496 = scalar_lea.vmem %s7, 56
        %v9497 = vld [vmem:[%s9496] sm:$0xf]
        %v9499 = vsel %vm4814, %v9497, 0
        %9501 = vmatprep.subr.mxu0 0.0
        %9502 = vmatpush1.msra.mxu0 0.0
        %9503 = vmatprep.subr.mxu0 0.0
        %9504 = vmatpush1.msra.mxu0 0.0
        %9505 = vmatprep.subr.mxu0 0.0
        %9506 = vmatpush1.msra.mxu0 0.0
        %9507 = vmatprep.subr.mxu0 0.0
        %9508 = vmatpush1.msra.mxu0 0.0
        %9509 = vmatprep.subr.mxu0 0.0
        %9510 = vmatpush1.msra.mxu0 0.0
        %9511 = vmatprep.subr.mxu0 0.0
        %9512 = vmatpush1.msra.mxu0 0.0
        %9513 = vmatprep.subr.mxu0 0.0
        %9514 = vmatpush1.msra.mxu0 0.0
        %9515 = vmatprep.subr.mxu0 0.0
        %9516 = vmatpush1.msra.mxu0 0.0
        %9517 = vmatprep.subr.mxu0 0.0
        %9518 = vmatpush1.msra.mxu0 0.0
        %9519 = vmatprep.subr.mxu0 0.0
        %9520 = vmatpush1.msra.mxu0 0.0
        %9521 = vmatprep.subr.mxu0 0.0
        %9522 = vmatpush1.msra.mxu0 0.0
        %9523 = vmatprep.subr.mxu0 0.0
        %9524 = vmatpush1.msra.mxu0 0.0
        %9525 = vmatprep.subr.mxu0 0.0
        %9526 = vmatpush1.msra.mxu0 0.0
        %9527 = vmatprep.subr.mxu0 0.0
        %9528 = vmatpush1.msra.mxu0 0.0
        %9529 = vmatprep.subr.mxu0 0.0
        %9530 = vmatpush1.msra.mxu0 %v7353
        %9531 = vmatprep.subr.mxu0 0.0
        %9532 = vmatpush1.msra.mxu0 %v7352
        %9533 = vmatprep.subr.mxu0 0.0
        %9534 = vmatpush2.msra.mxu0 0.0
        %9535 = vmatprep.subr.mxu0 0.0
        %9536 = vmatpush2.msra.mxu0 0.0
        %9537 = vmatprep.subr.mxu0 0.0
        %9538 = vmatpush2.msra.mxu0 0.0
        %9539 = vmatprep.subr.mxu0 0.0
        %9540 = vmatpush2.msra.mxu0 0.0
        %9541 = vmatprep.subr.mxu0 0.0
        %9542 = vmatpush2.msra.mxu0 0.0
        %9543 = vmatprep.subr.mxu0 0.0
        %9544 = vmatpush2.msra.mxu0 0.0
        %9545 = vmatprep.subr.mxu0 0.0
        %9546 = vmatpush2.msra.mxu0 0.0
        %9547 = vmatprep.subr.mxu0 0.0
        %9548 = vmatpush2.msra.mxu0 0.0
        %9549 = vmatprep.subr.mxu0 0.0
        %9550 = vmatpush2.msra.mxu0 0.0
        %9551 = vmatprep.subr.mxu0 0.0
        %9552 = vmatpush2.msra.mxu0 0.0
        %9553 = vmatprep.subr.mxu0 0.0
        %9554 = vmatpush2.msra.mxu0 0.0
        %9555 = vmatprep.subr.mxu0 0.0
        %9556 = vmatpush2.msra.mxu0 0.0
        %9557 = vmatprep.subr.mxu0 0.0
        %9558 = vmatpush2.msra.mxu0 0.0
        %9559 = vmatprep.subr.mxu0 0.0
        %9560 = vmatpush2.msra.mxu0 0.0
        %9561 = vmatprep.subr.mxu0 0.0
        %9562 = vmatpush2.msra.mxu0 0.0
        %9563 = vmatprep.subr.mxu0 0.0
        %9564 = vmatpush2.msra.mxu0 0.0
        %9565 = vmatprep.mubr.f32.mxu0 0.0
        %9566 = vmatmul.mubr.f32.gmra.mxu0 %v9499
        %v9567 = vpop.f32.mrf.mxu0
        %v9568 = vadd.f32 0.0, %v9567
        %v9569 = vpop.f32.mrf.mxu0
        %9570 = vdwg.mxu0
        %v9571 = vld [vmem:[%s8 + $0x1c0] sm:$0xff]
        %v9572 = vld [vmem:[%s8 + $0x1c8] sm:$0xff]
        %v9573 = vld [vmem:[%s8 + $0x1d0] sm:$0xff]
        %v9574 = vld [vmem:[%s8 + $0x1d8] sm:$0xff]
        %v9576 = vsel %vm7513, %v9568, 0
        %9578 = vmatprep.subr.mxu0 0.0
        %9579 = vmatpush1.msra.mxu0 0.0
        %9580 = vmatprep.subr.mxu0 0.0
        %9581 = vmatpush1.msra.mxu0 0.0
        %9582 = vmatprep.subr.mxu0 0.0
        %9583 = vmatpush1.msra.mxu0 0.0
        %9584 = vmatprep.subr.mxu0 0.0
        %9585 = vmatpush1.msra.mxu0 0.0
        %9586 = vmatprep.subr.mxu0 0.0
        %9587 = vmatpush1.msra.mxu0 0.0
        %9588 = vmatprep.subr.mxu0 0.0
        %9589 = vmatpush1.msra.mxu0 0.0
        %9590 = vmatprep.subr.mxu0 0.0
        %9591 = vmatpush1.msra.mxu0 0.0
        %9592 = vmatprep.subr.mxu0 0.0
        %9593 = vmatpush1.msra.mxu0 0.0
        %9594 = vmatprep.subr.mxu0 0.0
        %9595 = vmatpush1.msra.mxu0 0.0
        %9596 = vmatprep.subr.mxu0 0.0
        %9597 = vmatpush1.msra.mxu0 0.0
        %9598 = vmatprep.subr.mxu0 0.0
        %9599 = vmatpush1.msra.mxu0 0.0
        %9600 = vmatprep.subr.mxu0 0.0
        %9601 = vmatpush1.msra.mxu0 0.0
        %9602 = vmatprep.subr.mxu0 0.0
        %9603 = vmatpush1.msra.mxu0 %v9574
        %9604 = vmatprep.subr.mxu0 0.0
        %9605 = vmatpush1.msra.mxu0 %v9573
        %9606 = vmatprep.subr.mxu0 0.0
        %9607 = vmatpush1.msra.mxu0 %v9572
        %9608 = vmatprep.subr.mxu0 0.0
        %9609 = vmatpush1.msra.mxu0 %v9571
        %9610 = vmatprep.subr.mxu0 0.0
        %9611 = vmatpush2.msra.mxu0 0.0
        %9612 = vmatprep.subr.mxu0 0.0
        %9613 = vmatpush2.msra.mxu0 0.0
        %9614 = vmatprep.subr.mxu0 0.0
        %9615 = vmatpush2.msra.mxu0 0.0
        %9616 = vmatprep.subr.mxu0 0.0
        %9617 = vmatpush2.msra.mxu0 0.0
        %9618 = vmatprep.subr.mxu0 0.0
        %9619 = vmatpush2.msra.mxu0 0.0
        %9620 = vmatprep.subr.mxu0 0.0
        %9621 = vmatpush2.msra.mxu0 0.0
        %9622 = vmatprep.subr.mxu0 0.0
        %9623 = vmatpush2.msra.mxu0 0.0
        %9624 = vmatprep.subr.mxu0 0.0
        %9625 = vmatpush2.msra.mxu0 0.0
        %9626 = vmatprep.subr.mxu0 0.0
        %9627 = vmatpush2.msra.mxu0 0.0
        %9628 = vmatprep.subr.mxu0 0.0
        %9629 = vmatpush2.msra.mxu0 0.0
        %9630 = vmatprep.subr.mxu0 0.0
        %9631 = vmatpush2.msra.mxu0 0.0
        %9632 = vmatprep.subr.mxu0 0.0
        %9633 = vmatpush2.msra.mxu0 0.0
        %9634 = vmatprep.subr.mxu0 0.0
        %9635 = vmatpush2.msra.mxu0 0.0
        %9636 = vmatprep.subr.mxu0 0.0
        %9637 = vmatpush2.msra.mxu0 0.0
        %9638 = vmatprep.subr.mxu0 0.0
        %9639 = vmatpush2.msra.mxu0 0.0
        %9640 = vmatprep.subr.mxu0 0.0
        %9641 = vmatpush2.msra.mxu0 0.0
        %9642 = vmatprep.mubr.f32.mxu0 0.0
        %9643 = vmatmul.mubr.f32.gmra.mxu0 %v9576
        %v9644 = vpop.f32.mrf.mxu0
        %v9645 = vadd.f32 0.0, %v9644
        %v9646 = vpop.f32.mrf.mxu0
        %9647 = vdwg.mxu0
        %v9648 = vadd.f32 %v9495, %v9645
        %s9649 = scalar_lea.vmem %s7, 60
        %v9650 = vld [vmem:[%s9649] sm:$0xf]
        %v9652 = vsel %vm4814, %v9650, 0
        %9654 = vmatprep.subr.mxu0 0.0
        %9655 = vmatpush1.msra.mxu0 0.0
        %9656 = vmatprep.subr.mxu0 0.0
        %9657 = vmatpush1.msra.mxu0 0.0
        %9658 = vmatprep.subr.mxu0 0.0
        %9659 = vmatpush1.msra.mxu0 0.0
        %9660 = vmatprep.subr.mxu0 0.0
        %9661 = vmatpush1.msra.mxu0 0.0
        %9662 = vmatprep.subr.mxu0 0.0
        %9663 = vmatpush1.msra.mxu0 0.0
        %9664 = vmatprep.subr.mxu0 0.0
        %9665 = vmatpush1.msra.mxu0 0.0
        %9666 = vmatprep.subr.mxu0 0.0
        %9667 = vmatpush1.msra.mxu0 0.0
        %9668 = vmatprep.subr.mxu0 0.0
        %9669 = vmatpush1.msra.mxu0 0.0
        %9670 = vmatprep.subr.mxu0 0.0
        %9671 = vmatpush1.msra.mxu0 0.0
        %9672 = vmatprep.subr.mxu0 0.0
        %9673 = vmatpush1.msra.mxu0 0.0
        %9674 = vmatprep.subr.mxu0 0.0
        %9675 = vmatpush1.msra.mxu0 0.0
        %9676 = vmatprep.subr.mxu0 0.0
        %9677 = vmatpush1.msra.mxu0 0.0
        %9678 = vmatprep.subr.mxu0 0.0
        %9679 = vmatpush1.msra.mxu0 0.0
        %9680 = vmatprep.subr.mxu0 0.0
        %9681 = vmatpush1.msra.mxu0 0.0
        %9682 = vmatprep.subr.mxu0 0.0
        %9683 = vmatpush1.msra.mxu0 %v7353
        %9684 = vmatprep.subr.mxu0 0.0
        %9685 = vmatpush1.msra.mxu0 %v7352
        %9686 = vmatprep.subr.mxu0 0.0
        %9687 = vmatpush2.msra.mxu0 0.0
        %9688 = vmatprep.subr.mxu0 0.0
        %9689 = vmatpush2.msra.mxu0 0.0
        %9690 = vmatprep.subr.mxu0 0.0
        %9691 = vmatpush2.msra.mxu0 0.0
        %9692 = vmatprep.subr.mxu0 0.0
        %9693 = vmatpush2.msra.mxu0 0.0
        %9694 = vmatprep.subr.mxu0 0.0
        %9695 = vmatpush2.msra.mxu0 0.0
        %9696 = vmatprep.subr.mxu0 0.0
        %9697 = vmatpush2.msra.mxu0 0.0
        %9698 = vmatprep.subr.mxu0 0.0
        %9699 = vmatpush2.msra.mxu0 0.0
        %9700 = vmatprep.subr.mxu0 0.0
        %9701 = vmatpush2.msra.mxu0 0.0
        %9702 = vmatprep.subr.mxu0 0.0
        %9703 = vmatpush2.msra.mxu0 0.0
        %9704 = vmatprep.subr.mxu0 0.0
        %9705 = vmatpush2.msra.mxu0 0.0
        %9706 = vmatprep.subr.mxu0 0.0
        %9707 = vmatpush2.msra.mxu0 0.0
        %9708 = vmatprep.subr.mxu0 0.0
        %9709 = vmatpush2.msra.mxu0 0.0
        %9710 = vmatprep.subr.mxu0 0.0
        %9711 = vmatpush2.msra.mxu0 0.0
        %9712 = vmatprep.subr.mxu0 0.0
        %9713 = vmatpush2.msra.mxu0 0.0
        %9714 = vmatprep.subr.mxu0 0.0
        %9715 = vmatpush2.msra.mxu0 0.0
        %9716 = vmatprep.subr.mxu0 0.0
        %9717 = vmatpush2.msra.mxu0 0.0
        %9718 = vmatprep.mubr.f32.mxu0 0.0
        %9719 = vmatmul.mubr.f32.gmra.mxu0 %v9652
        %v9720 = vpop.f32.mrf.mxu0
        %v9721 = vadd.f32 0.0, %v9720
        %v9722 = vpop.f32.mrf.mxu0
        %9723 = vdwg.mxu0
        %v9724 = vld [vmem:[%s8 + $0x1e0] sm:$0xff]
        %v9725 = vld [vmem:[%s8 + $0x1e8] sm:$0xff]
        %v9726 = vld [vmem:[%s8 + $0x1f0] sm:$0xff]
        %v9727 = vld [vmem:[%s8 + $0x1f8] sm:$0xff]
        %v9729 = vsel %vm7513, %v9721, 0
        %9731 = vmatprep.subr.mxu0 0.0
        %9732 = vmatpush1.msra.mxu0 0.0
        %9733 = vmatprep.subr.mxu0 0.0
        %9734 = vmatpush1.msra.mxu0 0.0
        %9735 = vmatprep.subr.mxu0 0.0
        %9736 = vmatpush1.msra.mxu0 0.0
        %9737 = vmatprep.subr.mxu0 0.0
        %9738 = vmatpush1.msra.mxu0 0.0
        %9739 = vmatprep.subr.mxu0 0.0
        %9740 = vmatpush1.msra.mxu0 0.0
        %9741 = vmatprep.subr.mxu0 0.0
        %9742 = vmatpush1.msra.mxu0 0.0
        %9743 = vmatprep.subr.mxu0 0.0
        %9744 = vmatpush1.msra.mxu0 0.0
        %9745 = vmatprep.subr.mxu0 0.0
        %9746 = vmatpush1.msra.mxu0 0.0
        %9747 = vmatprep.subr.mxu0 0.0
        %9748 = vmatpush1.msra.mxu0 0.0
        %9749 = vmatprep.subr.mxu0 0.0
        %9750 = vmatpush1.msra.mxu0 0.0
        %9751 = vmatprep.subr.mxu0 0.0
        %9752 = vmatpush1.msra.mxu0 0.0
        %9753 = vmatprep.subr.mxu0 0.0
        %9754 = vmatpush1.msra.mxu0 0.0
        %9755 = vmatprep.subr.mxu0 0.0
        %9756 = vmatpush1.msra.mxu0 %v9727
        %9757 = vmatprep.subr.mxu0 0.0
        %9758 = vmatpush1.msra.mxu0 %v9726
        %9759 = vmatprep.subr.mxu0 0.0
        %9760 = vmatpush1.msra.mxu0 %v9725
        %9761 = vmatprep.subr.mxu0 0.0
        %9762 = vmatpush1.msra.mxu0 %v9724
        %9763 = vmatprep.subr.mxu0 0.0
        %9764 = vmatpush2.msra.mxu0 0.0
        %9765 = vmatprep.subr.mxu0 0.0
        %9766 = vmatpush2.msra.mxu0 0.0
        %9767 = vmatprep.subr.mxu0 0.0
        %9768 = vmatpush2.msra.mxu0 0.0
        %9769 = vmatprep.subr.mxu0 0.0
        %9770 = vmatpush2.msra.mxu0 0.0
        %9771 = vmatprep.subr.mxu0 0.0
        %9772 = vmatpush2.msra.mxu0 0.0
        %9773 = vmatprep.subr.mxu0 0.0
        %9774 = vmatpush2.msra.mxu0 0.0
        %9775 = vmatprep.subr.mxu0 0.0
        %9776 = vmatpush2.msra.mxu0 0.0
        %9777 = vmatprep.subr.mxu0 0.0
        %9778 = vmatpush2.msra.mxu0 0.0
        %9779 = vmatprep.subr.mxu0 0.0
        %9780 = vmatpush2.msra.mxu0 0.0
        %9781 = vmatprep.subr.mxu0 0.0
        %9782 = vmatpush2.msra.mxu0 0.0
        %9783 = vmatprep.subr.mxu0 0.0
        %9784 = vmatpush2.msra.mxu0 0.0
        %9785 = vmatprep.subr.mxu0 0.0
        %9786 = vmatpush2.msra.mxu0 0.0
        %9787 = vmatprep.subr.mxu0 0.0
        %9788 = vmatpush2.msra.mxu0 0.0
        %9789 = vmatprep.subr.mxu0 0.0
        %9790 = vmatpush2.msra.mxu0 0.0
        %9791 = vmatprep.subr.mxu0 0.0
        %9792 = vmatpush2.msra.mxu0 0.0
        %9793 = vmatprep.subr.mxu0 0.0
        %9794 = vmatpush2.msra.mxu0 0.0
        %9795 = vmatprep.mubr.f32.mxu0 0.0
        %9796 = vmatmul.mubr.f32.gmra.mxu0 %v9729
        %v9797 = vpop.f32.mrf.mxu0
        %v9798 = vadd.f32 0.0, %v9797
        %v9799 = vpop.f32.mrf.mxu0
        %9800 = vdwg.mxu0
        %v9801 = vadd.f32 %v9648, %v9798
        %v9802 = vld [vmem:[%s9] sm:$0x1]
        %v9804 = vlaneseq
        %v9805 = vshrl.u32 %v9804, 7
        %v9806 = vsub.s32 0, %v9805
        %v9807 = vrot.slane %v9802, %v9806
        %v9809 = vadd.f32 %v9801, %v9807
        %v9810 = vmax.f32 %v9809, 0.0
        %9811 = vst [vmem:[%s434] sm:$0xf] %v9810
        %p9812 = scmp.lt.s32.totalorder %s27, 1
        %s9813 = scalar_select %p9812, %s27, 1
        %s9814 = smul.addr %s9813, 8
        %s9815 = smul.addr %s9814, 8
        %s9816 = scalar_lea.vmem %s10, %s9815
        %s9817 = sand.u32 %s276, 1
        %s9818 = scalar_lea.sflag [#allocation3], %s9817
        %s9819 = sand.u32 %s276, 1
        %s9820 = smul.addr %s9819, 16
        %s9821 = scalar_lea.vmem [#allocation2], %s9820
        %p9822 = scmp.lt.s32.totalorder %s27, 1
        %s9823 = scalar_select %p9822, %s27, 1
        %s9824 = smul.addr %s9823, 4
        %s9825 = scalar_lea.vmem %s12, %s9824
        // Predicated region
        $region61: #{cnn_features_forward.1} parent=59 // pred_check
          %p9826 = pneg %p260
        $region62: #{cnn_features_forward.1} parent=59 // pred_check_branch
          %9828 = sbr.rel (%p9826) target = $region64
        $region63: #{cnn_features_forward.1} parent=59 // pred_region
          _
        $region64: #{cnn_features_forward.1} parent=59 // pred_fallthru
          _
        // Predicated region
        $region65: #{cnn_features_forward.1} parent=59 // pred_check
          %p9829 = pneg %p286
        $region66: #{cnn_features_forward.1} parent=59 // pred_check_branch
          %9831 = sbr.rel (%p9829) target = $region68
        $region67: #{cnn_features_forward.1} parent=59 // pred_region
          %s9833 = ssub.s32 256, 256
          %9834 = vsyncadd %s9818, %s9833
          %s9835 = smul.addr %s27, 2
          %s9836 = smul.addr %s9835, 128
          %s9837 = scalar_lea.hbm %s11, %s9836
          %s9838 = sshll.u32 %s9821, 4
          %s9839 = int_to_ptr.vmem [resolvable:$true] %s9838
          %9844 = dma.vmem_to_hbm [thread:$0]  %s9839, 256, %s9837, %s9818, 128, 128, 8
        $region68: #{cnn_features_forward.1} parent=59 // pred_fallthru
          _
        // Predicated region
        $region69: #{cnn_features_forward.1} parent=59 // pred_check
          %p9845 = pneg %p312
        $region70: #{cnn_features_forward.1} parent=59 // pred_check_branch
          %9847 = sbr.rel (%p9845) target = $region72
        $region71: #{cnn_features_forward.1} parent=59 // pred_region
          _
        $region72: #{cnn_features_forward.1} parent=59 // pred_fallthru
          _
      $region60: #{cnn_features_forward.1} parent=5 // pred_fallthru
        _
      %p9848 = scmp.le.s32.totalorder 2, %s22
      // Predicated region
      $region73: #{cnn_features_forward.1} parent=5 // pred_check
        %p9849 = pneg %p9848
      $region74: #{cnn_features_forward.1} parent=5 // pred_check_branch
        %9851 = sbr.rel (%p9849) target = $region76
      $region75: #{cnn_features_forward.1} parent=5 // pred_region
        %s9852 = ssub.s32 %s22, 2
        // Predicated region
        $region77: #{cnn_features_forward.1} parent=75 // pred_check
          %p9853 = pneg %p266
        $region78: #{cnn_features_forward.1} parent=75 // pred_check_branch
          %9855 = sbr.rel (%p9853) target = $region80
        $region79: #{cnn_features_forward.1} parent=75 // pred_region
          %p9856 = scmp.lt.s32.totalorder %s28, 1
          %s9857 = scalar_select %p9856, %s28, 1
          %s9858 = smul.addr %s9857, 8
          %s9859 = smul.addr %s9858, 8
          %s9860 = scalar_lea.vmem %s10, %s9859
        $region80: #{cnn_features_forward.1} parent=75 // pred_fallthru
          _
        // Predicated region
        $region81: #{cnn_features_forward.1} parent=75 // pred_check
          %p9861 = pneg %p292
        $region82: #{cnn_features_forward.1} parent=75 // pred_check_branch
          %9863 = sbr.rel (%p9861) target = $region84
        $region83: #{cnn_features_forward.1} parent=75 // pred_region
          %s9864 = sand.u32 %s277, 1
          %s9865 = scalar_lea.sflag [#allocation3], %s9864
          %s9866 = sand.u32 %s277, 1
          %s9867 = smul.addr %s9866, 16
          %s9868 = scalar_lea.vmem [#allocation2], %s9867
          %9869 = dma.done %s9865, 256
        $region84: #{cnn_features_forward.1} parent=75 // pred_fallthru
          _
        // Predicated region
        $region85: #{cnn_features_forward.1} parent=75 // pred_check
          %p9870 = pneg %p318
        $region86: #{cnn_features_forward.1} parent=75 // pred_check_branch
          %9872 = sbr.rel (%p9870) target = $region88
        $region87: #{cnn_features_forward.1} parent=75 // pred_region
          %p9873 = scmp.lt.s32.totalorder %s28, 1
          %s9874 = scalar_select %p9873, %s28, 1
          %s9875 = smul.addr %s9874, 4
          %s9876 = scalar_lea.vmem %s12, %s9875
        $region88: #{cnn_features_forward.1} parent=75 // pred_fallthru
          _
      $region76: #{cnn_features_forward.1} parent=5 // pred_fallthru
        _
    $region6: #{cnn_features_forward.1} parent=1 // loop_footer
      %s26 = sadd.s32 1, %s22
    $region7: #{cnn_features_forward.1} parent=1 // loop_footer_branch
      %21 = sbr.rel target = $region3
    $region8: #{cnn_features_forward.1} parent=1 // loop_exit
      _
    %9877 = vsyncpa [#allocation3], 1
    %s9878 = scalar_lea.sflag [#allocation3], 1
    %9879 = vsyncpa %s9878, 1

</llo_original>
